<compile_context>
chip_gen: v7x
topology: tpu7x:2x2x1
jax: 0.10.0
libtpu: 0.0.40
codegen_flags: <defaults>
</compile_context>

<pallas_src>
import functools
import math

import numpy as np
import jax
import jax.numpy as jnp
from jax.experimental import pallas as pl
from jax.experimental.pallas import tpu as pltpu


def _round_up(x, m):
    return (x + m - 1) // m * m


# ----------------------------------------------------------------------------
# Tiled matmul kernel with fused bias + optional ReLU epilogue (full K per tile)
# ----------------------------------------------------------------------------
def _mm_bias_act_kernel(a_ref, b_ref, bias_ref, o_ref, *, relu):
    r = jnp.dot(a_ref[...], b_ref[...], preferred_element_type=jnp.float32)
    r = r + bias_ref[...]
    if relu:
        r = jnp.maximum(r, 0.0)
    o_ref[...] = r.astype(o_ref.dtype)


def matmul_bias_act(a, b, bias, relu=False, out_dtype=jnp.bfloat16):
    """(M,K) @ (K,N) + bias, optional ReLU.  bf16 MXU inputs, f32 accumulate."""
    M, K = a.shape
    Kb, N = b.shape
    assert K == Kb

    a_p = a.astype(jnp.bfloat16)
    b_p = b.astype(jnp.bfloat16)

    # K: callers (im2col) already emit 128-aligned K; fallback pad for safety.
    Kp = _round_up(K, 128)
    if Kp != K:
        a_p = jnp.pad(a_p, ((0, 0), (0, Kp - K)))
        b_p = jnp.pad(b_p, ((0, Kp - K), (0, 0)))

    # M tiles: 256/128 for large M (fills 256-wide MXUs), exact small tile else.
    if M >= 128:
        Mp = _round_up(M, 128)
        tm = 256 if (Mp % 256 == 0 and Mp >= 256) else 128
    else:
        Mp = _round_up(M, 8)
        tm = Mp
    if Mp != M:
        a_p = jnp.pad(a_p, ((0, Mp - M), (0, 0)))

    Np = _round_up(N, 128)
    tn = 256 if (Np % 256 == 0 and Np >= 256) else 128
    if Np != N:
        b_p = jnp.pad(b_p, ((0, 0), (0, Np - N)))
    bias_p = jnp.pad(bias.astype(jnp.float32), (0, Np - N)).reshape(1, Np)

    out = pl.pallas_call(
        functools.partial(_mm_bias_act_kernel, relu=relu),
        out_shape=jax.ShapeDtypeStruct((Mp, Np), out_dtype),
        grid=(Mp // tm, Np // tn),
        in_specs=[pl.BlockSpec((tm, Kp), lambda i, j: (i, 0)),
                  pl.BlockSpec((Kp, tn), lambda i, j: (0, j)),
                  pl.BlockSpec((1, tn), lambda i, j: (0, j))],
        out_specs=pl.BlockSpec((tm, tn), lambda i, j: (i, j)),
        compiler_params=pltpu.CompilerParams(
            dimension_semantics=("parallel", "parallel"),
            vmem_limit_bytes=48 * 1024 * 1024),   # v7x-safe (64 MiB physical)
    )(a_p, b_p, bias_p)
    if (Mp, Np) != (M, N):
        out = out[:M, :N]
    return out


# ----------------------------------------------------------------------------
# Fused similarity (4 bmm's) + softmax + matcher weighted-max kernel
# ----------------------------------------------------------------------------
def _simmatch_kernel(ink_ref, pnk_ref, ik_ref, pk_ref, cnkT_ref, ckT_ref,
                     iseg_ref, pseg_ref, o_ref):
    m = pl.program_id(1)

    @pl.when(m == 0)
    def _():
        o_ref[...] = jnp.full(o_ref.shape, -jnp.inf, dtype=o_ref.dtype)

    cnkT = cnkT_ref[0]                     # (C, P)  current norm-keys (lane-dense)
    ckT = ckT_ref[0]                       # (C, P)  current keys
    iseg = iseg_ref[0]                     # (tmem, 2) [bg, fg]
    pseg = pseg_ref[0]

    def two_rows(sim, seg):                # weighted max over memory pixels
        bg = jnp.max(sim * seg[:, 0:1], axis=0, keepdims=True)
        fg = jnp.max(sim * seg[:, 1:2], axis=0, keepdims=True)
        return [bg, fg]

    def row_softmax(s):                    # softmax over current pixels (lanes)
        mx = jnp.max(s, axis=-1, keepdims=True)
        e = jnp.exp(s - mx)
        return e * pl.reciprocal(jnp.sum(e, axis=-1, keepdims=True), approx=True)

    # Compute the four (tmem, P) similarity blocks sequentially so only one is
    # live at a time (bounds VMEM/vreg pressure, important on v7x).
    rows = []
    ics = (jnp.dot(ink_ref[0], cnkT, preferred_element_type=jnp.float32) + 1.0) * 0.5
    rows += two_rows(ics, iseg)                                   # global bg/fg
    pcs = (jnp.dot(pnk_ref[0], cnkT, preferred_element_type=jnp.float32) + 1.0) * 0.5
    rows += two_rows(pcs, pseg)                                   # local bg/fg
    iss = row_softmax(jnp.dot(ik_ref[0], ckT, preferred_element_type=jnp.float32))
    rows += two_rows(iss, iseg)                                   # eq_global bg/fg
    pss = row_softmax(jnp.dot(pk_ref[0], ckT, preferred_element_type=jnp.float32))
    rows += two_rows(pss, pseg)                                   # eq_local bg/fg

    rows8 = jnp.concatenate(rows, axis=0)                         # (8, P)
    o_ref[0] = jnp.maximum(o_ref[0], rows8)                       # one full-tile store


def fused_similarity_matcher(init_nk, prev_nk, init_k, prev_k,
                             cur_nkT, cur_kT, init_seg16, prev_seg16):
    """Memory keys NHWC (B,Hs,Ws,C); current keys pre-transposed (B,C,P);
    segs NHWC (B,Hs,Ws,2).  Returns the (B, 8, P) matching score."""
    B, C, P = cur_nkT.shape

    def kflat(x):
        return x.reshape(B, P, C).astype(jnp.bfloat16)

    def sflat(x):
        return x.reshape(B, P, 2).astype(jnp.float32)

    if P > 512 and P % 256 == 0:
        tmem = 256
    elif P > 512 and P % 128 == 0:
        tmem = 128
    else:
        tmem = P                                             # tmem always divides P
    nmt = P // tmem

    spec_mem = pl.BlockSpec((1, tmem, C), lambda b, m: (b, m, 0))
    spec_curT = pl.BlockSpec((1, C, P), lambda b, m: (b, 0, 0))
    spec_seg = pl.BlockSpec((1, tmem, 2), lambda b, m: (b, m, 0))

    return pl.pallas_call(
        _simmatch_kernel,
        out_shape=jax.ShapeDtypeStruct((B, 8, P), jnp.float32),
        grid=(B, nmt),
        in_specs=[spec_mem, spec_mem, spec_mem, spec_mem,
                  spec_curT, spec_curT, spec_seg, spec_seg],
        out_specs=pl.BlockSpec((1, 8, P), lambda b, m: (b, 0, 0)),
        compiler_params=pltpu.CompilerParams(
            dimension_semantics=("parallel", "arbitrary"),
            vmem_limit_bytes=48 * 1024 * 1024),
    )(kflat(init_nk), kflat(prev_nk), kflat(init_k), kflat(prev_k),
      cur_nkT.astype(jnp.bfloat16), cur_kT.astype(jnp.bfloat16),
      sflat(init_seg16), sflat(prev_seg16))


# ----------------------------------------------------------------------------
# Conv / ConvTranspose built on the Pallas matmul kernel (NHWC layout)
# ----------------------------------------------------------------------------
# TODO(synk): im2col patches are still materialized by XLA (in bf16, K-padded
# in-place) rather than generated tile-by-tile inside the matmul kernel.
def im2col_nhwc(x, kh, kw, stride, pad):
    """x must already be bf16.  Returns 128-aligned-K patches (pad folded in)."""
    if pad > 0:
        x = jnp.pad(x, ((0, 0), (pad, pad), (pad, pad), (0, 0)))
    B, H, W, C = x.shape
    Ho = (H - kh) // stride + 1
    Wo = (W - kw) // stride + 1
    cols = []
    for i in range(kh):
        for j in range(kw):
            cols.append(x[:, i:i + stride * (Ho - 1) + 1:stride,
                             j:j + stride * (Wo - 1) + 1:stride, :])
    K = kh * kw * C
    Kp = _round_up(K, 128)
    if Kp != K:                      # fold K pad into patch construction
        cols.append(jnp.zeros((B, Ho, Wo, Kp - K), x.dtype))
    patches = jnp.concatenate(cols, axis=-1)               # (B, Ho, Wo, Kp)
    return patches.reshape(B * Ho * Wo, Kp), Ho, Wo


def conv2d_nhwc(x, p, stride=1, pad=0, relu=False, out_dtype=jnp.bfloat16):
    w, b = p["w"], p["b"]                                   # w: (Cout, Cin, kh, kw)
    Cout, Cin, kh, kw = w.shape
    B = x.shape[0]
    patches, Ho, Wo = im2col_nhwc(x.astype(jnp.bfloat16), kh, kw, stride, pad)
    K = kh * kw * Cin
    w_mat = w.transpose(2, 3, 1, 0).reshape(K, Cout)        # (i,j,c) row order
    if patches.shape[1] != K:
        w_mat = jnp.pad(w_mat, ((0, patches.shape[1] - K), (0, 0)))
    out = matmul_bias_act(patches, w_mat, b, relu=relu, out_dtype=out_dtype)
    return out.reshape(B, Ho, Wo, Cout)


def conv_transpose2d_nhwc(x, p, stride, pad, out_dtype=jnp.bfloat16):
    """Sub-pixel ConvTranspose2d: one stride-1 conv over the un-dilated input
    with stride^2 phase kernels (2x2 window), then a pixel shuffle."""
    w, b = p["w"], p["b"]                                   # (Cin, Cout, kh, kw)
    Cin, Cout, kh, kw = w.shape
    s = stride
    B, H, W, _ = x.shape
    assert kh == kw and kh == 2 * pad + s                   # holds for this model
    KHp = -(-kh // s)                                       # taps per phase (== 2)

    # Phase weight matrix; rows follow im2col order ((ay*KHp+ax)*Cin + ci),
    # cols are ((ry*s + rx)*Cout + co).
    wm = jnp.zeros((KHp, KHp, Cin, s, s, Cout), w.dtype)
    for ry in range(s):
        phy = (ry + pad) % s
        for ay in range(KHp):
            ky = s * (KHp - 1 - ay) + phy
            if not (0 <= ky < kh):
                continue
            for rx in range(s):
                phx = (rx + pad) % s
                for ax in range(KHp):
                    kx = s * (KHp - 1 - ax) + phx
                    if not (0 <= kx < kw):
                        continue
                    wm = wm.at[ay, ax, :, ry, rx, :].set(w[:, :, ky, kx])
    w_mat = wm.reshape(KHp * KHp * Cin, s * s * Cout)
    bias_vec = jnp.tile(b, s * s)

    patches, Hw, Ww = im2col_nhwc(x.astype(jnp.bfloat16), KHp, KHp, 1, KHp - 1)
    if patches.shape[1] != w_mat.shape[0]:
        w_mat = jnp.pad(w_mat, ((0, patches.shape[1] - w_mat.shape[0]), (0, 0)))
    mm = matmul_bias_act(patches, w_mat, bias_vec, relu=False, out_dtype=out_dtype)
    mm = mm.reshape(B, Hw, Ww, s, s, Cout)                  # Hw = H+1, Ww = W+1

    off = [(r + pad) // s for r in range(s)]                # per-phase window offset
    rows = []
    for ry in range(s):
        cols = []
        for rx in range(s):
            cols.append(mm[:, off[ry]:off[ry] + H, off[rx]:off[rx] + W, ry, rx, :])
        rows.append(jnp.stack(cols, axis=3).reshape(B, H, W * s, Cout))
    return jnp.stack(rows, axis=2).reshape(B, H * s, W * s, Cout)


# ----------------------------------------------------------------------------
# Parameters (deterministic kaiming-uniform init, biases zero)
# ----------------------------------------------------------------------------
def _kaiming_uniform(key, shape):
    fan_in = int(np.prod(shape[1:]))
    bound = math.sqrt(6.0 / fan_in)
    return jax.random.uniform(key, shape, jnp.float32, -bound, bound)


def make_params(key):
    keys = iter(jax.random.split(key, 64))

    def conv_p(cout, cin, k):
        return {"w": _kaiming_uniform(next(keys), (cout, cin, k, k)),
                "b": jnp.zeros((cout,), jnp.float32)}

    def deconv_p(cin, cout, k):
        return {"w": _kaiming_uniform(next(keys), (cin, cout, k, k)),
                "b": jnp.zeros((cout,), jnp.float32)}

    def cbam_p(c):
        return {"c1": conv_p(c, c, 3), "c2a": conv_p(c, c, 1), "c2b": conv_p(c, c, 1),
                "c3a": conv_p(16, 2, 3), "c3b": conv_p(1, 16, 3)}

    return {
        # synthetic encoder (see TODO in encoder_forward)
        "enc1": conv_p(256, 3, 4), "enc2": conv_p(512, 256, 2), "enc3": conv_p(1024, 512, 2),
        # matcher
        "m_conv1": conv_p(512, 1024, 1), "m_conv2": conv_p(512, 1024, 1),
        # decoder
        "d_conv1": conv_p(256, 1024, 1), "d_blend1": conv_p(256, 266, 3),
        "d_cbam1": cbam_p(256), "d_deconv1": deconv_p(256, 2, 4),
        "d_conv2": conv_p(256, 512, 1), "d_blend2": conv_p(256, 258, 3),
        "d_cbam2": cbam_p(256), "d_deconv2": deconv_p(256, 2, 4),
        "d_conv3": conv_p(256, 256, 1), "d_blend3": conv_p(256, 258, 3),
        "d_cbam3": cbam_p(256), "d_deconv3": deconv_p(256, 2, 6),
        "mean": jnp.array([0.485, 0.456, 0.406], jnp.float32).reshape(1, 1, 1, 3),
        "std": jnp.array([0.229, 0.224, 0.225], jnp.float32).reshape(1, 1, 1, 3),
    }


# ----------------------------------------------------------------------------
# Model blocks (all activations NHWC, bf16 between layers)
# ----------------------------------------------------------------------------
def encoder_forward(img_nchw, p):
    # TODO(synk): pretrained DenseNet121 backbone cannot be loaded here; replaced by
    # a deterministic synthetic conv stack producing s4/s8/s16 features with the same
    # channel counts (256/512/1024) and strides (4/8/16).
    x = img_nchw.transpose(0, 2, 3, 1)                      # NHWC
    x = (x - p["mean"]) / p["std"]
    s4 = conv2d_nhwc(x, p["enc1"], stride=4, pad=0, relu=True)
    s8 = conv2d_nhwc(s4, p["enc2"], stride=2, pad=0, relu=True)
    s16 = conv2d_nhwc(s8, p["enc3"], stride=2, pad=0, relu=True)
    return {"s16": s16, "s8": s8, "s4": s4}


def get_norm_key(s16, p):
    key = conv2d_nhwc(s16, p["m_conv1"], 1, 0, relu=False, out_dtype=jnp.float32)
    norm = jnp.sqrt(jnp.sum(key * key, axis=-1, keepdims=True))
    return key / jnp.maximum(norm, 1e-12)                   # eps guards all-zero keys


def get_key(s16, p):
    return conv2d_nhwc(s16, p["m_conv2"], 1, 0, relu=False, out_dtype=jnp.float32)


def cbam_forward(x, p):
    x = conv2d_nhwc(x, p["c1"], 1, 1, relu=False)           # bf16

    # Channel MLP: M == batch, far too small for a pallas_call -- plain jnp dots,
    # with the avg/max branches batched into one (2B, C) matmul pair.
    B, _, _, C = x.shape
    xf = x.astype(jnp.float32)
    pooled = jnp.concatenate([jnp.mean(xf, axis=(1, 2)),
                              jnp.max(xf, axis=(1, 2))], axis=0)      # (2B, C)
    w1 = p["c2a"]["w"].reshape(C, C).T
    w2 = p["c2b"]["w"].reshape(C, C).T
    t = jnp.maximum(pooled @ w1 + p["c2a"]["b"], 0.0)
    t = t @ w2 + p["c2b"]["b"]
    c = jax.nn.sigmoid(t[:B] + t[B:]).reshape(B, 1, 1, C)
    x = x * c.astype(x.dtype)

    sp = jnp.concatenate([jnp.mean(x.astype(jnp.float32), axis=-1, keepdims=True),
                          jnp.max(x.astype(jnp.float32), axis=-1, keepdims=True)],
                         axis=-1)
    s = conv2d_nhwc(sp, p["c3a"], 1, 1, relu=True)
    s = jax.nn.sigmoid(conv2d_nhwc(s, p["c3b"], 1, 1, relu=False))
    return x * s.astype(x.dtype)


def decoder_forward(feats, matching_score, prev_seg_16, p):
    x = jnp.concatenate([conv2d_nhwc(feats["s16"], p["d_conv1"], 1, 0, relu=True),
                         matching_score.astype(jnp.bfloat16),
                         prev_seg_16.astype(jnp.bfloat16)], axis=-1)
    x = conv2d_nhwc(x, p["d_blend1"], 1, 1, relu=True)
    x = cbam_forward(x, p["d_cbam1"])
    s8 = conv_transpose2d_nhwc(x, p["d_deconv1"], 2, 1)

    x = jnp.concatenate([conv2d_nhwc(feats["s8"], p["d_conv2"], 1, 0, relu=True), s8],
                        axis=-1)
    x = conv2d_nhwc(x, p["d_blend2"], 1, 1, relu=True)
    x = cbam_forward(x, p["d_cbam2"])
    s4 = conv_transpose2d_nhwc(x, p["d_deconv2"], 2, 1)

    x = jnp.concatenate([conv2d_nhwc(feats["s4"], p["d_conv3"], 1, 0, relu=True), s4],
                        axis=-1)
    x = conv2d_nhwc(x, p["d_blend3"], 1, 1, relu=True)
    x = cbam_forward(x, p["d_cbam3"])
    return conv_transpose2d_nhwc(x, p["d_deconv3"], 4, 1, out_dtype=jnp.float32)


def vos_forward(feats, norm_key, key, state, p):
    B, Hs, Ws, C = norm_key.shape
    P = Hs * Ws
    # Current-frame keys transposed once to (B, C, P): in-kernel products are
    # canonical (tmem,C)@(C,P) MXU matmuls with a lane-dense P output.
    cur_nkT = norm_key.reshape(B, P, C).transpose(0, 2, 1)
    cur_kT = key.reshape(B, P, C).transpose(0, 2, 1)
    final_score = {}
    for k in sorted(state.keys()):
        st = state[k]
        mscore = fused_similarity_matcher(
            st["init_norm_key"], st["prev_norm_key"],
            st["init_key"], st["prev_key"],
            cur_nkT, cur_kT, st["init_seg_16"], st["prev_seg_16"])   # (B, 8, P)
        mscore = mscore.reshape(B, 8, Hs, Ws).transpose(0, 2, 3, 1)  # NHWC, tiny
        final_score[k] = decoder_forward(feats, mscore, st["prev_seg_16"], p)
    return final_score


def avg_pool_16(x):
    B, H, W, C = x.shape
    return x.reshape(B, H // 16, 16, W // 16, 16, C).mean(axis=(2, 4))


# ----------------------------------------------------------------------------
# Per-sequence jitted steps
# ----------------------------------------------------------------------------
def _init_step(img0, init_mask, params, *, object_ids):
    feats = encoder_forward(img0, params)
    norm_key = get_norm_key(feats["s16"], params)
    key = get_key(feats["s16"], params)
    m = init_mask.transpose(0, 2, 3, 1)                     # (B,H,W,1)
    segs = {}
    for k in object_ids:
        seg = jnp.concatenate([(m != k), (m == k)], axis=-1).astype(jnp.float32)
        segs[k] = avg_pool_16(seg)
    return norm_key, key, segs


def _frame_step(img, state, params):
    feats = encoder_forward(img, params)
    norm_key = get_norm_key(feats["s16"], params)
    key = get_key(feats["s16"], params)
    final_nhwc = vos_forward(feats, norm_key, key, state, params)
    pred_seg16 = {k: avg_pool_16(jax.nn.softmax(v, axis=-1))
                  for k, v in final_nhwc.items()}
    final_score = {k: v.transpose(0, 3, 1, 2) for k, v in final_nhwc.items()}  # NCHW
    return final_score, norm_key, key, pred_seg16


# ----------------------------------------------------------------------------
# EMVOS top level (B != 1 "scores" branch, as in the reference)
# ----------------------------------------------------------------------------
def get_padding(h, w, div):
    h_pad = (div - h % div) % div
    w_pad = (div - w % div) % div
    return [(w_pad + 1) // 2, w_pad // 2, (h_pad + 1) // 2, h_pad // 2]


def detach_padding(output, padding):
    H, W = output.shape[-2], output.shape[-1]
    return output[..., padding[2]:H - padding[3], padding[0]:W - padding[1]]


def emvos_forward(imgs, given_masks, val_frame_ids, params):
    B, L, _, H, W = imgs.shape
    padding = get_padding(H, W, 16)
    assert B != 1, "this script exercises the B != 1 (scores) branch"
    # TODO(synk): B == 1 inference branch (aggregate_objects data-dependent mask
    # relabeling) is not implemented; the B != 1 branch never reaches it.
    mask0 = given_masks[:, 0]                               # (B, 1, H, W)
    if tuple(padding) != (0, 0, 0, 0):
        pad5 = ((0, 0), (0, 0), (0, 0), (padding[2], padding[3]), (padding[0], padding[1]))
        imgs = jnp.pad(imgs, pad5, mode="reflect")
        pad4 = ((0, 0), (0, 0), (padding[2], padding[3]), (padding[0], padding[1]))
        mask0 = jnp.pad(mask0.astype(jnp.float32), pad4, mode="reflect").astype(jnp.int32)

    object_ids = tuple(int(v) for v in np.unique(np.asarray(mask0)) if int(v) != 0)

    init_step = jax.jit(_init_step, static_argnames=("object_ids",))
    frame_step = jax.jit(_frame_step)

    norm_key, key, segs = init_step(imgs[:, 0], mask0, params, object_ids=object_ids)
    state = {k: {"init_norm_key": norm_key, "prev_norm_key": norm_key,
                 "init_key": key, "prev_key": key,
                 "init_seg_16": segs[k], "prev_seg_16": segs[k]}
             for k in object_ids}

    score_lst = []
    for i in range(1, L):
        final_score, norm_key, key, pred_seg16 = frame_step(imgs[:, i], state, params)
        if i < L - 1:
            for k in object_ids:
                state[k]["prev_norm_key"] = norm_key
                state[k]["prev_key"] = key
                state[k]["prev_seg_16"] = pred_seg16[k]
        score_lst.append(final_score[1])                    # (B, 2, H, W)

    scores = jnp.stack(score_lst, axis=1)                   # (B, L-1, 2, H, W)
    scores = detach_padding(scores, padding)
    return {"scores": scores}


# ----------------------------------------------------------------------------
if __name__ == "__main__":
    B, L, H, W = 2, 3, 32, 32
    rng = jax.random.PRNGKey(0)
    k_img, k_param = jax.random.split(rng)

    imgs = jax.random.uniform(k_img, (B, L, 3, H, W), jnp.float32)
    masks_np = np.zeros((B, L, 1, H, W), np.int32)
    masks_np[:, :, :, 8:24, 8:24] = 1                       # object id 1
    given_masks = jnp.asarray(masks_np)

    params = make_params(k_param)
    out = emvos_forward(imgs, given_masks, None, params)
    scores = jax.block_until_ready(out["scores"])

    assert scores.shape == (B, L - 1, 2, H, W), scores.shape
    assert bool(jnp.all(jnp.isfinite(scores)))
    print("KERNEL_OK")
</pallas_src>

<mosaic_0001>
module attributes {stable_mosaic.version = 11 : i64} {
  func.func @_mm_bias_act_kernel(%arg0: i32, %arg1: i32, %arg2: memref<128x128xbf16, #tpu.memory_space<vmem>>, %arg3: memref<128x256xbf16, #tpu.memory_space<vmem>>, %arg4: memref<1x256xf32, #tpu.memory_space<vmem>>, %arg5: memref<128x256xbf16, #tpu.memory_space<vmem>>) attributes {dimension_semantics = [#tpu.dimension_semantics<parallel>, #tpu.dimension_semantics<parallel>], iteration_bounds = array<i64: 1, 1>, scalar_prefetch = 0 : i64, scratch_operands = 0 : i64, tpu.core_type = #tpu.core_type<tc>, window_params = [{transform_indices = @transform_0, window_bounds = array<i64: 128, 128>}, {transform_indices = @transform_1, window_bounds = array<i64: 128, 256>}, {transform_indices = @transform_2, window_bounds = array<i64: 1, 256>}, {transform_indices = @transform_3, window_bounds = array<i64: 128, 256>}]} {
    %c0 = arith.constant 0 : index
    %c0_0 = arith.constant 0 : index
    %0 = vector.load %arg2[%c0, %c0_0] : memref<128x128xbf16, #tpu.memory_space<vmem>>, vector<128x128xbf16>
    %c0_1 = arith.constant 0 : index
    %c0_2 = arith.constant 0 : index
    %1 = vector.load %arg3[%c0_1, %c0_2] : memref<128x256xbf16, #tpu.memory_space<vmem>>, vector<128x256xbf16>
    %cst = arith.constant dense<0.000000e+00> : vector<128x256xf32>
    %2 = tpu.matmul %0, %1, %cst {dimension_numbers = #tpu.dot_dimension_numbers<[1], [0], [0], [1], [0, 0, 1, 1], [], []>} : vector<128x128xbf16>, vector<128x256xbf16>, vector<128x256xf32> -> vector<128x256xf32>
    %c0_3 = arith.constant 0 : index
    %c0_4 = arith.constant 0 : index
    %3 = vector.load %arg4[%c0_3, %c0_4] : memref<1x256xf32, #tpu.memory_space<vmem>>, vector<1x256xf32>
    %4 = vector.broadcast %3 : vector<1x256xf32> to vector<128x256xf32>
    %5 = arith.addf %2, %4 : vector<128x256xf32>
    %cst_5 = arith.constant 0.000000e+00 : f32
    %6 = vector.broadcast %cst_5 : f32 to vector<128x256xf32>
    %7 = arith.maximumf %5, %6 : vector<128x256xf32>
    %8 = arith.truncf %7 : vector<128x256xf32> to vector<128x256xbf16>
    %c0_6 = arith.constant 0 : index
    %c0_7 = arith.constant 0 : index
    %9 = vector.load %arg5[%c0_6, %c0_7] : memref<128x256xbf16, #tpu.memory_space<vmem>>, vector<128x256xbf16>
    tpu.vector_store %arg5[%c0_6, %c0_7], %8 {strides = array<i32>} : memref<128x256xbf16, #tpu.memory_space<vmem>>, vector<128x256xbf16>,
    return
  }
  func.func @transform_0(%arg0: i32, %arg1: i32) -> (i32, i32) {
    %c0_i32 = arith.constant 0 : i32
    %c0_i32_0 = arith.constant 0 : i32
    return %arg0, %c0_i32 : i32, i32
  }
  func.func @transform_1(%arg0: i32, %arg1: i32) -> (i32, i32) {
    %c0_i32 = arith.constant 0 : i32
    %c0_i32_0 = arith.constant 0 : i32
    return %c0_i32, %arg1 : i32, i32
  }
  func.func @transform_2(%arg0: i32, %arg1: i32) -> (i32, i32) {
    %c0_i32 = arith.constant 0 : i32
    %c0_i32_0 = arith.constant 0 : i32
    return %c0_i32, %arg1 : i32, i32
  }
  func.func @transform_3(%arg0: i32, %arg1: i32) -> (i32, i32) {
    %c0_i32 = arith.constant 0 : i32
    return %arg0, %arg1 : i32, i32
  }
}

module attributes {stable_mosaic.version = 11 : i64} {
  func.func @_mm_bias_act_kernel(%arg0: i32, %arg1: i32, %arg2: memref<32x1024xbf16, #tpu.memory_space<vmem>>, %arg3: memref<1024x256xbf16, #tpu.memory_space<vmem>>, %arg4: memref<1x256xf32, #tpu.memory_space<vmem>>, %arg5: memref<32x256xbf16, #tpu.memory_space<vmem>>) attributes {dimension_semantics = [#tpu.dimension_semantics<parallel>, #tpu.dimension_semantics<parallel>], iteration_bounds = array<i64: 1, 2>, scalar_prefetch = 0 : i64, scratch_operands = 0 : i64, tpu.core_type = #tpu.core_type<tc>, window_params = [{transform_indices = @transform_0, window_bounds = array<i64: 32, 1024>}, {transform_indices = @transform_1, window_bounds = array<i64: 1024, 256>}, {transform_indices = @transform_2, window_bounds = array<i64: 1, 256>}, {transform_indices = @transform_3, window_bounds = array<i64: 32, 256>}]} {
    %c0 = arith.constant 0 : index
    %c0_0 = arith.constant 0 : index
    %0 = vector.load %arg2[%c0, %c0_0] : memref<32x1024xbf16, #tpu.memory_space<vmem>>, vector<32x1024xbf16>
    %c0_1 = arith.constant 0 : index
    %c0_2 = arith.constant 0 : index
    %1 = vector.load %arg3[%c0_1, %c0_2] : memref<1024x256xbf16, #tpu.memory_space<vmem>>, vector<1024x256xbf16>
    %cst = arith.constant dense<0.000000e+00> : vector<32x256xf32>
    %2 = tpu.matmul %0, %1, %cst {dimension_numbers = #tpu.dot_dimension_numbers<[1], [0], [0], [1], [0, 0, 1, 1], [], []>} : vector<32x1024xbf16>, vector<1024x256xbf16>, vector<32x256xf32> -> vector<32x256xf32>
    %c0_3 = arith.constant 0 : index
    %c0_4 = arith.constant 0 : index
    %3 = vector.load %arg4[%c0_3, %c0_4] : memref<1x256xf32, #tpu.memory_space<vmem>>, vector<1x256xf32>
    %4 = vector.broadcast %3 : vector<1x256xf32> to vector<32x256xf32>
    %5 = arith.addf %2, %4 : vector<32x256xf32>
    %cst_5 = arith.constant 0.000000e+00 : f32
    %6 = vector.broadcast %cst_5 : f32 to vector<32x256xf32>
    %7 = arith.maximumf %5, %6 : vector<32x256xf32>
    %8 = arith.truncf %7 : vector<32x256xf32> to vector<32x256xbf16>
    %c0_6 = arith.constant 0 : index
    %c0_7 = arith.constant 0 : index
    %9 = vector.load %arg5[%c0_6, %c0_7] : memref<32x256xbf16, #tpu.memory_space<vmem>>, vector<32x256xbf16>
    tpu.vector_store %arg5[%c0_6, %c0_7], %8 {strides = array<i32>} : memref<32x256xbf16, #tpu.memory_space<vmem>>, vector<32x256xbf16>,
    return
  }
  func.func @transform_0(%arg0: i32, %arg1: i32) -> (i32, i32) {
    %c0_i32 = arith.constant 0 : i32
    %c0_i32_0 = arith.constant 0 : i32
    return %arg0, %c0_i32 : i32, i32
  }
  func.func @transform_1(%arg0: i32, %arg1: i32) -> (i32, i32) {
    %c0_i32 = arith.constant 0 : i32
    %c0_i32_0 = arith.constant 0 : i32
    return %c0_i32, %arg1 : i32, i32
  }
  func.func @transform_2(%arg0: i32, %arg1: i32) -> (i32, i32) {
    %c0_i32 = arith.constant 0 : i32
    %c0_i32_0 = arith.constant 0 : i32
    return %c0_i32, %arg1 : i32, i32
  }
  func.func @transform_3(%arg0: i32, %arg1: i32) -> (i32, i32) {
    %c0_i32 = arith.constant 0 : i32
    return %arg0, %arg1 : i32, i32
  }
}

module attributes {stable_mosaic.version = 11 : i64} {
  func.func @_mm_bias_act_kernel(%arg0: i32, %arg1: i32, %arg2: memref<8x2048xbf16, #tpu.memory_space<vmem>>, %arg3: memref<2048x256xbf16, #tpu.memory_space<vmem>>, %arg4: memref<1x256xf32, #tpu.memory_space<vmem>>, %arg5: memref<8x256xbf16, #tpu.memory_space<vmem>>) attributes {dimension_semantics = [#tpu.dimension_semantics<parallel>, #tpu.dimension_semantics<parallel>], iteration_bounds = array<i64: 1, 4>, scalar_prefetch = 0 : i64, scratch_operands = 0 : i64, tpu.core_type = #tpu.core_type<tc>, window_params = [{transform_indices = @transform_0, window_bounds = array<i64: 8, 2048>}, {transform_indices = @transform_1, window_bounds = array<i64: 2048, 256>}, {transform_indices = @transform_2, window_bounds = array<i64: 1, 256>}, {transform_indices = @transform_3, window_bounds = array<i64: 8, 256>}]} {
    %c0 = arith.constant 0 : index
    %c0_0 = arith.constant 0 : index
    %0 = vector.load %arg2[%c0, %c0_0] : memref<8x2048xbf16, #tpu.memory_space<vmem>>, vector<8x2048xbf16>
    %c0_1 = arith.constant 0 : index
    %c0_2 = arith.constant 0 : index
    %1 = vector.load %arg3[%c0_1, %c0_2] : memref<2048x256xbf16, #tpu.memory_space<vmem>>, vector<2048x256xbf16>
    %cst = arith.constant dense<0.000000e+00> : vector<8x256xf32>
    %2 = tpu.matmul %0, %1, %cst {dimension_numbers = #tpu.dot_dimension_numbers<[1], [0], [0], [1], [0, 0, 1, 1], [], []>} : vector<8x2048xbf16>, vector<2048x256xbf16>, vector<8x256xf32> -> vector<8x256xf32>
    %c0_3 = arith.constant 0 : index
    %c0_4 = arith.constant 0 : index
    %3 = vector.load %arg4[%c0_3, %c0_4] : memref<1x256xf32, #tpu.memory_space<vmem>>, vector<1x256xf32>
    %4 = vector.broadcast %3 : vector<1x256xf32> to vector<8x256xf32>
    %5 = arith.addf %2, %4 : vector<8x256xf32>
    %cst_5 = arith.constant 0.000000e+00 : f32
    %6 = vector.broadcast %cst_5 : f32 to vector<8x256xf32>
    %7 = arith.maximumf %5, %6 : vector<8x256xf32>
    %8 = arith.truncf %7 : vector<8x256xf32> to vector<8x256xbf16>
    %c0_6 = arith.constant 0 : index
    %c0_7 = arith.constant 0 : index
    %9 = vector.load %arg5[%c0_6, %c0_7] : memref<8x256xbf16, #tpu.memory_space<vmem>>, vector<8x256xbf16>
    tpu.vector_store %arg5[%c0_6, %c0_7], %8 {strides = array<i32>} : memref<8x256xbf16, #tpu.memory_space<vmem>>, vector<8x256xbf16>,
    return
  }
  func.func @transform_0(%arg0: i32, %arg1: i32) -> (i32, i32) {
    %c0_i32 = arith.constant 0 : i32
    %c0_i32_0 = arith.constant 0 : i32
    return %arg0, %c0_i32 : i32, i32
  }
  func.func @transform_1(%arg0: i32, %arg1: i32) -> (i32, i32) {
    %c0_i32 = arith.constant 0 : i32
    %c0_i32_0 = arith.constant 0 : i32
    return %c0_i32, %arg1 : i32, i32
  }
  func.func @transform_2(%arg0: i32, %arg1: i32) -> (i32, i32) {
    %c0_i32 = arith.constant 0 : i32
    %c0_i32_0 = arith.constant 0 : i32
    return %c0_i32, %arg1 : i32, i32
  }
  func.func @transform_3(%arg0: i32, %arg1: i32) -> (i32, i32) {
    %c0_i32 = arith.constant 0 : i32
    return %arg0, %arg1 : i32, i32
  }
}

module attributes {stable_mosaic.version = 11 : i64} {
  func.func @_mm_bias_act_kernel(%arg0: i32, %arg1: i32, %arg2: memref<8x1024xbf16, #tpu.memory_space<vmem>>, %arg3: memref<1024x256xbf16, #tpu.memory_space<vmem>>, %arg4: memref<1x256xf32, #tpu.memory_space<vmem>>, %arg5: memref<8x256xf32, #tpu.memory_space<vmem>>) attributes {dimension_semantics = [#tpu.dimension_semantics<parallel>, #tpu.dimension_semantics<parallel>], iteration_bounds = array<i64: 1, 2>, scalar_prefetch = 0 : i64, scratch_operands = 0 : i64, tpu.core_type = #tpu.core_type<tc>, window_params = [{transform_indices = @transform_0, window_bounds = array<i64: 8, 1024>}, {transform_indices = @transform_1, window_bounds = array<i64: 1024, 256>}, {transform_indices = @transform_2, window_bounds = array<i64: 1, 256>}, {transform_indices = @transform_3, window_bounds = array<i64: 8, 256>}]} {
    %c0 = arith.constant 0 : index
    %c0_0 = arith.constant 0 : index
    %0 = vector.load %arg2[%c0, %c0_0] : memref<8x1024xbf16, #tpu.memory_space<vmem>>, vector<8x1024xbf16>
    %c0_1 = arith.constant 0 : index
    %c0_2 = arith.constant 0 : index
    %1 = vector.load %arg3[%c0_1, %c0_2] : memref<1024x256xbf16, #tpu.memory_space<vmem>>, vector<1024x256xbf16>
    %cst = arith.constant dense<0.000000e+00> : vector<8x256xf32>
    %2 = tpu.matmul %0, %1, %cst {dimension_numbers = #tpu.dot_dimension_numbers<[1], [0], [0], [1], [0, 0, 1, 1], [], []>} : vector<8x1024xbf16>, vector<1024x256xbf16>, vector<8x256xf32> -> vector<8x256xf32>
    %c0_3 = arith.constant 0 : index
    %c0_4 = arith.constant 0 : index
    %3 = vector.load %arg4[%c0_3, %c0_4] : memref<1x256xf32, #tpu.memory_space<vmem>>, vector<1x256xf32>
    %4 = vector.broadcast %3 : vector<1x256xf32> to vector<8x256xf32>
    %5 = arith.addf %2, %4 : vector<8x256xf32>
    %c0_5 = arith.constant 0 : index
    %c0_6 = arith.constant 0 : index
    %6 = vector.load %arg5[%c0_5, %c0_6] : memref<8x256xf32, #tpu.memory_space<vmem>>, vector<8x256xf32>
    tpu.vector_store %arg5[%c0_5, %c0_6], %5 {strides = array<i32>} : memref<8x256xf32, #tpu.memory_space<vmem>>, vector<8x256xf32>,
    return
  }
  func.func @transform_0(%arg0: i32, %arg1: i32) -> (i32, i32) {
    %c0_i32 = arith.constant 0 : i32
    %c0_i32_0 = arith.constant 0 : i32
    return %arg0, %c0_i32 : i32, i32
  }
  func.func @transform_1(%arg0: i32, %arg1: i32) -> (i32, i32) {
    %c0_i32 = arith.constant 0 : i32
    %c0_i32_0 = arith.constant 0 : i32
    return %c0_i32, %arg1 : i32, i32
  }
  func.func @transform_2(%arg0: i32, %arg1: i32) -> (i32, i32) {
    %c0_i32 = arith.constant 0 : i32
    %c0_i32_0 = arith.constant 0 : i32
    return %c0_i32, %arg1 : i32, i32
  }
  func.func @transform_3(%arg0: i32, %arg1: i32) -> (i32, i32) {
    %c0_i32 = arith.constant 0 : i32
    return %arg0, %arg1 : i32, i32
  }
}

</mosaic_0001>

<llo_original>
// kernel: _init_step.5
$region0: #{_init_step.5}
  #allocation0 [shape = 'u32[]', space=smem, size = 0x4, offset = 0x4, fixed_abs, tag = 'smem constant byte address 0x4 - core index']
  #allocation1 [shape = 'u32[144,128]{1,0:T(1,128)}', space=vmem, size = 0x12000, scoped, tag = 'internal scratch']
  %s0 = inlined_call_operand.vmem [shape: bf16[128,128], index: 0, kind: input, shape index: {}]
  %s1 = inlined_call_operand.vmem [shape: bf16[128,256], index: 1, kind: input, shape index: {}]
  %s2 = inlined_call_operand.hbm [shape: f32[1,256], index: 2, kind: input, shape index: {}]
  %s3 = inlined_call_operand.vmem [shape: bf16[128,256], index: 3, kind: output, shape index: {}]
  %s4 = sld [smem:[#allocation0]]
  $region26: #{_init_step.5} parent=0
    _
  %s6 = ssub.s32 1, %s4
  %s7 = scalar_select 0, %s6, %s4
  $region1: #{_init_step.5} parent=0
    #allocation2 [shape = 'u8[1024]{0}', space=vmem, size = 0x400, scoped, tag = 'input window, operand 2, single buffered']
    #allocation3 [shape = 's32[1]{0}', space=sflag, size = 0x4, scoped, tag = 'scoped memory for _init_step.5']
    %8 = vsyncpa [#allocation3], 0
    // Predicated region
    $region2: #{_init_step.5} parent=1 // pred_check
      _
    $region3: #{_init_step.5} parent=1 // pred_check_branch
      %10 = sbr.rel (0) target = $region5
    $region4: #{_init_step.5} parent=1 // pred_region
      _
    $region5: #{_init_step.5} parent=1 // pred_fallthru
      _
    // Predicated region
    $region6: #{_init_step.5} parent=1 // pred_check
      _
    $region7: #{_init_step.5} parent=1 // pred_check_branch
      %12 = sbr.rel (0) target = $region9
    $region8: #{_init_step.5} parent=1 // pred_region
      _
    $region9: #{_init_step.5} parent=1 // pred_fallthru
      _
    // Predicated region
    $region10: #{_init_step.5} parent=1 // pred_check
      _
    $region11: #{_init_step.5} parent=1 // pred_check_branch
      %14 = sbr.rel (0) target = $region13
    $region12: #{_init_step.5} parent=1 // pred_region
      %s16 = ssub.s32 32, 32
      %17 = vsyncadd [#allocation3], %s16
      %s19 = sshll.u32 [#allocation2], 4
      %s20 = int_to_ptr.vmem [resolvable:$true] %s19
      %22 = dma.hbm_to_vmem [thread:$0]  %s2, 32, %s20, [#allocation3]
    $region13: #{_init_step.5} parent=1 // pred_fallthru
      _
    // Predicated region
    $region14: #{_init_step.5} parent=1 // pred_check
      _
    $region15: #{_init_step.5} parent=1 // pred_check_branch
      %24 = sbr.rel (0) target = $region17
    $region16: #{_init_step.5} parent=1 // pred_region
      %25 = dma.done [#allocation3], 32
    $region17: #{_init_step.5} parent=1 // pred_fallthru
      _
    %v27 = vld [vmem:[%s0] sm:$0xf]
    %v28 = vld [vmem:[%s0 + $0x4] sm:$0xf]
    %v29 = vld [vmem:[%s0 + $0x8] sm:$0xf]
    %v30 = vld [vmem:[%s0 + $0xc] sm:$0xf]
    %v31 = vld [vmem:[%s0 + $0x10] sm:$0xf]
    %v32 = vld [vmem:[%s0 + $0x14] sm:$0xf]
    %v33 = vld [vmem:[%s0 + $0x18] sm:$0xf]
    %v34 = vld [vmem:[%s0 + $0x1c] sm:$0xf]
    %v35 = vld [vmem:[%s0 + $0x20] sm:$0xf]
    %v36 = vld [vmem:[%s0 + $0x24] sm:$0xf]
    %v37 = vld [vmem:[%s0 + $0x28] sm:$0xf]
    %v38 = vld [vmem:[%s0 + $0x2c] sm:$0xf]
    %v39 = vld [vmem:[%s0 + $0x30] sm:$0xf]
    %v40 = vld [vmem:[%s0 + $0x34] sm:$0xf]
    %v41 = vld [vmem:[%s0 + $0x38] sm:$0xf]
    %v42 = vld [vmem:[%s0 + $0x3c] sm:$0xf]
    %v43 = vld [vmem:[%s1] sm:$0xff]
    %v44 = vld [vmem:[%s1 + $0x8] sm:$0xff]
    %v45 = vld [vmem:[%s1 + $0x10] sm:$0xff]
    %v46 = vld [vmem:[%s1 + $0x18] sm:$0xff]
    %v47 = vld [vmem:[%s1 + $0x20] sm:$0xff]
    %v48 = vld [vmem:[%s1 + $0x28] sm:$0xff]
    %v49 = vld [vmem:[%s1 + $0x30] sm:$0xff]
    %v50 = vld [vmem:[%s1 + $0x38] sm:$0xff]
    %v51 = vld [vmem:[%s1 + $0x40] sm:$0xff]
    %v52 = vld [vmem:[%s1 + $0x48] sm:$0xff]
    %v53 = vld [vmem:[%s1 + $0x50] sm:$0xff]
    %v54 = vld [vmem:[%s1 + $0x58] sm:$0xff]
    %v55 = vld [vmem:[%s1 + $0x60] sm:$0xff]
    %v56 = vld [vmem:[%s1 + $0x68] sm:$0xff]
    %v57 = vld [vmem:[%s1 + $0x70] sm:$0xff]
    %v58 = vld [vmem:[%s1 + $0x78] sm:$0xff]
    %v59 = vld [vmem:[#allocation2] sm:$0x3]
    %v61 = vlaneseq
    %v62 = vshrl.u32 %v61, 7
    %v63 = vsub.s32 0, %v62
    %v64 = vrot.slane %v59, %v63
    %v65 = vlaneseq
    %v66 = vshrl.u32 %v65, 7
    %v67 = vsub.s32 1, %v66
    %v68 = vrot.slane %v59, %v67
    %v87 = vunpack.c.l.b16 %v27
    %v88 = vunpack.c.l.b16 %v28
    %v89 = vunpack.c.l.b16 %v29
    %v90 = vunpack.c.l.b16 %v30
    %v91 = vunpack.c.l.b16 %v31
    %v92 = vunpack.c.l.b16 %v32
    %v93 = vunpack.c.l.b16 %v33
    %v94 = vunpack.c.l.b16 %v34
    %v95 = vunpack.c.l.b16 %v35
    %v96 = vunpack.c.l.b16 %v36
    %v97 = vunpack.c.l.b16 %v37
    %v98 = vunpack.c.l.b16 %v38
    %v99 = vunpack.c.l.b16 %v39
    %v100 = vunpack.c.l.b16 %v40
    %v101 = vunpack.c.l.b16 %v41
    %v102 = vunpack.c.l.b16 %v42
    %v103 = vpack.c.b16 %v88, %v87
    %v104 = vpack.c.b16 %v90, %v89
    %v105 = vpack.c.b16 %v92, %v91
    %v106 = vpack.c.b16 %v94, %v93
    %v107 = vpack.c.b16 %v96, %v95
    %v108 = vpack.c.b16 %v98, %v97
    %v109 = vpack.c.b16 %v100, %v99
    %v110 = vpack.c.b16 %v102, %v101
    %v135 = vunpack.c.l.b16 %v43
    %v136 = vunpack.c.h.b16 %v43
    %v137 = vunpack.c.l.b16 %v44
    %v138 = vunpack.c.h.b16 %v44
    %v139 = vunpack.c.l.b16 %v45
    %v140 = vunpack.c.h.b16 %v45
    %v141 = vunpack.c.l.b16 %v46
    %v142 = vunpack.c.h.b16 %v46
    %v143 = vunpack.c.l.b16 %v47
    %v144 = vunpack.c.h.b16 %v47
    %v145 = vunpack.c.l.b16 %v48
    %v146 = vunpack.c.h.b16 %v48
    %v147 = vunpack.c.l.b16 %v49
    %v148 = vunpack.c.h.b16 %v49
    %v149 = vunpack.c.l.b16 %v50
    %v150 = vunpack.c.h.b16 %v50
    %v151 = vunpack.c.l.b16 %v51
    %v152 = vunpack.c.h.b16 %v51
    %v153 = vunpack.c.l.b16 %v52
    %v154 = vunpack.c.h.b16 %v52
    %v155 = vunpack.c.l.b16 %v53
    %v156 = vunpack.c.h.b16 %v53
    %v157 = vunpack.c.l.b16 %v54
    %v158 = vunpack.c.h.b16 %v54
    %v159 = vunpack.c.l.b16 %v55
    %v160 = vunpack.c.h.b16 %v55
    %v161 = vunpack.c.l.b16 %v56
    %v162 = vunpack.c.h.b16 %v56
    %v163 = vunpack.c.l.b16 %v57
    %v164 = vunpack.c.h.b16 %v57
    %v165 = vunpack.c.l.b16 %v58
    %v166 = vunpack.c.h.b16 %v58
    %v167 = vpack.c.b16 %v137, %v135
    %v168 = vpack.c.b16 %v138, %v136
    %v169 = vpack.c.b16 %v141, %v139
    %v170 = vpack.c.b16 %v142, %v140
    %v171 = vpack.c.b16 %v145, %v143
    %v172 = vpack.c.b16 %v146, %v144
    %v173 = vpack.c.b16 %v149, %v147
    %v174 = vpack.c.b16 %v150, %v148
    %v175 = vpack.c.b16 %v153, %v151
    %v176 = vpack.c.b16 %v154, %v152
    %v177 = vpack.c.b16 %v157, %v155
    %v178 = vpack.c.b16 %v158, %v156
    %v179 = vpack.c.b16 %v161, %v159
    %v180 = vpack.c.b16 %v162, %v160
    %v181 = vpack.c.b16 %v165, %v163
    %v182 = vpack.c.b16 %v166, %v164
    %199 = vmatprep.subr.bf16.mxu0 %v168
    %200 = vmatpush1.bf16.msra.mxu0 %v167
    %201 = vmatprep.subr.bf16.mxu0 %v170
    %202 = vmatpush1.bf16.msra.mxu0 %v169
    %203 = vmatprep.subr.bf16.mxu0 %v172
    %204 = vmatpush1.bf16.msra.mxu0 %v171
    %205 = vmatprep.subr.bf16.mxu0 %v174
    %206 = vmatpush1.bf16.msra.mxu0 %v173
    %207 = vmatprep.subr.bf16.mxu0 %v176
    %208 = vmatpush1.bf16.msra.mxu0 %v175
    %209 = vmatprep.subr.bf16.mxu0 %v178
    %210 = vmatpush1.bf16.msra.mxu0 %v177
    %211 = vmatprep.subr.bf16.mxu0 %v180
    %212 = vmatpush1.bf16.msra.mxu0 %v179
    %213 = vmatprep.subr.bf16.mxu0 %v182
    %214 = vmatpush1.bf16.msra.mxu0 %v181
    %215 = vmatprep.subr.bf16.mxu0 0
    %216 = vmatpush1.bf16.msra.mxu0 0
    %217 = vmatprep.subr.bf16.mxu0 0
    %218 = vmatpush1.bf16.msra.mxu0 0
    %219 = vmatprep.subr.bf16.mxu0 0
    %220 = vmatpush1.bf16.msra.mxu0 0
    %221 = vmatprep.subr.bf16.mxu0 0
    %222 = vmatpush1.bf16.msra.mxu0 0
    %223 = vmatprep.subr.bf16.mxu0 0
    %224 = vmatpush1.bf16.msra.mxu0 0
    %225 = vmatprep.subr.bf16.mxu0 0
    %226 = vmatpush1.bf16.msra.mxu0 0
    %227 = vmatprep.subr.bf16.mxu0 0
    %228 = vmatpush1.bf16.msra.mxu0 0
    %229 = vmatprep.subr.bf16.mxu0 0
    %230 = vmatpush1.bf16.msra.mxu0 0
    %231 = vmatprep.mubr.bf16.mxu0 0
    %232 = vmatmul.mubr.bf16.gmra.mrb[0].mxu0 %v103
    %v233 = vpop.f32.mrb[0].mxu0
    %v234 = vadd.f32 %v64, %v233
    %v235 = vpop.f32.mrb[0].mxu0
    %v236 = vadd.f32 %v68, %v235
    %v237 = vpop.f32.mrb[0].mxu0
    %v238 = vadd.f32 %v64, %v237
    %v239 = vpop.f32.mrb[0].mxu0
    %v240 = vadd.f32 %v68, %v239
    %241 = vmatprep.mubr.bf16.mxu0 0
    %242 = vmatmul.mubr.bf16.gmra.mrb[0].mxu0 %v104
    %v243 = vpop.f32.mrb[0].mxu0
    %v244 = vadd.f32 %v64, %v243
    %v245 = vpop.f32.mrb[0].mxu0
    %v246 = vadd.f32 %v68, %v245
    %v247 = vpop.f32.mrb[0].mxu0
    %v248 = vadd.f32 %v64, %v247
    %v249 = vpop.f32.mrb[0].mxu0
    %v250 = vadd.f32 %v68, %v249
    %251 = vmatprep.mubr.bf16.mxu0 0
    %252 = vmatmul.mubr.bf16.gmra.mrb[0].mxu0 %v105
    %v253 = vpop.f32.mrb[0].mxu0
    %v254 = vadd.f32 %v64, %v253
    %v255 = vpop.f32.mrb[0].mxu0
    %v256 = vadd.f32 %v68, %v255
    %v257 = vpop.f32.mrb[0].mxu0
    %v258 = vadd.f32 %v64, %v257
    %v259 = vpop.f32.mrb[0].mxu0
    %v260 = vadd.f32 %v68, %v259
    %261 = vmatprep.mubr.bf16.mxu0 0
    %262 = vmatmul.mubr.bf16.gmra.mrb[0].mxu0 %v106
    %v263 = vpop.f32.mrb[0].mxu0
    %v264 = vadd.f32 %v64, %v263
    %v265 = vpop.f32.mrb[0].mxu0
    %v266 = vadd.f32 %v68, %v265
    %v267 = vpop.f32.mrb[0].mxu0
    %v268 = vadd.f32 %v64, %v267
    %v269 = vpop.f32.mrb[0].mxu0
    %v270 = vadd.f32 %v68, %v269
    %271 = vmatprep.mubr.bf16.mxu0 0
    %272 = vmatmul.mubr.bf16.gmra.mrb[0].mxu0 %v107
    %v273 = vpop.f32.mrb[0].mxu0
    %v274 = vadd.f32 %v64, %v273
    %v275 = vpop.f32.mrb[0].mxu0
    %v276 = vadd.f32 %v68, %v275
    %v277 = vpop.f32.mrb[0].mxu0
    %v278 = vadd.f32 %v64, %v277
    %v279 = vpop.f32.mrb[0].mxu0
    %v280 = vadd.f32 %v68, %v279
    %281 = vmatprep.mubr.bf16.mxu0 0
    %282 = vmatmul.mubr.bf16.gmra.mrb[0].mxu0 %v108
    %v283 = vpop.f32.mrb[0].mxu0
    %v284 = vadd.f32 %v64, %v283
    %v285 = vpop.f32.mrb[0].mxu0
    %v286 = vadd.f32 %v68, %v285
    %v287 = vpop.f32.mrb[0].mxu0
    %v288 = vadd.f32 %v64, %v287
    %v289 = vpop.f32.mrb[0].mxu0
    %v290 = vadd.f32 %v68, %v289
    %291 = vmatprep.mubr.bf16.mxu0 0
    %292 = vmatmul.mubr.bf16.gmra.mrb[0].mxu0 %v109
    %v293 = vpop.f32.mrb[0].mxu0
    %v294 = vadd.f32 %v64, %v293
    %v295 = vpop.f32.mrb[0].mxu0
    %v296 = vadd.f32 %v68, %v295
    %v297 = vpop.f32.mrb[0].mxu0
    %v298 = vadd.f32 %v64, %v297
    %v299 = vpop.f32.mrb[0].mxu0
    %v300 = vadd.f32 %v68, %v299
    %301 = vmatprep.mubr.bf16.mxu0 0
    %302 = vmatmul.mubr.bf16.gmra.mrb[0].mxu0 %v110
    %v303 = vpop.f32.mrb[0].mxu0
    %v304 = vadd.f32 %v64, %v303
    %v305 = vpop.f32.mrb[0].mxu0
    %v306 = vadd.f32 %v68, %v305
    %v307 = vpop.f32.mrb[0].mxu0
    %v308 = vadd.f32 %v64, %v307
    %v309 = vpop.f32.mrb[0].mxu0
    %v310 = vadd.f32 %v68, %v309
    %311 = vdwg.mxu0
    %v312 = vmax.f32 %v234, 0.0
    %v313 = vmax.f32 %v236, 0.0
    %v314 = vmax.f32 %v238, 0.0
    %v315 = vmax.f32 %v240, 0.0
    %v316 = vmax.f32 %v244, 0.0
    %v317 = vmax.f32 %v246, 0.0
    %v318 = vmax.f32 %v248, 0.0
    %v319 = vmax.f32 %v250, 0.0
    %v320 = vmax.f32 %v254, 0.0
    %v321 = vmax.f32 %v256, 0.0
    %v322 = vmax.f32 %v258, 0.0
    %v323 = vmax.f32 %v260, 0.0
    %v324 = vmax.f32 %v264, 0.0
    %v325 = vmax.f32 %v266, 0.0
    %v326 = vmax.f32 %v268, 0.0
    %v327 = vmax.f32 %v270, 0.0
    %v328 = vmax.f32 %v274, 0.0
    %v329 = vmax.f32 %v276, 0.0
    %v330 = vmax.f32 %v278, 0.0
    %v331 = vmax.f32 %v280, 0.0
    %v332 = vmax.f32 %v284, 0.0
    %v333 = vmax.f32 %v286, 0.0
    %v334 = vmax.f32 %v288, 0.0
    %v335 = vmax.f32 %v290, 0.0
    %v336 = vmax.f32 %v294, 0.0
    %v337 = vmax.f32 %v296, 0.0
    %v338 = vmax.f32 %v298, 0.0
    %v339 = vmax.f32 %v300, 0.0
    %v340 = vmax.f32 %v304, 0.0
    %v341 = vmax.f32 %v306, 0.0
    %v342 = vmax.f32 %v308, 0.0
    %v343 = vmax.f32 %v310, 0.0
    %v344 = vpack.c.bf16 %v314, %v312
    %v345 = vpack.c.bf16 %v315, %v313
    %v346 = vpack.c.bf16 %v318, %v316
    %v347 = vpack.c.bf16 %v319, %v317
    %v348 = vpack.c.bf16 %v322, %v320
    %v349 = vpack.c.bf16 %v323, %v321
    %v350 = vpack.c.bf16 %v326, %v324
    %v351 = vpack.c.bf16 %v327, %v325
    %v352 = vpack.c.bf16 %v330, %v328
    %v353 = vpack.c.bf16 %v331, %v329
    %v354 = vpack.c.bf16 %v334, %v332
    %v355 = vpack.c.bf16 %v335, %v333
    %v356 = vpack.c.bf16 %v338, %v336
    %v357 = vpack.c.bf16 %v339, %v337
    %v358 = vpack.c.bf16 %v342, %v340
    %v359 = vpack.c.bf16 %v343, %v341
    %v376 = vunpack.c.l.b16 %v344
    %v377 = vunpack.c.l.b16 %v345
    %v378 = vunpack.c.h.b16 %v344
    %v379 = vunpack.c.h.b16 %v345
    %v380 = vunpack.c.l.b16 %v346
    %v381 = vunpack.c.l.b16 %v347
    %v382 = vunpack.c.h.b16 %v346
    %v383 = vunpack.c.h.b16 %v347
    %v384 = vunpack.c.l.b16 %v348
    %v385 = vunpack.c.l.b16 %v349
    %v386 = vunpack.c.h.b16 %v348
    %v387 = vunpack.c.h.b16 %v349
    %v388 = vunpack.c.l.b16 %v350
    %v389 = vunpack.c.l.b16 %v351
    %v390 = vunpack.c.h.b16 %v350
    %v391 = vunpack.c.h.b16 %v351
    %v392 = vunpack.c.l.b16 %v352
    %v393 = vunpack.c.l.b16 %v353
    %v394 = vunpack.c.h.b16 %v352
    %v395 = vunpack.c.h.b16 %v353
    %v396 = vunpack.c.l.b16 %v354
    %v397 = vunpack.c.l.b16 %v355
    %v398 = vunpack.c.h.b16 %v354
    %v399 = vunpack.c.h.b16 %v355
    %v400 = vunpack.c.l.b16 %v356
    %v401 = vunpack.c.l.b16 %v357
    %v402 = vunpack.c.h.b16 %v356
    %v403 = vunpack.c.h.b16 %v357
    %v404 = vunpack.c.l.b16 %v358
    %v405 = vunpack.c.l.b16 %v359
    %v406 = vunpack.c.h.b16 %v358
    %v407 = vunpack.c.h.b16 %v359
    %v408 = vpack.c.b16 %v377, %v376
    %v409 = vpack.c.b16 %v379, %v378
    %v410 = vpack.c.b16 %v381, %v380
    %v411 = vpack.c.b16 %v383, %v382
    %v412 = vpack.c.b16 %v385, %v384
    %v413 = vpack.c.b16 %v387, %v386
    %v414 = vpack.c.b16 %v389, %v388
    %v415 = vpack.c.b16 %v391, %v390
    %v416 = vpack.c.b16 %v393, %v392
    %v417 = vpack.c.b16 %v395, %v394
    %v418 = vpack.c.b16 %v397, %v396
    %v419 = vpack.c.b16 %v399, %v398
    %v420 = vpack.c.b16 %v401, %v400
    %v421 = vpack.c.b16 %v403, %v402
    %v422 = vpack.c.b16 %v405, %v404
    %v423 = vpack.c.b16 %v407, %v406
    %440 = vst [vmem:[%s3] sm:$0xff] %v408
    %441 = vst [vmem:[%s3 + $0x8] sm:$0xff] %v409
    %442 = vst [vmem:[%s3 + $0x10] sm:$0xff] %v410
    %443 = vst [vmem:[%s3 + $0x18] sm:$0xff] %v411
    %444 = vst [vmem:[%s3 + $0x20] sm:$0xff] %v412
    %445 = vst [vmem:[%s3 + $0x28] sm:$0xff] %v413
    %446 = vst [vmem:[%s3 + $0x30] sm:$0xff] %v414
    %447 = vst [vmem:[%s3 + $0x38] sm:$0xff] %v415
    %448 = vst [vmem:[%s3 + $0x40] sm:$0xff] %v416
    %449 = vst [vmem:[%s3 + $0x48] sm:$0xff] %v417
    %450 = vst [vmem:[%s3 + $0x50] sm:$0xff] %v418
    %451 = vst [vmem:[%s3 + $0x58] sm:$0xff] %v419
    %452 = vst [vmem:[%s3 + $0x60] sm:$0xff] %v420
    %453 = vst [vmem:[%s3 + $0x68] sm:$0xff] %v421
    %454 = vst [vmem:[%s3 + $0x70] sm:$0xff] %v422
    %455 = vst [vmem:[%s3 + $0x78] sm:$0xff] %v423
    // Predicated region
    $region18: #{_init_step.5} parent=1 // pred_check
      _
    $region19: #{_init_step.5} parent=1 // pred_check_branch
      %457 = sbr.rel (0) target = $region21
    $region20: #{_init_step.5} parent=1 // pred_region
      _
    $region21: #{_init_step.5} parent=1 // pred_fallthru
      _
    // Predicated region
    $region22: #{_init_step.5} parent=1 // pred_check
      _
    $region23: #{_init_step.5} parent=1 // pred_check_branch
      %459 = sbr.rel (0) target = $region25
    $region24: #{_init_step.5} parent=1 // pred_region
      _
    $region25: #{_init_step.5} parent=1 // pred_fallthru
      _
    %460 = vsyncpa [#allocation3], 1

// kernel: _init_step.6
$region0: #{_init_step.6}
  #allocation0 [shape = 'u32[]', space=smem, size = 0x4, offset = 0x4, fixed_abs, tag = 'smem constant byte address 0x4 - core index']
  #allocation1 [shape = 'u32[144,128]{1,0:T(1,128)}', space=vmem, size = 0x12000, scoped, tag = 'internal scratch']
  %s0 = inlined_call_operand.vmem [shape: bf16[32,1024], index: 0, kind: input, shape index: {}]
  %s1 = inlined_call_operand.vmem [shape: bf16[1024,512], index: 1, kind: input, shape index: {}]
  %s2 = inlined_call_operand.vmem [shape: f32[1,512], index: 2, kind: input, shape index: {}]
  %s3 = inlined_call_operand.vmem [shape: bf16[32,512], index: 3, kind: output, shape index: {}]
  %s4 = sld [smem:[#allocation0]]
  $region117: #{_init_step.6} parent=0
    _
  %s6 = ssub.s32 1, %s4
  %s7 = scalar_select 0, %s6, %s4
  $region1: #{_init_step.6} parent=0
    #allocation2 [shape = 'u8[1048576]{0}', space=vmem, size = 0x100000, scoped, tag = 'input window, operand 1']
    #allocation3 [shape = 'u8[32768]{0}', space=vmem, size = 0x8000, scoped, tag = 'output window, operand 0']
    loop: start=0, step=1, limit=4
    $region2: #{_init_step.6} parent=1 // loop_pre_header
      _
    $region3: #{_init_step.6} parent=1 // loop_header
      %s9 = sphi 0, %s13
      %p10 = scmp.ge.s32.totalorder %s9, 4
      %s16 = sphi 0, %s28
      %s17 = sphi 0, %s24
      %s18 = sphi 0, %s16
      %s19 = sphi 0, %s17
      %s20 = sphi 0, %s18
      %s21 = sphi 0, %s19
      %s31 = sphi 0, %s33
      %s34 = sphi 0, %s31
      %s35 = sphi 0, %s34
      %s51 = sphi 0, %s35
      %s57 = sphi 0, %s59
      %s60 = sphi 0, %s57
      %s61 = sphi 0, %s60
      %s77 = sphi 0, %s61
      %s83 = sphi 0, %s85
      %s86 = sphi 0, %s83
      %s87 = sphi 0, %s86
      %s103 = sphi 0, %s87
      %s111 = sphi 0, %s113
      %s114 = sphi 0, %s111
      %s115 = sphi 0, %s114
      %s131 = sphi 0, %s115
    $region4: #{_init_step.6} parent=1 // loop_header_branch
      %12 = sbr.rel (%p10) target = $region8
    $region5: #{_init_step.6} parent=1 // loop_body
      %s14 = ssub.s32 %s9, 1
      %s15 = ssub.s32 %s9, 2
      %s22 = sadd.s32 1, %s17
      %p23 = scmp.ge.s32.totalorder %s22, 2
      %s24 = scalar_select %p23, 0, %s22
      %s25 = sadd.s32 1, %s16
      %s26 = scalar_select %p23, %s25, %s16
      %p27 = scmp.ge.s32.totalorder %s26, 1
      %s28 = scalar_select %p27, 0, %s26
      %s29 = ssub.s32 %s16, %s28
      %p30 = scmp.eq.s32.totalorder %s29, 0
      %s32 = sadd.s32 %s31, 1
      %s33 = scalar_select %p30, %s31, %s32
      %p36 = pneg %p30
      %p37 = scmp.eq.s32.totalorder %s9, 1
      %p38 = por %p36, %p37
      %p39 = scmp.ne.s32.totalorder %s31, %s34
      %p40 = scmp.eq.s32.totalorder %s9, 0
      %p41 = por %p39, %p40
      %p42 = scmp.ne.s32.totalorder %s31, %s34
      %p43 = scmp.eq.s32.totalorder %s14, 1
      %p44 = por %p42, %p43
      %p45 = scmp.ne.s32.totalorder %s34, %s35
      %p46 = scmp.eq.s32.totalorder %s14, 0
      %p47 = por %p45, %p46
      %p48 = scmp.ne.s32.totalorder %s34, %s35
      %p49 = scmp.eq.s32.totalorder %s15, 1
      %p50 = por %p48, %p49
      %p52 = scmp.ne.s32.totalorder %s35, %s51
      %p53 = scmp.eq.s32.totalorder %s15, 0
      %p54 = por %p52, %p53
      %s55 = ssub.s32 %s17, %s24
      %p56 = scmp.eq.s32.totalorder %s55, 0
      %s58 = sadd.s32 %s57, 1
      %s59 = scalar_select %p56, %s57, %s58
      %p62 = pneg %p56
      %p63 = scmp.eq.s32.totalorder %s9, 1
      %p64 = por %p62, %p63
      %p65 = scmp.ne.s32.totalorder %s57, %s60
      %p66 = scmp.eq.s32.totalorder %s9, 0
      %p67 = por %p65, %p66
      %p68 = scmp.ne.s32.totalorder %s57, %s60
      %p69 = scmp.eq.s32.totalorder %s14, 1
      %p70 = por %p68, %p69
      %p71 = scmp.ne.s32.totalorder %s60, %s61
      %p72 = scmp.eq.s32.totalorder %s14, 0
      %p73 = por %p71, %p72
      %p74 = scmp.ne.s32.totalorder %s60, %s61
      %p75 = scmp.eq.s32.totalorder %s15, 1
      %p76 = por %p74, %p75
      %p78 = scmp.ne.s32.totalorder %s61, %s77
      %p79 = scmp.eq.s32.totalorder %s15, 0
      %p80 = por %p78, %p79
      %s81 = ssub.s32 %s17, %s24
      %p82 = scmp.eq.s32.totalorder %s81, 0
      %s84 = sadd.s32 %s83, 1
      %s85 = scalar_select %p82, %s83, %s84
      %p88 = pneg %p82
      %p89 = scmp.eq.s32.totalorder %s9, 1
      %p90 = por %p88, %p89
      %p91 = scmp.ne.s32.totalorder %s83, %s86
      %p92 = scmp.eq.s32.totalorder %s9, 0
      %p93 = por %p91, %p92
      %p94 = scmp.ne.s32.totalorder %s83, %s86
      %p95 = scmp.eq.s32.totalorder %s14, 1
      %p96 = por %p94, %p95
      %p97 = scmp.ne.s32.totalorder %s86, %s87
      %p98 = scmp.eq.s32.totalorder %s14, 0
      %p99 = por %p97, %p98
      %p100 = scmp.ne.s32.totalorder %s86, %s87
      %p101 = scmp.eq.s32.totalorder %s15, 1
      %p102 = por %p100, %p101
      %p104 = scmp.ne.s32.totalorder %s87, %s103
      %p105 = scmp.eq.s32.totalorder %s15, 0
      %p106 = por %p104, %p105
      %s107 = ssub.s32 %s16, %s28
      %s108 = ssub.s32 %s17, %s24
      %s109 = sor.u32 %s107, %s108
      %p110 = scmp.eq.s32.totalorder %s109, 0
      %s112 = sadd.s32 %s111, 1
      %s113 = scalar_select %p110, %s111, %s112
      %p116 = pneg %p110
      %p117 = scmp.eq.s32.totalorder %s9, 1
      %p118 = por %p116, %p117
      %p119 = scmp.ne.s32.totalorder %s111, %s114
      %p120 = scmp.eq.s32.totalorder %s9, 0
      %p121 = por %p119, %p120
      %p122 = scmp.ne.s32.totalorder %s111, %s114
      %p123 = scmp.eq.s32.totalorder %s14, 1
      %p124 = por %p122, %p123
      %p125 = scmp.ne.s32.totalorder %s114, %s115
      %p126 = scmp.eq.s32.totalorder %s14, 0
      %p127 = por %p125, %p126
      %p128 = scmp.ne.s32.totalorder %s114, %s115
      %p129 = scmp.eq.s32.totalorder %s15, 1
      %p130 = por %p128, %p129
      %p132 = scmp.ne.s32.totalorder %s115, %s131
      %p133 = scmp.eq.s32.totalorder %s15, 0
      %p134 = por %p132, %p133
      %p135 = scmp.le.s32.totalorder 1, %s9
      %p136 = scmp.lt.s32.totalorder %s9, 3
      %p137 = pnand %p135, %p136
      %p138 = pneg %p137
      // Predicated region
      $region9: #{_init_step.6} parent=5 // pred_check
        _
      $region10: #{_init_step.6} parent=5 // pred_check_branch
        %140 = sbr.rel (%p137) target = $region12
      $region11: #{_init_step.6} parent=5 // pred_region
        %s141 = ssub.s32 %s9, 1
        // Predicated region
        $region13: #{_init_step.6} parent=11 // pred_check
          %p142 = pneg %p47
        $region14: #{_init_step.6} parent=11 // pred_check_branch
          %144 = sbr.rel (%p142) target = $region16
        $region15: #{_init_step.6} parent=11 // pred_region
          %s145 = smul.u32 4, %s18
          %p146 = scmp.lt.s32.totalorder %s145, 3
          %s147 = scalar_select %p146, %s145, 3
          %s148 = smul.addr %s147, 8
          %s149 = smul.addr %s148, 4
          %s150 = scalar_lea.vmem %s0, %s149
          %s151 = smul.u32 4, %s18
        $region16: #{_init_step.6} parent=11 // pred_fallthru
          _
      $region12: #{_init_step.6} parent=5 // pred_fallthru
        _
      %p152 = scmp.lt.s32.totalorder %s9, 2
      // Predicated region
      $region17: #{_init_step.6} parent=5 // pred_check
        %p153 = pneg %p152
      $region18: #{_init_step.6} parent=5 // pred_check_branch
        %155 = sbr.rel (%p153) target = $region20
      $region19: #{_init_step.6} parent=5 // pred_region
        // Predicated region
        $region21: #{_init_step.6} parent=19 // pred_check
          %p156 = pneg %p67
        $region22: #{_init_step.6} parent=19 // pred_check_branch
          %158 = sbr.rel (%p156) target = $region24
        $region23: #{_init_step.6} parent=19 // pred_region
          %s159 = sand.u32 %s57, 1
          %s160 = sand.u32 %s57, 1
          %s161 = smul.addr %s160, 1024
          %s162 = scalar_lea.vmem [#allocation2], %s161
          %s163 = smul.u32 2, %s17
          %s164 = smul.addr %s163, 4
          %s165 = scalar_lea.vmem %s1, %s164
          // Predicated region
          $region25: #{_init_step.6} parent=23 // pred_check
            _
          $region26: #{_init_step.6} parent=23 // pred_check_branch
            %167 = sbr.rel (0) target = $region28
          $region27: #{_init_step.6} parent=23 // pred_region
            // Predicated region
            $region29: #{_init_step.6} parent=27 // pred_check
              _
            $region30: #{_init_step.6} parent=27 // pred_check_branch
              %169 = sbr.rel (0) target = $region32
            $region31: #{_init_step.6} parent=27 // pred_region
              // Predicated region
              $region44: #{_init_step.6} parent=31 // pred_check
                _
              $region45: #{_init_step.6} parent=31 // pred_check_branch
                %438 = sbr.rel (0) target = $region47
              $region46: #{_init_step.6} parent=31 // pred_region
                loop: start=0, step=1, limit=1
                $region48: #{_init_step.6} parent=46 // loop_pre_header
                  _
                $region49: #{_init_step.6} parent=46 // loop_header
                  %s440 = sphi 0, %s444
                  %p441 = scmp.ge.s32.totalorder %s440, 1
                  %s445 = sphi %s165, %s165
                  %s446 = sphi %s162, %s162
                $region50: #{_init_step.6} parent=46 // loop_header_branch
                  %443 = sbr.rel (%p441) target = $region54
                $region51: #{_init_step.6} parent=46 // loop_body
                  %v447 = vld [vmem:[%s445] sm:$0xff]
                  %448 = vst [vmem:[%s446] sm:$0xff] %v447
                  %v449 = vld [vmem:[%s445 + $0x10] sm:$0xff]
                  %450 = vst [vmem:[%s446 + $0x8] sm:$0xff] %v449
                  %v451 = vld [vmem:[%s445 + $0x20] sm:$0xff]
                  %452 = vst [vmem:[%s446 + $0x10] sm:$0xff] %v451
                  %v453 = vld [vmem:[%s445 + $0x30] sm:$0xff]
                  %454 = vst [vmem:[%s446 + $0x18] sm:$0xff] %v453
                  %v455 = vld [vmem:[%s445 + $0x40] sm:$0xff]
                  %456 = vst [vmem:[%s446 + $0x20] sm:$0xff] %v455
                  %v457 = vld [vmem:[%s445 + $0x50] sm:$0xff]
                  %458 = vst [vmem:[%s446 + $0x28] sm:$0xff] %v457
                  %v459 = vld [vmem:[%s445 + $0x60] sm:$0xff]
                  %460 = vst [vmem:[%s446 + $0x30] sm:$0xff] %v459
                  %v461 = vld [vmem:[%s445 + $0x70] sm:$0xff]
                  %462 = vst [vmem:[%s446 + $0x38] sm:$0xff] %v461
                  %v463 = vld [vmem:[%s445 + $0x80] sm:$0xff]
                  %464 = vst [vmem:[%s446 + $0x40] sm:$0xff] %v463
                  %v465 = vld [vmem:[%s445 + $0x90] sm:$0xff]
                  %466 = vst [vmem:[%s446 + $0x48] sm:$0xff] %v465
                  %v467 = vld [vmem:[%s445 + $0xa0] sm:$0xff]
                  %468 = vst [vmem:[%s446 + $0x50] sm:$0xff] %v467
                  %v469 = vld [vmem:[%s445 + $0xb0] sm:$0xff]
                  %470 = vst [vmem:[%s446 + $0x58] sm:$0xff] %v469
                  %v471 = vld [vmem:[%s445 + $0xc0] sm:$0xff]
                  %472 = vst [vmem:[%s446 + $0x60] sm:$0xff] %v471
                  %v473 = vld [vmem:[%s445 + $0xd0] sm:$0xff]
                  %474 = vst [vmem:[%s446 + $0x68] sm:$0xff] %v473
                  %v475 = vld [vmem:[%s445 + $0xe0] sm:$0xff]
                  %476 = vst [vmem:[%s446 + $0x70] sm:$0xff] %v475
                  %v477 = vld [vmem:[%s445 + $0xf0] sm:$0xff]
                  %478 = vst [vmem:[%s446 + $0x78] sm:$0xff] %v477
                  %v479 = vld [vmem:[%s445 + $0x100] sm:$0xff]
                  %480 = vst [vmem:[%s446 + $0x80] sm:$0xff] %v479
                  %v481 = vld [vmem:[%s445 + $0x110] sm:$0xff]
                  %482 = vst [vmem:[%s446 + $0x88] sm:$0xff] %v481
                  %v483 = vld [vmem:[%s445 + $0x120] sm:$0xff]
                  %484 = vst [vmem:[%s446 + $0x90] sm:$0xff] %v483
                  %v485 = vld [vmem:[%s445 + $0x130] sm:$0xff]
                  %486 = vst [vmem:[%s446 + $0x98] sm:$0xff] %v485
                  %v487 = vld [vmem:[%s445 + $0x140] sm:$0xff]
                  %488 = vst [vmem:[%s446 + $0xa0] sm:$0xff] %v487
                  %v489 = vld [vmem:[%s445 + $0x150] sm:$0xff]
                  %490 = vst [vmem:[%s446 + $0xa8] sm:$0xff] %v489
                  %v491 = vld [vmem:[%s445 + $0x160] sm:$0xff]
                  %492 = vst [vmem:[%s446 + $0xb0] sm:$0xff] %v491
                  %v493 = vld [vmem:[%s445 + $0x170] sm:$0xff]
                  %494 = vst [vmem:[%s446 + $0xb8] sm:$0xff] %v493
                  %v495 = vld [vmem:[%s445 + $0x180] sm:$0xff]
                  %496 = vst [vmem:[%s446 + $0xc0] sm:$0xff] %v495
                  %v497 = vld [vmem:[%s445 + $0x190] sm:$0xff]
                  %498 = vst [vmem:[%s446 + $0xc8] sm:$0xff] %v497
                  %v499 = vld [vmem:[%s445 + $0x1a0] sm:$0xff]
                  %500 = vst [vmem:[%s446 + $0xd0] sm:$0xff] %v499
                  %v501 = vld [vmem:[%s445 + $0x1b0] sm:$0xff]
                  %502 = vst [vmem:[%s446 + $0xd8] sm:$0xff] %v501
                  %v503 = vld [vmem:[%s445 + $0x1c0] sm:$0xff]
                  %504 = vst [vmem:[%s446 + $0xe0] sm:$0xff] %v503
                  %v505 = vld [vmem:[%s445 + $0x1d0] sm:$0xff]
                  %506 = vst [vmem:[%s446 + $0xe8] sm:$0xff] %v505
                  %v507 = vld [vmem:[%s445 + $0x1e0] sm:$0xff]
                  %508 = vst [vmem:[%s446 + $0xf0] sm:$0xff] %v507
                  %v509 = vld [vmem:[%s445 + $0x1f0] sm:$0xff]
                  %510 = vst [vmem:[%s446 + $0xf8] sm:$0xff] %v509
                  %v511 = vld [vmem:[%s445 + $0x200] sm:$0xff]
                  %512 = vst [vmem:[%s446 + $0x100] sm:$0xff] %v511
                  %v513 = vld [vmem:[%s445 + $0x210] sm:$0xff]
                  %514 = vst [vmem:[%s446 + $0x108] sm:$0xff] %v513
                  %v515 = vld [vmem:[%s445 + $0x220] sm:$0xff]
                  %516 = vst [vmem:[%s446 + $0x110] sm:$0xff] %v515
                  %v517 = vld [vmem:[%s445 + $0x230] sm:$0xff]
                  %518 = vst [vmem:[%s446 + $0x118] sm:$0xff] %v517
                  %v519 = vld [vmem:[%s445 + $0x240] sm:$0xff]
                  %520 = vst [vmem:[%s446 + $0x120] sm:$0xff] %v519
                  %v521 = vld [vmem:[%s445 + $0x250] sm:$0xff]
                  %522 = vst [vmem:[%s446 + $0x128] sm:$0xff] %v521
                  %v523 = vld [vmem:[%s445 + $0x260] sm:$0xff]
                  %524 = vst [vmem:[%s446 + $0x130] sm:$0xff] %v523
                  %v525 = vld [vmem:[%s445 + $0x270] sm:$0xff]
                  %526 = vst [vmem:[%s446 + $0x138] sm:$0xff] %v525
                  %v527 = vld [vmem:[%s445 + $0x280] sm:$0xff]
                  %528 = vst [vmem:[%s446 + $0x140] sm:$0xff] %v527
                  %v529 = vld [vmem:[%s445 + $0x290] sm:$0xff]
                  %530 = vst [vmem:[%s446 + $0x148] sm:$0xff] %v529
                  %v531 = vld [vmem:[%s445 + $0x2a0] sm:$0xff]
                  %532 = vst [vmem:[%s446 + $0x150] sm:$0xff] %v531
                  %v533 = vld [vmem:[%s445 + $0x2b0] sm:$0xff]
                  %534 = vst [vmem:[%s446 + $0x158] sm:$0xff] %v533
                  %v535 = vld [vmem:[%s445 + $0x2c0] sm:$0xff]
                  %536 = vst [vmem:[%s446 + $0x160] sm:$0xff] %v535
                  %v537 = vld [vmem:[%s445 + $0x2d0] sm:$0xff]
                  %538 = vst [vmem:[%s446 + $0x168] sm:$0xff] %v537
                  %v539 = vld [vmem:[%s445 + $0x2e0] sm:$0xff]
                  %540 = vst [vmem:[%s446 + $0x170] sm:$0xff] %v539
                  %v541 = vld [vmem:[%s445 + $0x2f0] sm:$0xff]
                  %542 = vst [vmem:[%s446 + $0x178] sm:$0xff] %v541
                  %v543 = vld [vmem:[%s445 + $0x300] sm:$0xff]
                  %544 = vst [vmem:[%s446 + $0x180] sm:$0xff] %v543
                  %v545 = vld [vmem:[%s445 + $0x310] sm:$0xff]
                  %546 = vst [vmem:[%s446 + $0x188] sm:$0xff] %v545
                  %v547 = vld [vmem:[%s445 + $0x320] sm:$0xff]
                  %548 = vst [vmem:[%s446 + $0x190] sm:$0xff] %v547
                  %v549 = vld [vmem:[%s445 + $0x330] sm:$0xff]
                  %550 = vst [vmem:[%s446 + $0x198] sm:$0xff] %v549
                  %v551 = vld [vmem:[%s445 + $0x340] sm:$0xff]
                  %552 = vst [vmem:[%s446 + $0x1a0] sm:$0xff] %v551
                  %v553 = vld [vmem:[%s445 + $0x350] sm:$0xff]
                  %554 = vst [vmem:[%s446 + $0x1a8] sm:$0xff] %v553
                  %v555 = vld [vmem:[%s445 + $0x360] sm:$0xff]
                  %556 = vst [vmem:[%s446 + $0x1b0] sm:$0xff] %v555
                  %v557 = vld [vmem:[%s445 + $0x370] sm:$0xff]
                  %558 = vst [vmem:[%s446 + $0x1b8] sm:$0xff] %v557
                  %v559 = vld [vmem:[%s445 + $0x380] sm:$0xff]
                  %560 = vst [vmem:[%s446 + $0x1c0] sm:$0xff] %v559
                  %v561 = vld [vmem:[%s445 + $0x390] sm:$0xff]
                  %562 = vst [vmem:[%s446 + $0x1c8] sm:$0xff] %v561
                  %v563 = vld [vmem:[%s445 + $0x3a0] sm:$0xff]
                  %564 = vst [vmem:[%s446 + $0x1d0] sm:$0xff] %v563
                  %v565 = vld [vmem:[%s445 + $0x3b0] sm:$0xff]
                  %566 = vst [vmem:[%s446 + $0x1d8] sm:$0xff] %v565
                  %v567 = vld [vmem:[%s445 + $0x3c0] sm:$0xff]
                  %568 = vst [vmem:[%s446 + $0x1e0] sm:$0xff] %v567
                  %v569 = vld [vmem:[%s445 + $0x3d0] sm:$0xff]
                  %570 = vst [vmem:[%s446 + $0x1e8] sm:$0xff] %v569
                  %v571 = vld [vmem:[%s445 + $0x3e0] sm:$0xff]
                  %572 = vst [vmem:[%s446 + $0x1f0] sm:$0xff] %v571
                  %v573 = vld [vmem:[%s445 + $0x3f0] sm:$0xff]
                  %574 = vst [vmem:[%s446 + $0x1f8] sm:$0xff] %v573
                  %v575 = vld [vmem:[%s445 + $0x400] sm:$0xff]
                  %576 = vst [vmem:[%s446 + $0x200] sm:$0xff] %v575
                  %v577 = vld [vmem:[%s445 + $0x410] sm:$0xff]
                  %578 = vst [vmem:[%s446 + $0x208] sm:$0xff] %v577
                  %v579 = vld [vmem:[%s445 + $0x420] sm:$0xff]
                  %580 = vst [vmem:[%s446 + $0x210] sm:$0xff] %v579
                  %v581 = vld [vmem:[%s445 + $0x430] sm:$0xff]
                  %582 = vst [vmem:[%s446 + $0x218] sm:$0xff] %v581
                  %v583 = vld [vmem:[%s445 + $0x440] sm:$0xff]
                  %584 = vst [vmem:[%s446 + $0x220] sm:$0xff] %v583
                  %v585 = vld [vmem:[%s445 + $0x450] sm:$0xff]
                  %586 = vst [vmem:[%s446 + $0x228] sm:$0xff] %v585
                  %v587 = vld [vmem:[%s445 + $0x460] sm:$0xff]
                  %588 = vst [vmem:[%s446 + $0x230] sm:$0xff] %v587
                  %v589 = vld [vmem:[%s445 + $0x470] sm:$0xff]
                  %590 = vst [vmem:[%s446 + $0x238] sm:$0xff] %v589
                  %v591 = vld [vmem:[%s445 + $0x480] sm:$0xff]
                  %592 = vst [vmem:[%s446 + $0x240] sm:$0xff] %v591
                  %v593 = vld [vmem:[%s445 + $0x490] sm:$0xff]
                  %594 = vst [vmem:[%s446 + $0x248] sm:$0xff] %v593
                  %v595 = vld [vmem:[%s445 + $0x4a0] sm:$0xff]
                  %596 = vst [vmem:[%s446 + $0x250] sm:$0xff] %v595
                  %v597 = vld [vmem:[%s445 + $0x4b0] sm:$0xff]
                  %598 = vst [vmem:[%s446 + $0x258] sm:$0xff] %v597
                  %v599 = vld [vmem:[%s445 + $0x4c0] sm:$0xff]
                  %600 = vst [vmem:[%s446 + $0x260] sm:$0xff] %v599
                  %v601 = vld [vmem:[%s445 + $0x4d0] sm:$0xff]
                  %602 = vst [vmem:[%s446 + $0x268] sm:$0xff] %v601
                  %v603 = vld [vmem:[%s445 + $0x4e0] sm:$0xff]
                  %604 = vst [vmem:[%s446 + $0x270] sm:$0xff] %v603
                  %v605 = vld [vmem:[%s445 + $0x4f0] sm:$0xff]
                  %606 = vst [vmem:[%s446 + $0x278] sm:$0xff] %v605
                  %v607 = vld [vmem:[%s445 + $0x500] sm:$0xff]
                  %608 = vst [vmem:[%s446 + $0x280] sm:$0xff] %v607
                  %v609 = vld [vmem:[%s445 + $0x510] sm:$0xff]
                  %610 = vst [vmem:[%s446 + $0x288] sm:$0xff] %v609
                  %v611 = vld [vmem:[%s445 + $0x520] sm:$0xff]
                  %612 = vst [vmem:[%s446 + $0x290] sm:$0xff] %v611
                  %v613 = vld [vmem:[%s445 + $0x530] sm:$0xff]
                  %614 = vst [vmem:[%s446 + $0x298] sm:$0xff] %v613
                  %v615 = vld [vmem:[%s445 + $0x540] sm:$0xff]
                  %616 = vst [vmem:[%s446 + $0x2a0] sm:$0xff] %v615
                  %v617 = vld [vmem:[%s445 + $0x550] sm:$0xff]
                  %618 = vst [vmem:[%s446 + $0x2a8] sm:$0xff] %v617
                  %v619 = vld [vmem:[%s445 + $0x560] sm:$0xff]
                  %620 = vst [vmem:[%s446 + $0x2b0] sm:$0xff] %v619
                  %v621 = vld [vmem:[%s445 + $0x570] sm:$0xff]
                  %622 = vst [vmem:[%s446 + $0x2b8] sm:$0xff] %v621
                  %v623 = vld [vmem:[%s445 + $0x580] sm:$0xff]
                  %624 = vst [vmem:[%s446 + $0x2c0] sm:$0xff] %v623
                  %v625 = vld [vmem:[%s445 + $0x590] sm:$0xff]
                  %626 = vst [vmem:[%s446 + $0x2c8] sm:$0xff] %v625
                  %v627 = vld [vmem:[%s445 + $0x5a0] sm:$0xff]
                  %628 = vst [vmem:[%s446 + $0x2d0] sm:$0xff] %v627
                  %v629 = vld [vmem:[%s445 + $0x5b0] sm:$0xff]
                  %630 = vst [vmem:[%s446 + $0x2d8] sm:$0xff] %v629
                  %v631 = vld [vmem:[%s445 + $0x5c0] sm:$0xff]
                  %632 = vst [vmem:[%s446 + $0x2e0] sm:$0xff] %v631
                  %v633 = vld [vmem:[%s445 + $0x5d0] sm:$0xff]
                  %634 = vst [vmem:[%s446 + $0x2e8] sm:$0xff] %v633
                  %v635 = vld [vmem:[%s445 + $0x5e0] sm:$0xff]
                  %636 = vst [vmem:[%s446 + $0x2f0] sm:$0xff] %v635
                  %v637 = vld [vmem:[%s445 + $0x5f0] sm:$0xff]
                  %638 = vst [vmem:[%s446 + $0x2f8] sm:$0xff] %v637
                  %v639 = vld [vmem:[%s445 + $0x600] sm:$0xff]
                  %640 = vst [vmem:[%s446 + $0x300] sm:$0xff] %v639
                  %v641 = vld [vmem:[%s445 + $0x610] sm:$0xff]
                  %642 = vst [vmem:[%s446 + $0x308] sm:$0xff] %v641
                  %v643 = vld [vmem:[%s445 + $0x620] sm:$0xff]
                  %644 = vst [vmem:[%s446 + $0x310] sm:$0xff] %v643
                  %v645 = vld [vmem:[%s445 + $0x630] sm:$0xff]
                  %646 = vst [vmem:[%s446 + $0x318] sm:$0xff] %v645
                  %v647 = vld [vmem:[%s445 + $0x640] sm:$0xff]
                  %648 = vst [vmem:[%s446 + $0x320] sm:$0xff] %v647
                  %v649 = vld [vmem:[%s445 + $0x650] sm:$0xff]
                  %650 = vst [vmem:[%s446 + $0x328] sm:$0xff] %v649
                  %v651 = vld [vmem:[%s445 + $0x660] sm:$0xff]
                  %652 = vst [vmem:[%s446 + $0x330] sm:$0xff] %v651
                  %v653 = vld [vmem:[%s445 + $0x670] sm:$0xff]
                  %654 = vst [vmem:[%s446 + $0x338] sm:$0xff] %v653
                  %v655 = vld [vmem:[%s445 + $0x680] sm:$0xff]
                  %656 = vst [vmem:[%s446 + $0x340] sm:$0xff] %v655
                  %v657 = vld [vmem:[%s445 + $0x690] sm:$0xff]
                  %658 = vst [vmem:[%s446 + $0x348] sm:$0xff] %v657
                  %v659 = vld [vmem:[%s445 + $0x6a0] sm:$0xff]
                  %660 = vst [vmem:[%s446 + $0x350] sm:$0xff] %v659
                  %v661 = vld [vmem:[%s445 + $0x6b0] sm:$0xff]
                  %662 = vst [vmem:[%s446 + $0x358] sm:$0xff] %v661
                  %v663 = vld [vmem:[%s445 + $0x6c0] sm:$0xff]
                  %664 = vst [vmem:[%s446 + $0x360] sm:$0xff] %v663
                  %v665 = vld [vmem:[%s445 + $0x6d0] sm:$0xff]
                  %666 = vst [vmem:[%s446 + $0x368] sm:$0xff] %v665
                  %v667 = vld [vmem:[%s445 + $0x6e0] sm:$0xff]
                  %668 = vst [vmem:[%s446 + $0x370] sm:$0xff] %v667
                  %v669 = vld [vmem:[%s445 + $0x6f0] sm:$0xff]
                  %670 = vst [vmem:[%s446 + $0x378] sm:$0xff] %v669
                  %v671 = vld [vmem:[%s445 + $0x700] sm:$0xff]
                  %672 = vst [vmem:[%s446 + $0x380] sm:$0xff] %v671
                  %v673 = vld [vmem:[%s445 + $0x710] sm:$0xff]
                  %674 = vst [vmem:[%s446 + $0x388] sm:$0xff] %v673
                  %v675 = vld [vmem:[%s445 + $0x720] sm:$0xff]
                  %676 = vst [vmem:[%s446 + $0x390] sm:$0xff] %v675
                  %v677 = vld [vmem:[%s445 + $0x730] sm:$0xff]
                  %678 = vst [vmem:[%s446 + $0x398] sm:$0xff] %v677
                  %v679 = vld [vmem:[%s445 + $0x740] sm:$0xff]
                  %680 = vst [vmem:[%s446 + $0x3a0] sm:$0xff] %v679
                  %v681 = vld [vmem:[%s445 + $0x750] sm:$0xff]
                  %682 = vst [vmem:[%s446 + $0x3a8] sm:$0xff] %v681
                  %v683 = vld [vmem:[%s445 + $0x760] sm:$0xff]
                  %684 = vst [vmem:[%s446 + $0x3b0] sm:$0xff] %v683
                  %v685 = vld [vmem:[%s445 + $0x770] sm:$0xff]
                  %686 = vst [vmem:[%s446 + $0x3b8] sm:$0xff] %v685
                  %v687 = vld [vmem:[%s445 + $0x780] sm:$0xff]
                  %688 = vst [vmem:[%s446 + $0x3c0] sm:$0xff] %v687
                  %v689 = vld [vmem:[%s445 + $0x790] sm:$0xff]
                  %690 = vst [vmem:[%s446 + $0x3c8] sm:$0xff] %v689
                  %v691 = vld [vmem:[%s445 + $0x7a0] sm:$0xff]
                  %692 = vst [vmem:[%s446 + $0x3d0] sm:$0xff] %v691
                  %v693 = vld [vmem:[%s445 + $0x7b0] sm:$0xff]
                  %694 = vst [vmem:[%s446 + $0x3d8] sm:$0xff] %v693
                  %v695 = vld [vmem:[%s445 + $0x7c0] sm:$0xff]
                  %696 = vst [vmem:[%s446 + $0x3e0] sm:$0xff] %v695
                  %v697 = vld [vmem:[%s445 + $0x7d0] sm:$0xff]
                  %698 = vst [vmem:[%s446 + $0x3e8] sm:$0xff] %v697
                  %v699 = vld [vmem:[%s445 + $0x7e0] sm:$0xff]
                  %700 = vst [vmem:[%s446 + $0x3f0] sm:$0xff] %v699
                  %v701 = vld [vmem:[%s445 + $0x7f0] sm:$0xff]
                  %702 = vst [vmem:[%s446 + $0x3f8] sm:$0xff] %v701
                $region52: #{_init_step.6} parent=46 // loop_footer
                  %s444 = sadd.s32 1, %s440
                $region53: #{_init_step.6} parent=46 // loop_footer_branch
                  %439 = sbr.rel target = $region49
                $region54: #{_init_step.6} parent=46 // loop_exit
                  _
              $region47: #{_init_step.6} parent=31 // pred_fallthru
                _
              // Predicated region
              $region55: #{_init_step.6} parent=31 // pred_check
                _
              $region56: #{_init_step.6} parent=31 // pred_check_branch
                %704 = sbr.rel target = $region58
              $region57: #{_init_step.6} parent=31 // pred_region
                _
              $region58: #{_init_step.6} parent=31 // pred_fallthru
                _
            $region32: #{_init_step.6} parent=27 // pred_fallthru
              _
            // Predicated region
            $region33: #{_init_step.6} parent=27 // pred_check
              _
            $region34: #{_init_step.6} parent=27 // pred_check_branch
              %171 = sbr.rel target = $region36
            $region35: #{_init_step.6} parent=27 // pred_region
              loop: start=0, step=1, limit=1
              $region37: #{_init_step.6} parent=35 // loop_pre_header
                _
              $region38: #{_init_step.6} parent=35 // loop_header
                %s174 = sphi 0, %s178
                %p175 = scmp.ge.s32.totalorder %s174, 1
                %s179 = sphi %s165, %s165
                %s180 = sphi %s162, %s162
              $region39: #{_init_step.6} parent=35 // loop_header_branch
                %177 = sbr.rel (%p175) target = $region43
              $region40: #{_init_step.6} parent=35 // loop_body
                %v181 = vld [vmem:[%s179] sm:$0xff]
                %182 = vst [vmem:[%s180] sm:$0xff] %v181
                %v183 = vld [vmem:[%s179 + $0x10] sm:$0xff]
                %184 = vst [vmem:[%s180 + $0x8] sm:$0xff] %v183
                %v185 = vld [vmem:[%s179 + $0x20] sm:$0xff]
                %186 = vst [vmem:[%s180 + $0x10] sm:$0xff] %v185
                %v187 = vld [vmem:[%s179 + $0x30] sm:$0xff]
                %188 = vst [vmem:[%s180 + $0x18] sm:$0xff] %v187
                %v189 = vld [vmem:[%s179 + $0x40] sm:$0xff]
                %190 = vst [vmem:[%s180 + $0x20] sm:$0xff] %v189
                %v191 = vld [vmem:[%s179 + $0x50] sm:$0xff]
                %192 = vst [vmem:[%s180 + $0x28] sm:$0xff] %v191
                %v193 = vld [vmem:[%s179 + $0x60] sm:$0xff]
                %194 = vst [vmem:[%s180 + $0x30] sm:$0xff] %v193
                %v195 = vld [vmem:[%s179 + $0x70] sm:$0xff]
                %196 = vst [vmem:[%s180 + $0x38] sm:$0xff] %v195
                %v197 = vld [vmem:[%s179 + $0x80] sm:$0xff]
                %198 = vst [vmem:[%s180 + $0x40] sm:$0xff] %v197
                %v199 = vld [vmem:[%s179 + $0x90] sm:$0xff]
                %200 = vst [vmem:[%s180 + $0x48] sm:$0xff] %v199
                %v201 = vld [vmem:[%s179 + $0xa0] sm:$0xff]
                %202 = vst [vmem:[%s180 + $0x50] sm:$0xff] %v201
                %v203 = vld [vmem:[%s179 + $0xb0] sm:$0xff]
                %204 = vst [vmem:[%s180 + $0x58] sm:$0xff] %v203
                %v205 = vld [vmem:[%s179 + $0xc0] sm:$0xff]
                %206 = vst [vmem:[%s180 + $0x60] sm:$0xff] %v205
                %v207 = vld [vmem:[%s179 + $0xd0] sm:$0xff]
                %208 = vst [vmem:[%s180 + $0x68] sm:$0xff] %v207
                %v209 = vld [vmem:[%s179 + $0xe0] sm:$0xff]
                %210 = vst [vmem:[%s180 + $0x70] sm:$0xff] %v209
                %v211 = vld [vmem:[%s179 + $0xf0] sm:$0xff]
                %212 = vst [vmem:[%s180 + $0x78] sm:$0xff] %v211
                %v213 = vld [vmem:[%s179 + $0x100] sm:$0xff]
                %214 = vst [vmem:[%s180 + $0x80] sm:$0xff] %v213
                %v215 = vld [vmem:[%s179 + $0x110] sm:$0xff]
                %216 = vst [vmem:[%s180 + $0x88] sm:$0xff] %v215
                %v217 = vld [vmem:[%s179 + $0x120] sm:$0xff]
                %218 = vst [vmem:[%s180 + $0x90] sm:$0xff] %v217
                %v219 = vld [vmem:[%s179 + $0x130] sm:$0xff]
                %220 = vst [vmem:[%s180 + $0x98] sm:$0xff] %v219
                %v221 = vld [vmem:[%s179 + $0x140] sm:$0xff]
                %222 = vst [vmem:[%s180 + $0xa0] sm:$0xff] %v221
                %v223 = vld [vmem:[%s179 + $0x150] sm:$0xff]
                %224 = vst [vmem:[%s180 + $0xa8] sm:$0xff] %v223
                %v225 = vld [vmem:[%s179 + $0x160] sm:$0xff]
                %226 = vst [vmem:[%s180 + $0xb0] sm:$0xff] %v225
                %v227 = vld [vmem:[%s179 + $0x170] sm:$0xff]
                %228 = vst [vmem:[%s180 + $0xb8] sm:$0xff] %v227
                %v229 = vld [vmem:[%s179 + $0x180] sm:$0xff]
                %230 = vst [vmem:[%s180 + $0xc0] sm:$0xff] %v229
                %v231 = vld [vmem:[%s179 + $0x190] sm:$0xff]
                %232 = vst [vmem:[%s180 + $0xc8] sm:$0xff] %v231
                %v233 = vld [vmem:[%s179 + $0x1a0] sm:$0xff]
                %234 = vst [vmem:[%s180 + $0xd0] sm:$0xff] %v233
                %v235 = vld [vmem:[%s179 + $0x1b0] sm:$0xff]
                %236 = vst [vmem:[%s180 + $0xd8] sm:$0xff] %v235
                %v237 = vld [vmem:[%s179 + $0x1c0] sm:$0xff]
                %238 = vst [vmem:[%s180 + $0xe0] sm:$0xff] %v237
                %v239 = vld [vmem:[%s179 + $0x1d0] sm:$0xff]
                %240 = vst [vmem:[%s180 + $0xe8] sm:$0xff] %v239
                %v241 = vld [vmem:[%s179 + $0x1e0] sm:$0xff]
                %242 = vst [vmem:[%s180 + $0xf0] sm:$0xff] %v241
                %v243 = vld [vmem:[%s179 + $0x1f0] sm:$0xff]
                %244 = vst [vmem:[%s180 + $0xf8] sm:$0xff] %v243
                %v245 = vld [vmem:[%s179 + $0x200] sm:$0xff]
                %246 = vst [vmem:[%s180 + $0x100] sm:$0xff] %v245
                %v247 = vld [vmem:[%s179 + $0x210] sm:$0xff]
                %248 = vst [vmem:[%s180 + $0x108] sm:$0xff] %v247
                %v249 = vld [vmem:[%s179 + $0x220] sm:$0xff]
                %250 = vst [vmem:[%s180 + $0x110] sm:$0xff] %v249
                %v251 = vld [vmem:[%s179 + $0x230] sm:$0xff]
                %252 = vst [vmem:[%s180 + $0x118] sm:$0xff] %v251
                %v253 = vld [vmem:[%s179 + $0x240] sm:$0xff]
                %254 = vst [vmem:[%s180 + $0x120] sm:$0xff] %v253
                %v255 = vld [vmem:[%s179 + $0x250] sm:$0xff]
                %256 = vst [vmem:[%s180 + $0x128] sm:$0xff] %v255
                %v257 = vld [vmem:[%s179 + $0x260] sm:$0xff]
                %258 = vst [vmem:[%s180 + $0x130] sm:$0xff] %v257
                %v259 = vld [vmem:[%s179 + $0x270] sm:$0xff]
                %260 = vst [vmem:[%s180 + $0x138] sm:$0xff] %v259
                %v261 = vld [vmem:[%s179 + $0x280] sm:$0xff]
                %262 = vst [vmem:[%s180 + $0x140] sm:$0xff] %v261
                %v263 = vld [vmem:[%s179 + $0x290] sm:$0xff]
                %264 = vst [vmem:[%s180 + $0x148] sm:$0xff] %v263
                %v265 = vld [vmem:[%s179 + $0x2a0] sm:$0xff]
                %266 = vst [vmem:[%s180 + $0x150] sm:$0xff] %v265
                %v267 = vld [vmem:[%s179 + $0x2b0] sm:$0xff]
                %268 = vst [vmem:[%s180 + $0x158] sm:$0xff] %v267
                %v269 = vld [vmem:[%s179 + $0x2c0] sm:$0xff]
                %270 = vst [vmem:[%s180 + $0x160] sm:$0xff] %v269
                %v271 = vld [vmem:[%s179 + $0x2d0] sm:$0xff]
                %272 = vst [vmem:[%s180 + $0x168] sm:$0xff] %v271
                %v273 = vld [vmem:[%s179 + $0x2e0] sm:$0xff]
                %274 = vst [vmem:[%s180 + $0x170] sm:$0xff] %v273
                %v275 = vld [vmem:[%s179 + $0x2f0] sm:$0xff]
                %276 = vst [vmem:[%s180 + $0x178] sm:$0xff] %v275
                %v277 = vld [vmem:[%s179 + $0x300] sm:$0xff]
                %278 = vst [vmem:[%s180 + $0x180] sm:$0xff] %v277
                %v279 = vld [vmem:[%s179 + $0x310] sm:$0xff]
                %280 = vst [vmem:[%s180 + $0x188] sm:$0xff] %v279
                %v281 = vld [vmem:[%s179 + $0x320] sm:$0xff]
                %282 = vst [vmem:[%s180 + $0x190] sm:$0xff] %v281
                %v283 = vld [vmem:[%s179 + $0x330] sm:$0xff]
                %284 = vst [vmem:[%s180 + $0x198] sm:$0xff] %v283
                %v285 = vld [vmem:[%s179 + $0x340] sm:$0xff]
                %286 = vst [vmem:[%s180 + $0x1a0] sm:$0xff] %v285
                %v287 = vld [vmem:[%s179 + $0x350] sm:$0xff]
                %288 = vst [vmem:[%s180 + $0x1a8] sm:$0xff] %v287
                %v289 = vld [vmem:[%s179 + $0x360] sm:$0xff]
                %290 = vst [vmem:[%s180 + $0x1b0] sm:$0xff] %v289
                %v291 = vld [vmem:[%s179 + $0x370] sm:$0xff]
                %292 = vst [vmem:[%s180 + $0x1b8] sm:$0xff] %v291
                %v293 = vld [vmem:[%s179 + $0x380] sm:$0xff]
                %294 = vst [vmem:[%s180 + $0x1c0] sm:$0xff] %v293
                %v295 = vld [vmem:[%s179 + $0x390] sm:$0xff]
                %296 = vst [vmem:[%s180 + $0x1c8] sm:$0xff] %v295
                %v297 = vld [vmem:[%s179 + $0x3a0] sm:$0xff]
                %298 = vst [vmem:[%s180 + $0x1d0] sm:$0xff] %v297
                %v299 = vld [vmem:[%s179 + $0x3b0] sm:$0xff]
                %300 = vst [vmem:[%s180 + $0x1d8] sm:$0xff] %v299
                %v301 = vld [vmem:[%s179 + $0x3c0] sm:$0xff]
                %302 = vst [vmem:[%s180 + $0x1e0] sm:$0xff] %v301
                %v303 = vld [vmem:[%s179 + $0x3d0] sm:$0xff]
                %304 = vst [vmem:[%s180 + $0x1e8] sm:$0xff] %v303
                %v305 = vld [vmem:[%s179 + $0x3e0] sm:$0xff]
                %306 = vst [vmem:[%s180 + $0x1f0] sm:$0xff] %v305
                %v307 = vld [vmem:[%s179 + $0x3f0] sm:$0xff]
                %308 = vst [vmem:[%s180 + $0x1f8] sm:$0xff] %v307
                %v309 = vld [vmem:[%s179 + $0x400] sm:$0xff]
                %310 = vst [vmem:[%s180 + $0x200] sm:$0xff] %v309
                %v311 = vld [vmem:[%s179 + $0x410] sm:$0xff]
                %312 = vst [vmem:[%s180 + $0x208] sm:$0xff] %v311
                %v313 = vld [vmem:[%s179 + $0x420] sm:$0xff]
                %314 = vst [vmem:[%s180 + $0x210] sm:$0xff] %v313
                %v315 = vld [vmem:[%s179 + $0x430] sm:$0xff]
                %316 = vst [vmem:[%s180 + $0x218] sm:$0xff] %v315
                %v317 = vld [vmem:[%s179 + $0x440] sm:$0xff]
                %318 = vst [vmem:[%s180 + $0x220] sm:$0xff] %v317
                %v319 = vld [vmem:[%s179 + $0x450] sm:$0xff]
                %320 = vst [vmem:[%s180 + $0x228] sm:$0xff] %v319
                %v321 = vld [vmem:[%s179 + $0x460] sm:$0xff]
                %322 = vst [vmem:[%s180 + $0x230] sm:$0xff] %v321
                %v323 = vld [vmem:[%s179 + $0x470] sm:$0xff]
                %324 = vst [vmem:[%s180 + $0x238] sm:$0xff] %v323
                %v325 = vld [vmem:[%s179 + $0x480] sm:$0xff]
                %326 = vst [vmem:[%s180 + $0x240] sm:$0xff] %v325
                %v327 = vld [vmem:[%s179 + $0x490] sm:$0xff]
                %328 = vst [vmem:[%s180 + $0x248] sm:$0xff] %v327
                %v329 = vld [vmem:[%s179 + $0x4a0] sm:$0xff]
                %330 = vst [vmem:[%s180 + $0x250] sm:$0xff] %v329
                %v331 = vld [vmem:[%s179 + $0x4b0] sm:$0xff]
                %332 = vst [vmem:[%s180 + $0x258] sm:$0xff] %v331
                %v333 = vld [vmem:[%s179 + $0x4c0] sm:$0xff]
                %334 = vst [vmem:[%s180 + $0x260] sm:$0xff] %v333
                %v335 = vld [vmem:[%s179 + $0x4d0] sm:$0xff]
                %336 = vst [vmem:[%s180 + $0x268] sm:$0xff] %v335
                %v337 = vld [vmem:[%s179 + $0x4e0] sm:$0xff]
                %338 = vst [vmem:[%s180 + $0x270] sm:$0xff] %v337
                %v339 = vld [vmem:[%s179 + $0x4f0] sm:$0xff]
                %340 = vst [vmem:[%s180 + $0x278] sm:$0xff] %v339
                %v341 = vld [vmem:[%s179 + $0x500] sm:$0xff]
                %342 = vst [vmem:[%s180 + $0x280] sm:$0xff] %v341
                %v343 = vld [vmem:[%s179 + $0x510] sm:$0xff]
                %344 = vst [vmem:[%s180 + $0x288] sm:$0xff] %v343
                %v345 = vld [vmem:[%s179 + $0x520] sm:$0xff]
                %346 = vst [vmem:[%s180 + $0x290] sm:$0xff] %v345
                %v347 = vld [vmem:[%s179 + $0x530] sm:$0xff]
                %348 = vst [vmem:[%s180 + $0x298] sm:$0xff] %v347
                %v349 = vld [vmem:[%s179 + $0x540] sm:$0xff]
                %350 = vst [vmem:[%s180 + $0x2a0] sm:$0xff] %v349
                %v351 = vld [vmem:[%s179 + $0x550] sm:$0xff]
                %352 = vst [vmem:[%s180 + $0x2a8] sm:$0xff] %v351
                %v353 = vld [vmem:[%s179 + $0x560] sm:$0xff]
                %354 = vst [vmem:[%s180 + $0x2b0] sm:$0xff] %v353
                %v355 = vld [vmem:[%s179 + $0x570] sm:$0xff]
                %356 = vst [vmem:[%s180 + $0x2b8] sm:$0xff] %v355
                %v357 = vld [vmem:[%s179 + $0x580] sm:$0xff]
                %358 = vst [vmem:[%s180 + $0x2c0] sm:$0xff] %v357
                %v359 = vld [vmem:[%s179 + $0x590] sm:$0xff]
                %360 = vst [vmem:[%s180 + $0x2c8] sm:$0xff] %v359
                %v361 = vld [vmem:[%s179 + $0x5a0] sm:$0xff]
                %362 = vst [vmem:[%s180 + $0x2d0] sm:$0xff] %v361
                %v363 = vld [vmem:[%s179 + $0x5b0] sm:$0xff]
                %364 = vst [vmem:[%s180 + $0x2d8] sm:$0xff] %v363
                %v365 = vld [vmem:[%s179 + $0x5c0] sm:$0xff]
                %366 = vst [vmem:[%s180 + $0x2e0] sm:$0xff] %v365
                %v367 = vld [vmem:[%s179 + $0x5d0] sm:$0xff]
                %368 = vst [vmem:[%s180 + $0x2e8] sm:$0xff] %v367
                %v369 = vld [vmem:[%s179 + $0x5e0] sm:$0xff]
                %370 = vst [vmem:[%s180 + $0x2f0] sm:$0xff] %v369
                %v371 = vld [vmem:[%s179 + $0x5f0] sm:$0xff]
                %372 = vst [vmem:[%s180 + $0x2f8] sm:$0xff] %v371
                %v373 = vld [vmem:[%s179 + $0x600] sm:$0xff]
                %374 = vst [vmem:[%s180 + $0x300] sm:$0xff] %v373
                %v375 = vld [vmem:[%s179 + $0x610] sm:$0xff]
                %376 = vst [vmem:[%s180 + $0x308] sm:$0xff] %v375
                %v377 = vld [vmem:[%s179 + $0x620] sm:$0xff]
                %378 = vst [vmem:[%s180 + $0x310] sm:$0xff] %v377
                %v379 = vld [vmem:[%s179 + $0x630] sm:$0xff]
                %380 = vst [vmem:[%s180 + $0x318] sm:$0xff] %v379
                %v381 = vld [vmem:[%s179 + $0x640] sm:$0xff]
                %382 = vst [vmem:[%s180 + $0x320] sm:$0xff] %v381
                %v383 = vld [vmem:[%s179 + $0x650] sm:$0xff]
                %384 = vst [vmem:[%s180 + $0x328] sm:$0xff] %v383
                %v385 = vld [vmem:[%s179 + $0x660] sm:$0xff]
                %386 = vst [vmem:[%s180 + $0x330] sm:$0xff] %v385
                %v387 = vld [vmem:[%s179 + $0x670] sm:$0xff]
                %388 = vst [vmem:[%s180 + $0x338] sm:$0xff] %v387
                %v389 = vld [vmem:[%s179 + $0x680] sm:$0xff]
                %390 = vst [vmem:[%s180 + $0x340] sm:$0xff] %v389
                %v391 = vld [vmem:[%s179 + $0x690] sm:$0xff]
                %392 = vst [vmem:[%s180 + $0x348] sm:$0xff] %v391
                %v393 = vld [vmem:[%s179 + $0x6a0] sm:$0xff]
                %394 = vst [vmem:[%s180 + $0x350] sm:$0xff] %v393
                %v395 = vld [vmem:[%s179 + $0x6b0] sm:$0xff]
                %396 = vst [vmem:[%s180 + $0x358] sm:$0xff] %v395
                %v397 = vld [vmem:[%s179 + $0x6c0] sm:$0xff]
                %398 = vst [vmem:[%s180 + $0x360] sm:$0xff] %v397
                %v399 = vld [vmem:[%s179 + $0x6d0] sm:$0xff]
                %400 = vst [vmem:[%s180 + $0x368] sm:$0xff] %v399
                %v401 = vld [vmem:[%s179 + $0x6e0] sm:$0xff]
                %402 = vst [vmem:[%s180 + $0x370] sm:$0xff] %v401
                %v403 = vld [vmem:[%s179 + $0x6f0] sm:$0xff]
                %404 = vst [vmem:[%s180 + $0x378] sm:$0xff] %v403
                %v405 = vld [vmem:[%s179 + $0x700] sm:$0xff]
                %406 = vst [vmem:[%s180 + $0x380] sm:$0xff] %v405
                %v407 = vld [vmem:[%s179 + $0x710] sm:$0xff]
                %408 = vst [vmem:[%s180 + $0x388] sm:$0xff] %v407
                %v409 = vld [vmem:[%s179 + $0x720] sm:$0xff]
                %410 = vst [vmem:[%s180 + $0x390] sm:$0xff] %v409
                %v411 = vld [vmem:[%s179 + $0x730] sm:$0xff]
                %412 = vst [vmem:[%s180 + $0x398] sm:$0xff] %v411
                %v413 = vld [vmem:[%s179 + $0x740] sm:$0xff]
                %414 = vst [vmem:[%s180 + $0x3a0] sm:$0xff] %v413
                %v415 = vld [vmem:[%s179 + $0x750] sm:$0xff]
                %416 = vst [vmem:[%s180 + $0x3a8] sm:$0xff] %v415
                %v417 = vld [vmem:[%s179 + $0x760] sm:$0xff]
                %418 = vst [vmem:[%s180 + $0x3b0] sm:$0xff] %v417
                %v419 = vld [vmem:[%s179 + $0x770] sm:$0xff]
                %420 = vst [vmem:[%s180 + $0x3b8] sm:$0xff] %v419
                %v421 = vld [vmem:[%s179 + $0x780] sm:$0xff]
                %422 = vst [vmem:[%s180 + $0x3c0] sm:$0xff] %v421
                %v423 = vld [vmem:[%s179 + $0x790] sm:$0xff]
                %424 = vst [vmem:[%s180 + $0x3c8] sm:$0xff] %v423
                %v425 = vld [vmem:[%s179 + $0x7a0] sm:$0xff]
                %426 = vst [vmem:[%s180 + $0x3d0] sm:$0xff] %v425
                %v427 = vld [vmem:[%s179 + $0x7b0] sm:$0xff]
                %428 = vst [vmem:[%s180 + $0x3d8] sm:$0xff] %v427
                %v429 = vld [vmem:[%s179 + $0x7c0] sm:$0xff]
                %430 = vst [vmem:[%s180 + $0x3e0] sm:$0xff] %v429
                %v431 = vld [vmem:[%s179 + $0x7d0] sm:$0xff]
                %432 = vst [vmem:[%s180 + $0x3e8] sm:$0xff] %v431
                %v433 = vld [vmem:[%s179 + $0x7e0] sm:$0xff]
                %434 = vst [vmem:[%s180 + $0x3f0] sm:$0xff] %v433
                %v435 = vld [vmem:[%s179 + $0x7f0] sm:$0xff]
                %436 = vst [vmem:[%s180 + $0x3f8] sm:$0xff] %v435
              $region41: #{_init_step.6} parent=35 // loop_footer
                %s178 = sadd.s32 1, %s174
              $region42: #{_init_step.6} parent=35 // loop_footer_branch
                %173 = sbr.rel target = $region38
              $region43: #{_init_step.6} parent=35 // loop_exit
                _
            $region36: #{_init_step.6} parent=27 // pred_fallthru
              _
          $region28: #{_init_step.6} parent=23 // pred_fallthru
            _
          %705 = vnop
        $region24: #{_init_step.6} parent=19 // pred_fallthru
          _
        // Predicated region
        $region59: #{_init_step.6} parent=19 // pred_check
          %p706 = pneg %p93
        $region60: #{_init_step.6} parent=19 // pred_check_branch
          %708 = sbr.rel (%p706) target = $region62
        $region61: #{_init_step.6} parent=19 // pred_region
          %s709 = smul.u32 2, %s17
          %p710 = scmp.lt.s32.totalorder %s709, 3
          %s711 = scalar_select %p710, %s709, 3
          %s712 = scalar_lea.vmem %s2, %s711
          %s713 = smul.u32 2, %s17
        $region62: #{_init_step.6} parent=19 // pred_fallthru
          _
      $region20: #{_init_step.6} parent=5 // pred_fallthru
        _
      %p714 = scmp.le.s32.totalorder 1, %s9
      %p715 = scmp.lt.s32.totalorder %s9, 3
      %p716 = pnand %p714, %p715
      %p717 = pneg %p716
      // Predicated region
      $region63: #{_init_step.6} parent=5 // pred_check
        _
      $region64: #{_init_step.6} parent=5 // pred_check_branch
        %719 = sbr.rel (%p716) target = $region66
      $region65: #{_init_step.6} parent=5 // pred_region
        %s720 = ssub.s32 %s9, 1
        %s721 = sand.u32 %s60, 1
        %s722 = sand.u32 %s60, 1
        %s723 = smul.addr %s722, 1024
        %s724 = scalar_lea.vmem [#allocation2], %s723
        // Predicated region
        $region67: #{_init_step.6} parent=65 // pred_check
          %p725 = pneg %p73
        $region68: #{_init_step.6} parent=65 // pred_check_branch
          %727 = sbr.rel (%p725) target = $region70
        $region69: #{_init_step.6} parent=65 // pred_region
          _
        $region70: #{_init_step.6} parent=65 // pred_fallthru
          _
        %s728 = smul.u32 4, %s18
        %p729 = scmp.lt.s32.totalorder %s728, 3
        %s730 = scalar_select %p729, %s728, 3
        %s731 = smul.addr %s730, 8
        %s732 = smul.addr %s731, 4
        %s733 = scalar_lea.vmem %s0, %s732
        %p734 = pneg %p47
        %p735 = pneg %p44
        %s736 = sand.u32 %s60, 1
        %s737 = sand.u32 %s60, 1
        %s738 = smul.addr %s737, 1024
        %s739 = scalar_lea.vmem [#allocation2], %s738
        %p740 = pneg %p73
        %p741 = pneg %p70
        %s742 = smul.u32 2, %s19
        %p743 = scmp.lt.s32.totalorder %s742, 3
        %s744 = scalar_select %p743, %s742, 3
        %s745 = scalar_lea.vmem %s2, %s744
        %p746 = pneg %p99
        %p747 = pneg %p96
        %p748 = pneg %p127
        %p749 = pneg %p124
        %s750 = sand.u32 %s114, 1
        %s751 = sand.u32 %s114, 1
        %s752 = smul.addr %s751, 32
        %s753 = scalar_lea.vmem [#allocation3], %s752
        %s754 = smul.u32 4, %s18
        %p755 = scmp.lt.s32.totalorder %s754, 3
        %s756 = scalar_select %p755, %s754, 3
        %s757 = smul.addr %s756, 8
        %s758 = smul.addr %s757, 4
        %s759 = scalar_lea.vmem %s0, %s758
        %s760 = smul.u32 4, %s18
        %s761 = smul.u32 2, %s19
        %s762 = smul.u32 2, %s19
        %p763 = scmp.lt.s32.totalorder %s762, 3
        %s764 = scalar_select %p763, %s762, 3
        %s765 = scalar_lea.vmem %s2, %s764
        %s766 = smul.u32 2, %s19
        %s767 = smul.u32 4, %s18
        %s768 = smul.u32 2, %s19
        %v769 = vld [vmem:[%s759] sm:$0xff]
        %v770 = vld [vmem:[%s759 + $0x8] sm:$0xff]
        %v771 = vld [vmem:[%s759 + $0x10] sm:$0xff]
        %v772 = vld [vmem:[%s759 + $0x18] sm:$0xff]
        %v773 = vld [vmem:[%s759 + $0x20] sm:$0xff]
        %v774 = vld [vmem:[%s759 + $0x28] sm:$0xff]
        %v775 = vld [vmem:[%s759 + $0x30] sm:$0xff]
        %v776 = vld [vmem:[%s759 + $0x38] sm:$0xff]
        %v777 = vld [vmem:[%s759 + $0x40] sm:$0xff]
        %v778 = vld [vmem:[%s759 + $0x48] sm:$0xff]
        %v779 = vld [vmem:[%s759 + $0x50] sm:$0xff]
        %v780 = vld [vmem:[%s759 + $0x58] sm:$0xff]
        %v781 = vld [vmem:[%s759 + $0x60] sm:$0xff]
        %v782 = vld [vmem:[%s759 + $0x68] sm:$0xff]
        %v783 = vld [vmem:[%s759 + $0x70] sm:$0xff]
        %v784 = vld [vmem:[%s759 + $0x78] sm:$0xff]
        %v785 = vld [vmem:[%s724] sm:$0xff]
        %v786 = vld [vmem:[%s724 + $0x8] sm:$0xff]
        %v787 = vld [vmem:[%s724 + $0x10] sm:$0xff]
        %v788 = vld [vmem:[%s724 + $0x18] sm:$0xff]
        %v789 = vld [vmem:[%s724 + $0x20] sm:$0xff]
        %v790 = vld [vmem:[%s724 + $0x28] sm:$0xff]
        %v791 = vld [vmem:[%s724 + $0x30] sm:$0xff]
        %v792 = vld [vmem:[%s724 + $0x38] sm:$0xff]
        %v793 = vld [vmem:[%s724 + $0x40] sm:$0xff]
        %v794 = vld [vmem:[%s724 + $0x48] sm:$0xff]
        %v795 = vld [vmem:[%s724 + $0x50] sm:$0xff]
        %v796 = vld [vmem:[%s724 + $0x58] sm:$0xff]
        %v797 = vld [vmem:[%s724 + $0x60] sm:$0xff]
        %v798 = vld [vmem:[%s724 + $0x68] sm:$0xff]
        %v799 = vld [vmem:[%s724 + $0x70] sm:$0xff]
        %v800 = vld [vmem:[%s724 + $0x78] sm:$0xff]
        %v801 = vld [vmem:[%s724 + $0x80] sm:$0xff]
        %v802 = vld [vmem:[%s724 + $0x88] sm:$0xff]
        %v803 = vld [vmem:[%s724 + $0x90] sm:$0xff]
        %v804 = vld [vmem:[%s724 + $0x98] sm:$0xff]
        %v805 = vld [vmem:[%s724 + $0xa0] sm:$0xff]
        %v806 = vld [vmem:[%s724 + $0xa8] sm:$0xff]
        %v807 = vld [vmem:[%s724 + $0xb0] sm:$0xff]
        %v808 = vld [vmem:[%s724 + $0xb8] sm:$0xff]
        %v809 = vld [vmem:[%s724 + $0xc0] sm:$0xff]
        %v810 = vld [vmem:[%s724 + $0xc8] sm:$0xff]
        %v811 = vld [vmem:[%s724 + $0xd0] sm:$0xff]
        %v812 = vld [vmem:[%s724 + $0xd8] sm:$0xff]
        %v813 = vld [vmem:[%s724 + $0xe0] sm:$0xff]
        %v814 = vld [vmem:[%s724 + $0xe8] sm:$0xff]
        %v815 = vld [vmem:[%s724 + $0xf0] sm:$0xff]
        %v816 = vld [vmem:[%s724 + $0xf8] sm:$0xff]
        %v817 = vld [vmem:[%s724 + $0x100] sm:$0xff]
        %v818 = vld [vmem:[%s724 + $0x108] sm:$0xff]
        %v819 = vld [vmem:[%s724 + $0x110] sm:$0xff]
        %v820 = vld [vmem:[%s724 + $0x118] sm:$0xff]
        %v821 = vld [vmem:[%s724 + $0x120] sm:$0xff]
        %v822 = vld [vmem:[%s724 + $0x128] sm:$0xff]
        %v823 = vld [vmem:[%s724 + $0x130] sm:$0xff]
        %v824 = vld [vmem:[%s724 + $0x138] sm:$0xff]
        %v825 = vld [vmem:[%s724 + $0x140] sm:$0xff]
        %v826 = vld [vmem:[%s724 + $0x148] sm:$0xff]
        %v827 = vld [vmem:[%s724 + $0x150] sm:$0xff]
        %v828 = vld [vmem:[%s724 + $0x158] sm:$0xff]
        %v829 = vld [vmem:[%s724 + $0x160] sm:$0xff]
        %v830 = vld [vmem:[%s724 + $0x168] sm:$0xff]
        %v831 = vld [vmem:[%s724 + $0x170] sm:$0xff]
        %v832 = vld [vmem:[%s724 + $0x178] sm:$0xff]
        %v833 = vld [vmem:[%s724 + $0x180] sm:$0xff]
        %v834 = vld [vmem:[%s724 + $0x188] sm:$0xff]
        %v835 = vld [vmem:[%s724 + $0x190] sm:$0xff]
        %v836 = vld [vmem:[%s724 + $0x198] sm:$0xff]
        %v837 = vld [vmem:[%s724 + $0x1a0] sm:$0xff]
        %v838 = vld [vmem:[%s724 + $0x1a8] sm:$0xff]
        %v839 = vld [vmem:[%s724 + $0x1b0] sm:$0xff]
        %v840 = vld [vmem:[%s724 + $0x1b8] sm:$0xff]
        %v841 = vld [vmem:[%s724 + $0x1c0] sm:$0xff]
        %v842 = vld [vmem:[%s724 + $0x1c8] sm:$0xff]
        %v843 = vld [vmem:[%s724 + $0x1d0] sm:$0xff]
        %v844 = vld [vmem:[%s724 + $0x1d8] sm:$0xff]
        %v845 = vld [vmem:[%s724 + $0x1e0] sm:$0xff]
        %v846 = vld [vmem:[%s724 + $0x1e8] sm:$0xff]
        %v847 = vld [vmem:[%s724 + $0x1f0] sm:$0xff]
        %v848 = vld [vmem:[%s724 + $0x1f8] sm:$0xff]
        %v849 = vld [vmem:[%s724 + $0x200] sm:$0xff]
        %v850 = vld [vmem:[%s724 + $0x208] sm:$0xff]
        %v851 = vld [vmem:[%s724 + $0x210] sm:$0xff]
        %v852 = vld [vmem:[%s724 + $0x218] sm:$0xff]
        %v853 = vld [vmem:[%s724 + $0x220] sm:$0xff]
        %v854 = vld [vmem:[%s724 + $0x228] sm:$0xff]
        %v855 = vld [vmem:[%s724 + $0x230] sm:$0xff]
        %v856 = vld [vmem:[%s724 + $0x238] sm:$0xff]
        %v857 = vld [vmem:[%s724 + $0x240] sm:$0xff]
        %v858 = vld [vmem:[%s724 + $0x248] sm:$0xff]
        %v859 = vld [vmem:[%s724 + $0x250] sm:$0xff]
        %v860 = vld [vmem:[%s724 + $0x258] sm:$0xff]
        %v861 = vld [vmem:[%s724 + $0x260] sm:$0xff]
        %v862 = vld [vmem:[%s724 + $0x268] sm:$0xff]
        %v863 = vld [vmem:[%s724 + $0x270] sm:$0xff]
        %v864 = vld [vmem:[%s724 + $0x278] sm:$0xff]
        %v865 = vld [vmem:[%s724 + $0x280] sm:$0xff]
        %v866 = vld [vmem:[%s724 + $0x288] sm:$0xff]
        %v867 = vld [vmem:[%s724 + $0x290] sm:$0xff]
        %v868 = vld [vmem:[%s724 + $0x298] sm:$0xff]
        %v869 = vld [vmem:[%s724 + $0x2a0] sm:$0xff]
        %v870 = vld [vmem:[%s724 + $0x2a8] sm:$0xff]
        %v871 = vld [vmem:[%s724 + $0x2b0] sm:$0xff]
        %v872 = vld [vmem:[%s724 + $0x2b8] sm:$0xff]
        %v873 = vld [vmem:[%s724 + $0x2c0] sm:$0xff]
        %v874 = vld [vmem:[%s724 + $0x2c8] sm:$0xff]
        %v875 = vld [vmem:[%s724 + $0x2d0] sm:$0xff]
        %v876 = vld [vmem:[%s724 + $0x2d8] sm:$0xff]
        %v877 = vld [vmem:[%s724 + $0x2e0] sm:$0xff]
        %v878 = vld [vmem:[%s724 + $0x2e8] sm:$0xff]
        %v879 = vld [vmem:[%s724 + $0x2f0] sm:$0xff]
        %v880 = vld [vmem:[%s724 + $0x2f8] sm:$0xff]
        %v881 = vld [vmem:[%s724 + $0x300] sm:$0xff]
        %v882 = vld [vmem:[%s724 + $0x308] sm:$0xff]
        %v883 = vld [vmem:[%s724 + $0x310] sm:$0xff]
        %v884 = vld [vmem:[%s724 + $0x318] sm:$0xff]
        %v885 = vld [vmem:[%s724 + $0x320] sm:$0xff]
        %v886 = vld [vmem:[%s724 + $0x328] sm:$0xff]
        %v887 = vld [vmem:[%s724 + $0x330] sm:$0xff]
        %v888 = vld [vmem:[%s724 + $0x338] sm:$0xff]
        %v889 = vld [vmem:[%s724 + $0x340] sm:$0xff]
        %v890 = vld [vmem:[%s724 + $0x348] sm:$0xff]
        %v891 = vld [vmem:[%s724 + $0x350] sm:$0xff]
        %v892 = vld [vmem:[%s724 + $0x358] sm:$0xff]
        %v893 = vld [vmem:[%s724 + $0x360] sm:$0xff]
        %v894 = vld [vmem:[%s724 + $0x368] sm:$0xff]
        %v895 = vld [vmem:[%s724 + $0x370] sm:$0xff]
        %v896 = vld [vmem:[%s724 + $0x378] sm:$0xff]
        %v897 = vld [vmem:[%s724 + $0x380] sm:$0xff]
        %v898 = vld [vmem:[%s724 + $0x388] sm:$0xff]
        %v899 = vld [vmem:[%s724 + $0x390] sm:$0xff]
        %v900 = vld [vmem:[%s724 + $0x398] sm:$0xff]
        %v901 = vld [vmem:[%s724 + $0x3a0] sm:$0xff]
        %v902 = vld [vmem:[%s724 + $0x3a8] sm:$0xff]
        %v903 = vld [vmem:[%s724 + $0x3b0] sm:$0xff]
        %v904 = vld [vmem:[%s724 + $0x3b8] sm:$0xff]
        %v905 = vld [vmem:[%s724 + $0x3c0] sm:$0xff]
        %v906 = vld [vmem:[%s724 + $0x3c8] sm:$0xff]
        %v907 = vld [vmem:[%s724 + $0x3d0] sm:$0xff]
        %v908 = vld [vmem:[%s724 + $0x3d8] sm:$0xff]
        %v909 = vld [vmem:[%s724 + $0x3e0] sm:$0xff]
        %v910 = vld [vmem:[%s724 + $0x3e8] sm:$0xff]
        %v911 = vld [vmem:[%s724 + $0x3f0] sm:$0xff]
        %v912 = vld [vmem:[%s724 + $0x3f8] sm:$0xff]
        %v913 = vld [vmem:[%s765] sm:$0x3]
        %v915 = vlaneseq
        %v916 = vshrl.u32 %v915, 7
        %v917 = vsub.s32 0, %v916
        %v918 = vrot.slane %v913, %v917
        %v919 = vlaneseq
        %v920 = vshrl.u32 %v919, 7
        %v921 = vsub.s32 1, %v920
        %v922 = vrot.slane %v913, %v921
        %v941 = vunpack.c.l.b16 %v769
        %v942 = vunpack.c.h.b16 %v769
        %v943 = vunpack.c.l.b16 %v770
        %v944 = vunpack.c.h.b16 %v770
        %v945 = vunpack.c.l.b16 %v771
        %v946 = vunpack.c.h.b16 %v771
        %v947 = vunpack.c.l.b16 %v772
        %v948 = vunpack.c.h.b16 %v772
        %v949 = vunpack.c.l.b16 %v773
        %v950 = vunpack.c.h.b16 %v773
        %v951 = vunpack.c.l.b16 %v774
        %v952 = vunpack.c.h.b16 %v774
        %v953 = vunpack.c.l.b16 %v775
        %v954 = vunpack.c.h.b16 %v775
        %v955 = vunpack.c.l.b16 %v776
        %v956 = vunpack.c.h.b16 %v776
        %v957 = vunpack.c.l.b16 %v777
        %v958 = vunpack.c.h.b16 %v777
        %v959 = vunpack.c.l.b16 %v778
        %v960 = vunpack.c.h.b16 %v778
        %v961 = vunpack.c.l.b16 %v779
        %v962 = vunpack.c.h.b16 %v779
        %v963 = vunpack.c.l.b16 %v780
        %v964 = vunpack.c.h.b16 %v780
        %v965 = vunpack.c.l.b16 %v781
        %v966 = vunpack.c.h.b16 %v781
        %v967 = vunpack.c.l.b16 %v782
        %v968 = vunpack.c.h.b16 %v782
        %v969 = vunpack.c.l.b16 %v783
        %v970 = vunpack.c.h.b16 %v783
        %v971 = vunpack.c.l.b16 %v784
        %v972 = vunpack.c.h.b16 %v784
        %v973 = vpack.c.b16 %v949, %v941
        %v974 = vpack.c.b16 %v950, %v942
        %v975 = vpack.c.b16 %v951, %v943
        %v976 = vpack.c.b16 %v952, %v944
        %v977 = vpack.c.b16 %v953, %v945
        %v978 = vpack.c.b16 %v954, %v946
        %v979 = vpack.c.b16 %v955, %v947
        %v980 = vpack.c.b16 %v956, %v948
        %v981 = vpack.c.b16 %v965, %v957
        %v982 = vpack.c.b16 %v966, %v958
        %v983 = vpack.c.b16 %v967, %v959
        %v984 = vpack.c.b16 %v968, %v960
        %v985 = vpack.c.b16 %v969, %v961
        %v986 = vpack.c.b16 %v970, %v962
        %v987 = vpack.c.b16 %v971, %v963
        %v988 = vpack.c.b16 %v972, %v964
        %v1133 = vunpack.c.l.b16 %v785
        %v1134 = vunpack.c.h.b16 %v785
        %v1135 = vunpack.c.l.b16 %v786
        %v1136 = vunpack.c.h.b16 %v786
        %v1137 = vunpack.c.l.b16 %v787
        %v1138 = vunpack.c.h.b16 %v787
        %v1139 = vunpack.c.l.b16 %v788
        %v1140 = vunpack.c.h.b16 %v788
        %v1141 = vunpack.c.l.b16 %v789
        %v1142 = vunpack.c.h.b16 %v789
        %v1143 = vunpack.c.l.b16 %v790
        %v1144 = vunpack.c.h.b16 %v790
        %v1145 = vunpack.c.l.b16 %v791
        %v1146 = vunpack.c.h.b16 %v791
        %v1147 = vunpack.c.l.b16 %v792
        %v1148 = vunpack.c.h.b16 %v792
        %v1149 = vunpack.c.l.b16 %v793
        %v1150 = vunpack.c.h.b16 %v793
        %v1151 = vunpack.c.l.b16 %v794
        %v1152 = vunpack.c.h.b16 %v794
        %v1153 = vunpack.c.l.b16 %v795
        %v1154 = vunpack.c.h.b16 %v795
        %v1155 = vunpack.c.l.b16 %v796
        %v1156 = vunpack.c.h.b16 %v796
        %v1157 = vunpack.c.l.b16 %v797
        %v1158 = vunpack.c.h.b16 %v797
        %v1159 = vunpack.c.l.b16 %v798
        %v1160 = vunpack.c.h.b16 %v798
        %v1161 = vunpack.c.l.b16 %v799
        %v1162 = vunpack.c.h.b16 %v799
        %v1163 = vunpack.c.l.b16 %v800
        %v1164 = vunpack.c.h.b16 %v800
        %v1165 = vunpack.c.l.b16 %v801
        %v1166 = vunpack.c.h.b16 %v801
        %v1167 = vunpack.c.l.b16 %v802
        %v1168 = vunpack.c.h.b16 %v802
        %v1169 = vunpack.c.l.b16 %v803
        %v1170 = vunpack.c.h.b16 %v803
        %v1171 = vunpack.c.l.b16 %v804
        %v1172 = vunpack.c.h.b16 %v804
        %v1173 = vunpack.c.l.b16 %v805
        %v1174 = vunpack.c.h.b16 %v805
        %v1175 = vunpack.c.l.b16 %v806
        %v1176 = vunpack.c.h.b16 %v806
        %v1177 = vunpack.c.l.b16 %v807
        %v1178 = vunpack.c.h.b16 %v807
        %v1179 = vunpack.c.l.b16 %v808
        %v1180 = vunpack.c.h.b16 %v808
        %v1181 = vunpack.c.l.b16 %v809
        %v1182 = vunpack.c.h.b16 %v809
        %v1183 = vunpack.c.l.b16 %v810
        %v1184 = vunpack.c.h.b16 %v810
        %v1185 = vunpack.c.l.b16 %v811
        %v1186 = vunpack.c.h.b16 %v811
        %v1187 = vunpack.c.l.b16 %v812
        %v1188 = vunpack.c.h.b16 %v812
        %v1189 = vunpack.c.l.b16 %v813
        %v1190 = vunpack.c.h.b16 %v813
        %v1191 = vunpack.c.l.b16 %v814
        %v1192 = vunpack.c.h.b16 %v814
        %v1193 = vunpack.c.l.b16 %v815
        %v1194 = vunpack.c.h.b16 %v815
        %v1195 = vunpack.c.l.b16 %v816
        %v1196 = vunpack.c.h.b16 %v816
        %v1197 = vunpack.c.l.b16 %v817
        %v1198 = vunpack.c.h.b16 %v817
        %v1199 = vunpack.c.l.b16 %v818
        %v1200 = vunpack.c.h.b16 %v818
        %v1201 = vunpack.c.l.b16 %v819
        %v1202 = vunpack.c.h.b16 %v819
        %v1203 = vunpack.c.l.b16 %v820
        %v1204 = vunpack.c.h.b16 %v820
        %v1205 = vunpack.c.l.b16 %v821
        %v1206 = vunpack.c.h.b16 %v821
        %v1207 = vunpack.c.l.b16 %v822
        %v1208 = vunpack.c.h.b16 %v822
        %v1209 = vunpack.c.l.b16 %v823
        %v1210 = vunpack.c.h.b16 %v823
        %v1211 = vunpack.c.l.b16 %v824
        %v1212 = vunpack.c.h.b16 %v824
        %v1213 = vunpack.c.l.b16 %v825
        %v1214 = vunpack.c.h.b16 %v825
        %v1215 = vunpack.c.l.b16 %v826
        %v1216 = vunpack.c.h.b16 %v826
        %v1217 = vunpack.c.l.b16 %v827
        %v1218 = vunpack.c.h.b16 %v827
        %v1219 = vunpack.c.l.b16 %v828
        %v1220 = vunpack.c.h.b16 %v828
        %v1221 = vunpack.c.l.b16 %v829
        %v1222 = vunpack.c.h.b16 %v829
        %v1223 = vunpack.c.l.b16 %v830
        %v1224 = vunpack.c.h.b16 %v830
        %v1225 = vunpack.c.l.b16 %v831
        %v1226 = vunpack.c.h.b16 %v831
        %v1227 = vunpack.c.l.b16 %v832
        %v1228 = vunpack.c.h.b16 %v832
        %v1229 = vunpack.c.l.b16 %v833
        %v1230 = vunpack.c.h.b16 %v833
        %v1231 = vunpack.c.l.b16 %v834
        %v1232 = vunpack.c.h.b16 %v834
        %v1233 = vunpack.c.l.b16 %v835
        %v1234 = vunpack.c.h.b16 %v835
        %v1235 = vunpack.c.l.b16 %v836
        %v1236 = vunpack.c.h.b16 %v836
        %v1237 = vunpack.c.l.b16 %v837
        %v1238 = vunpack.c.h.b16 %v837
        %v1239 = vunpack.c.l.b16 %v838
        %v1240 = vunpack.c.h.b16 %v838
        %v1241 = vunpack.c.l.b16 %v839
        %v1242 = vunpack.c.h.b16 %v839
        %v1243 = vunpack.c.l.b16 %v840
        %v1244 = vunpack.c.h.b16 %v840
        %v1245 = vunpack.c.l.b16 %v841
        %v1246 = vunpack.c.h.b16 %v841
        %v1247 = vunpack.c.l.b16 %v842
        %v1248 = vunpack.c.h.b16 %v842
        %v1249 = vunpack.c.l.b16 %v843
        %v1250 = vunpack.c.h.b16 %v843
        %v1251 = vunpack.c.l.b16 %v844
        %v1252 = vunpack.c.h.b16 %v844
        %v1253 = vunpack.c.l.b16 %v845
        %v1254 = vunpack.c.h.b16 %v845
        %v1255 = vunpack.c.l.b16 %v846
        %v1256 = vunpack.c.h.b16 %v846
        %v1257 = vunpack.c.l.b16 %v847
        %v1258 = vunpack.c.h.b16 %v847
        %v1259 = vunpack.c.l.b16 %v848
        %v1260 = vunpack.c.h.b16 %v848
        %v1261 = vunpack.c.l.b16 %v849
        %v1262 = vunpack.c.h.b16 %v849
        %v1263 = vunpack.c.l.b16 %v850
        %v1264 = vunpack.c.h.b16 %v850
        %v1265 = vunpack.c.l.b16 %v851
        %v1266 = vunpack.c.h.b16 %v851
        %v1267 = vunpack.c.l.b16 %v852
        %v1268 = vunpack.c.h.b16 %v852
        %v1269 = vunpack.c.l.b16 %v853
        %v1270 = vunpack.c.h.b16 %v853
        %v1271 = vunpack.c.l.b16 %v854
        %v1272 = vunpack.c.h.b16 %v854
        %v1273 = vunpack.c.l.b16 %v855
        %v1274 = vunpack.c.h.b16 %v855
        %v1275 = vunpack.c.l.b16 %v856
        %v1276 = vunpack.c.h.b16 %v856
        %v1277 = vunpack.c.l.b16 %v857
        %v1278 = vunpack.c.h.b16 %v857
        %v1279 = vunpack.c.l.b16 %v858
        %v1280 = vunpack.c.h.b16 %v858
        %v1281 = vunpack.c.l.b16 %v859
        %v1282 = vunpack.c.h.b16 %v859
        %v1283 = vunpack.c.l.b16 %v860
        %v1284 = vunpack.c.h.b16 %v860
        %v1285 = vunpack.c.l.b16 %v861
        %v1286 = vunpack.c.h.b16 %v861
        %v1287 = vunpack.c.l.b16 %v862
        %v1288 = vunpack.c.h.b16 %v862
        %v1289 = vunpack.c.l.b16 %v863
        %v1290 = vunpack.c.h.b16 %v863
        %v1291 = vunpack.c.l.b16 %v864
        %v1292 = vunpack.c.h.b16 %v864
        %v1293 = vunpack.c.l.b16 %v865
        %v1294 = vunpack.c.h.b16 %v865
        %v1295 = vunpack.c.l.b16 %v866
        %v1296 = vunpack.c.h.b16 %v866
        %v1297 = vunpack.c.l.b16 %v867
        %v1298 = vunpack.c.h.b16 %v867
        %v1299 = vunpack.c.l.b16 %v868
        %v1300 = vunpack.c.h.b16 %v868
        %v1301 = vunpack.c.l.b16 %v869
        %v1302 = vunpack.c.h.b16 %v869
        %v1303 = vunpack.c.l.b16 %v870
        %v1304 = vunpack.c.h.b16 %v870
        %v1305 = vunpack.c.l.b16 %v871
        %v1306 = vunpack.c.h.b16 %v871
        %v1307 = vunpack.c.l.b16 %v872
        %v1308 = vunpack.c.h.b16 %v872
        %v1309 = vunpack.c.l.b16 %v873
        %v1310 = vunpack.c.h.b16 %v873
        %v1311 = vunpack.c.l.b16 %v874
        %v1312 = vunpack.c.h.b16 %v874
        %v1313 = vunpack.c.l.b16 %v875
        %v1314 = vunpack.c.h.b16 %v875
        %v1315 = vunpack.c.l.b16 %v876
        %v1316 = vunpack.c.h.b16 %v876
        %v1317 = vunpack.c.l.b16 %v877
        %v1318 = vunpack.c.h.b16 %v877
        %v1319 = vunpack.c.l.b16 %v878
        %v1320 = vunpack.c.h.b16 %v878
        %v1321 = vunpack.c.l.b16 %v879
        %v1322 = vunpack.c.h.b16 %v879
        %v1323 = vunpack.c.l.b16 %v880
        %v1324 = vunpack.c.h.b16 %v880
        %v1325 = vunpack.c.l.b16 %v881
        %v1326 = vunpack.c.h.b16 %v881
        %v1327 = vunpack.c.l.b16 %v882
        %v1328 = vunpack.c.h.b16 %v882
        %v1329 = vunpack.c.l.b16 %v883
        %v1330 = vunpack.c.h.b16 %v883
        %v1331 = vunpack.c.l.b16 %v884
        %v1332 = vunpack.c.h.b16 %v884
        %v1333 = vunpack.c.l.b16 %v885
        %v1334 = vunpack.c.h.b16 %v885
        %v1335 = vunpack.c.l.b16 %v886
        %v1336 = vunpack.c.h.b16 %v886
        %v1337 = vunpack.c.l.b16 %v887
        %v1338 = vunpack.c.h.b16 %v887
        %v1339 = vunpack.c.l.b16 %v888
        %v1340 = vunpack.c.h.b16 %v888
        %v1341 = vunpack.c.l.b16 %v889
        %v1342 = vunpack.c.h.b16 %v889
        %v1343 = vunpack.c.l.b16 %v890
        %v1344 = vunpack.c.h.b16 %v890
        %v1345 = vunpack.c.l.b16 %v891
        %v1346 = vunpack.c.h.b16 %v891
        %v1347 = vunpack.c.l.b16 %v892
        %v1348 = vunpack.c.h.b16 %v892
        %v1349 = vunpack.c.l.b16 %v893
        %v1350 = vunpack.c.h.b16 %v893
        %v1351 = vunpack.c.l.b16 %v894
        %v1352 = vunpack.c.h.b16 %v894
        %v1353 = vunpack.c.l.b16 %v895
        %v1354 = vunpack.c.h.b16 %v895
        %v1355 = vunpack.c.l.b16 %v896
        %v1356 = vunpack.c.h.b16 %v896
        %v1357 = vunpack.c.l.b16 %v897
        %v1358 = vunpack.c.h.b16 %v897
        %v1359 = vunpack.c.l.b16 %v898
        %v1360 = vunpack.c.h.b16 %v898
        %v1361 = vunpack.c.l.b16 %v899
        %v1362 = vunpack.c.h.b16 %v899
        %v1363 = vunpack.c.l.b16 %v900
        %v1364 = vunpack.c.h.b16 %v900
        %v1365 = vunpack.c.l.b16 %v901
        %v1366 = vunpack.c.h.b16 %v901
        %v1367 = vunpack.c.l.b16 %v902
        %v1368 = vunpack.c.h.b16 %v902
        %v1369 = vunpack.c.l.b16 %v903
        %v1370 = vunpack.c.h.b16 %v903
        %v1371 = vunpack.c.l.b16 %v904
        %v1372 = vunpack.c.h.b16 %v904
        %v1373 = vunpack.c.l.b16 %v905
        %v1374 = vunpack.c.h.b16 %v905
        %v1375 = vunpack.c.l.b16 %v906
        %v1376 = vunpack.c.h.b16 %v906
        %v1377 = vunpack.c.l.b16 %v907
        %v1378 = vunpack.c.h.b16 %v907
        %v1379 = vunpack.c.l.b16 %v908
        %v1380 = vunpack.c.h.b16 %v908
        %v1381 = vunpack.c.l.b16 %v909
        %v1382 = vunpack.c.h.b16 %v909
        %v1383 = vunpack.c.l.b16 %v910
        %v1384 = vunpack.c.h.b16 %v910
        %v1385 = vunpack.c.l.b16 %v911
        %v1386 = vunpack.c.h.b16 %v911
        %v1387 = vunpack.c.l.b16 %v912
        %v1388 = vunpack.c.h.b16 %v912
        %v1389 = vpack.c.b16 %v1135, %v1133
        %v1390 = vpack.c.b16 %v1136, %v1134
        %v1391 = vpack.c.b16 %v1139, %v1137
        %v1392 = vpack.c.b16 %v1140, %v1138
        %v1393 = vpack.c.b16 %v1143, %v1141
        %v1394 = vpack.c.b16 %v1144, %v1142
        %v1395 = vpack.c.b16 %v1147, %v1145
        %v1396 = vpack.c.b16 %v1148, %v1146
        %v1397 = vpack.c.b16 %v1151, %v1149
        %v1398 = vpack.c.b16 %v1152, %v1150
        %v1399 = vpack.c.b16 %v1155, %v1153
        %v1400 = vpack.c.b16 %v1156, %v1154
        %v1401 = vpack.c.b16 %v1159, %v1157
        %v1402 = vpack.c.b16 %v1160, %v1158
        %v1403 = vpack.c.b16 %v1163, %v1161
        %v1404 = vpack.c.b16 %v1164, %v1162
        %v1405 = vpack.c.b16 %v1167, %v1165
        %v1406 = vpack.c.b16 %v1168, %v1166
        %v1407 = vpack.c.b16 %v1171, %v1169
        %v1408 = vpack.c.b16 %v1172, %v1170
        %v1409 = vpack.c.b16 %v1175, %v1173
        %v1410 = vpack.c.b16 %v1176, %v1174
        %v1411 = vpack.c.b16 %v1179, %v1177
        %v1412 = vpack.c.b16 %v1180, %v1178
        %v1413 = vpack.c.b16 %v1183, %v1181
        %v1414 = vpack.c.b16 %v1184, %v1182
        %v1415 = vpack.c.b16 %v1187, %v1185
        %v1416 = vpack.c.b16 %v1188, %v1186
        %v1417 = vpack.c.b16 %v1191, %v1189
        %v1418 = vpack.c.b16 %v1192, %v1190
        %v1419 = vpack.c.b16 %v1195, %v1193
        %v1420 = vpack.c.b16 %v1196, %v1194
        %v1421 = vpack.c.b16 %v1199, %v1197
        %v1422 = vpack.c.b16 %v1200, %v1198
        %v1423 = vpack.c.b16 %v1203, %v1201
        %v1424 = vpack.c.b16 %v1204, %v1202
        %v1425 = vpack.c.b16 %v1207, %v1205
        %v1426 = vpack.c.b16 %v1208, %v1206
        %v1427 = vpack.c.b16 %v1211, %v1209
        %v1428 = vpack.c.b16 %v1212, %v1210
        %v1429 = vpack.c.b16 %v1215, %v1213
        %v1430 = vpack.c.b16 %v1216, %v1214
        %v1431 = vpack.c.b16 %v1219, %v1217
        %v1432 = vpack.c.b16 %v1220, %v1218
        %v1433 = vpack.c.b16 %v1223, %v1221
        %v1434 = vpack.c.b16 %v1224, %v1222
        %v1435 = vpack.c.b16 %v1227, %v1225
        %v1436 = vpack.c.b16 %v1228, %v1226
        %v1437 = vpack.c.b16 %v1231, %v1229
        %v1438 = vpack.c.b16 %v1232, %v1230
        %v1439 = vpack.c.b16 %v1235, %v1233
        %v1440 = vpack.c.b16 %v1236, %v1234
        %v1441 = vpack.c.b16 %v1239, %v1237
        %v1442 = vpack.c.b16 %v1240, %v1238
        %v1443 = vpack.c.b16 %v1243, %v1241
        %v1444 = vpack.c.b16 %v1244, %v1242
        %v1445 = vpack.c.b16 %v1247, %v1245
        %v1446 = vpack.c.b16 %v1248, %v1246
        %v1447 = vpack.c.b16 %v1251, %v1249
        %v1448 = vpack.c.b16 %v1252, %v1250
        %v1449 = vpack.c.b16 %v1255, %v1253
        %v1450 = vpack.c.b16 %v1256, %v1254
        %v1451 = vpack.c.b16 %v1259, %v1257
        %v1452 = vpack.c.b16 %v1260, %v1258
        %v1453 = vpack.c.b16 %v1263, %v1261
        %v1454 = vpack.c.b16 %v1264, %v1262
        %v1455 = vpack.c.b16 %v1267, %v1265
        %v1456 = vpack.c.b16 %v1268, %v1266
        %v1457 = vpack.c.b16 %v1271, %v1269
        %v1458 = vpack.c.b16 %v1272, %v1270
        %v1459 = vpack.c.b16 %v1275, %v1273
        %v1460 = vpack.c.b16 %v1276, %v1274
        %v1461 = vpack.c.b16 %v1279, %v1277
        %v1462 = vpack.c.b16 %v1280, %v1278
        %v1463 = vpack.c.b16 %v1283, %v1281
        %v1464 = vpack.c.b16 %v1284, %v1282
        %v1465 = vpack.c.b16 %v1287, %v1285
        %v1466 = vpack.c.b16 %v1288, %v1286
        %v1467 = vpack.c.b16 %v1291, %v1289
        %v1468 = vpack.c.b16 %v1292, %v1290
        %v1469 = vpack.c.b16 %v1295, %v1293
        %v1470 = vpack.c.b16 %v1296, %v1294
        %v1471 = vpack.c.b16 %v1299, %v1297
        %v1472 = vpack.c.b16 %v1300, %v1298
        %v1473 = vpack.c.b16 %v1303, %v1301
        %v1474 = vpack.c.b16 %v1304, %v1302
        %v1475 = vpack.c.b16 %v1307, %v1305
        %v1476 = vpack.c.b16 %v1308, %v1306
        %v1477 = vpack.c.b16 %v1311, %v1309
        %v1478 = vpack.c.b16 %v1312, %v1310
        %v1479 = vpack.c.b16 %v1315, %v1313
        %v1480 = vpack.c.b16 %v1316, %v1314
        %v1481 = vpack.c.b16 %v1319, %v1317
        %v1482 = vpack.c.b16 %v1320, %v1318
        %v1483 = vpack.c.b16 %v1323, %v1321
        %v1484 = vpack.c.b16 %v1324, %v1322
        %v1485 = vpack.c.b16 %v1327, %v1325
        %v1486 = vpack.c.b16 %v1328, %v1326
        %v1487 = vpack.c.b16 %v1331, %v1329
        %v1488 = vpack.c.b16 %v1332, %v1330
        %v1489 = vpack.c.b16 %v1335, %v1333
        %v1490 = vpack.c.b16 %v1336, %v1334
        %v1491 = vpack.c.b16 %v1339, %v1337
        %v1492 = vpack.c.b16 %v1340, %v1338
        %v1493 = vpack.c.b16 %v1343, %v1341
        %v1494 = vpack.c.b16 %v1344, %v1342
        %v1495 = vpack.c.b16 %v1347, %v1345
        %v1496 = vpack.c.b16 %v1348, %v1346
        %v1497 = vpack.c.b16 %v1351, %v1349
        %v1498 = vpack.c.b16 %v1352, %v1350
        %v1499 = vpack.c.b16 %v1355, %v1353
        %v1500 = vpack.c.b16 %v1356, %v1354
        %v1501 = vpack.c.b16 %v1359, %v1357
        %v1502 = vpack.c.b16 %v1360, %v1358
        %v1503 = vpack.c.b16 %v1363, %v1361
        %v1504 = vpack.c.b16 %v1364, %v1362
        %v1505 = vpack.c.b16 %v1367, %v1365
        %v1506 = vpack.c.b16 %v1368, %v1366
        %v1507 = vpack.c.b16 %v1371, %v1369
        %v1508 = vpack.c.b16 %v1372, %v1370
        %v1509 = vpack.c.b16 %v1375, %v1373
        %v1510 = vpack.c.b16 %v1376, %v1374
        %v1511 = vpack.c.b16 %v1379, %v1377
        %v1512 = vpack.c.b16 %v1380, %v1378
        %v1513 = vpack.c.b16 %v1383, %v1381
        %v1514 = vpack.c.b16 %v1384, %v1382
        %v1515 = vpack.c.b16 %v1387, %v1385
        %v1516 = vpack.c.b16 %v1388, %v1386
        %1645 = vmatprep.subr.bf16.mxu0 %v1390
        %1646 = vmatpush1.bf16.msra.mxu0 %v1389
        %1647 = vmatprep.subr.bf16.mxu0 %v1392
        %1648 = vmatpush1.bf16.msra.mxu0 %v1391
        %1649 = vmatprep.subr.bf16.mxu0 %v1394
        %1650 = vmatpush1.bf16.msra.mxu0 %v1393
        %1651 = vmatprep.subr.bf16.mxu0 %v1396
        %1652 = vmatpush1.bf16.msra.mxu0 %v1395
        %1653 = vmatprep.subr.bf16.mxu0 %v1398
        %1654 = vmatpush1.bf16.msra.mxu0 %v1397
        %1655 = vmatprep.subr.bf16.mxu0 %v1400
        %1656 = vmatpush1.bf16.msra.mxu0 %v1399
        %1657 = vmatprep.subr.bf16.mxu0 %v1402
        %1658 = vmatpush1.bf16.msra.mxu0 %v1401
        %1659 = vmatprep.subr.bf16.mxu0 %v1404
        %1660 = vmatpush1.bf16.msra.mxu0 %v1403
        %1661 = vmatprep.subr.bf16.mxu0 %v1406
        %1662 = vmatpush1.bf16.msra.mxu0 %v1405
        %1663 = vmatprep.subr.bf16.mxu0 %v1408
        %1664 = vmatpush1.bf16.msra.mxu0 %v1407
        %1665 = vmatprep.subr.bf16.mxu0 %v1410
        %1666 = vmatpush1.bf16.msra.mxu0 %v1409
        %1667 = vmatprep.subr.bf16.mxu0 %v1412
        %1668 = vmatpush1.bf16.msra.mxu0 %v1411
        %1669 = vmatprep.subr.bf16.mxu0 %v1414
        %1670 = vmatpush1.bf16.msra.mxu0 %v1413
        %1671 = vmatprep.subr.bf16.mxu0 %v1416
        %1672 = vmatpush1.bf16.msra.mxu0 %v1415
        %1673 = vmatprep.subr.bf16.mxu0 %v1418
        %1674 = vmatpush1.bf16.msra.mxu0 %v1417
        %1675 = vmatprep.subr.bf16.mxu0 %v1420
        %1676 = vmatpush1.bf16.msra.mxu0 %v1419
        %1677 = vmatprep.mubr.bf16.mxu0 %v974
        %1678 = vmatmul.mubr.bf16.gmra.mrb[0].mxu0 %v973
        %v1679 = vpop.f32.mrb[0].mxu0
        %v1680 = vadd.f32 %v918, %v1679
        %v1681 = vpop.f32.mrb[0].mxu0
        %v1682 = vadd.f32 %v922, %v1681
        %v1683 = vpop.f32.mrb[0].mxu0
        %v1684 = vadd.f32 %v918, %v1683
        %v1685 = vpop.f32.mrb[0].mxu0
        %v1686 = vadd.f32 %v922, %v1685
        %1687 = vmatprep.mubr.bf16.mxu0 %v982
        %1688 = vmatmul.mubr.bf16.gmra.mrb[0].mxu0 %v981
        %v1689 = vpop.f32.mrb[0].mxu0
        %v1690 = vadd.f32 %v918, %v1689
        %v1691 = vpop.f32.mrb[0].mxu0
        %v1692 = vadd.f32 %v922, %v1691
        %v1693 = vpop.f32.mrb[0].mxu0
        %v1694 = vadd.f32 %v918, %v1693
        %v1695 = vpop.f32.mrb[0].mxu0
        %v1696 = vadd.f32 %v922, %v1695
        %1697 = vdwg.mxu0
        %1698 = vmatprep.subr.bf16.mxu0 %v1422
        %1699 = vmatpush1.bf16.msra.mxu0 %v1421
        %1700 = vmatprep.subr.bf16.mxu0 %v1424
        %1701 = vmatpush1.bf16.msra.mxu0 %v1423
        %1702 = vmatprep.subr.bf16.mxu0 %v1426
        %1703 = vmatpush1.bf16.msra.mxu0 %v1425
        %1704 = vmatprep.subr.bf16.mxu0 %v1428
        %1705 = vmatpush1.bf16.msra.mxu0 %v1427
        %1706 = vmatprep.subr.bf16.mxu0 %v1430
        %1707 = vmatpush1.bf16.msra.mxu0 %v1429
        %1708 = vmatprep.subr.bf16.mxu0 %v1432
        %1709 = vmatpush1.bf16.msra.mxu0 %v1431
        %1710 = vmatprep.subr.bf16.mxu0 %v1434
        %1711 = vmatpush1.bf16.msra.mxu0 %v1433
        %1712 = vmatprep.subr.bf16.mxu0 %v1436
        %1713 = vmatpush1.bf16.msra.mxu0 %v1435
        %1714 = vmatprep.subr.bf16.mxu0 %v1438
        %1715 = vmatpush1.bf16.msra.mxu0 %v1437
        %1716 = vmatprep.subr.bf16.mxu0 %v1440
        %1717 = vmatpush1.bf16.msra.mxu0 %v1439
        %1718 = vmatprep.subr.bf16.mxu0 %v1442
        %1719 = vmatpush1.bf16.msra.mxu0 %v1441
        %1720 = vmatprep.subr.bf16.mxu0 %v1444
        %1721 = vmatpush1.bf16.msra.mxu0 %v1443
        %1722 = vmatprep.subr.bf16.mxu0 %v1446
        %1723 = vmatpush1.bf16.msra.mxu0 %v1445
        %1724 = vmatprep.subr.bf16.mxu0 %v1448
        %1725 = vmatpush1.bf16.msra.mxu0 %v1447
        %1726 = vmatprep.subr.bf16.mxu0 %v1450
        %1727 = vmatpush1.bf16.msra.mxu0 %v1449
        %1728 = vmatprep.subr.bf16.mxu0 %v1452
        %1729 = vmatpush1.bf16.msra.mxu0 %v1451
        %1730 = vmatprep.mubr.bf16.mxu0 %v976
        %1731 = vmatmul.mubr.bf16.gmra.mrb[0].mxu0 %v975
        %v1732 = vpop.f32.mrb[0].mxu0
        %v1733 = vadd.f32 %v1680, %v1732
        %v1734 = vpop.f32.mrb[0].mxu0
        %v1735 = vadd.f32 %v1682, %v1734
        %v1736 = vpop.f32.mrb[0].mxu0
        %v1737 = vadd.f32 %v1684, %v1736
        %v1738 = vpop.f32.mrb[0].mxu0
        %v1739 = vadd.f32 %v1686, %v1738
        %1740 = vmatprep.mubr.bf16.mxu0 %v984
        %1741 = vmatmul.mubr.bf16.gmra.mrb[0].mxu0 %v983
        %v1742 = vpop.f32.mrb[0].mxu0
        %v1743 = vadd.f32 %v1690, %v1742
        %v1744 = vpop.f32.mrb[0].mxu0
        %v1745 = vadd.f32 %v1692, %v1744
        %v1746 = vpop.f32.mrb[0].mxu0
        %v1747 = vadd.f32 %v1694, %v1746
        %v1748 = vpop.f32.mrb[0].mxu0
        %v1749 = vadd.f32 %v1696, %v1748
        %1750 = vdwg.mxu0
        %1751 = vmatprep.subr.bf16.mxu0 %v1454
        %1752 = vmatpush1.bf16.msra.mxu0 %v1453
        %1753 = vmatprep.subr.bf16.mxu0 %v1456
        %1754 = vmatpush1.bf16.msra.mxu0 %v1455
        %1755 = vmatprep.subr.bf16.mxu0 %v1458
        %1756 = vmatpush1.bf16.msra.mxu0 %v1457
        %1757 = vmatprep.subr.bf16.mxu0 %v1460
        %1758 = vmatpush1.bf16.msra.mxu0 %v1459
        %1759 = vmatprep.subr.bf16.mxu0 %v1462
        %1760 = vmatpush1.bf16.msra.mxu0 %v1461
        %1761 = vmatprep.subr.bf16.mxu0 %v1464
        %1762 = vmatpush1.bf16.msra.mxu0 %v1463
        %1763 = vmatprep.subr.bf16.mxu0 %v1466
        %1764 = vmatpush1.bf16.msra.mxu0 %v1465
        %1765 = vmatprep.subr.bf16.mxu0 %v1468
        %1766 = vmatpush1.bf16.msra.mxu0 %v1467
        %1767 = vmatprep.subr.bf16.mxu0 %v1470
        %1768 = vmatpush1.bf16.msra.mxu0 %v1469
        %1769 = vmatprep.subr.bf16.mxu0 %v1472
        %1770 = vmatpush1.bf16.msra.mxu0 %v1471
        %1771 = vmatprep.subr.bf16.mxu0 %v1474
        %1772 = vmatpush1.bf16.msra.mxu0 %v1473
        %1773 = vmatprep.subr.bf16.mxu0 %v1476
        %1774 = vmatpush1.bf16.msra.mxu0 %v1475
        %1775 = vmatprep.subr.bf16.mxu0 %v1478
        %1776 = vmatpush1.bf16.msra.mxu0 %v1477
        %1777 = vmatprep.subr.bf16.mxu0 %v1480
        %1778 = vmatpush1.bf16.msra.mxu0 %v1479
        %1779 = vmatprep.subr.bf16.mxu0 %v1482
        %1780 = vmatpush1.bf16.msra.mxu0 %v1481
        %1781 = vmatprep.subr.bf16.mxu0 %v1484
        %1782 = vmatpush1.bf16.msra.mxu0 %v1483
        %1783 = vmatprep.mubr.bf16.mxu0 %v978
        %1784 = vmatmul.mubr.bf16.gmra.mrb[0].mxu0 %v977
        %v1785 = vpop.f32.mrb[0].mxu0
        %v1786 = vadd.f32 %v1733, %v1785
        %v1787 = vpop.f32.mrb[0].mxu0
        %v1788 = vadd.f32 %v1735, %v1787
        %v1789 = vpop.f32.mrb[0].mxu0
        %v1790 = vadd.f32 %v1737, %v1789
        %v1791 = vpop.f32.mrb[0].mxu0
        %v1792 = vadd.f32 %v1739, %v1791
        %1793 = vmatprep.mubr.bf16.mxu0 %v986
        %1794 = vmatmul.mubr.bf16.gmra.mrb[0].mxu0 %v985
        %v1795 = vpop.f32.mrb[0].mxu0
        %v1796 = vadd.f32 %v1743, %v1795
        %v1797 = vpop.f32.mrb[0].mxu0
        %v1798 = vadd.f32 %v1745, %v1797
        %v1799 = vpop.f32.mrb[0].mxu0
        %v1800 = vadd.f32 %v1747, %v1799
        %v1801 = vpop.f32.mrb[0].mxu0
        %v1802 = vadd.f32 %v1749, %v1801
        %1803 = vdwg.mxu0
        %1804 = vmatprep.subr.bf16.mxu0 %v1486
        %1805 = vmatpush1.bf16.msra.mxu0 %v1485
        %1806 = vmatprep.subr.bf16.mxu0 %v1488
        %1807 = vmatpush1.bf16.msra.mxu0 %v1487
        %1808 = vmatprep.subr.bf16.mxu0 %v1490
        %1809 = vmatpush1.bf16.msra.mxu0 %v1489
        %1810 = vmatprep.subr.bf16.mxu0 %v1492
        %1811 = vmatpush1.bf16.msra.mxu0 %v1491
        %1812 = vmatprep.subr.bf16.mxu0 %v1494
        %1813 = vmatpush1.bf16.msra.mxu0 %v1493
        %1814 = vmatprep.subr.bf16.mxu0 %v1496
        %1815 = vmatpush1.bf16.msra.mxu0 %v1495
        %1816 = vmatprep.subr.bf16.mxu0 %v1498
        %1817 = vmatpush1.bf16.msra.mxu0 %v1497
        %1818 = vmatprep.subr.bf16.mxu0 %v1500
        %1819 = vmatpush1.bf16.msra.mxu0 %v1499
        %1820 = vmatprep.subr.bf16.mxu0 %v1502
        %1821 = vmatpush1.bf16.msra.mxu0 %v1501
        %1822 = vmatprep.subr.bf16.mxu0 %v1504
        %1823 = vmatpush1.bf16.msra.mxu0 %v1503
        %1824 = vmatprep.subr.bf16.mxu0 %v1506
        %1825 = vmatpush1.bf16.msra.mxu0 %v1505
        %1826 = vmatprep.subr.bf16.mxu0 %v1508
        %1827 = vmatpush1.bf16.msra.mxu0 %v1507
        %1828 = vmatprep.subr.bf16.mxu0 %v1510
        %1829 = vmatpush1.bf16.msra.mxu0 %v1509
        %1830 = vmatprep.subr.bf16.mxu0 %v1512
        %1831 = vmatpush1.bf16.msra.mxu0 %v1511
        %1832 = vmatprep.subr.bf16.mxu0 %v1514
        %1833 = vmatpush1.bf16.msra.mxu0 %v1513
        %1834 = vmatprep.subr.bf16.mxu0 %v1516
        %1835 = vmatpush1.bf16.msra.mxu0 %v1515
        %1836 = vmatprep.mubr.bf16.mxu0 %v980
        %1837 = vmatmul.mubr.bf16.gmra.mrb[0].mxu0 %v979
        %v1838 = vpop.f32.mrb[0].mxu0
        %v1839 = vadd.f32 %v1786, %v1838
        %v1840 = vpop.f32.mrb[0].mxu0
        %v1841 = vadd.f32 %v1788, %v1840
        %v1842 = vpop.f32.mrb[0].mxu0
        %v1843 = vadd.f32 %v1790, %v1842
        %v1844 = vpop.f32.mrb[0].mxu0
        %v1845 = vadd.f32 %v1792, %v1844
        %1846 = vmatprep.mubr.bf16.mxu0 %v988
        %1847 = vmatmul.mubr.bf16.gmra.mrb[0].mxu0 %v987
        %v1848 = vpop.f32.mrb[0].mxu0
        %v1849 = vadd.f32 %v1796, %v1848
        %v1850 = vpop.f32.mrb[0].mxu0
        %v1851 = vadd.f32 %v1798, %v1850
        %v1852 = vpop.f32.mrb[0].mxu0
        %v1853 = vadd.f32 %v1800, %v1852
        %v1854 = vpop.f32.mrb[0].mxu0
        %v1855 = vadd.f32 %v1802, %v1854
        %1856 = vdwg.mxu0
        %v1857 = vmax.f32 %v1839, 0.0
        %v1858 = vmax.f32 %v1841, 0.0
        %v1859 = vmax.f32 %v1843, 0.0
        %v1860 = vmax.f32 %v1845, 0.0
        %v1861 = vmax.f32 %v1849, 0.0
        %v1862 = vmax.f32 %v1851, 0.0
        %v1863 = vmax.f32 %v1853, 0.0
        %v1864 = vmax.f32 %v1855, 0.0
        %v1865 = vpack.c.bf16 %v1859, %v1857
        %v1866 = vpack.c.bf16 %v1860, %v1858
        %v1867 = vpack.c.bf16 %v1863, %v1861
        %v1868 = vpack.c.bf16 %v1864, %v1862
        %v1873 = vunpack.c.l.b16 %v1865
        %v1874 = vunpack.c.l.b16 %v1866
        %v1875 = vunpack.c.h.b16 %v1865
        %v1876 = vunpack.c.h.b16 %v1866
        %v1877 = vunpack.c.l.b16 %v1867
        %v1878 = vunpack.c.l.b16 %v1868
        %v1879 = vunpack.c.h.b16 %v1867
        %v1880 = vunpack.c.h.b16 %v1868
        %v1881 = vpack.c.b16 %v1874, %v1873
        %v1882 = vpack.c.b16 %v1876, %v1875
        %v1883 = vpack.c.b16 %v1878, %v1877
        %v1884 = vpack.c.b16 %v1880, %v1879
        %1889 = vst [vmem:[%s753] sm:$0xff] %v1881
        %1890 = vst [vmem:[%s753 + $0x8] sm:$0xff] %v1882
        %1891 = vst [vmem:[%s753 + $0x10] sm:$0xff] %v1883
        %1892 = vst [vmem:[%s753 + $0x18] sm:$0xff] %v1884
        %s1893 = sand.u32 %s114, 1
        %s1894 = sand.u32 %s114, 1
        %s1895 = smul.addr %s1894, 32
        %s1896 = scalar_lea.vmem [#allocation3], %s1895
        // Predicated region
        $region71: #{_init_step.6} parent=65 // pred_check
          %p1897 = pneg %p124
        $region72: #{_init_step.6} parent=65 // pred_check_branch
          %1899 = sbr.rel (%p1897) target = $region74
        $region73: #{_init_step.6} parent=65 // pred_region
          %s1900 = smul.u32 4, %s18
          %s1901 = smul.u32 2, %s19
          %s1902 = smul.addr %s1900, 4
          %s1903 = sadd.s32 %s1901, %s1902
          %s1904 = smul.addr %s1903, 4
          %s1905 = scalar_lea.vmem %s3, %s1904
          // Predicated region
          $region75: #{_init_step.6} parent=73 // pred_check
            _
          $region76: #{_init_step.6} parent=73 // pred_check_branch
            %1907 = sbr.rel (0) target = $region78
          $region77: #{_init_step.6} parent=73 // pred_region
            // Predicated region
            $region79: #{_init_step.6} parent=77 // pred_check
              _
            $region80: #{_init_step.6} parent=77 // pred_check_branch
              %1909 = sbr.rel (0) target = $region82
            $region81: #{_init_step.6} parent=77 // pred_region
              // Predicated region
              $region94: #{_init_step.6} parent=81 // pred_check
                _
              $region95: #{_init_step.6} parent=81 // pred_check_branch
                %1930 = sbr.rel (0) target = $region97
              $region96: #{_init_step.6} parent=81 // pred_region
                loop: start=0, step=1, limit=1
                $region98: #{_init_step.6} parent=96 // loop_pre_header
                  _
                $region99: #{_init_step.6} parent=96 // loop_header
                  %s1932 = sphi 0, %s1936
                  %p1933 = scmp.ge.s32.totalorder %s1932, 1
                  %s1937 = sphi %s1896, %s1896
                  %s1938 = sphi %s1905, %s1905
                $region100: #{_init_step.6} parent=96 // loop_header_branch
                  %1935 = sbr.rel (%p1933) target = $region104
                $region101: #{_init_step.6} parent=96 // loop_body
                  %v1939 = vld [vmem:[%s1937] sm:$0xff]
                  %1940 = vst [vmem:[%s1938] sm:$0xff] %v1939
                  %v1941 = vld [vmem:[%s1937 + $0x8] sm:$0xff]
                  %1942 = vst [vmem:[%s1938 + $0x10] sm:$0xff] %v1941
                  %v1943 = vld [vmem:[%s1937 + $0x10] sm:$0xff]
                  %1944 = vst [vmem:[%s1938 + $0x20] sm:$0xff] %v1943
                  %v1945 = vld [vmem:[%s1937 + $0x18] sm:$0xff]
                  %1946 = vst [vmem:[%s1938 + $0x30] sm:$0xff] %v1945
                $region102: #{_init_step.6} parent=96 // loop_footer
                  %s1936 = sadd.s32 1, %s1932
                $region103: #{_init_step.6} parent=96 // loop_footer_branch
                  %1931 = sbr.rel target = $region99
                $region104: #{_init_step.6} parent=96 // loop_exit
                  _
              $region97: #{_init_step.6} parent=81 // pred_fallthru
                _
              // Predicated region
              $region105: #{_init_step.6} parent=81 // pred_check
                _
              $region106: #{_init_step.6} parent=81 // pred_check_branch
                %1948 = sbr.rel target = $region108
              $region107: #{_init_step.6} parent=81 // pred_region
                _
              $region108: #{_init_step.6} parent=81 // pred_fallthru
                _
            $region82: #{_init_step.6} parent=77 // pred_fallthru
              _
            // Predicated region
            $region83: #{_init_step.6} parent=77 // pred_check
              _
            $region84: #{_init_step.6} parent=77 // pred_check_branch
              %1911 = sbr.rel target = $region86
            $region85: #{_init_step.6} parent=77 // pred_region
              loop: start=0, step=1, limit=1
              $region87: #{_init_step.6} parent=85 // loop_pre_header
                _
              $region88: #{_init_step.6} parent=85 // loop_header
                %s1914 = sphi 0, %s1918
                %p1915 = scmp.ge.s32.totalorder %s1914, 1
                %s1919 = sphi %s1896, %s1896
                %s1920 = sphi %s1905, %s1905
              $region89: #{_init_step.6} parent=85 // loop_header_branch
                %1917 = sbr.rel (%p1915) target = $region93
              $region90: #{_init_step.6} parent=85 // loop_body
                %v1921 = vld [vmem:[%s1919] sm:$0xff]
                %1922 = vst [vmem:[%s1920] sm:$0xff] %v1921
                %v1923 = vld [vmem:[%s1919 + $0x8] sm:$0xff]
                %1924 = vst [vmem:[%s1920 + $0x10] sm:$0xff] %v1923
                %v1925 = vld [vmem:[%s1919 + $0x10] sm:$0xff]
                %1926 = vst [vmem:[%s1920 + $0x20] sm:$0xff] %v1925
                %v1927 = vld [vmem:[%s1919 + $0x18] sm:$0xff]
                %1928 = vst [vmem:[%s1920 + $0x30] sm:$0xff] %v1927
              $region91: #{_init_step.6} parent=85 // loop_footer
                %s1918 = sadd.s32 1, %s1914
              $region92: #{_init_step.6} parent=85 // loop_footer_branch
                %1913 = sbr.rel target = $region88
              $region93: #{_init_step.6} parent=85 // loop_exit
                _
            $region86: #{_init_step.6} parent=77 // pred_fallthru
              _
          $region78: #{_init_step.6} parent=73 // pred_fallthru
            _
          %1949 = vnop
        $region74: #{_init_step.6} parent=65 // pred_fallthru
          _
      $region66: #{_init_step.6} parent=5 // pred_fallthru
        _
      %p1950 = scmp.le.s32.totalorder 2, %s9
      // Predicated region
      $region109: #{_init_step.6} parent=5 // pred_check
        %p1951 = pneg %p1950
      $region110: #{_init_step.6} parent=5 // pred_check_branch
        %1953 = sbr.rel (%p1951) target = $region112
      $region111: #{_init_step.6} parent=5 // pred_region
        %s1954 = ssub.s32 %s9, 2
        // Predicated region
        $region113: #{_init_step.6} parent=111 // pred_check
          %p1955 = pneg %p130
        $region114: #{_init_step.6} parent=111 // pred_check_branch
          %1957 = sbr.rel (%p1955) target = $region116
        $region115: #{_init_step.6} parent=111 // pred_region
          %s1958 = sand.u32 %s115, 1
          %s1959 = sand.u32 %s115, 1
          %s1960 = smul.addr %s1959, 32
          %s1961 = scalar_lea.vmem [#allocation3], %s1960
        $region116: #{_init_step.6} parent=111 // pred_fallthru
          _
      $region112: #{_init_step.6} parent=5 // pred_fallthru
        _
    $region6: #{_init_step.6} parent=1 // loop_footer
      %s13 = sadd.s32 1, %s9
    $region7: #{_init_step.6} parent=1 // loop_footer_branch
      %8 = sbr.rel target = $region3
    $region8: #{_init_step.6} parent=1 // loop_exit
      _

// kernel: _init_step.7
$region0: #{_init_step.7}
  #allocation0 [shape = 'u32[]', space=smem, size = 0x4, offset = 0x4, fixed_abs, tag = 'smem constant byte address 0x4 - core index']
  #allocation1 [shape = 'u32[144,128]{1,0:T(1,128)}', space=vmem, size = 0x12000, scoped, tag = 'internal scratch']
  %s0 = inlined_call_operand.vmem [shape: bf16[8,2048], index: 0, kind: input, shape index: {}]
  %s1 = inlined_call_operand.vmem [shape: bf16[2048,1024], index: 1, kind: input, shape index: {}]
  %s2 = inlined_call_operand.vmem [shape: f32[1,1024], index: 2, kind: input, shape index: {}]
  %s3 = inlined_call_operand.vmem [shape: bf16[8,1024], index: 3, kind: output, shape index: {}]
  %s4 = sld [smem:[#allocation0]]
  $region83: #{_init_step.7} parent=0
    _
  %s6 = ssub.s32 1, %s4
  %s7 = scalar_select 0, %s6, %s4
  $region1: #{_init_step.7} parent=0
    #allocation2 [shape = 'u8[2097152]{0}', space=vmem, size = 0x200000, scoped, tag = 'input window, operand 1']
    loop: start=0, step=1, limit=6
    $region2: #{_init_step.7} parent=1 // loop_pre_header
      _
    $region3: #{_init_step.7} parent=1 // loop_header
      %s9 = sphi 0, %s13
      %p10 = scmp.ge.s32.totalorder %s9, 6
      %s16 = sphi 0, %s28
      %s17 = sphi 0, %s24
      %s18 = sphi 0, %s16
      %s19 = sphi 0, %s17
      %s20 = sphi 0, %s18
      %s21 = sphi 0, %s19
      %s31 = sphi 0, %s33
      %s34 = sphi 0, %s31
      %s35 = sphi 0, %s34
      %s51 = sphi 0, %s35
      %s57 = sphi 0, %s59
      %s60 = sphi 0, %s57
      %s61 = sphi 0, %s60
      %s77 = sphi 0, %s61
      %s83 = sphi 0, %s85
      %s86 = sphi 0, %s83
      %s87 = sphi 0, %s86
      %s103 = sphi 0, %s87
      %s111 = sphi 0, %s113
      %s114 = sphi 0, %s111
      %s115 = sphi 0, %s114
      %s131 = sphi 0, %s115
    $region4: #{_init_step.7} parent=1 // loop_header_branch
      %12 = sbr.rel (%p10) target = $region8
    $region5: #{_init_step.7} parent=1 // loop_body
      %s14 = ssub.s32 %s9, 1
      %s15 = ssub.s32 %s9, 2
      %s22 = sadd.s32 1, %s17
      %p23 = scmp.ge.s32.totalorder %s22, 4
      %s24 = scalar_select %p23, 0, %s22
      %s25 = sadd.s32 1, %s16
      %s26 = scalar_select %p23, %s25, %s16
      %p27 = scmp.ge.s32.totalorder %s26, 1
      %s28 = scalar_select %p27, 0, %s26
      %s29 = ssub.s32 %s16, %s28
      %p30 = scmp.eq.s32.totalorder %s29, 0
      %s32 = sadd.s32 %s31, 1
      %s33 = scalar_select %p30, %s31, %s32
      %p36 = pneg %p30
      %p37 = scmp.eq.s32.totalorder %s9, 3
      %p38 = por %p36, %p37
      %p39 = scmp.ne.s32.totalorder %s31, %s34
      %p40 = scmp.eq.s32.totalorder %s9, 0
      %p41 = por %p39, %p40
      %p42 = scmp.ne.s32.totalorder %s31, %s34
      %p43 = scmp.eq.s32.totalorder %s14, 3
      %p44 = por %p42, %p43
      %p45 = scmp.ne.s32.totalorder %s34, %s35
      %p46 = scmp.eq.s32.totalorder %s14, 0
      %p47 = por %p45, %p46
      %p48 = scmp.ne.s32.totalorder %s34, %s35
      %p49 = scmp.eq.s32.totalorder %s15, 3
      %p50 = por %p48, %p49
      %p52 = scmp.ne.s32.totalorder %s35, %s51
      %p53 = scmp.eq.s32.totalorder %s15, 0
      %p54 = por %p52, %p53
      %s55 = ssub.s32 %s17, %s24
      %p56 = scmp.eq.s32.totalorder %s55, 0
      %s58 = sadd.s32 %s57, 1
      %s59 = scalar_select %p56, %s57, %s58
      %p62 = pneg %p56
      %p63 = scmp.eq.s32.totalorder %s9, 3
      %p64 = por %p62, %p63
      %p65 = scmp.ne.s32.totalorder %s57, %s60
      %p66 = scmp.eq.s32.totalorder %s9, 0
      %p67 = por %p65, %p66
      %p68 = scmp.ne.s32.totalorder %s57, %s60
      %p69 = scmp.eq.s32.totalorder %s14, 3
      %p70 = por %p68, %p69
      %p71 = scmp.ne.s32.totalorder %s60, %s61
      %p72 = scmp.eq.s32.totalorder %s14, 0
      %p73 = por %p71, %p72
      %p74 = scmp.ne.s32.totalorder %s60, %s61
      %p75 = scmp.eq.s32.totalorder %s15, 3
      %p76 = por %p74, %p75
      %p78 = scmp.ne.s32.totalorder %s61, %s77
      %p79 = scmp.eq.s32.totalorder %s15, 0
      %p80 = por %p78, %p79
      %s81 = ssub.s32 %s17, %s24
      %p82 = scmp.eq.s32.totalorder %s81, 0
      %s84 = sadd.s32 %s83, 1
      %s85 = scalar_select %p82, %s83, %s84
      %p88 = pneg %p82
      %p89 = scmp.eq.s32.totalorder %s9, 3
      %p90 = por %p88, %p89
      %p91 = scmp.ne.s32.totalorder %s83, %s86
      %p92 = scmp.eq.s32.totalorder %s9, 0
      %p93 = por %p91, %p92
      %p94 = scmp.ne.s32.totalorder %s83, %s86
      %p95 = scmp.eq.s32.totalorder %s14, 3
      %p96 = por %p94, %p95
      %p97 = scmp.ne.s32.totalorder %s86, %s87
      %p98 = scmp.eq.s32.totalorder %s14, 0
      %p99 = por %p97, %p98
      %p100 = scmp.ne.s32.totalorder %s86, %s87
      %p101 = scmp.eq.s32.totalorder %s15, 3
      %p102 = por %p100, %p101
      %p104 = scmp.ne.s32.totalorder %s87, %s103
      %p105 = scmp.eq.s32.totalorder %s15, 0
      %p106 = por %p104, %p105
      %s107 = ssub.s32 %s16, %s28
      %s108 = ssub.s32 %s17, %s24
      %s109 = sor.u32 %s107, %s108
      %p110 = scmp.eq.s32.totalorder %s109, 0
      %s112 = sadd.s32 %s111, 1
      %s113 = scalar_select %p110, %s111, %s112
      %p116 = pneg %p110
      %p117 = scmp.eq.s32.totalorder %s9, 3
      %p118 = por %p116, %p117
      %p119 = scmp.ne.s32.totalorder %s111, %s114
      %p120 = scmp.eq.s32.totalorder %s9, 0
      %p121 = por %p119, %p120
      %p122 = scmp.ne.s32.totalorder %s111, %s114
      %p123 = scmp.eq.s32.totalorder %s14, 3
      %p124 = por %p122, %p123
      %p125 = scmp.ne.s32.totalorder %s114, %s115
      %p126 = scmp.eq.s32.totalorder %s14, 0
      %p127 = por %p125, %p126
      %p128 = scmp.ne.s32.totalorder %s114, %s115
      %p129 = scmp.eq.s32.totalorder %s15, 3
      %p130 = por %p128, %p129
      %p132 = scmp.ne.s32.totalorder %s115, %s131
      %p133 = scmp.eq.s32.totalorder %s15, 0
      %p134 = por %p132, %p133
      %p135 = scmp.le.s32.totalorder 1, %s9
      %p136 = scmp.lt.s32.totalorder %s9, 5
      %p137 = pnand %p135, %p136
      %p138 = pneg %p137
      // Predicated region
      $region9: #{_init_step.7} parent=5 // pred_check
        _
      $region10: #{_init_step.7} parent=5 // pred_check_branch
        %140 = sbr.rel (%p137) target = $region12
      $region11: #{_init_step.7} parent=5 // pred_region
        %s141 = ssub.s32 %s9, 1
        // Predicated region
        $region13: #{_init_step.7} parent=11 // pred_check
          %p142 = pneg %p47
        $region14: #{_init_step.7} parent=11 // pred_check_branch
          %144 = sbr.rel (%p142) target = $region16
        $region15: #{_init_step.7} parent=11 // pred_region
          %p145 = scmp.lt.s32.totalorder %s18, 0
          %s146 = scalar_select %p145, %s18, 0
          %s147 = smul.addr %s146, 16
          %s148 = smul.addr %s147, 4
          %s149 = scalar_lea.vmem %s0, %s148
        $region16: #{_init_step.7} parent=11 // pred_fallthru
          _
      $region12: #{_init_step.7} parent=5 // pred_fallthru
        _
      %p150 = scmp.lt.s32.totalorder %s9, 4
      // Predicated region
      $region17: #{_init_step.7} parent=5 // pred_check
        %p151 = pneg %p150
      $region18: #{_init_step.7} parent=5 // pred_check_branch
        %153 = sbr.rel (%p151) target = $region20
      $region19: #{_init_step.7} parent=5 // pred_region
        // Predicated region
        $region21: #{_init_step.7} parent=19 // pred_check
          %p154 = pneg %p67
        $region22: #{_init_step.7} parent=19 // pred_check_branch
          %156 = sbr.rel (%p154) target = $region24
        $region23: #{_init_step.7} parent=19 // pred_region
          %s157 = sand.u32 %s57, 1
          %s158 = sand.u32 %s57, 1
          %s159 = smul.addr %s158, 2048
          %s160 = scalar_lea.vmem [#allocation2], %s159
          %s161 = smul.u32 2, %s17
          %s162 = smul.addr %s161, 4
          %s163 = scalar_lea.vmem %s1, %s162
          // Predicated region
          $region25: #{_init_step.7} parent=23 // pred_check
            _
          $region26: #{_init_step.7} parent=23 // pred_check_branch
            %165 = sbr.rel (0) target = $region28
          $region27: #{_init_step.7} parent=23 // pred_region
            // Predicated region
            $region29: #{_init_step.7} parent=27 // pred_check
              _
            $region30: #{_init_step.7} parent=27 // pred_check_branch
              %167 = sbr.rel (0) target = $region32
            $region31: #{_init_step.7} parent=27 // pred_region
              // Predicated region
              $region44: #{_init_step.7} parent=31 // pred_check
                _
              $region45: #{_init_step.7} parent=31 // pred_check_branch
                %692 = sbr.rel (0) target = $region47
              $region46: #{_init_step.7} parent=31 // pred_region
                loop: start=0, step=1, limit=1
                $region48: #{_init_step.7} parent=46 // loop_pre_header
                  _
                $region49: #{_init_step.7} parent=46 // loop_header
                  %s694 = sphi 0, %s698
                  %p695 = scmp.ge.s32.totalorder %s694, 1
                  %s699 = sphi %s163, %s163
                  %s700 = sphi %s160, %s160
                $region50: #{_init_step.7} parent=46 // loop_header_branch
                  %697 = sbr.rel (%p695) target = $region54
                $region51: #{_init_step.7} parent=46 // loop_body
                  %v701 = vld [vmem:[%s699] sm:$0xff]
                  %702 = vst [vmem:[%s700] sm:$0xff] %v701
                  %v703 = vld [vmem:[%s699 + $0x20] sm:$0xff]
                  %704 = vst [vmem:[%s700 + $0x8] sm:$0xff] %v703
                  %v705 = vld [vmem:[%s699 + $0x40] sm:$0xff]
                  %706 = vst [vmem:[%s700 + $0x10] sm:$0xff] %v705
                  %v707 = vld [vmem:[%s699 + $0x60] sm:$0xff]
                  %708 = vst [vmem:[%s700 + $0x18] sm:$0xff] %v707
                  %v709 = vld [vmem:[%s699 + $0x80] sm:$0xff]
                  %710 = vst [vmem:[%s700 + $0x20] sm:$0xff] %v709
                  %v711 = vld [vmem:[%s699 + $0xa0] sm:$0xff]
                  %712 = vst [vmem:[%s700 + $0x28] sm:$0xff] %v711
                  %v713 = vld [vmem:[%s699 + $0xc0] sm:$0xff]
                  %714 = vst [vmem:[%s700 + $0x30] sm:$0xff] %v713
                  %v715 = vld [vmem:[%s699 + $0xe0] sm:$0xff]
                  %716 = vst [vmem:[%s700 + $0x38] sm:$0xff] %v715
                  %v717 = vld [vmem:[%s699 + $0x100] sm:$0xff]
                  %718 = vst [vmem:[%s700 + $0x40] sm:$0xff] %v717
                  %v719 = vld [vmem:[%s699 + $0x120] sm:$0xff]
                  %720 = vst [vmem:[%s700 + $0x48] sm:$0xff] %v719
                  %v721 = vld [vmem:[%s699 + $0x140] sm:$0xff]
                  %722 = vst [vmem:[%s700 + $0x50] sm:$0xff] %v721
                  %v723 = vld [vmem:[%s699 + $0x160] sm:$0xff]
                  %724 = vst [vmem:[%s700 + $0x58] sm:$0xff] %v723
                  %v725 = vld [vmem:[%s699 + $0x180] sm:$0xff]
                  %726 = vst [vmem:[%s700 + $0x60] sm:$0xff] %v725
                  %v727 = vld [vmem:[%s699 + $0x1a0] sm:$0xff]
                  %728 = vst [vmem:[%s700 + $0x68] sm:$0xff] %v727
                  %v729 = vld [vmem:[%s699 + $0x1c0] sm:$0xff]
                  %730 = vst [vmem:[%s700 + $0x70] sm:$0xff] %v729
                  %v731 = vld [vmem:[%s699 + $0x1e0] sm:$0xff]
                  %732 = vst [vmem:[%s700 + $0x78] sm:$0xff] %v731
                  %v733 = vld [vmem:[%s699 + $0x200] sm:$0xff]
                  %734 = vst [vmem:[%s700 + $0x80] sm:$0xff] %v733
                  %v735 = vld [vmem:[%s699 + $0x220] sm:$0xff]
                  %736 = vst [vmem:[%s700 + $0x88] sm:$0xff] %v735
                  %v737 = vld [vmem:[%s699 + $0x240] sm:$0xff]
                  %738 = vst [vmem:[%s700 + $0x90] sm:$0xff] %v737
                  %v739 = vld [vmem:[%s699 + $0x260] sm:$0xff]
                  %740 = vst [vmem:[%s700 + $0x98] sm:$0xff] %v739
                  %v741 = vld [vmem:[%s699 + $0x280] sm:$0xff]
                  %742 = vst [vmem:[%s700 + $0xa0] sm:$0xff] %v741
                  %v743 = vld [vmem:[%s699 + $0x2a0] sm:$0xff]
                  %744 = vst [vmem:[%s700 + $0xa8] sm:$0xff] %v743
                  %v745 = vld [vmem:[%s699 + $0x2c0] sm:$0xff]
                  %746 = vst [vmem:[%s700 + $0xb0] sm:$0xff] %v745
                  %v747 = vld [vmem:[%s699 + $0x2e0] sm:$0xff]
                  %748 = vst [vmem:[%s700 + $0xb8] sm:$0xff] %v747
                  %v749 = vld [vmem:[%s699 + $0x300] sm:$0xff]
                  %750 = vst [vmem:[%s700 + $0xc0] sm:$0xff] %v749
                  %v751 = vld [vmem:[%s699 + $0x320] sm:$0xff]
                  %752 = vst [vmem:[%s700 + $0xc8] sm:$0xff] %v751
                  %v753 = vld [vmem:[%s699 + $0x340] sm:$0xff]
                  %754 = vst [vmem:[%s700 + $0xd0] sm:$0xff] %v753
                  %v755 = vld [vmem:[%s699 + $0x360] sm:$0xff]
                  %756 = vst [vmem:[%s700 + $0xd8] sm:$0xff] %v755
                  %v757 = vld [vmem:[%s699 + $0x380] sm:$0xff]
                  %758 = vst [vmem:[%s700 + $0xe0] sm:$0xff] %v757
                  %v759 = vld [vmem:[%s699 + $0x3a0] sm:$0xff]
                  %760 = vst [vmem:[%s700 + $0xe8] sm:$0xff] %v759
                  %v761 = vld [vmem:[%s699 + $0x3c0] sm:$0xff]
                  %762 = vst [vmem:[%s700 + $0xf0] sm:$0xff] %v761
                  %v763 = vld [vmem:[%s699 + $0x3e0] sm:$0xff]
                  %764 = vst [vmem:[%s700 + $0xf8] sm:$0xff] %v763
                  %v765 = vld [vmem:[%s699 + $0x400] sm:$0xff]
                  %766 = vst [vmem:[%s700 + $0x100] sm:$0xff] %v765
                  %v767 = vld [vmem:[%s699 + $0x420] sm:$0xff]
                  %768 = vst [vmem:[%s700 + $0x108] sm:$0xff] %v767
                  %v769 = vld [vmem:[%s699 + $0x440] sm:$0xff]
                  %770 = vst [vmem:[%s700 + $0x110] sm:$0xff] %v769
                  %v771 = vld [vmem:[%s699 + $0x460] sm:$0xff]
                  %772 = vst [vmem:[%s700 + $0x118] sm:$0xff] %v771
                  %v773 = vld [vmem:[%s699 + $0x480] sm:$0xff]
                  %774 = vst [vmem:[%s700 + $0x120] sm:$0xff] %v773
                  %v775 = vld [vmem:[%s699 + $0x4a0] sm:$0xff]
                  %776 = vst [vmem:[%s700 + $0x128] sm:$0xff] %v775
                  %v777 = vld [vmem:[%s699 + $0x4c0] sm:$0xff]
                  %778 = vst [vmem:[%s700 + $0x130] sm:$0xff] %v777
                  %v779 = vld [vmem:[%s699 + $0x4e0] sm:$0xff]
                  %780 = vst [vmem:[%s700 + $0x138] sm:$0xff] %v779
                  %v781 = vld [vmem:[%s699 + $0x500] sm:$0xff]
                  %782 = vst [vmem:[%s700 + $0x140] sm:$0xff] %v781
                  %v783 = vld [vmem:[%s699 + $0x520] sm:$0xff]
                  %784 = vst [vmem:[%s700 + $0x148] sm:$0xff] %v783
                  %v785 = vld [vmem:[%s699 + $0x540] sm:$0xff]
                  %786 = vst [vmem:[%s700 + $0x150] sm:$0xff] %v785
                  %v787 = vld [vmem:[%s699 + $0x560] sm:$0xff]
                  %788 = vst [vmem:[%s700 + $0x158] sm:$0xff] %v787
                  %v789 = vld [vmem:[%s699 + $0x580] sm:$0xff]
                  %790 = vst [vmem:[%s700 + $0x160] sm:$0xff] %v789
                  %v791 = vld [vmem:[%s699 + $0x5a0] sm:$0xff]
                  %792 = vst [vmem:[%s700 + $0x168] sm:$0xff] %v791
                  %v793 = vld [vmem:[%s699 + $0x5c0] sm:$0xff]
                  %794 = vst [vmem:[%s700 + $0x170] sm:$0xff] %v793
                  %v795 = vld [vmem:[%s699 + $0x5e0] sm:$0xff]
                  %796 = vst [vmem:[%s700 + $0x178] sm:$0xff] %v795
                  %v797 = vld [vmem:[%s699 + $0x600] sm:$0xff]
                  %798 = vst [vmem:[%s700 + $0x180] sm:$0xff] %v797
                  %v799 = vld [vmem:[%s699 + $0x620] sm:$0xff]
                  %800 = vst [vmem:[%s700 + $0x188] sm:$0xff] %v799
                  %v801 = vld [vmem:[%s699 + $0x640] sm:$0xff]
                  %802 = vst [vmem:[%s700 + $0x190] sm:$0xff] %v801
                  %v803 = vld [vmem:[%s699 + $0x660] sm:$0xff]
                  %804 = vst [vmem:[%s700 + $0x198] sm:$0xff] %v803
                  %v805 = vld [vmem:[%s699 + $0x680] sm:$0xff]
                  %806 = vst [vmem:[%s700 + $0x1a0] sm:$0xff] %v805
                  %v807 = vld [vmem:[%s699 + $0x6a0] sm:$0xff]
                  %808 = vst [vmem:[%s700 + $0x1a8] sm:$0xff] %v807
                  %v809 = vld [vmem:[%s699 + $0x6c0] sm:$0xff]
                  %810 = vst [vmem:[%s700 + $0x1b0] sm:$0xff] %v809
                  %v811 = vld [vmem:[%s699 + $0x6e0] sm:$0xff]
                  %812 = vst [vmem:[%s700 + $0x1b8] sm:$0xff] %v811
                  %v813 = vld [vmem:[%s699 + $0x700] sm:$0xff]
                  %814 = vst [vmem:[%s700 + $0x1c0] sm:$0xff] %v813
                  %v815 = vld [vmem:[%s699 + $0x720] sm:$0xff]
                  %816 = vst [vmem:[%s700 + $0x1c8] sm:$0xff] %v815
                  %v817 = vld [vmem:[%s699 + $0x740] sm:$0xff]
                  %818 = vst [vmem:[%s700 + $0x1d0] sm:$0xff] %v817
                  %v819 = vld [vmem:[%s699 + $0x760] sm:$0xff]
                  %820 = vst [vmem:[%s700 + $0x1d8] sm:$0xff] %v819
                  %v821 = vld [vmem:[%s699 + $0x780] sm:$0xff]
                  %822 = vst [vmem:[%s700 + $0x1e0] sm:$0xff] %v821
                  %v823 = vld [vmem:[%s699 + $0x7a0] sm:$0xff]
                  %824 = vst [vmem:[%s700 + $0x1e8] sm:$0xff] %v823
                  %v825 = vld [vmem:[%s699 + $0x7c0] sm:$0xff]
                  %826 = vst [vmem:[%s700 + $0x1f0] sm:$0xff] %v825
                  %v827 = vld [vmem:[%s699 + $0x7e0] sm:$0xff]
                  %828 = vst [vmem:[%s700 + $0x1f8] sm:$0xff] %v827
                  %v829 = vld [vmem:[%s699 + $0x800] sm:$0xff]
                  %830 = vst [vmem:[%s700 + $0x200] sm:$0xff] %v829
                  %v831 = vld [vmem:[%s699 + $0x820] sm:$0xff]
                  %832 = vst [vmem:[%s700 + $0x208] sm:$0xff] %v831
                  %v833 = vld [vmem:[%s699 + $0x840] sm:$0xff]
                  %834 = vst [vmem:[%s700 + $0x210] sm:$0xff] %v833
                  %v835 = vld [vmem:[%s699 + $0x860] sm:$0xff]
                  %836 = vst [vmem:[%s700 + $0x218] sm:$0xff] %v835
                  %v837 = vld [vmem:[%s699 + $0x880] sm:$0xff]
                  %838 = vst [vmem:[%s700 + $0x220] sm:$0xff] %v837
                  %v839 = vld [vmem:[%s699 + $0x8a0] sm:$0xff]
                  %840 = vst [vmem:[%s700 + $0x228] sm:$0xff] %v839
                  %v841 = vld [vmem:[%s699 + $0x8c0] sm:$0xff]
                  %842 = vst [vmem:[%s700 + $0x230] sm:$0xff] %v841
                  %v843 = vld [vmem:[%s699 + $0x8e0] sm:$0xff]
                  %844 = vst [vmem:[%s700 + $0x238] sm:$0xff] %v843
                  %v845 = vld [vmem:[%s699 + $0x900] sm:$0xff]
                  %846 = vst [vmem:[%s700 + $0x240] sm:$0xff] %v845
                  %v847 = vld [vmem:[%s699 + $0x920] sm:$0xff]
                  %848 = vst [vmem:[%s700 + $0x248] sm:$0xff] %v847
                  %v849 = vld [vmem:[%s699 + $0x940] sm:$0xff]
                  %850 = vst [vmem:[%s700 + $0x250] sm:$0xff] %v849
                  %v851 = vld [vmem:[%s699 + $0x960] sm:$0xff]
                  %852 = vst [vmem:[%s700 + $0x258] sm:$0xff] %v851
                  %v853 = vld [vmem:[%s699 + $0x980] sm:$0xff]
                  %854 = vst [vmem:[%s700 + $0x260] sm:$0xff] %v853
                  %v855 = vld [vmem:[%s699 + $0x9a0] sm:$0xff]
                  %856 = vst [vmem:[%s700 + $0x268] sm:$0xff] %v855
                  %v857 = vld [vmem:[%s699 + $0x9c0] sm:$0xff]
                  %858 = vst [vmem:[%s700 + $0x270] sm:$0xff] %v857
                  %v859 = vld [vmem:[%s699 + $0x9e0] sm:$0xff]
                  %860 = vst [vmem:[%s700 + $0x278] sm:$0xff] %v859
                  %v861 = vld [vmem:[%s699 + $0xa00] sm:$0xff]
                  %862 = vst [vmem:[%s700 + $0x280] sm:$0xff] %v861
                  %v863 = vld [vmem:[%s699 + $0xa20] sm:$0xff]
                  %864 = vst [vmem:[%s700 + $0x288] sm:$0xff] %v863
                  %v865 = vld [vmem:[%s699 + $0xa40] sm:$0xff]
                  %866 = vst [vmem:[%s700 + $0x290] sm:$0xff] %v865
                  %v867 = vld [vmem:[%s699 + $0xa60] sm:$0xff]
                  %868 = vst [vmem:[%s700 + $0x298] sm:$0xff] %v867
                  %v869 = vld [vmem:[%s699 + $0xa80] sm:$0xff]
                  %870 = vst [vmem:[%s700 + $0x2a0] sm:$0xff] %v869
                  %v871 = vld [vmem:[%s699 + $0xaa0] sm:$0xff]
                  %872 = vst [vmem:[%s700 + $0x2a8] sm:$0xff] %v871
                  %v873 = vld [vmem:[%s699 + $0xac0] sm:$0xff]
                  %874 = vst [vmem:[%s700 + $0x2b0] sm:$0xff] %v873
                  %v875 = vld [vmem:[%s699 + $0xae0] sm:$0xff]
                  %876 = vst [vmem:[%s700 + $0x2b8] sm:$0xff] %v875
                  %v877 = vld [vmem:[%s699 + $0xb00] sm:$0xff]
                  %878 = vst [vmem:[%s700 + $0x2c0] sm:$0xff] %v877
                  %v879 = vld [vmem:[%s699 + $0xb20] sm:$0xff]
                  %880 = vst [vmem:[%s700 + $0x2c8] sm:$0xff] %v879
                  %v881 = vld [vmem:[%s699 + $0xb40] sm:$0xff]
                  %882 = vst [vmem:[%s700 + $0x2d0] sm:$0xff] %v881
                  %v883 = vld [vmem:[%s699 + $0xb60] sm:$0xff]
                  %884 = vst [vmem:[%s700 + $0x2d8] sm:$0xff] %v883
                  %v885 = vld [vmem:[%s699 + $0xb80] sm:$0xff]
                  %886 = vst [vmem:[%s700 + $0x2e0] sm:$0xff] %v885
                  %v887 = vld [vmem:[%s699 + $0xba0] sm:$0xff]
                  %888 = vst [vmem:[%s700 + $0x2e8] sm:$0xff] %v887
                  %v889 = vld [vmem:[%s699 + $0xbc0] sm:$0xff]
                  %890 = vst [vmem:[%s700 + $0x2f0] sm:$0xff] %v889
                  %v891 = vld [vmem:[%s699 + $0xbe0] sm:$0xff]
                  %892 = vst [vmem:[%s700 + $0x2f8] sm:$0xff] %v891
                  %v893 = vld [vmem:[%s699 + $0xc00] sm:$0xff]
                  %894 = vst [vmem:[%s700 + $0x300] sm:$0xff] %v893
                  %v895 = vld [vmem:[%s699 + $0xc20] sm:$0xff]
                  %896 = vst [vmem:[%s700 + $0x308] sm:$0xff] %v895
                  %v897 = vld [vmem:[%s699 + $0xc40] sm:$0xff]
                  %898 = vst [vmem:[%s700 + $0x310] sm:$0xff] %v897
                  %v899 = vld [vmem:[%s699 + $0xc60] sm:$0xff]
                  %900 = vst [vmem:[%s700 + $0x318] sm:$0xff] %v899
                  %v901 = vld [vmem:[%s699 + $0xc80] sm:$0xff]
                  %902 = vst [vmem:[%s700 + $0x320] sm:$0xff] %v901
                  %v903 = vld [vmem:[%s699 + $0xca0] sm:$0xff]
                  %904 = vst [vmem:[%s700 + $0x328] sm:$0xff] %v903
                  %v905 = vld [vmem:[%s699 + $0xcc0] sm:$0xff]
                  %906 = vst [vmem:[%s700 + $0x330] sm:$0xff] %v905
                  %v907 = vld [vmem:[%s699 + $0xce0] sm:$0xff]
                  %908 = vst [vmem:[%s700 + $0x338] sm:$0xff] %v907
                  %v909 = vld [vmem:[%s699 + $0xd00] sm:$0xff]
                  %910 = vst [vmem:[%s700 + $0x340] sm:$0xff] %v909
                  %v911 = vld [vmem:[%s699 + $0xd20] sm:$0xff]
                  %912 = vst [vmem:[%s700 + $0x348] sm:$0xff] %v911
                  %v913 = vld [vmem:[%s699 + $0xd40] sm:$0xff]
                  %914 = vst [vmem:[%s700 + $0x350] sm:$0xff] %v913
                  %v915 = vld [vmem:[%s699 + $0xd60] sm:$0xff]
                  %916 = vst [vmem:[%s700 + $0x358] sm:$0xff] %v915
                  %v917 = vld [vmem:[%s699 + $0xd80] sm:$0xff]
                  %918 = vst [vmem:[%s700 + $0x360] sm:$0xff] %v917
                  %v919 = vld [vmem:[%s699 + $0xda0] sm:$0xff]
                  %920 = vst [vmem:[%s700 + $0x368] sm:$0xff] %v919
                  %v921 = vld [vmem:[%s699 + $0xdc0] sm:$0xff]
                  %922 = vst [vmem:[%s700 + $0x370] sm:$0xff] %v921
                  %v923 = vld [vmem:[%s699 + $0xde0] sm:$0xff]
                  %924 = vst [vmem:[%s700 + $0x378] sm:$0xff] %v923
                  %v925 = vld [vmem:[%s699 + $0xe00] sm:$0xff]
                  %926 = vst [vmem:[%s700 + $0x380] sm:$0xff] %v925
                  %v927 = vld [vmem:[%s699 + $0xe20] sm:$0xff]
                  %928 = vst [vmem:[%s700 + $0x388] sm:$0xff] %v927
                  %v929 = vld [vmem:[%s699 + $0xe40] sm:$0xff]
                  %930 = vst [vmem:[%s700 + $0x390] sm:$0xff] %v929
                  %v931 = vld [vmem:[%s699 + $0xe60] sm:$0xff]
                  %932 = vst [vmem:[%s700 + $0x398] sm:$0xff] %v931
                  %v933 = vld [vmem:[%s699 + $0xe80] sm:$0xff]
                  %934 = vst [vmem:[%s700 + $0x3a0] sm:$0xff] %v933
                  %v935 = vld [vmem:[%s699 + $0xea0] sm:$0xff]
                  %936 = vst [vmem:[%s700 + $0x3a8] sm:$0xff] %v935
                  %v937 = vld [vmem:[%s699 + $0xec0] sm:$0xff]
                  %938 = vst [vmem:[%s700 + $0x3b0] sm:$0xff] %v937
                  %v939 = vld [vmem:[%s699 + $0xee0] sm:$0xff]
                  %940 = vst [vmem:[%s700 + $0x3b8] sm:$0xff] %v939
                  %v941 = vld [vmem:[%s699 + $0xf00] sm:$0xff]
                  %942 = vst [vmem:[%s700 + $0x3c0] sm:$0xff] %v941
                  %v943 = vld [vmem:[%s699 + $0xf20] sm:$0xff]
                  %944 = vst [vmem:[%s700 + $0x3c8] sm:$0xff] %v943
                  %v945 = vld [vmem:[%s699 + $0xf40] sm:$0xff]
                  %946 = vst [vmem:[%s700 + $0x3d0] sm:$0xff] %v945
                  %v947 = vld [vmem:[%s699 + $0xf60] sm:$0xff]
                  %948 = vst [vmem:[%s700 + $0x3d8] sm:$0xff] %v947
                  %v949 = vld [vmem:[%s699 + $0xf80] sm:$0xff]
                  %950 = vst [vmem:[%s700 + $0x3e0] sm:$0xff] %v949
                  %v951 = vld [vmem:[%s699 + $0xfa0] sm:$0xff]
                  %952 = vst [vmem:[%s700 + $0x3e8] sm:$0xff] %v951
                  %v953 = vld [vmem:[%s699 + $0xfc0] sm:$0xff]
                  %954 = vst [vmem:[%s700 + $0x3f0] sm:$0xff] %v953
                  %v955 = vld [vmem:[%s699 + $0xfe0] sm:$0xff]
                  %956 = vst [vmem:[%s700 + $0x3f8] sm:$0xff] %v955
                  %v957 = vld [vmem:[%s699 + $0x1000] sm:$0xff]
                  %958 = vst [vmem:[%s700 + $0x400] sm:$0xff] %v957
                  %v959 = vld [vmem:[%s699 + $0x1020] sm:$0xff]
                  %960 = vst [vmem:[%s700 + $0x408] sm:$0xff] %v959
                  %v961 = vld [vmem:[%s699 + $0x1040] sm:$0xff]
                  %962 = vst [vmem:[%s700 + $0x410] sm:$0xff] %v961
                  %v963 = vld [vmem:[%s699 + $0x1060] sm:$0xff]
                  %964 = vst [vmem:[%s700 + $0x418] sm:$0xff] %v963
                  %v965 = vld [vmem:[%s699 + $0x1080] sm:$0xff]
                  %966 = vst [vmem:[%s700 + $0x420] sm:$0xff] %v965
                  %v967 = vld [vmem:[%s699 + $0x10a0] sm:$0xff]
                  %968 = vst [vmem:[%s700 + $0x428] sm:$0xff] %v967
                  %v969 = vld [vmem:[%s699 + $0x10c0] sm:$0xff]
                  %970 = vst [vmem:[%s700 + $0x430] sm:$0xff] %v969
                  %v971 = vld [vmem:[%s699 + $0x10e0] sm:$0xff]
                  %972 = vst [vmem:[%s700 + $0x438] sm:$0xff] %v971
                  %v973 = vld [vmem:[%s699 + $0x1100] sm:$0xff]
                  %974 = vst [vmem:[%s700 + $0x440] sm:$0xff] %v973
                  %v975 = vld [vmem:[%s699 + $0x1120] sm:$0xff]
                  %976 = vst [vmem:[%s700 + $0x448] sm:$0xff] %v975
                  %v977 = vld [vmem:[%s699 + $0x1140] sm:$0xff]
                  %978 = vst [vmem:[%s700 + $0x450] sm:$0xff] %v977
                  %v979 = vld [vmem:[%s699 + $0x1160] sm:$0xff]
                  %980 = vst [vmem:[%s700 + $0x458] sm:$0xff] %v979
                  %v981 = vld [vmem:[%s699 + $0x1180] sm:$0xff]
                  %982 = vst [vmem:[%s700 + $0x460] sm:$0xff] %v981
                  %v983 = vld [vmem:[%s699 + $0x11a0] sm:$0xff]
                  %984 = vst [vmem:[%s700 + $0x468] sm:$0xff] %v983
                  %v985 = vld [vmem:[%s699 + $0x11c0] sm:$0xff]
                  %986 = vst [vmem:[%s700 + $0x470] sm:$0xff] %v985
                  %v987 = vld [vmem:[%s699 + $0x11e0] sm:$0xff]
                  %988 = vst [vmem:[%s700 + $0x478] sm:$0xff] %v987
                  %v989 = vld [vmem:[%s699 + $0x1200] sm:$0xff]
                  %990 = vst [vmem:[%s700 + $0x480] sm:$0xff] %v989
                  %v991 = vld [vmem:[%s699 + $0x1220] sm:$0xff]
                  %992 = vst [vmem:[%s700 + $0x488] sm:$0xff] %v991
                  %v993 = vld [vmem:[%s699 + $0x1240] sm:$0xff]
                  %994 = vst [vmem:[%s700 + $0x490] sm:$0xff] %v993
                  %v995 = vld [vmem:[%s699 + $0x1260] sm:$0xff]
                  %996 = vst [vmem:[%s700 + $0x498] sm:$0xff] %v995
                  %v997 = vld [vmem:[%s699 + $0x1280] sm:$0xff]
                  %998 = vst [vmem:[%s700 + $0x4a0] sm:$0xff] %v997
                  %v999 = vld [vmem:[%s699 + $0x12a0] sm:$0xff]
                  %1000 = vst [vmem:[%s700 + $0x4a8] sm:$0xff] %v999
                  %v1001 = vld [vmem:[%s699 + $0x12c0] sm:$0xff]
                  %1002 = vst [vmem:[%s700 + $0x4b0] sm:$0xff] %v1001
                  %v1003 = vld [vmem:[%s699 + $0x12e0] sm:$0xff]
                  %1004 = vst [vmem:[%s700 + $0x4b8] sm:$0xff] %v1003
                  %v1005 = vld [vmem:[%s699 + $0x1300] sm:$0xff]
                  %1006 = vst [vmem:[%s700 + $0x4c0] sm:$0xff] %v1005
                  %v1007 = vld [vmem:[%s699 + $0x1320] sm:$0xff]
                  %1008 = vst [vmem:[%s700 + $0x4c8] sm:$0xff] %v1007
                  %v1009 = vld [vmem:[%s699 + $0x1340] sm:$0xff]
                  %1010 = vst [vmem:[%s700 + $0x4d0] sm:$0xff] %v1009
                  %v1011 = vld [vmem:[%s699 + $0x1360] sm:$0xff]
                  %1012 = vst [vmem:[%s700 + $0x4d8] sm:$0xff] %v1011
                  %v1013 = vld [vmem:[%s699 + $0x1380] sm:$0xff]
                  %1014 = vst [vmem:[%s700 + $0x4e0] sm:$0xff] %v1013
                  %v1015 = vld [vmem:[%s699 + $0x13a0] sm:$0xff]
                  %1016 = vst [vmem:[%s700 + $0x4e8] sm:$0xff] %v1015
                  %v1017 = vld [vmem:[%s699 + $0x13c0] sm:$0xff]
                  %1018 = vst [vmem:[%s700 + $0x4f0] sm:$0xff] %v1017
                  %v1019 = vld [vmem:[%s699 + $0x13e0] sm:$0xff]
                  %1020 = vst [vmem:[%s700 + $0x4f8] sm:$0xff] %v1019
                  %v1021 = vld [vmem:[%s699 + $0x1400] sm:$0xff]
                  %1022 = vst [vmem:[%s700 + $0x500] sm:$0xff] %v1021
                  %v1023 = vld [vmem:[%s699 + $0x1420] sm:$0xff]
                  %1024 = vst [vmem:[%s700 + $0x508] sm:$0xff] %v1023
                  %v1025 = vld [vmem:[%s699 + $0x1440] sm:$0xff]
                  %1026 = vst [vmem:[%s700 + $0x510] sm:$0xff] %v1025
                  %v1027 = vld [vmem:[%s699 + $0x1460] sm:$0xff]
                  %1028 = vst [vmem:[%s700 + $0x518] sm:$0xff] %v1027
                  %v1029 = vld [vmem:[%s699 + $0x1480] sm:$0xff]
                  %1030 = vst [vmem:[%s700 + $0x520] sm:$0xff] %v1029
                  %v1031 = vld [vmem:[%s699 + $0x14a0] sm:$0xff]
                  %1032 = vst [vmem:[%s700 + $0x528] sm:$0xff] %v1031
                  %v1033 = vld [vmem:[%s699 + $0x14c0] sm:$0xff]
                  %1034 = vst [vmem:[%s700 + $0x530] sm:$0xff] %v1033
                  %v1035 = vld [vmem:[%s699 + $0x14e0] sm:$0xff]
                  %1036 = vst [vmem:[%s700 + $0x538] sm:$0xff] %v1035
                  %v1037 = vld [vmem:[%s699 + $0x1500] sm:$0xff]
                  %1038 = vst [vmem:[%s700 + $0x540] sm:$0xff] %v1037
                  %v1039 = vld [vmem:[%s699 + $0x1520] sm:$0xff]
                  %1040 = vst [vmem:[%s700 + $0x548] sm:$0xff] %v1039
                  %v1041 = vld [vmem:[%s699 + $0x1540] sm:$0xff]
                  %1042 = vst [vmem:[%s700 + $0x550] sm:$0xff] %v1041
                  %v1043 = vld [vmem:[%s699 + $0x1560] sm:$0xff]
                  %1044 = vst [vmem:[%s700 + $0x558] sm:$0xff] %v1043
                  %v1045 = vld [vmem:[%s699 + $0x1580] sm:$0xff]
                  %1046 = vst [vmem:[%s700 + $0x560] sm:$0xff] %v1045
                  %v1047 = vld [vmem:[%s699 + $0x15a0] sm:$0xff]
                  %1048 = vst [vmem:[%s700 + $0x568] sm:$0xff] %v1047
                  %v1049 = vld [vmem:[%s699 + $0x15c0] sm:$0xff]
                  %1050 = vst [vmem:[%s700 + $0x570] sm:$0xff] %v1049
                  %v1051 = vld [vmem:[%s699 + $0x15e0] sm:$0xff]
                  %1052 = vst [vmem:[%s700 + $0x578] sm:$0xff] %v1051
                  %v1053 = vld [vmem:[%s699 + $0x1600] sm:$0xff]
                  %1054 = vst [vmem:[%s700 + $0x580] sm:$0xff] %v1053
                  %v1055 = vld [vmem:[%s699 + $0x1620] sm:$0xff]
                  %1056 = vst [vmem:[%s700 + $0x588] sm:$0xff] %v1055
                  %v1057 = vld [vmem:[%s699 + $0x1640] sm:$0xff]
                  %1058 = vst [vmem:[%s700 + $0x590] sm:$0xff] %v1057
                  %v1059 = vld [vmem:[%s699 + $0x1660] sm:$0xff]
                  %1060 = vst [vmem:[%s700 + $0x598] sm:$0xff] %v1059
                  %v1061 = vld [vmem:[%s699 + $0x1680] sm:$0xff]
                  %1062 = vst [vmem:[%s700 + $0x5a0] sm:$0xff] %v1061
                  %v1063 = vld [vmem:[%s699 + $0x16a0] sm:$0xff]
                  %1064 = vst [vmem:[%s700 + $0x5a8] sm:$0xff] %v1063
                  %v1065 = vld [vmem:[%s699 + $0x16c0] sm:$0xff]
                  %1066 = vst [vmem:[%s700 + $0x5b0] sm:$0xff] %v1065
                  %v1067 = vld [vmem:[%s699 + $0x16e0] sm:$0xff]
                  %1068 = vst [vmem:[%s700 + $0x5b8] sm:$0xff] %v1067
                  %v1069 = vld [vmem:[%s699 + $0x1700] sm:$0xff]
                  %1070 = vst [vmem:[%s700 + $0x5c0] sm:$0xff] %v1069
                  %v1071 = vld [vmem:[%s699 + $0x1720] sm:$0xff]
                  %1072 = vst [vmem:[%s700 + $0x5c8] sm:$0xff] %v1071
                  %v1073 = vld [vmem:[%s699 + $0x1740] sm:$0xff]
                  %1074 = vst [vmem:[%s700 + $0x5d0] sm:$0xff] %v1073
                  %v1075 = vld [vmem:[%s699 + $0x1760] sm:$0xff]
                  %1076 = vst [vmem:[%s700 + $0x5d8] sm:$0xff] %v1075
                  %v1077 = vld [vmem:[%s699 + $0x1780] sm:$0xff]
                  %1078 = vst [vmem:[%s700 + $0x5e0] sm:$0xff] %v1077
                  %v1079 = vld [vmem:[%s699 + $0x17a0] sm:$0xff]
                  %1080 = vst [vmem:[%s700 + $0x5e8] sm:$0xff] %v1079
                  %v1081 = vld [vmem:[%s699 + $0x17c0] sm:$0xff]
                  %1082 = vst [vmem:[%s700 + $0x5f0] sm:$0xff] %v1081
                  %v1083 = vld [vmem:[%s699 + $0x17e0] sm:$0xff]
                  %1084 = vst [vmem:[%s700 + $0x5f8] sm:$0xff] %v1083
                  %v1085 = vld [vmem:[%s699 + $0x1800] sm:$0xff]
                  %1086 = vst [vmem:[%s700 + $0x600] sm:$0xff] %v1085
                  %v1087 = vld [vmem:[%s699 + $0x1820] sm:$0xff]
                  %1088 = vst [vmem:[%s700 + $0x608] sm:$0xff] %v1087
                  %v1089 = vld [vmem:[%s699 + $0x1840] sm:$0xff]
                  %1090 = vst [vmem:[%s700 + $0x610] sm:$0xff] %v1089
                  %v1091 = vld [vmem:[%s699 + $0x1860] sm:$0xff]
                  %1092 = vst [vmem:[%s700 + $0x618] sm:$0xff] %v1091
                  %v1093 = vld [vmem:[%s699 + $0x1880] sm:$0xff]
                  %1094 = vst [vmem:[%s700 + $0x620] sm:$0xff] %v1093
                  %v1095 = vld [vmem:[%s699 + $0x18a0] sm:$0xff]
                  %1096 = vst [vmem:[%s700 + $0x628] sm:$0xff] %v1095
                  %v1097 = vld [vmem:[%s699 + $0x18c0] sm:$0xff]
                  %1098 = vst [vmem:[%s700 + $0x630] sm:$0xff] %v1097
                  %v1099 = vld [vmem:[%s699 + $0x18e0] sm:$0xff]
                  %1100 = vst [vmem:[%s700 + $0x638] sm:$0xff] %v1099
                  %v1101 = vld [vmem:[%s699 + $0x1900] sm:$0xff]
                  %1102 = vst [vmem:[%s700 + $0x640] sm:$0xff] %v1101
                  %v1103 = vld [vmem:[%s699 + $0x1920] sm:$0xff]
                  %1104 = vst [vmem:[%s700 + $0x648] sm:$0xff] %v1103
                  %v1105 = vld [vmem:[%s699 + $0x1940] sm:$0xff]
                  %1106 = vst [vmem:[%s700 + $0x650] sm:$0xff] %v1105
                  %v1107 = vld [vmem:[%s699 + $0x1960] sm:$0xff]
                  %1108 = vst [vmem:[%s700 + $0x658] sm:$0xff] %v1107
                  %v1109 = vld [vmem:[%s699 + $0x1980] sm:$0xff]
                  %1110 = vst [vmem:[%s700 + $0x660] sm:$0xff] %v1109
                  %v1111 = vld [vmem:[%s699 + $0x19a0] sm:$0xff]
                  %1112 = vst [vmem:[%s700 + $0x668] sm:$0xff] %v1111
                  %v1113 = vld [vmem:[%s699 + $0x19c0] sm:$0xff]
                  %1114 = vst [vmem:[%s700 + $0x670] sm:$0xff] %v1113
                  %v1115 = vld [vmem:[%s699 + $0x19e0] sm:$0xff]
                  %1116 = vst [vmem:[%s700 + $0x678] sm:$0xff] %v1115
                  %v1117 = vld [vmem:[%s699 + $0x1a00] sm:$0xff]
                  %1118 = vst [vmem:[%s700 + $0x680] sm:$0xff] %v1117
                  %v1119 = vld [vmem:[%s699 + $0x1a20] sm:$0xff]
                  %1120 = vst [vmem:[%s700 + $0x688] sm:$0xff] %v1119
                  %v1121 = vld [vmem:[%s699 + $0x1a40] sm:$0xff]
                  %1122 = vst [vmem:[%s700 + $0x690] sm:$0xff] %v1121
                  %v1123 = vld [vmem:[%s699 + $0x1a60] sm:$0xff]
                  %1124 = vst [vmem:[%s700 + $0x698] sm:$0xff] %v1123
                  %v1125 = vld [vmem:[%s699 + $0x1a80] sm:$0xff]
                  %1126 = vst [vmem:[%s700 + $0x6a0] sm:$0xff] %v1125
                  %v1127 = vld [vmem:[%s699 + $0x1aa0] sm:$0xff]
                  %1128 = vst [vmem:[%s700 + $0x6a8] sm:$0xff] %v1127
                  %v1129 = vld [vmem:[%s699 + $0x1ac0] sm:$0xff]
                  %1130 = vst [vmem:[%s700 + $0x6b0] sm:$0xff] %v1129
                  %v1131 = vld [vmem:[%s699 + $0x1ae0] sm:$0xff]
                  %1132 = vst [vmem:[%s700 + $0x6b8] sm:$0xff] %v1131
                  %v1133 = vld [vmem:[%s699 + $0x1b00] sm:$0xff]
                  %1134 = vst [vmem:[%s700 + $0x6c0] sm:$0xff] %v1133
                  %v1135 = vld [vmem:[%s699 + $0x1b20] sm:$0xff]
                  %1136 = vst [vmem:[%s700 + $0x6c8] sm:$0xff] %v1135
                  %v1137 = vld [vmem:[%s699 + $0x1b40] sm:$0xff]
                  %1138 = vst [vmem:[%s700 + $0x6d0] sm:$0xff] %v1137
                  %v1139 = vld [vmem:[%s699 + $0x1b60] sm:$0xff]
                  %1140 = vst [vmem:[%s700 + $0x6d8] sm:$0xff] %v1139
                  %v1141 = vld [vmem:[%s699 + $0x1b80] sm:$0xff]
                  %1142 = vst [vmem:[%s700 + $0x6e0] sm:$0xff] %v1141
                  %v1143 = vld [vmem:[%s699 + $0x1ba0] sm:$0xff]
                  %1144 = vst [vmem:[%s700 + $0x6e8] sm:$0xff] %v1143
                  %v1145 = vld [vmem:[%s699 + $0x1bc0] sm:$0xff]
                  %1146 = vst [vmem:[%s700 + $0x6f0] sm:$0xff] %v1145
                  %v1147 = vld [vmem:[%s699 + $0x1be0] sm:$0xff]
                  %1148 = vst [vmem:[%s700 + $0x6f8] sm:$0xff] %v1147
                  %v1149 = vld [vmem:[%s699 + $0x1c00] sm:$0xff]
                  %1150 = vst [vmem:[%s700 + $0x700] sm:$0xff] %v1149
                  %v1151 = vld [vmem:[%s699 + $0x1c20] sm:$0xff]
                  %1152 = vst [vmem:[%s700 + $0x708] sm:$0xff] %v1151
                  %v1153 = vld [vmem:[%s699 + $0x1c40] sm:$0xff]
                  %1154 = vst [vmem:[%s700 + $0x710] sm:$0xff] %v1153
                  %v1155 = vld [vmem:[%s699 + $0x1c60] sm:$0xff]
                  %1156 = vst [vmem:[%s700 + $0x718] sm:$0xff] %v1155
                  %v1157 = vld [vmem:[%s699 + $0x1c80] sm:$0xff]
                  %1158 = vst [vmem:[%s700 + $0x720] sm:$0xff] %v1157
                  %v1159 = vld [vmem:[%s699 + $0x1ca0] sm:$0xff]
                  %1160 = vst [vmem:[%s700 + $0x728] sm:$0xff] %v1159
                  %v1161 = vld [vmem:[%s699 + $0x1cc0] sm:$0xff]
                  %1162 = vst [vmem:[%s700 + $0x730] sm:$0xff] %v1161
                  %v1163 = vld [vmem:[%s699 + $0x1ce0] sm:$0xff]
                  %1164 = vst [vmem:[%s700 + $0x738] sm:$0xff] %v1163
                  %v1165 = vld [vmem:[%s699 + $0x1d00] sm:$0xff]
                  %1166 = vst [vmem:[%s700 + $0x740] sm:$0xff] %v1165
                  %v1167 = vld [vmem:[%s699 + $0x1d20] sm:$0xff]
                  %1168 = vst [vmem:[%s700 + $0x748] sm:$0xff] %v1167
                  %v1169 = vld [vmem:[%s699 + $0x1d40] sm:$0xff]
                  %1170 = vst [vmem:[%s700 + $0x750] sm:$0xff] %v1169
                  %v1171 = vld [vmem:[%s699 + $0x1d60] sm:$0xff]
                  %1172 = vst [vmem:[%s700 + $0x758] sm:$0xff] %v1171
                  %v1173 = vld [vmem:[%s699 + $0x1d80] sm:$0xff]
                  %1174 = vst [vmem:[%s700 + $0x760] sm:$0xff] %v1173
                  %v1175 = vld [vmem:[%s699 + $0x1da0] sm:$0xff]
                  %1176 = vst [vmem:[%s700 + $0x768] sm:$0xff] %v1175
                  %v1177 = vld [vmem:[%s699 + $0x1dc0] sm:$0xff]
                  %1178 = vst [vmem:[%s700 + $0x770] sm:$0xff] %v1177
                  %v1179 = vld [vmem:[%s699 + $0x1de0] sm:$0xff]
                  %1180 = vst [vmem:[%s700 + $0x778] sm:$0xff] %v1179
                  %v1181 = vld [vmem:[%s699 + $0x1e00] sm:$0xff]
                  %1182 = vst [vmem:[%s700 + $0x780] sm:$0xff] %v1181
                  %v1183 = vld [vmem:[%s699 + $0x1e20] sm:$0xff]
                  %1184 = vst [vmem:[%s700 + $0x788] sm:$0xff] %v1183
                  %v1185 = vld [vmem:[%s699 + $0x1e40] sm:$0xff]
                  %1186 = vst [vmem:[%s700 + $0x790] sm:$0xff] %v1185
                  %v1187 = vld [vmem:[%s699 + $0x1e60] sm:$0xff]
                  %1188 = vst [vmem:[%s700 + $0x798] sm:$0xff] %v1187
                  %v1189 = vld [vmem:[%s699 + $0x1e80] sm:$0xff]
                  %1190 = vst [vmem:[%s700 + $0x7a0] sm:$0xff] %v1189
                  %v1191 = vld [vmem:[%s699 + $0x1ea0] sm:$0xff]
                  %1192 = vst [vmem:[%s700 + $0x7a8] sm:$0xff] %v1191
                  %v1193 = vld [vmem:[%s699 + $0x1ec0] sm:$0xff]
                  %1194 = vst [vmem:[%s700 + $0x7b0] sm:$0xff] %v1193
                  %v1195 = vld [vmem:[%s699 + $0x1ee0] sm:$0xff]
                  %1196 = vst [vmem:[%s700 + $0x7b8] sm:$0xff] %v1195
                  %v1197 = vld [vmem:[%s699 + $0x1f00] sm:$0xff]
                  %1198 = vst [vmem:[%s700 + $0x7c0] sm:$0xff] %v1197
                  %v1199 = vld [vmem:[%s699 + $0x1f20] sm:$0xff]
                  %1200 = vst [vmem:[%s700 + $0x7c8] sm:$0xff] %v1199
                  %v1201 = vld [vmem:[%s699 + $0x1f40] sm:$0xff]
                  %1202 = vst [vmem:[%s700 + $0x7d0] sm:$0xff] %v1201
                  %v1203 = vld [vmem:[%s699 + $0x1f60] sm:$0xff]
                  %1204 = vst [vmem:[%s700 + $0x7d8] sm:$0xff] %v1203
                  %v1205 = vld [vmem:[%s699 + $0x1f80] sm:$0xff]
                  %1206 = vst [vmem:[%s700 + $0x7e0] sm:$0xff] %v1205
                  %v1207 = vld [vmem:[%s699 + $0x1fa0] sm:$0xff]
                  %1208 = vst [vmem:[%s700 + $0x7e8] sm:$0xff] %v1207
                  %v1209 = vld [vmem:[%s699 + $0x1fc0] sm:$0xff]
                  %1210 = vst [vmem:[%s700 + $0x7f0] sm:$0xff] %v1209
                  %v1211 = vld [vmem:[%s699 + $0x1fe0] sm:$0xff]
                  %1212 = vst [vmem:[%s700 + $0x7f8] sm:$0xff] %v1211
                $region52: #{_init_step.7} parent=46 // loop_footer
                  %s698 = sadd.s32 1, %s694
                $region53: #{_init_step.7} parent=46 // loop_footer_branch
                  %693 = sbr.rel target = $region49
                $region54: #{_init_step.7} parent=46 // loop_exit
                  _
              $region47: #{_init_step.7} parent=31 // pred_fallthru
                _
              // Predicated region
              $region55: #{_init_step.7} parent=31 // pred_check
                _
              $region56: #{_init_step.7} parent=31 // pred_check_branch
                %1214 = sbr.rel target = $region58
              $region57: #{_init_step.7} parent=31 // pred_region
                _
              $region58: #{_init_step.7} parent=31 // pred_fallthru
                _
            $region32: #{_init_step.7} parent=27 // pred_fallthru
              _
            // Predicated region
            $region33: #{_init_step.7} parent=27 // pred_check
              _
            $region34: #{_init_step.7} parent=27 // pred_check_branch
              %169 = sbr.rel target = $region36
            $region35: #{_init_step.7} parent=27 // pred_region
              loop: start=0, step=1, limit=1
              $region37: #{_init_step.7} parent=35 // loop_pre_header
                _
              $region38: #{_init_step.7} parent=35 // loop_header
                %s172 = sphi 0, %s176
                %p173 = scmp.ge.s32.totalorder %s172, 1
                %s177 = sphi %s163, %s163
                %s178 = sphi %s160, %s160
              $region39: #{_init_step.7} parent=35 // loop_header_branch
                %175 = sbr.rel (%p173) target = $region43
              $region40: #{_init_step.7} parent=35 // loop_body
                %v179 = vld [vmem:[%s177] sm:$0xff]
                %180 = vst [vmem:[%s178] sm:$0xff] %v179
                %v181 = vld [vmem:[%s177 + $0x20] sm:$0xff]
                %182 = vst [vmem:[%s178 + $0x8] sm:$0xff] %v181
                %v183 = vld [vmem:[%s177 + $0x40] sm:$0xff]
                %184 = vst [vmem:[%s178 + $0x10] sm:$0xff] %v183
                %v185 = vld [vmem:[%s177 + $0x60] sm:$0xff]
                %186 = vst [vmem:[%s178 + $0x18] sm:$0xff] %v185
                %v187 = vld [vmem:[%s177 + $0x80] sm:$0xff]
                %188 = vst [vmem:[%s178 + $0x20] sm:$0xff] %v187
                %v189 = vld [vmem:[%s177 + $0xa0] sm:$0xff]
                %190 = vst [vmem:[%s178 + $0x28] sm:$0xff] %v189
                %v191 = vld [vmem:[%s177 + $0xc0] sm:$0xff]
                %192 = vst [vmem:[%s178 + $0x30] sm:$0xff] %v191
                %v193 = vld [vmem:[%s177 + $0xe0] sm:$0xff]
                %194 = vst [vmem:[%s178 + $0x38] sm:$0xff] %v193
                %v195 = vld [vmem:[%s177 + $0x100] sm:$0xff]
                %196 = vst [vmem:[%s178 + $0x40] sm:$0xff] %v195
                %v197 = vld [vmem:[%s177 + $0x120] sm:$0xff]
                %198 = vst [vmem:[%s178 + $0x48] sm:$0xff] %v197
                %v199 = vld [vmem:[%s177 + $0x140] sm:$0xff]
                %200 = vst [vmem:[%s178 + $0x50] sm:$0xff] %v199
                %v201 = vld [vmem:[%s177 + $0x160] sm:$0xff]
                %202 = vst [vmem:[%s178 + $0x58] sm:$0xff] %v201
                %v203 = vld [vmem:[%s177 + $0x180] sm:$0xff]
                %204 = vst [vmem:[%s178 + $0x60] sm:$0xff] %v203
                %v205 = vld [vmem:[%s177 + $0x1a0] sm:$0xff]
                %206 = vst [vmem:[%s178 + $0x68] sm:$0xff] %v205
                %v207 = vld [vmem:[%s177 + $0x1c0] sm:$0xff]
                %208 = vst [vmem:[%s178 + $0x70] sm:$0xff] %v207
                %v209 = vld [vmem:[%s177 + $0x1e0] sm:$0xff]
                %210 = vst [vmem:[%s178 + $0x78] sm:$0xff] %v209
                %v211 = vld [vmem:[%s177 + $0x200] sm:$0xff]
                %212 = vst [vmem:[%s178 + $0x80] sm:$0xff] %v211
                %v213 = vld [vmem:[%s177 + $0x220] sm:$0xff]
                %214 = vst [vmem:[%s178 + $0x88] sm:$0xff] %v213
                %v215 = vld [vmem:[%s177 + $0x240] sm:$0xff]
                %216 = vst [vmem:[%s178 + $0x90] sm:$0xff] %v215
                %v217 = vld [vmem:[%s177 + $0x260] sm:$0xff]
                %218 = vst [vmem:[%s178 + $0x98] sm:$0xff] %v217
                %v219 = vld [vmem:[%s177 + $0x280] sm:$0xff]
                %220 = vst [vmem:[%s178 + $0xa0] sm:$0xff] %v219
                %v221 = vld [vmem:[%s177 + $0x2a0] sm:$0xff]
                %222 = vst [vmem:[%s178 + $0xa8] sm:$0xff] %v221
                %v223 = vld [vmem:[%s177 + $0x2c0] sm:$0xff]
                %224 = vst [vmem:[%s178 + $0xb0] sm:$0xff] %v223
                %v225 = vld [vmem:[%s177 + $0x2e0] sm:$0xff]
                %226 = vst [vmem:[%s178 + $0xb8] sm:$0xff] %v225
                %v227 = vld [vmem:[%s177 + $0x300] sm:$0xff]
                %228 = vst [vmem:[%s178 + $0xc0] sm:$0xff] %v227
                %v229 = vld [vmem:[%s177 + $0x320] sm:$0xff]
                %230 = vst [vmem:[%s178 + $0xc8] sm:$0xff] %v229
                %v231 = vld [vmem:[%s177 + $0x340] sm:$0xff]
                %232 = vst [vmem:[%s178 + $0xd0] sm:$0xff] %v231
                %v233 = vld [vmem:[%s177 + $0x360] sm:$0xff]
                %234 = vst [vmem:[%s178 + $0xd8] sm:$0xff] %v233
                %v235 = vld [vmem:[%s177 + $0x380] sm:$0xff]
                %236 = vst [vmem:[%s178 + $0xe0] sm:$0xff] %v235
                %v237 = vld [vmem:[%s177 + $0x3a0] sm:$0xff]
                %238 = vst [vmem:[%s178 + $0xe8] sm:$0xff] %v237
                %v239 = vld [vmem:[%s177 + $0x3c0] sm:$0xff]
                %240 = vst [vmem:[%s178 + $0xf0] sm:$0xff] %v239
                %v241 = vld [vmem:[%s177 + $0x3e0] sm:$0xff]
                %242 = vst [vmem:[%s178 + $0xf8] sm:$0xff] %v241
                %v243 = vld [vmem:[%s177 + $0x400] sm:$0xff]
                %244 = vst [vmem:[%s178 + $0x100] sm:$0xff] %v243
                %v245 = vld [vmem:[%s177 + $0x420] sm:$0xff]
                %246 = vst [vmem:[%s178 + $0x108] sm:$0xff] %v245
                %v247 = vld [vmem:[%s177 + $0x440] sm:$0xff]
                %248 = vst [vmem:[%s178 + $0x110] sm:$0xff] %v247
                %v249 = vld [vmem:[%s177 + $0x460] sm:$0xff]
                %250 = vst [vmem:[%s178 + $0x118] sm:$0xff] %v249
                %v251 = vld [vmem:[%s177 + $0x480] sm:$0xff]
                %252 = vst [vmem:[%s178 + $0x120] sm:$0xff] %v251
                %v253 = vld [vmem:[%s177 + $0x4a0] sm:$0xff]
                %254 = vst [vmem:[%s178 + $0x128] sm:$0xff] %v253
                %v255 = vld [vmem:[%s177 + $0x4c0] sm:$0xff]
                %256 = vst [vmem:[%s178 + $0x130] sm:$0xff] %v255
                %v257 = vld [vmem:[%s177 + $0x4e0] sm:$0xff]
                %258 = vst [vmem:[%s178 + $0x138] sm:$0xff] %v257
                %v259 = vld [vmem:[%s177 + $0x500] sm:$0xff]
                %260 = vst [vmem:[%s178 + $0x140] sm:$0xff] %v259
                %v261 = vld [vmem:[%s177 + $0x520] sm:$0xff]
                %262 = vst [vmem:[%s178 + $0x148] sm:$0xff] %v261
                %v263 = vld [vmem:[%s177 + $0x540] sm:$0xff]
                %264 = vst [vmem:[%s178 + $0x150] sm:$0xff] %v263
                %v265 = vld [vmem:[%s177 + $0x560] sm:$0xff]
                %266 = vst [vmem:[%s178 + $0x158] sm:$0xff] %v265
                %v267 = vld [vmem:[%s177 + $0x580] sm:$0xff]
                %268 = vst [vmem:[%s178 + $0x160] sm:$0xff] %v267
                %v269 = vld [vmem:[%s177 + $0x5a0] sm:$0xff]
                %270 = vst [vmem:[%s178 + $0x168] sm:$0xff] %v269
                %v271 = vld [vmem:[%s177 + $0x5c0] sm:$0xff]
                %272 = vst [vmem:[%s178 + $0x170] sm:$0xff] %v271
                %v273 = vld [vmem:[%s177 + $0x5e0] sm:$0xff]
                %274 = vst [vmem:[%s178 + $0x178] sm:$0xff] %v273
                %v275 = vld [vmem:[%s177 + $0x600] sm:$0xff]
                %276 = vst [vmem:[%s178 + $0x180] sm:$0xff] %v275
                %v277 = vld [vmem:[%s177 + $0x620] sm:$0xff]
                %278 = vst [vmem:[%s178 + $0x188] sm:$0xff] %v277
                %v279 = vld [vmem:[%s177 + $0x640] sm:$0xff]
                %280 = vst [vmem:[%s178 + $0x190] sm:$0xff] %v279
                %v281 = vld [vmem:[%s177 + $0x660] sm:$0xff]
                %282 = vst [vmem:[%s178 + $0x198] sm:$0xff] %v281
                %v283 = vld [vmem:[%s177 + $0x680] sm:$0xff]
                %284 = vst [vmem:[%s178 + $0x1a0] sm:$0xff] %v283
                %v285 = vld [vmem:[%s177 + $0x6a0] sm:$0xff]
                %286 = vst [vmem:[%s178 + $0x1a8] sm:$0xff] %v285
                %v287 = vld [vmem:[%s177 + $0x6c0] sm:$0xff]
                %288 = vst [vmem:[%s178 + $0x1b0] sm:$0xff] %v287
                %v289 = vld [vmem:[%s177 + $0x6e0] sm:$0xff]
                %290 = vst [vmem:[%s178 + $0x1b8] sm:$0xff] %v289
                %v291 = vld [vmem:[%s177 + $0x700] sm:$0xff]
                %292 = vst [vmem:[%s178 + $0x1c0] sm:$0xff] %v291
                %v293 = vld [vmem:[%s177 + $0x720] sm:$0xff]
                %294 = vst [vmem:[%s178 + $0x1c8] sm:$0xff] %v293
                %v295 = vld [vmem:[%s177 + $0x740] sm:$0xff]
                %296 = vst [vmem:[%s178 + $0x1d0] sm:$0xff] %v295
                %v297 = vld [vmem:[%s177 + $0x760] sm:$0xff]
                %298 = vst [vmem:[%s178 + $0x1d8] sm:$0xff] %v297
                %v299 = vld [vmem:[%s177 + $0x780] sm:$0xff]
                %300 = vst [vmem:[%s178 + $0x1e0] sm:$0xff] %v299
                %v301 = vld [vmem:[%s177 + $0x7a0] sm:$0xff]
                %302 = vst [vmem:[%s178 + $0x1e8] sm:$0xff] %v301
                %v303 = vld [vmem:[%s177 + $0x7c0] sm:$0xff]
                %304 = vst [vmem:[%s178 + $0x1f0] sm:$0xff] %v303
                %v305 = vld [vmem:[%s177 + $0x7e0] sm:$0xff]
                %306 = vst [vmem:[%s178 + $0x1f8] sm:$0xff] %v305
                %v307 = vld [vmem:[%s177 + $0x800] sm:$0xff]
                %308 = vst [vmem:[%s178 + $0x200] sm:$0xff] %v307
                %v309 = vld [vmem:[%s177 + $0x820] sm:$0xff]
                %310 = vst [vmem:[%s178 + $0x208] sm:$0xff] %v309
                %v311 = vld [vmem:[%s177 + $0x840] sm:$0xff]
                %312 = vst [vmem:[%s178 + $0x210] sm:$0xff] %v311
                %v313 = vld [vmem:[%s177 + $0x860] sm:$0xff]
                %314 = vst [vmem:[%s178 + $0x218] sm:$0xff] %v313
                %v315 = vld [vmem:[%s177 + $0x880] sm:$0xff]
                %316 = vst [vmem:[%s178 + $0x220] sm:$0xff] %v315
                %v317 = vld [vmem:[%s177 + $0x8a0] sm:$0xff]
                %318 = vst [vmem:[%s178 + $0x228] sm:$0xff] %v317
                %v319 = vld [vmem:[%s177 + $0x8c0] sm:$0xff]
                %320 = vst [vmem:[%s178 + $0x230] sm:$0xff] %v319
                %v321 = vld [vmem:[%s177 + $0x8e0] sm:$0xff]
                %322 = vst [vmem:[%s178 + $0x238] sm:$0xff] %v321
                %v323 = vld [vmem:[%s177 + $0x900] sm:$0xff]
                %324 = vst [vmem:[%s178 + $0x240] sm:$0xff] %v323
                %v325 = vld [vmem:[%s177 + $0x920] sm:$0xff]
                %326 = vst [vmem:[%s178 + $0x248] sm:$0xff] %v325
                %v327 = vld [vmem:[%s177 + $0x940] sm:$0xff]
                %328 = vst [vmem:[%s178 + $0x250] sm:$0xff] %v327
                %v329 = vld [vmem:[%s177 + $0x960] sm:$0xff]
                %330 = vst [vmem:[%s178 + $0x258] sm:$0xff] %v329
                %v331 = vld [vmem:[%s177 + $0x980] sm:$0xff]
                %332 = vst [vmem:[%s178 + $0x260] sm:$0xff] %v331
                %v333 = vld [vmem:[%s177 + $0x9a0] sm:$0xff]
                %334 = vst [vmem:[%s178 + $0x268] sm:$0xff] %v333
                %v335 = vld [vmem:[%s177 + $0x9c0] sm:$0xff]
                %336 = vst [vmem:[%s178 + $0x270] sm:$0xff] %v335
                %v337 = vld [vmem:[%s177 + $0x9e0] sm:$0xff]
                %338 = vst [vmem:[%s178 + $0x278] sm:$0xff] %v337
                %v339 = vld [vmem:[%s177 + $0xa00] sm:$0xff]
                %340 = vst [vmem:[%s178 + $0x280] sm:$0xff] %v339
                %v341 = vld [vmem:[%s177 + $0xa20] sm:$0xff]
                %342 = vst [vmem:[%s178 + $0x288] sm:$0xff] %v341
                %v343 = vld [vmem:[%s177 + $0xa40] sm:$0xff]
                %344 = vst [vmem:[%s178 + $0x290] sm:$0xff] %v343
                %v345 = vld [vmem:[%s177 + $0xa60] sm:$0xff]
                %346 = vst [vmem:[%s178 + $0x298] sm:$0xff] %v345
                %v347 = vld [vmem:[%s177 + $0xa80] sm:$0xff]
                %348 = vst [vmem:[%s178 + $0x2a0] sm:$0xff] %v347
                %v349 = vld [vmem:[%s177 + $0xaa0] sm:$0xff]
                %350 = vst [vmem:[%s178 + $0x2a8] sm:$0xff] %v349
                %v351 = vld [vmem:[%s177 + $0xac0] sm:$0xff]
                %352 = vst [vmem:[%s178 + $0x2b0] sm:$0xff] %v351
                %v353 = vld [vmem:[%s177 + $0xae0] sm:$0xff]
                %354 = vst [vmem:[%s178 + $0x2b8] sm:$0xff] %v353
                %v355 = vld [vmem:[%s177 + $0xb00] sm:$0xff]
                %356 = vst [vmem:[%s178 + $0x2c0] sm:$0xff] %v355
                %v357 = vld [vmem:[%s177 + $0xb20] sm:$0xff]
                %358 = vst [vmem:[%s178 + $0x2c8] sm:$0xff] %v357
                %v359 = vld [vmem:[%s177 + $0xb40] sm:$0xff]
                %360 = vst [vmem:[%s178 + $0x2d0] sm:$0xff] %v359
                %v361 = vld [vmem:[%s177 + $0xb60] sm:$0xff]
                %362 = vst [vmem:[%s178 + $0x2d8] sm:$0xff] %v361
                %v363 = vld [vmem:[%s177 + $0xb80] sm:$0xff]
                %364 = vst [vmem:[%s178 + $0x2e0] sm:$0xff] %v363
                %v365 = vld [vmem:[%s177 + $0xba0] sm:$0xff]
                %366 = vst [vmem:[%s178 + $0x2e8] sm:$0xff] %v365
                %v367 = vld [vmem:[%s177 + $0xbc0] sm:$0xff]
                %368 = vst [vmem:[%s178 + $0x2f0] sm:$0xff] %v367
                %v369 = vld [vmem:[%s177 + $0xbe0] sm:$0xff]
                %370 = vst [vmem:[%s178 + $0x2f8] sm:$0xff] %v369
                %v371 = vld [vmem:[%s177 + $0xc00] sm:$0xff]
                %372 = vst [vmem:[%s178 + $0x300] sm:$0xff] %v371
                %v373 = vld [vmem:[%s177 + $0xc20] sm:$0xff]
                %374 = vst [vmem:[%s178 + $0x308] sm:$0xff] %v373
                %v375 = vld [vmem:[%s177 + $0xc40] sm:$0xff]
                %376 = vst [vmem:[%s178 + $0x310] sm:$0xff] %v375
                %v377 = vld [vmem:[%s177 + $0xc60] sm:$0xff]
                %378 = vst [vmem:[%s178 + $0x318] sm:$0xff] %v377
                %v379 = vld [vmem:[%s177 + $0xc80] sm:$0xff]
                %380 = vst [vmem:[%s178 + $0x320] sm:$0xff] %v379
                %v381 = vld [vmem:[%s177 + $0xca0] sm:$0xff]
                %382 = vst [vmem:[%s178 + $0x328] sm:$0xff] %v381
                %v383 = vld [vmem:[%s177 + $0xcc0] sm:$0xff]
                %384 = vst [vmem:[%s178 + $0x330] sm:$0xff] %v383
                %v385 = vld [vmem:[%s177 + $0xce0] sm:$0xff]
                %386 = vst [vmem:[%s178 + $0x338] sm:$0xff] %v385
                %v387 = vld [vmem:[%s177 + $0xd00] sm:$0xff]
                %388 = vst [vmem:[%s178 + $0x340] sm:$0xff] %v387
                %v389 = vld [vmem:[%s177 + $0xd20] sm:$0xff]
                %390 = vst [vmem:[%s178 + $0x348] sm:$0xff] %v389
                %v391 = vld [vmem:[%s177 + $0xd40] sm:$0xff]
                %392 = vst [vmem:[%s178 + $0x350] sm:$0xff] %v391
                %v393 = vld [vmem:[%s177 + $0xd60] sm:$0xff]
                %394 = vst [vmem:[%s178 + $0x358] sm:$0xff] %v393
                %v395 = vld [vmem:[%s177 + $0xd80] sm:$0xff]
                %396 = vst [vmem:[%s178 + $0x360] sm:$0xff] %v395
                %v397 = vld [vmem:[%s177 + $0xda0] sm:$0xff]
                %398 = vst [vmem:[%s178 + $0x368] sm:$0xff] %v397
                %v399 = vld [vmem:[%s177 + $0xdc0] sm:$0xff]
                %400 = vst [vmem:[%s178 + $0x370] sm:$0xff] %v399
                %v401 = vld [vmem:[%s177 + $0xde0] sm:$0xff]
                %402 = vst [vmem:[%s178 + $0x378] sm:$0xff] %v401
                %v403 = vld [vmem:[%s177 + $0xe00] sm:$0xff]
                %404 = vst [vmem:[%s178 + $0x380] sm:$0xff] %v403
                %v405 = vld [vmem:[%s177 + $0xe20] sm:$0xff]
                %406 = vst [vmem:[%s178 + $0x388] sm:$0xff] %v405
                %v407 = vld [vmem:[%s177 + $0xe40] sm:$0xff]
                %408 = vst [vmem:[%s178 + $0x390] sm:$0xff] %v407
                %v409 = vld [vmem:[%s177 + $0xe60] sm:$0xff]
                %410 = vst [vmem:[%s178 + $0x398] sm:$0xff] %v409
                %v411 = vld [vmem:[%s177 + $0xe80] sm:$0xff]
                %412 = vst [vmem:[%s178 + $0x3a0] sm:$0xff] %v411
                %v413 = vld [vmem:[%s177 + $0xea0] sm:$0xff]
                %414 = vst [vmem:[%s178 + $0x3a8] sm:$0xff] %v413
                %v415 = vld [vmem:[%s177 + $0xec0] sm:$0xff]
                %416 = vst [vmem:[%s178 + $0x3b0] sm:$0xff] %v415
                %v417 = vld [vmem:[%s177 + $0xee0] sm:$0xff]
                %418 = vst [vmem:[%s178 + $0x3b8] sm:$0xff] %v417
                %v419 = vld [vmem:[%s177 + $0xf00] sm:$0xff]
                %420 = vst [vmem:[%s178 + $0x3c0] sm:$0xff] %v419
                %v421 = vld [vmem:[%s177 + $0xf20] sm:$0xff]
                %422 = vst [vmem:[%s178 + $0x3c8] sm:$0xff] %v421
                %v423 = vld [vmem:[%s177 + $0xf40] sm:$0xff]
                %424 = vst [vmem:[%s178 + $0x3d0] sm:$0xff] %v423
                %v425 = vld [vmem:[%s177 + $0xf60] sm:$0xff]
                %426 = vst [vmem:[%s178 + $0x3d8] sm:$0xff] %v425
                %v427 = vld [vmem:[%s177 + $0xf80] sm:$0xff]
                %428 = vst [vmem:[%s178 + $0x3e0] sm:$0xff] %v427
                %v429 = vld [vmem:[%s177 + $0xfa0] sm:$0xff]
                %430 = vst [vmem:[%s178 + $0x3e8] sm:$0xff] %v429
                %v431 = vld [vmem:[%s177 + $0xfc0] sm:$0xff]
                %432 = vst [vmem:[%s178 + $0x3f0] sm:$0xff] %v431
                %v433 = vld [vmem:[%s177 + $0xfe0] sm:$0xff]
                %434 = vst [vmem:[%s178 + $0x3f8] sm:$0xff] %v433
                %v435 = vld [vmem:[%s177 + $0x1000] sm:$0xff]
                %436 = vst [vmem:[%s178 + $0x400] sm:$0xff] %v435
                %v437 = vld [vmem:[%s177 + $0x1020] sm:$0xff]
                %438 = vst [vmem:[%s178 + $0x408] sm:$0xff] %v437
                %v439 = vld [vmem:[%s177 + $0x1040] sm:$0xff]
                %440 = vst [vmem:[%s178 + $0x410] sm:$0xff] %v439
                %v441 = vld [vmem:[%s177 + $0x1060] sm:$0xff]
                %442 = vst [vmem:[%s178 + $0x418] sm:$0xff] %v441
                %v443 = vld [vmem:[%s177 + $0x1080] sm:$0xff]
                %444 = vst [vmem:[%s178 + $0x420] sm:$0xff] %v443
                %v445 = vld [vmem:[%s177 + $0x10a0] sm:$0xff]
                %446 = vst [vmem:[%s178 + $0x428] sm:$0xff] %v445
                %v447 = vld [vmem:[%s177 + $0x10c0] sm:$0xff]
                %448 = vst [vmem:[%s178 + $0x430] sm:$0xff] %v447
                %v449 = vld [vmem:[%s177 + $0x10e0] sm:$0xff]
                %450 = vst [vmem:[%s178 + $0x438] sm:$0xff] %v449
                %v451 = vld [vmem:[%s177 + $0x1100] sm:$0xff]
                %452 = vst [vmem:[%s178 + $0x440] sm:$0xff] %v451
                %v453 = vld [vmem:[%s177 + $0x1120] sm:$0xff]
                %454 = vst [vmem:[%s178 + $0x448] sm:$0xff] %v453
                %v455 = vld [vmem:[%s177 + $0x1140] sm:$0xff]
                %456 = vst [vmem:[%s178 + $0x450] sm:$0xff] %v455
                %v457 = vld [vmem:[%s177 + $0x1160] sm:$0xff]
                %458 = vst [vmem:[%s178 + $0x458] sm:$0xff] %v457
                %v459 = vld [vmem:[%s177 + $0x1180] sm:$0xff]
                %460 = vst [vmem:[%s178 + $0x460] sm:$0xff] %v459
                %v461 = vld [vmem:[%s177 + $0x11a0] sm:$0xff]
                %462 = vst [vmem:[%s178 + $0x468] sm:$0xff] %v461
                %v463 = vld [vmem:[%s177 + $0x11c0] sm:$0xff]
                %464 = vst [vmem:[%s178 + $0x470] sm:$0xff] %v463
                %v465 = vld [vmem:[%s177 + $0x11e0] sm:$0xff]
                %466 = vst [vmem:[%s178 + $0x478] sm:$0xff] %v465
                %v467 = vld [vmem:[%s177 + $0x1200] sm:$0xff]
                %468 = vst [vmem:[%s178 + $0x480] sm:$0xff] %v467
                %v469 = vld [vmem:[%s177 + $0x1220] sm:$0xff]
                %470 = vst [vmem:[%s178 + $0x488] sm:$0xff] %v469
                %v471 = vld [vmem:[%s177 + $0x1240] sm:$0xff]
                %472 = vst [vmem:[%s178 + $0x490] sm:$0xff] %v471
                %v473 = vld [vmem:[%s177 + $0x1260] sm:$0xff]
                %474 = vst [vmem:[%s178 + $0x498] sm:$0xff] %v473
                %v475 = vld [vmem:[%s177 + $0x1280] sm:$0xff]
                %476 = vst [vmem:[%s178 + $0x4a0] sm:$0xff] %v475
                %v477 = vld [vmem:[%s177 + $0x12a0] sm:$0xff]
                %478 = vst [vmem:[%s178 + $0x4a8] sm:$0xff] %v477
                %v479 = vld [vmem:[%s177 + $0x12c0] sm:$0xff]
                %480 = vst [vmem:[%s178 + $0x4b0] sm:$0xff] %v479
                %v481 = vld [vmem:[%s177 + $0x12e0] sm:$0xff]
                %482 = vst [vmem:[%s178 + $0x4b8] sm:$0xff] %v481
                %v483 = vld [vmem:[%s177 + $0x1300] sm:$0xff]
                %484 = vst [vmem:[%s178 + $0x4c0] sm:$0xff] %v483
                %v485 = vld [vmem:[%s177 + $0x1320] sm:$0xff]
                %486 = vst [vmem:[%s178 + $0x4c8] sm:$0xff] %v485
                %v487 = vld [vmem:[%s177 + $0x1340] sm:$0xff]
                %488 = vst [vmem:[%s178 + $0x4d0] sm:$0xff] %v487
                %v489 = vld [vmem:[%s177 + $0x1360] sm:$0xff]
                %490 = vst [vmem:[%s178 + $0x4d8] sm:$0xff] %v489
                %v491 = vld [vmem:[%s177 + $0x1380] sm:$0xff]
                %492 = vst [vmem:[%s178 + $0x4e0] sm:$0xff] %v491
                %v493 = vld [vmem:[%s177 + $0x13a0] sm:$0xff]
                %494 = vst [vmem:[%s178 + $0x4e8] sm:$0xff] %v493
                %v495 = vld [vmem:[%s177 + $0x13c0] sm:$0xff]
                %496 = vst [vmem:[%s178 + $0x4f0] sm:$0xff] %v495
                %v497 = vld [vmem:[%s177 + $0x13e0] sm:$0xff]
                %498 = vst [vmem:[%s178 + $0x4f8] sm:$0xff] %v497
                %v499 = vld [vmem:[%s177 + $0x1400] sm:$0xff]
                %500 = vst [vmem:[%s178 + $0x500] sm:$0xff] %v499
                %v501 = vld [vmem:[%s177 + $0x1420] sm:$0xff]
                %502 = vst [vmem:[%s178 + $0x508] sm:$0xff] %v501
                %v503 = vld [vmem:[%s177 + $0x1440] sm:$0xff]
                %504 = vst [vmem:[%s178 + $0x510] sm:$0xff] %v503
                %v505 = vld [vmem:[%s177 + $0x1460] sm:$0xff]
                %506 = vst [vmem:[%s178 + $0x518] sm:$0xff] %v505
                %v507 = vld [vmem:[%s177 + $0x1480] sm:$0xff]
                %508 = vst [vmem:[%s178 + $0x520] sm:$0xff] %v507
                %v509 = vld [vmem:[%s177 + $0x14a0] sm:$0xff]
                %510 = vst [vmem:[%s178 + $0x528] sm:$0xff] %v509
                %v511 = vld [vmem:[%s177 + $0x14c0] sm:$0xff]
                %512 = vst [vmem:[%s178 + $0x530] sm:$0xff] %v511
                %v513 = vld [vmem:[%s177 + $0x14e0] sm:$0xff]
                %514 = vst [vmem:[%s178 + $0x538] sm:$0xff] %v513
                %v515 = vld [vmem:[%s177 + $0x1500] sm:$0xff]
                %516 = vst [vmem:[%s178 + $0x540] sm:$0xff] %v515
                %v517 = vld [vmem:[%s177 + $0x1520] sm:$0xff]
                %518 = vst [vmem:[%s178 + $0x548] sm:$0xff] %v517
                %v519 = vld [vmem:[%s177 + $0x1540] sm:$0xff]
                %520 = vst [vmem:[%s178 + $0x550] sm:$0xff] %v519
                %v521 = vld [vmem:[%s177 + $0x1560] sm:$0xff]
                %522 = vst [vmem:[%s178 + $0x558] sm:$0xff] %v521
                %v523 = vld [vmem:[%s177 + $0x1580] sm:$0xff]
                %524 = vst [vmem:[%s178 + $0x560] sm:$0xff] %v523
                %v525 = vld [vmem:[%s177 + $0x15a0] sm:$0xff]
                %526 = vst [vmem:[%s178 + $0x568] sm:$0xff] %v525
                %v527 = vld [vmem:[%s177 + $0x15c0] sm:$0xff]
                %528 = vst [vmem:[%s178 + $0x570] sm:$0xff] %v527
                %v529 = vld [vmem:[%s177 + $0x15e0] sm:$0xff]
                %530 = vst [vmem:[%s178 + $0x578] sm:$0xff] %v529
                %v531 = vld [vmem:[%s177 + $0x1600] sm:$0xff]
                %532 = vst [vmem:[%s178 + $0x580] sm:$0xff] %v531
                %v533 = vld [vmem:[%s177 + $0x1620] sm:$0xff]
                %534 = vst [vmem:[%s178 + $0x588] sm:$0xff] %v533
                %v535 = vld [vmem:[%s177 + $0x1640] sm:$0xff]
                %536 = vst [vmem:[%s178 + $0x590] sm:$0xff] %v535
                %v537 = vld [vmem:[%s177 + $0x1660] sm:$0xff]
                %538 = vst [vmem:[%s178 + $0x598] sm:$0xff] %v537
                %v539 = vld [vmem:[%s177 + $0x1680] sm:$0xff]
                %540 = vst [vmem:[%s178 + $0x5a0] sm:$0xff] %v539
                %v541 = vld [vmem:[%s177 + $0x16a0] sm:$0xff]
                %542 = vst [vmem:[%s178 + $0x5a8] sm:$0xff] %v541
                %v543 = vld [vmem:[%s177 + $0x16c0] sm:$0xff]
                %544 = vst [vmem:[%s178 + $0x5b0] sm:$0xff] %v543
                %v545 = vld [vmem:[%s177 + $0x16e0] sm:$0xff]
                %546 = vst [vmem:[%s178 + $0x5b8] sm:$0xff] %v545
                %v547 = vld [vmem:[%s177 + $0x1700] sm:$0xff]
                %548 = vst [vmem:[%s178 + $0x5c0] sm:$0xff] %v547
                %v549 = vld [vmem:[%s177 + $0x1720] sm:$0xff]
                %550 = vst [vmem:[%s178 + $0x5c8] sm:$0xff] %v549
                %v551 = vld [vmem:[%s177 + $0x1740] sm:$0xff]
                %552 = vst [vmem:[%s178 + $0x5d0] sm:$0xff] %v551
                %v553 = vld [vmem:[%s177 + $0x1760] sm:$0xff]
                %554 = vst [vmem:[%s178 + $0x5d8] sm:$0xff] %v553
                %v555 = vld [vmem:[%s177 + $0x1780] sm:$0xff]
                %556 = vst [vmem:[%s178 + $0x5e0] sm:$0xff] %v555
                %v557 = vld [vmem:[%s177 + $0x17a0] sm:$0xff]
                %558 = vst [vmem:[%s178 + $0x5e8] sm:$0xff] %v557
                %v559 = vld [vmem:[%s177 + $0x17c0] sm:$0xff]
                %560 = vst [vmem:[%s178 + $0x5f0] sm:$0xff] %v559
                %v561 = vld [vmem:[%s177 + $0x17e0] sm:$0xff]
                %562 = vst [vmem:[%s178 + $0x5f8] sm:$0xff] %v561
                %v563 = vld [vmem:[%s177 + $0x1800] sm:$0xff]
                %564 = vst [vmem:[%s178 + $0x600] sm:$0xff] %v563
                %v565 = vld [vmem:[%s177 + $0x1820] sm:$0xff]
                %566 = vst [vmem:[%s178 + $0x608] sm:$0xff] %v565
                %v567 = vld [vmem:[%s177 + $0x1840] sm:$0xff]
                %568 = vst [vmem:[%s178 + $0x610] sm:$0xff] %v567
                %v569 = vld [vmem:[%s177 + $0x1860] sm:$0xff]
                %570 = vst [vmem:[%s178 + $0x618] sm:$0xff] %v569
                %v571 = vld [vmem:[%s177 + $0x1880] sm:$0xff]
                %572 = vst [vmem:[%s178 + $0x620] sm:$0xff] %v571
                %v573 = vld [vmem:[%s177 + $0x18a0] sm:$0xff]
                %574 = vst [vmem:[%s178 + $0x628] sm:$0xff] %v573
                %v575 = vld [vmem:[%s177 + $0x18c0] sm:$0xff]
                %576 = vst [vmem:[%s178 + $0x630] sm:$0xff] %v575
                %v577 = vld [vmem:[%s177 + $0x18e0] sm:$0xff]
                %578 = vst [vmem:[%s178 + $0x638] sm:$0xff] %v577
                %v579 = vld [vmem:[%s177 + $0x1900] sm:$0xff]
                %580 = vst [vmem:[%s178 + $0x640] sm:$0xff] %v579
                %v581 = vld [vmem:[%s177 + $0x1920] sm:$0xff]
                %582 = vst [vmem:[%s178 + $0x648] sm:$0xff] %v581
                %v583 = vld [vmem:[%s177 + $0x1940] sm:$0xff]
                %584 = vst [vmem:[%s178 + $0x650] sm:$0xff] %v583
                %v585 = vld [vmem:[%s177 + $0x1960] sm:$0xff]
                %586 = vst [vmem:[%s178 + $0x658] sm:$0xff] %v585
                %v587 = vld [vmem:[%s177 + $0x1980] sm:$0xff]
                %588 = vst [vmem:[%s178 + $0x660] sm:$0xff] %v587
                %v589 = vld [vmem:[%s177 + $0x19a0] sm:$0xff]
                %590 = vst [vmem:[%s178 + $0x668] sm:$0xff] %v589
                %v591 = vld [vmem:[%s177 + $0x19c0] sm:$0xff]
                %592 = vst [vmem:[%s178 + $0x670] sm:$0xff] %v591
                %v593 = vld [vmem:[%s177 + $0x19e0] sm:$0xff]
                %594 = vst [vmem:[%s178 + $0x678] sm:$0xff] %v593
                %v595 = vld [vmem:[%s177 + $0x1a00] sm:$0xff]
                %596 = vst [vmem:[%s178 + $0x680] sm:$0xff] %v595
                %v597 = vld [vmem:[%s177 + $0x1a20] sm:$0xff]
                %598 = vst [vmem:[%s178 + $0x688] sm:$0xff] %v597
                %v599 = vld [vmem:[%s177 + $0x1a40] sm:$0xff]
                %600 = vst [vmem:[%s178 + $0x690] sm:$0xff] %v599
                %v601 = vld [vmem:[%s177 + $0x1a60] sm:$0xff]
                %602 = vst [vmem:[%s178 + $0x698] sm:$0xff] %v601
                %v603 = vld [vmem:[%s177 + $0x1a80] sm:$0xff]
                %604 = vst [vmem:[%s178 + $0x6a0] sm:$0xff] %v603
                %v605 = vld [vmem:[%s177 + $0x1aa0] sm:$0xff]
                %606 = vst [vmem:[%s178 + $0x6a8] sm:$0xff] %v605
                %v607 = vld [vmem:[%s177 + $0x1ac0] sm:$0xff]
                %608 = vst [vmem:[%s178 + $0x6b0] sm:$0xff] %v607
                %v609 = vld [vmem:[%s177 + $0x1ae0] sm:$0xff]
                %610 = vst [vmem:[%s178 + $0x6b8] sm:$0xff] %v609
                %v611 = vld [vmem:[%s177 + $0x1b00] sm:$0xff]
                %612 = vst [vmem:[%s178 + $0x6c0] sm:$0xff] %v611
                %v613 = vld [vmem:[%s177 + $0x1b20] sm:$0xff]
                %614 = vst [vmem:[%s178 + $0x6c8] sm:$0xff] %v613
                %v615 = vld [vmem:[%s177 + $0x1b40] sm:$0xff]
                %616 = vst [vmem:[%s178 + $0x6d0] sm:$0xff] %v615
                %v617 = vld [vmem:[%s177 + $0x1b60] sm:$0xff]
                %618 = vst [vmem:[%s178 + $0x6d8] sm:$0xff] %v617
                %v619 = vld [vmem:[%s177 + $0x1b80] sm:$0xff]
                %620 = vst [vmem:[%s178 + $0x6e0] sm:$0xff] %v619
                %v621 = vld [vmem:[%s177 + $0x1ba0] sm:$0xff]
                %622 = vst [vmem:[%s178 + $0x6e8] sm:$0xff] %v621
                %v623 = vld [vmem:[%s177 + $0x1bc0] sm:$0xff]
                %624 = vst [vmem:[%s178 + $0x6f0] sm:$0xff] %v623
                %v625 = vld [vmem:[%s177 + $0x1be0] sm:$0xff]
                %626 = vst [vmem:[%s178 + $0x6f8] sm:$0xff] %v625
                %v627 = vld [vmem:[%s177 + $0x1c00] sm:$0xff]
                %628 = vst [vmem:[%s178 + $0x700] sm:$0xff] %v627
                %v629 = vld [vmem:[%s177 + $0x1c20] sm:$0xff]
                %630 = vst [vmem:[%s178 + $0x708] sm:$0xff] %v629
                %v631 = vld [vmem:[%s177 + $0x1c40] sm:$0xff]
                %632 = vst [vmem:[%s178 + $0x710] sm:$0xff] %v631
                %v633 = vld [vmem:[%s177 + $0x1c60] sm:$0xff]
                %634 = vst [vmem:[%s178 + $0x718] sm:$0xff] %v633
                %v635 = vld [vmem:[%s177 + $0x1c80] sm:$0xff]
                %636 = vst [vmem:[%s178 + $0x720] sm:$0xff] %v635
                %v637 = vld [vmem:[%s177 + $0x1ca0] sm:$0xff]
                %638 = vst [vmem:[%s178 + $0x728] sm:$0xff] %v637
                %v639 = vld [vmem:[%s177 + $0x1cc0] sm:$0xff]
                %640 = vst [vmem:[%s178 + $0x730] sm:$0xff] %v639
                %v641 = vld [vmem:[%s177 + $0x1ce0] sm:$0xff]
                %642 = vst [vmem:[%s178 + $0x738] sm:$0xff] %v641
                %v643 = vld [vmem:[%s177 + $0x1d00] sm:$0xff]
                %644 = vst [vmem:[%s178 + $0x740] sm:$0xff] %v643
                %v645 = vld [vmem:[%s177 + $0x1d20] sm:$0xff]
                %646 = vst [vmem:[%s178 + $0x748] sm:$0xff] %v645
                %v647 = vld [vmem:[%s177 + $0x1d40] sm:$0xff]
                %648 = vst [vmem:[%s178 + $0x750] sm:$0xff] %v647
                %v649 = vld [vmem:[%s177 + $0x1d60] sm:$0xff]
                %650 = vst [vmem:[%s178 + $0x758] sm:$0xff] %v649
                %v651 = vld [vmem:[%s177 + $0x1d80] sm:$0xff]
                %652 = vst [vmem:[%s178 + $0x760] sm:$0xff] %v651
                %v653 = vld [vmem:[%s177 + $0x1da0] sm:$0xff]
                %654 = vst [vmem:[%s178 + $0x768] sm:$0xff] %v653
                %v655 = vld [vmem:[%s177 + $0x1dc0] sm:$0xff]
                %656 = vst [vmem:[%s178 + $0x770] sm:$0xff] %v655
                %v657 = vld [vmem:[%s177 + $0x1de0] sm:$0xff]
                %658 = vst [vmem:[%s178 + $0x778] sm:$0xff] %v657
                %v659 = vld [vmem:[%s177 + $0x1e00] sm:$0xff]
                %660 = vst [vmem:[%s178 + $0x780] sm:$0xff] %v659
                %v661 = vld [vmem:[%s177 + $0x1e20] sm:$0xff]
                %662 = vst [vmem:[%s178 + $0x788] sm:$0xff] %v661
                %v663 = vld [vmem:[%s177 + $0x1e40] sm:$0xff]
                %664 = vst [vmem:[%s178 + $0x790] sm:$0xff] %v663
                %v665 = vld [vmem:[%s177 + $0x1e60] sm:$0xff]
                %666 = vst [vmem:[%s178 + $0x798] sm:$0xff] %v665
                %v667 = vld [vmem:[%s177 + $0x1e80] sm:$0xff]
                %668 = vst [vmem:[%s178 + $0x7a0] sm:$0xff] %v667
                %v669 = vld [vmem:[%s177 + $0x1ea0] sm:$0xff]
                %670 = vst [vmem:[%s178 + $0x7a8] sm:$0xff] %v669
                %v671 = vld [vmem:[%s177 + $0x1ec0] sm:$0xff]
                %672 = vst [vmem:[%s178 + $0x7b0] sm:$0xff] %v671
                %v673 = vld [vmem:[%s177 + $0x1ee0] sm:$0xff]
                %674 = vst [vmem:[%s178 + $0x7b8] sm:$0xff] %v673
                %v675 = vld [vmem:[%s177 + $0x1f00] sm:$0xff]
                %676 = vst [vmem:[%s178 + $0x7c0] sm:$0xff] %v675
                %v677 = vld [vmem:[%s177 + $0x1f20] sm:$0xff]
                %678 = vst [vmem:[%s178 + $0x7c8] sm:$0xff] %v677
                %v679 = vld [vmem:[%s177 + $0x1f40] sm:$0xff]
                %680 = vst [vmem:[%s178 + $0x7d0] sm:$0xff] %v679
                %v681 = vld [vmem:[%s177 + $0x1f60] sm:$0xff]
                %682 = vst [vmem:[%s178 + $0x7d8] sm:$0xff] %v681
                %v683 = vld [vmem:[%s177 + $0x1f80] sm:$0xff]
                %684 = vst [vmem:[%s178 + $0x7e0] sm:$0xff] %v683
                %v685 = vld [vmem:[%s177 + $0x1fa0] sm:$0xff]
                %686 = vst [vmem:[%s178 + $0x7e8] sm:$0xff] %v685
                %v687 = vld [vmem:[%s177 + $0x1fc0] sm:$0xff]
                %688 = vst [vmem:[%s178 + $0x7f0] sm:$0xff] %v687
                %v689 = vld [vmem:[%s177 + $0x1fe0] sm:$0xff]
                %690 = vst [vmem:[%s178 + $0x7f8] sm:$0xff] %v689
              $region41: #{_init_step.7} parent=35 // loop_footer
                %s176 = sadd.s32 1, %s172
              $region42: #{_init_step.7} parent=35 // loop_footer_branch
                %171 = sbr.rel target = $region38
              $region43: #{_init_step.7} parent=35 // loop_exit
                _
            $region36: #{_init_step.7} parent=27 // pred_fallthru
              _
          $region28: #{_init_step.7} parent=23 // pred_fallthru
            _
          %1215 = vnop
        $region24: #{_init_step.7} parent=19 // pred_fallthru
          _
        // Predicated region
        $region59: #{_init_step.7} parent=19 // pred_check
          %p1216 = pneg %p93
        $region60: #{_init_step.7} parent=19 // pred_check_branch
          %1218 = sbr.rel (%p1216) target = $region62
        $region61: #{_init_step.7} parent=19 // pred_region
          %s1219 = smul.u32 2, %s17
          %p1220 = scmp.lt.s32.totalorder %s1219, 7
          %s1221 = scalar_select %p1220, %s1219, 7
          %s1222 = scalar_lea.vmem %s2, %s1221
          %s1223 = smul.u32 2, %s17
        $region62: #{_init_step.7} parent=19 // pred_fallthru
          _
      $region20: #{_init_step.7} parent=5 // pred_fallthru
        _
      %p1224 = scmp.le.s32.totalorder 1, %s9
      %p1225 = scmp.lt.s32.totalorder %s9, 5
      %p1226 = pnand %p1224, %p1225
      %p1227 = pneg %p1226
      // Predicated region
      $region63: #{_init_step.7} parent=5 // pred_check
        _
      $region64: #{_init_step.7} parent=5 // pred_check_branch
        %1229 = sbr.rel (%p1226) target = $region66
      $region65: #{_init_step.7} parent=5 // pred_region
        %s1230 = ssub.s32 %s9, 1
        %s1231 = sand.u32 %s60, 1
        %s1232 = sand.u32 %s60, 1
        %s1233 = smul.addr %s1232, 2048
        %s1234 = scalar_lea.vmem [#allocation2], %s1233
        // Predicated region
        $region67: #{_init_step.7} parent=65 // pred_check
          %p1235 = pneg %p73
        $region68: #{_init_step.7} parent=65 // pred_check_branch
          %1237 = sbr.rel (%p1235) target = $region70
        $region69: #{_init_step.7} parent=65 // pred_region
          _
        $region70: #{_init_step.7} parent=65 // pred_fallthru
          _
        %p1238 = scmp.lt.s32.totalorder %s18, 0
        %s1239 = scalar_select %p1238, %s18, 0
        %s1240 = smul.addr %s1239, 16
        %s1241 = smul.addr %s1240, 4
        %s1242 = scalar_lea.vmem %s0, %s1241
        %p1243 = pneg %p47
        %p1244 = pneg %p44
        %s1245 = sand.u32 %s60, 1
        %s1246 = sand.u32 %s60, 1
        %s1247 = smul.addr %s1246, 2048
        %s1248 = scalar_lea.vmem [#allocation2], %s1247
        %p1249 = pneg %p73
        %p1250 = pneg %p70
        %s1251 = smul.u32 2, %s19
        %p1252 = scmp.lt.s32.totalorder %s1251, 7
        %s1253 = scalar_select %p1252, %s1251, 7
        %s1254 = scalar_lea.vmem %s2, %s1253
        %p1255 = pneg %p99
        %p1256 = pneg %p96
        %p1257 = pneg %p127
        %p1258 = pneg %p124
        %s1259 = smul.u32 2, %s19
        %p1260 = scmp.lt.s32.totalorder %s18, 0
        %s1261 = scalar_select %p1260, %s18, 0
        %p1262 = scmp.lt.s32.totalorder %s1259, 7
        %s1263 = scalar_select %p1262, %s1259, 7
        %s1264 = smul.addr %s1261, 8
        %s1265 = sadd.s32 %s1263, %s1264
        %s1266 = smul.addr %s1265, 4
        %s1267 = scalar_lea.vmem %s3, %s1266
        %p1268 = scmp.lt.s32.totalorder %s18, 0
        %s1269 = scalar_select %p1268, %s18, 0
        %s1270 = smul.addr %s1269, 16
        %s1271 = smul.addr %s1270, 4
        %s1272 = scalar_lea.vmem %s0, %s1271
        %s1273 = smul.u32 2, %s19
        %s1274 = smul.u32 2, %s19
        %p1275 = scmp.lt.s32.totalorder %s1274, 7
        %s1276 = scalar_select %p1275, %s1274, 7
        %s1277 = scalar_lea.vmem %s2, %s1276
        %s1278 = smul.u32 2, %s19
        %s1279 = smul.u32 2, %s19
        %p1280 = scmp.lt.s32.totalorder %s18, 0
        %s1281 = scalar_select %p1280, %s18, 0
        %p1282 = scmp.lt.s32.totalorder %s1279, 7
        %s1283 = scalar_select %p1282, %s1279, 7
        %s1284 = smul.addr %s1281, 8
        %s1285 = sadd.s32 %s1283, %s1284
        %s1286 = smul.addr %s1285, 4
        %s1287 = scalar_lea.vmem %s3, %s1286
        %s1288 = smul.u32 2, %s19
        %v1289 = vld [vmem:[%s1272] sm:$0xff]
        %v1290 = vld [vmem:[%s1272 + $0x8] sm:$0xff]
        %v1291 = vld [vmem:[%s1272 + $0x10] sm:$0xff]
        %v1292 = vld [vmem:[%s1272 + $0x18] sm:$0xff]
        %v1293 = vld [vmem:[%s1272 + $0x20] sm:$0xff]
        %v1294 = vld [vmem:[%s1272 + $0x28] sm:$0xff]
        %v1295 = vld [vmem:[%s1272 + $0x30] sm:$0xff]
        %v1296 = vld [vmem:[%s1272 + $0x38] sm:$0xff]
        %v1297 = vld [vmem:[%s1234] sm:$0xff]
        %v1298 = vld [vmem:[%s1234 + $0x8] sm:$0xff]
        %v1299 = vld [vmem:[%s1234 + $0x10] sm:$0xff]
        %v1300 = vld [vmem:[%s1234 + $0x18] sm:$0xff]
        %v1301 = vld [vmem:[%s1234 + $0x20] sm:$0xff]
        %v1302 = vld [vmem:[%s1234 + $0x28] sm:$0xff]
        %v1303 = vld [vmem:[%s1234 + $0x30] sm:$0xff]
        %v1304 = vld [vmem:[%s1234 + $0x38] sm:$0xff]
        %v1305 = vld [vmem:[%s1234 + $0x40] sm:$0xff]
        %v1306 = vld [vmem:[%s1234 + $0x48] sm:$0xff]
        %v1307 = vld [vmem:[%s1234 + $0x50] sm:$0xff]
        %v1308 = vld [vmem:[%s1234 + $0x58] sm:$0xff]
        %v1309 = vld [vmem:[%s1234 + $0x60] sm:$0xff]
        %v1310 = vld [vmem:[%s1234 + $0x68] sm:$0xff]
        %v1311 = vld [vmem:[%s1234 + $0x70] sm:$0xff]
        %v1312 = vld [vmem:[%s1234 + $0x78] sm:$0xff]
        %v1313 = vld [vmem:[%s1234 + $0x80] sm:$0xff]
        %v1314 = vld [vmem:[%s1234 + $0x88] sm:$0xff]
        %v1315 = vld [vmem:[%s1234 + $0x90] sm:$0xff]
        %v1316 = vld [vmem:[%s1234 + $0x98] sm:$0xff]
        %v1317 = vld [vmem:[%s1234 + $0xa0] sm:$0xff]
        %v1318 = vld [vmem:[%s1234 + $0xa8] sm:$0xff]
        %v1319 = vld [vmem:[%s1234 + $0xb0] sm:$0xff]
        %v1320 = vld [vmem:[%s1234 + $0xb8] sm:$0xff]
        %v1321 = vld [vmem:[%s1234 + $0xc0] sm:$0xff]
        %v1322 = vld [vmem:[%s1234 + $0xc8] sm:$0xff]
        %v1323 = vld [vmem:[%s1234 + $0xd0] sm:$0xff]
        %v1324 = vld [vmem:[%s1234 + $0xd8] sm:$0xff]
        %v1325 = vld [vmem:[%s1234 + $0xe0] sm:$0xff]
        %v1326 = vld [vmem:[%s1234 + $0xe8] sm:$0xff]
        %v1327 = vld [vmem:[%s1234 + $0xf0] sm:$0xff]
        %v1328 = vld [vmem:[%s1234 + $0xf8] sm:$0xff]
        %v1329 = vld [vmem:[%s1234 + $0x100] sm:$0xff]
        %v1330 = vld [vmem:[%s1234 + $0x108] sm:$0xff]
        %v1331 = vld [vmem:[%s1234 + $0x110] sm:$0xff]
        %v1332 = vld [vmem:[%s1234 + $0x118] sm:$0xff]
        %v1333 = vld [vmem:[%s1234 + $0x120] sm:$0xff]
        %v1334 = vld [vmem:[%s1234 + $0x128] sm:$0xff]
        %v1335 = vld [vmem:[%s1234 + $0x130] sm:$0xff]
        %v1336 = vld [vmem:[%s1234 + $0x138] sm:$0xff]
        %v1337 = vld [vmem:[%s1234 + $0x140] sm:$0xff]
        %v1338 = vld [vmem:[%s1234 + $0x148] sm:$0xff]
        %v1339 = vld [vmem:[%s1234 + $0x150] sm:$0xff]
        %v1340 = vld [vmem:[%s1234 + $0x158] sm:$0xff]
        %v1341 = vld [vmem:[%s1234 + $0x160] sm:$0xff]
        %v1342 = vld [vmem:[%s1234 + $0x168] sm:$0xff]
        %v1343 = vld [vmem:[%s1234 + $0x170] sm:$0xff]
        %v1344 = vld [vmem:[%s1234 + $0x178] sm:$0xff]
        %v1345 = vld [vmem:[%s1234 + $0x180] sm:$0xff]
        %v1346 = vld [vmem:[%s1234 + $0x188] sm:$0xff]
        %v1347 = vld [vmem:[%s1234 + $0x190] sm:$0xff]
        %v1348 = vld [vmem:[%s1234 + $0x198] sm:$0xff]
        %v1349 = vld [vmem:[%s1234 + $0x1a0] sm:$0xff]
        %v1350 = vld [vmem:[%s1234 + $0x1a8] sm:$0xff]
        %v1351 = vld [vmem:[%s1234 + $0x1b0] sm:$0xff]
        %v1352 = vld [vmem:[%s1234 + $0x1b8] sm:$0xff]
        %v1353 = vld [vmem:[%s1234 + $0x1c0] sm:$0xff]
        %v1354 = vld [vmem:[%s1234 + $0x1c8] sm:$0xff]
        %v1355 = vld [vmem:[%s1234 + $0x1d0] sm:$0xff]
        %v1356 = vld [vmem:[%s1234 + $0x1d8] sm:$0xff]
        %v1357 = vld [vmem:[%s1234 + $0x1e0] sm:$0xff]
        %v1358 = vld [vmem:[%s1234 + $0x1e8] sm:$0xff]
        %v1359 = vld [vmem:[%s1234 + $0x1f0] sm:$0xff]
        %v1360 = vld [vmem:[%s1234 + $0x1f8] sm:$0xff]
        %v1361 = vld [vmem:[%s1234 + $0x200] sm:$0xff]
        %v1362 = vld [vmem:[%s1234 + $0x208] sm:$0xff]
        %v1363 = vld [vmem:[%s1234 + $0x210] sm:$0xff]
        %v1364 = vld [vmem:[%s1234 + $0x218] sm:$0xff]
        %v1365 = vld [vmem:[%s1234 + $0x220] sm:$0xff]
        %v1366 = vld [vmem:[%s1234 + $0x228] sm:$0xff]
        %v1367 = vld [vmem:[%s1234 + $0x230] sm:$0xff]
        %v1368 = vld [vmem:[%s1234 + $0x238] sm:$0xff]
        %v1369 = vld [vmem:[%s1234 + $0x240] sm:$0xff]
        %v1370 = vld [vmem:[%s1234 + $0x248] sm:$0xff]
        %v1371 = vld [vmem:[%s1234 + $0x250] sm:$0xff]
        %v1372 = vld [vmem:[%s1234 + $0x258] sm:$0xff]
        %v1373 = vld [vmem:[%s1234 + $0x260] sm:$0xff]
        %v1374 = vld [vmem:[%s1234 + $0x268] sm:$0xff]
        %v1375 = vld [vmem:[%s1234 + $0x270] sm:$0xff]
        %v1376 = vld [vmem:[%s1234 + $0x278] sm:$0xff]
        %v1377 = vld [vmem:[%s1234 + $0x280] sm:$0xff]
        %v1378 = vld [vmem:[%s1234 + $0x288] sm:$0xff]
        %v1379 = vld [vmem:[%s1234 + $0x290] sm:$0xff]
        %v1380 = vld [vmem:[%s1234 + $0x298] sm:$0xff]
        %v1381 = vld [vmem:[%s1234 + $0x2a0] sm:$0xff]
        %v1382 = vld [vmem:[%s1234 + $0x2a8] sm:$0xff]
        %v1383 = vld [vmem:[%s1234 + $0x2b0] sm:$0xff]
        %v1384 = vld [vmem:[%s1234 + $0x2b8] sm:$0xff]
        %v1385 = vld [vmem:[%s1234 + $0x2c0] sm:$0xff]
        %v1386 = vld [vmem:[%s1234 + $0x2c8] sm:$0xff]
        %v1387 = vld [vmem:[%s1234 + $0x2d0] sm:$0xff]
        %v1388 = vld [vmem:[%s1234 + $0x2d8] sm:$0xff]
        %v1389 = vld [vmem:[%s1234 + $0x2e0] sm:$0xff]
        %v1390 = vld [vmem:[%s1234 + $0x2e8] sm:$0xff]
        %v1391 = vld [vmem:[%s1234 + $0x2f0] sm:$0xff]
        %v1392 = vld [vmem:[%s1234 + $0x2f8] sm:$0xff]
        %v1393 = vld [vmem:[%s1234 + $0x300] sm:$0xff]
        %v1394 = vld [vmem:[%s1234 + $0x308] sm:$0xff]
        %v1395 = vld [vmem:[%s1234 + $0x310] sm:$0xff]
        %v1396 = vld [vmem:[%s1234 + $0x318] sm:$0xff]
        %v1397 = vld [vmem:[%s1234 + $0x320] sm:$0xff]
        %v1398 = vld [vmem:[%s1234 + $0x328] sm:$0xff]
        %v1399 = vld [vmem:[%s1234 + $0x330] sm:$0xff]
        %v1400 = vld [vmem:[%s1234 + $0x338] sm:$0xff]
        %v1401 = vld [vmem:[%s1234 + $0x340] sm:$0xff]
        %v1402 = vld [vmem:[%s1234 + $0x348] sm:$0xff]
        %v1403 = vld [vmem:[%s1234 + $0x350] sm:$0xff]
        %v1404 = vld [vmem:[%s1234 + $0x358] sm:$0xff]
        %v1405 = vld [vmem:[%s1234 + $0x360] sm:$0xff]
        %v1406 = vld [vmem:[%s1234 + $0x368] sm:$0xff]
        %v1407 = vld [vmem:[%s1234 + $0x370] sm:$0xff]
        %v1408 = vld [vmem:[%s1234 + $0x378] sm:$0xff]
        %v1409 = vld [vmem:[%s1234 + $0x380] sm:$0xff]
        %v1410 = vld [vmem:[%s1234 + $0x388] sm:$0xff]
        %v1411 = vld [vmem:[%s1234 + $0x390] sm:$0xff]
        %v1412 = vld [vmem:[%s1234 + $0x398] sm:$0xff]
        %v1413 = vld [vmem:[%s1234 + $0x3a0] sm:$0xff]
        %v1414 = vld [vmem:[%s1234 + $0x3a8] sm:$0xff]
        %v1415 = vld [vmem:[%s1234 + $0x3b0] sm:$0xff]
        %v1416 = vld [vmem:[%s1234 + $0x3b8] sm:$0xff]
        %v1417 = vld [vmem:[%s1234 + $0x3c0] sm:$0xff]
        %v1418 = vld [vmem:[%s1234 + $0x3c8] sm:$0xff]
        %v1419 = vld [vmem:[%s1234 + $0x3d0] sm:$0xff]
        %v1420 = vld [vmem:[%s1234 + $0x3d8] sm:$0xff]
        %v1421 = vld [vmem:[%s1234 + $0x3e0] sm:$0xff]
        %v1422 = vld [vmem:[%s1234 + $0x3e8] sm:$0xff]
        %v1423 = vld [vmem:[%s1234 + $0x3f0] sm:$0xff]
        %v1424 = vld [vmem:[%s1234 + $0x3f8] sm:$0xff]
        %v1425 = vld [vmem:[%s1234 + $0x400] sm:$0xff]
        %v1426 = vld [vmem:[%s1234 + $0x408] sm:$0xff]
        %v1427 = vld [vmem:[%s1234 + $0x410] sm:$0xff]
        %v1428 = vld [vmem:[%s1234 + $0x418] sm:$0xff]
        %v1429 = vld [vmem:[%s1234 + $0x420] sm:$0xff]
        %v1430 = vld [vmem:[%s1234 + $0x428] sm:$0xff]
        %v1431 = vld [vmem:[%s1234 + $0x430] sm:$0xff]
        %v1432 = vld [vmem:[%s1234 + $0x438] sm:$0xff]
        %v1433 = vld [vmem:[%s1234 + $0x440] sm:$0xff]
        %v1434 = vld [vmem:[%s1234 + $0x448] sm:$0xff]
        %v1435 = vld [vmem:[%s1234 + $0x450] sm:$0xff]
        %v1436 = vld [vmem:[%s1234 + $0x458] sm:$0xff]
        %v1437 = vld [vmem:[%s1234 + $0x460] sm:$0xff]
        %v1438 = vld [vmem:[%s1234 + $0x468] sm:$0xff]
        %v1439 = vld [vmem:[%s1234 + $0x470] sm:$0xff]
        %v1440 = vld [vmem:[%s1234 + $0x478] sm:$0xff]
        %v1441 = vld [vmem:[%s1234 + $0x480] sm:$0xff]
        %v1442 = vld [vmem:[%s1234 + $0x488] sm:$0xff]
        %v1443 = vld [vmem:[%s1234 + $0x490] sm:$0xff]
        %v1444 = vld [vmem:[%s1234 + $0x498] sm:$0xff]
        %v1445 = vld [vmem:[%s1234 + $0x4a0] sm:$0xff]
        %v1446 = vld [vmem:[%s1234 + $0x4a8] sm:$0xff]
        %v1447 = vld [vmem:[%s1234 + $0x4b0] sm:$0xff]
        %v1448 = vld [vmem:[%s1234 + $0x4b8] sm:$0xff]
        %v1449 = vld [vmem:[%s1234 + $0x4c0] sm:$0xff]
        %v1450 = vld [vmem:[%s1234 + $0x4c8] sm:$0xff]
        %v1451 = vld [vmem:[%s1234 + $0x4d0] sm:$0xff]
        %v1452 = vld [vmem:[%s1234 + $0x4d8] sm:$0xff]
        %v1453 = vld [vmem:[%s1234 + $0x4e0] sm:$0xff]
        %v1454 = vld [vmem:[%s1234 + $0x4e8] sm:$0xff]
        %v1455 = vld [vmem:[%s1234 + $0x4f0] sm:$0xff]
        %v1456 = vld [vmem:[%s1234 + $0x4f8] sm:$0xff]
        %v1457 = vld [vmem:[%s1234 + $0x500] sm:$0xff]
        %v1458 = vld [vmem:[%s1234 + $0x508] sm:$0xff]
        %v1459 = vld [vmem:[%s1234 + $0x510] sm:$0xff]
        %v1460 = vld [vmem:[%s1234 + $0x518] sm:$0xff]
        %v1461 = vld [vmem:[%s1234 + $0x520] sm:$0xff]
        %v1462 = vld [vmem:[%s1234 + $0x528] sm:$0xff]
        %v1463 = vld [vmem:[%s1234 + $0x530] sm:$0xff]
        %v1464 = vld [vmem:[%s1234 + $0x538] sm:$0xff]
        %v1465 = vld [vmem:[%s1234 + $0x540] sm:$0xff]
        %v1466 = vld [vmem:[%s1234 + $0x548] sm:$0xff]
        %v1467 = vld [vmem:[%s1234 + $0x550] sm:$0xff]
        %v1468 = vld [vmem:[%s1234 + $0x558] sm:$0xff]
        %v1469 = vld [vmem:[%s1234 + $0x560] sm:$0xff]
        %v1470 = vld [vmem:[%s1234 + $0x568] sm:$0xff]
        %v1471 = vld [vmem:[%s1234 + $0x570] sm:$0xff]
        %v1472 = vld [vmem:[%s1234 + $0x578] sm:$0xff]
        %v1473 = vld [vmem:[%s1234 + $0x580] sm:$0xff]
        %v1474 = vld [vmem:[%s1234 + $0x588] sm:$0xff]
        %v1475 = vld [vmem:[%s1234 + $0x590] sm:$0xff]
        %v1476 = vld [vmem:[%s1234 + $0x598] sm:$0xff]
        %v1477 = vld [vmem:[%s1234 + $0x5a0] sm:$0xff]
        %v1478 = vld [vmem:[%s1234 + $0x5a8] sm:$0xff]
        %v1479 = vld [vmem:[%s1234 + $0x5b0] sm:$0xff]
        %v1480 = vld [vmem:[%s1234 + $0x5b8] sm:$0xff]
        %v1481 = vld [vmem:[%s1234 + $0x5c0] sm:$0xff]
        %v1482 = vld [vmem:[%s1234 + $0x5c8] sm:$0xff]
        %v1483 = vld [vmem:[%s1234 + $0x5d0] sm:$0xff]
        %v1484 = vld [vmem:[%s1234 + $0x5d8] sm:$0xff]
        %v1485 = vld [vmem:[%s1234 + $0x5e0] sm:$0xff]
        %v1486 = vld [vmem:[%s1234 + $0x5e8] sm:$0xff]
        %v1487 = vld [vmem:[%s1234 + $0x5f0] sm:$0xff]
        %v1488 = vld [vmem:[%s1234 + $0x5f8] sm:$0xff]
        %v1489 = vld [vmem:[%s1234 + $0x600] sm:$0xff]
        %v1490 = vld [vmem:[%s1234 + $0x608] sm:$0xff]
        %v1491 = vld [vmem:[%s1234 + $0x610] sm:$0xff]
        %v1492 = vld [vmem:[%s1234 + $0x618] sm:$0xff]
        %v1493 = vld [vmem:[%s1234 + $0x620] sm:$0xff]
        %v1494 = vld [vmem:[%s1234 + $0x628] sm:$0xff]
        %v1495 = vld [vmem:[%s1234 + $0x630] sm:$0xff]
        %v1496 = vld [vmem:[%s1234 + $0x638] sm:$0xff]
        %v1497 = vld [vmem:[%s1234 + $0x640] sm:$0xff]
        %v1498 = vld [vmem:[%s1234 + $0x648] sm:$0xff]
        %v1499 = vld [vmem:[%s1234 + $0x650] sm:$0xff]
        %v1500 = vld [vmem:[%s1234 + $0x658] sm:$0xff]
        %v1501 = vld [vmem:[%s1234 + $0x660] sm:$0xff]
        %v1502 = vld [vmem:[%s1234 + $0x668] sm:$0xff]
        %v1503 = vld [vmem:[%s1234 + $0x670] sm:$0xff]
        %v1504 = vld [vmem:[%s1234 + $0x678] sm:$0xff]
        %v1505 = vld [vmem:[%s1234 + $0x680] sm:$0xff]
        %v1506 = vld [vmem:[%s1234 + $0x688] sm:$0xff]
        %v1507 = vld [vmem:[%s1234 + $0x690] sm:$0xff]
        %v1508 = vld [vmem:[%s1234 + $0x698] sm:$0xff]
        %v1509 = vld [vmem:[%s1234 + $0x6a0] sm:$0xff]
        %v1510 = vld [vmem:[%s1234 + $0x6a8] sm:$0xff]
        %v1511 = vld [vmem:[%s1234 + $0x6b0] sm:$0xff]
        %v1512 = vld [vmem:[%s1234 + $0x6b8] sm:$0xff]
        %v1513 = vld [vmem:[%s1234 + $0x6c0] sm:$0xff]
        %v1514 = vld [vmem:[%s1234 + $0x6c8] sm:$0xff]
        %v1515 = vld [vmem:[%s1234 + $0x6d0] sm:$0xff]
        %v1516 = vld [vmem:[%s1234 + $0x6d8] sm:$0xff]
        %v1517 = vld [vmem:[%s1234 + $0x6e0] sm:$0xff]
        %v1518 = vld [vmem:[%s1234 + $0x6e8] sm:$0xff]
        %v1519 = vld [vmem:[%s1234 + $0x6f0] sm:$0xff]
        %v1520 = vld [vmem:[%s1234 + $0x6f8] sm:$0xff]
        %v1521 = vld [vmem:[%s1234 + $0x700] sm:$0xff]
        %v1522 = vld [vmem:[%s1234 + $0x708] sm:$0xff]
        %v1523 = vld [vmem:[%s1234 + $0x710] sm:$0xff]
        %v1524 = vld [vmem:[%s1234 + $0x718] sm:$0xff]
        %v1525 = vld [vmem:[%s1234 + $0x720] sm:$0xff]
        %v1526 = vld [vmem:[%s1234 + $0x728] sm:$0xff]
        %v1527 = vld [vmem:[%s1234 + $0x730] sm:$0xff]
        %v1528 = vld [vmem:[%s1234 + $0x738] sm:$0xff]
        %v1529 = vld [vmem:[%s1234 + $0x740] sm:$0xff]
        %v1530 = vld [vmem:[%s1234 + $0x748] sm:$0xff]
        %v1531 = vld [vmem:[%s1234 + $0x750] sm:$0xff]
        %v1532 = vld [vmem:[%s1234 + $0x758] sm:$0xff]
        %v1533 = vld [vmem:[%s1234 + $0x760] sm:$0xff]
        %v1534 = vld [vmem:[%s1234 + $0x768] sm:$0xff]
        %v1535 = vld [vmem:[%s1234 + $0x770] sm:$0xff]
        %v1536 = vld [vmem:[%s1234 + $0x778] sm:$0xff]
        %v1537 = vld [vmem:[%s1234 + $0x780] sm:$0xff]
        %v1538 = vld [vmem:[%s1234 + $0x788] sm:$0xff]
        %v1539 = vld [vmem:[%s1234 + $0x790] sm:$0xff]
        %v1540 = vld [vmem:[%s1234 + $0x798] sm:$0xff]
        %v1541 = vld [vmem:[%s1234 + $0x7a0] sm:$0xff]
        %v1542 = vld [vmem:[%s1234 + $0x7a8] sm:$0xff]
        %v1543 = vld [vmem:[%s1234 + $0x7b0] sm:$0xff]
        %v1544 = vld [vmem:[%s1234 + $0x7b8] sm:$0xff]
        %v1545 = vld [vmem:[%s1234 + $0x7c0] sm:$0xff]
        %v1546 = vld [vmem:[%s1234 + $0x7c8] sm:$0xff]
        %v1547 = vld [vmem:[%s1234 + $0x7d0] sm:$0xff]
        %v1548 = vld [vmem:[%s1234 + $0x7d8] sm:$0xff]
        %v1549 = vld [vmem:[%s1234 + $0x7e0] sm:$0xff]
        %v1550 = vld [vmem:[%s1234 + $0x7e8] sm:$0xff]
        %v1551 = vld [vmem:[%s1234 + $0x7f0] sm:$0xff]
        %v1552 = vld [vmem:[%s1234 + $0x7f8] sm:$0xff]
        %v1553 = vld [vmem:[%s1277] sm:$0x3]
        %v1555 = vlaneseq
        %v1556 = vshrl.u32 %v1555, 7
        %v1557 = vsub.s32 0, %v1556
        %v1558 = vrot.slane %v1553, %v1557
        %v1559 = vlaneseq
        %v1560 = vshrl.u32 %v1559, 7
        %v1561 = vsub.s32 1, %v1560
        %v1562 = vrot.slane %v1553, %v1561
        %v1573 = vunpack.c.l.b16 %v1289
        %v1574 = vunpack.c.h.b16 %v1289
        %v1575 = vunpack.c.l.b16 %v1290
        %v1576 = vunpack.c.h.b16 %v1290
        %v1577 = vunpack.c.l.b16 %v1291
        %v1578 = vunpack.c.h.b16 %v1291
        %v1579 = vunpack.c.l.b16 %v1292
        %v1580 = vunpack.c.h.b16 %v1292
        %v1581 = vunpack.c.l.b16 %v1293
        %v1582 = vunpack.c.h.b16 %v1293
        %v1583 = vunpack.c.l.b16 %v1294
        %v1584 = vunpack.c.h.b16 %v1294
        %v1585 = vunpack.c.l.b16 %v1295
        %v1586 = vunpack.c.h.b16 %v1295
        %v1587 = vunpack.c.l.b16 %v1296
        %v1588 = vunpack.c.h.b16 %v1296
        %v1589 = vpack.c.b16 %v1573, %v1573
        %v1590 = vpack.c.b16 %v1574, %v1574
        %v1591 = vpack.c.b16 %v1575, %v1575
        %v1592 = vpack.c.b16 %v1576, %v1576
        %v1593 = vpack.c.b16 %v1577, %v1577
        %v1594 = vpack.c.b16 %v1578, %v1578
        %v1595 = vpack.c.b16 %v1579, %v1579
        %v1596 = vpack.c.b16 %v1580, %v1580
        %v1597 = vpack.c.b16 %v1581, %v1581
        %v1598 = vpack.c.b16 %v1582, %v1582
        %v1599 = vpack.c.b16 %v1583, %v1583
        %v1600 = vpack.c.b16 %v1584, %v1584
        %v1601 = vpack.c.b16 %v1585, %v1585
        %v1602 = vpack.c.b16 %v1586, %v1586
        %v1603 = vpack.c.b16 %v1587, %v1587
        %v1604 = vpack.c.b16 %v1588, %v1588
        %v1877 = vunpack.c.l.b16 %v1297
        %v1878 = vunpack.c.h.b16 %v1297
        %v1879 = vunpack.c.l.b16 %v1298
        %v1880 = vunpack.c.h.b16 %v1298
        %v1881 = vunpack.c.l.b16 %v1299
        %v1882 = vunpack.c.h.b16 %v1299
        %v1883 = vunpack.c.l.b16 %v1300
        %v1884 = vunpack.c.h.b16 %v1300
        %v1885 = vunpack.c.l.b16 %v1301
        %v1886 = vunpack.c.h.b16 %v1301
        %v1887 = vunpack.c.l.b16 %v1302
        %v1888 = vunpack.c.h.b16 %v1302
        %v1889 = vunpack.c.l.b16 %v1303
        %v1890 = vunpack.c.h.b16 %v1303
        %v1891 = vunpack.c.l.b16 %v1304
        %v1892 = vunpack.c.h.b16 %v1304
        %v1893 = vunpack.c.l.b16 %v1305
        %v1894 = vunpack.c.h.b16 %v1305
        %v1895 = vunpack.c.l.b16 %v1306
        %v1896 = vunpack.c.h.b16 %v1306
        %v1897 = vunpack.c.l.b16 %v1307
        %v1898 = vunpack.c.h.b16 %v1307
        %v1899 = vunpack.c.l.b16 %v1308
        %v1900 = vunpack.c.h.b16 %v1308
        %v1901 = vunpack.c.l.b16 %v1309
        %v1902 = vunpack.c.h.b16 %v1309
        %v1903 = vunpack.c.l.b16 %v1310
        %v1904 = vunpack.c.h.b16 %v1310
        %v1905 = vunpack.c.l.b16 %v1311
        %v1906 = vunpack.c.h.b16 %v1311
        %v1907 = vunpack.c.l.b16 %v1312
        %v1908 = vunpack.c.h.b16 %v1312
        %v1909 = vunpack.c.l.b16 %v1313
        %v1910 = vunpack.c.h.b16 %v1313
        %v1911 = vunpack.c.l.b16 %v1314
        %v1912 = vunpack.c.h.b16 %v1314
        %v1913 = vunpack.c.l.b16 %v1315
        %v1914 = vunpack.c.h.b16 %v1315
        %v1915 = vunpack.c.l.b16 %v1316
        %v1916 = vunpack.c.h.b16 %v1316
        %v1917 = vunpack.c.l.b16 %v1317
        %v1918 = vunpack.c.h.b16 %v1317
        %v1919 = vunpack.c.l.b16 %v1318
        %v1920 = vunpack.c.h.b16 %v1318
        %v1921 = vunpack.c.l.b16 %v1319
        %v1922 = vunpack.c.h.b16 %v1319
        %v1923 = vunpack.c.l.b16 %v1320
        %v1924 = vunpack.c.h.b16 %v1320
        %v1925 = vunpack.c.l.b16 %v1321
        %v1926 = vunpack.c.h.b16 %v1321
        %v1927 = vunpack.c.l.b16 %v1322
        %v1928 = vunpack.c.h.b16 %v1322
        %v1929 = vunpack.c.l.b16 %v1323
        %v1930 = vunpack.c.h.b16 %v1323
        %v1931 = vunpack.c.l.b16 %v1324
        %v1932 = vunpack.c.h.b16 %v1324
        %v1933 = vunpack.c.l.b16 %v1325
        %v1934 = vunpack.c.h.b16 %v1325
        %v1935 = vunpack.c.l.b16 %v1326
        %v1936 = vunpack.c.h.b16 %v1326
        %v1937 = vunpack.c.l.b16 %v1327
        %v1938 = vunpack.c.h.b16 %v1327
        %v1939 = vunpack.c.l.b16 %v1328
        %v1940 = vunpack.c.h.b16 %v1328
        %v1941 = vunpack.c.l.b16 %v1329
        %v1942 = vunpack.c.h.b16 %v1329
        %v1943 = vunpack.c.l.b16 %v1330
        %v1944 = vunpack.c.h.b16 %v1330
        %v1945 = vunpack.c.l.b16 %v1331
        %v1946 = vunpack.c.h.b16 %v1331
        %v1947 = vunpack.c.l.b16 %v1332
        %v1948 = vunpack.c.h.b16 %v1332
        %v1949 = vunpack.c.l.b16 %v1333
        %v1950 = vunpack.c.h.b16 %v1333
        %v1951 = vunpack.c.l.b16 %v1334
        %v1952 = vunpack.c.h.b16 %v1334
        %v1953 = vunpack.c.l.b16 %v1335
        %v1954 = vunpack.c.h.b16 %v1335
        %v1955 = vunpack.c.l.b16 %v1336
        %v1956 = vunpack.c.h.b16 %v1336
        %v1957 = vunpack.c.l.b16 %v1337
        %v1958 = vunpack.c.h.b16 %v1337
        %v1959 = vunpack.c.l.b16 %v1338
        %v1960 = vunpack.c.h.b16 %v1338
        %v1961 = vunpack.c.l.b16 %v1339
        %v1962 = vunpack.c.h.b16 %v1339
        %v1963 = vunpack.c.l.b16 %v1340
        %v1964 = vunpack.c.h.b16 %v1340
        %v1965 = vunpack.c.l.b16 %v1341
        %v1966 = vunpack.c.h.b16 %v1341
        %v1967 = vunpack.c.l.b16 %v1342
        %v1968 = vunpack.c.h.b16 %v1342
        %v1969 = vunpack.c.l.b16 %v1343
        %v1970 = vunpack.c.h.b16 %v1343
        %v1971 = vunpack.c.l.b16 %v1344
        %v1972 = vunpack.c.h.b16 %v1344
        %v1973 = vunpack.c.l.b16 %v1345
        %v1974 = vunpack.c.h.b16 %v1345
        %v1975 = vunpack.c.l.b16 %v1346
        %v1976 = vunpack.c.h.b16 %v1346
        %v1977 = vunpack.c.l.b16 %v1347
        %v1978 = vunpack.c.h.b16 %v1347
        %v1979 = vunpack.c.l.b16 %v1348
        %v1980 = vunpack.c.h.b16 %v1348
        %v1981 = vunpack.c.l.b16 %v1349
        %v1982 = vunpack.c.h.b16 %v1349
        %v1983 = vunpack.c.l.b16 %v1350
        %v1984 = vunpack.c.h.b16 %v1350
        %v1985 = vunpack.c.l.b16 %v1351
        %v1986 = vunpack.c.h.b16 %v1351
        %v1987 = vunpack.c.l.b16 %v1352
        %v1988 = vunpack.c.h.b16 %v1352
        %v1989 = vunpack.c.l.b16 %v1353
        %v1990 = vunpack.c.h.b16 %v1353
        %v1991 = vunpack.c.l.b16 %v1354
        %v1992 = vunpack.c.h.b16 %v1354
        %v1993 = vunpack.c.l.b16 %v1355
        %v1994 = vunpack.c.h.b16 %v1355
        %v1995 = vunpack.c.l.b16 %v1356
        %v1996 = vunpack.c.h.b16 %v1356
        %v1997 = vunpack.c.l.b16 %v1357
        %v1998 = vunpack.c.h.b16 %v1357
        %v1999 = vunpack.c.l.b16 %v1358
        %v2000 = vunpack.c.h.b16 %v1358
        %v2001 = vunpack.c.l.b16 %v1359
        %v2002 = vunpack.c.h.b16 %v1359
        %v2003 = vunpack.c.l.b16 %v1360
        %v2004 = vunpack.c.h.b16 %v1360
        %v2005 = vunpack.c.l.b16 %v1361
        %v2006 = vunpack.c.h.b16 %v1361
        %v2007 = vunpack.c.l.b16 %v1362
        %v2008 = vunpack.c.h.b16 %v1362
        %v2009 = vunpack.c.l.b16 %v1363
        %v2010 = vunpack.c.h.b16 %v1363
        %v2011 = vunpack.c.l.b16 %v1364
        %v2012 = vunpack.c.h.b16 %v1364
        %v2013 = vunpack.c.l.b16 %v1365
        %v2014 = vunpack.c.h.b16 %v1365
        %v2015 = vunpack.c.l.b16 %v1366
        %v2016 = vunpack.c.h.b16 %v1366
        %v2017 = vunpack.c.l.b16 %v1367
        %v2018 = vunpack.c.h.b16 %v1367
        %v2019 = vunpack.c.l.b16 %v1368
        %v2020 = vunpack.c.h.b16 %v1368
        %v2021 = vunpack.c.l.b16 %v1369
        %v2022 = vunpack.c.h.b16 %v1369
        %v2023 = vunpack.c.l.b16 %v1370
        %v2024 = vunpack.c.h.b16 %v1370
        %v2025 = vunpack.c.l.b16 %v1371
        %v2026 = vunpack.c.h.b16 %v1371
        %v2027 = vunpack.c.l.b16 %v1372
        %v2028 = vunpack.c.h.b16 %v1372
        %v2029 = vunpack.c.l.b16 %v1373
        %v2030 = vunpack.c.h.b16 %v1373
        %v2031 = vunpack.c.l.b16 %v1374
        %v2032 = vunpack.c.h.b16 %v1374
        %v2033 = vunpack.c.l.b16 %v1375
        %v2034 = vunpack.c.h.b16 %v1375
        %v2035 = vunpack.c.l.b16 %v1376
        %v2036 = vunpack.c.h.b16 %v1376
        %v2037 = vunpack.c.l.b16 %v1377
        %v2038 = vunpack.c.h.b16 %v1377
        %v2039 = vunpack.c.l.b16 %v1378
        %v2040 = vunpack.c.h.b16 %v1378
        %v2041 = vunpack.c.l.b16 %v1379
        %v2042 = vunpack.c.h.b16 %v1379
        %v2043 = vunpack.c.l.b16 %v1380
        %v2044 = vunpack.c.h.b16 %v1380
        %v2045 = vunpack.c.l.b16 %v1381
        %v2046 = vunpack.c.h.b16 %v1381
        %v2047 = vunpack.c.l.b16 %v1382
        %v2048 = vunpack.c.h.b16 %v1382
        %v2049 = vunpack.c.l.b16 %v1383
        %v2050 = vunpack.c.h.b16 %v1383
        %v2051 = vunpack.c.l.b16 %v1384
        %v2052 = vunpack.c.h.b16 %v1384
        %v2053 = vunpack.c.l.b16 %v1385
        %v2054 = vunpack.c.h.b16 %v1385
        %v2055 = vunpack.c.l.b16 %v1386
        %v2056 = vunpack.c.h.b16 %v1386
        %v2057 = vunpack.c.l.b16 %v1387
        %v2058 = vunpack.c.h.b16 %v1387
        %v2059 = vunpack.c.l.b16 %v1388
        %v2060 = vunpack.c.h.b16 %v1388
        %v2061 = vunpack.c.l.b16 %v1389
        %v2062 = vunpack.c.h.b16 %v1389
        %v2063 = vunpack.c.l.b16 %v1390
        %v2064 = vunpack.c.h.b16 %v1390
        %v2065 = vunpack.c.l.b16 %v1391
        %v2066 = vunpack.c.h.b16 %v1391
        %v2067 = vunpack.c.l.b16 %v1392
        %v2068 = vunpack.c.h.b16 %v1392
        %v2069 = vunpack.c.l.b16 %v1393
        %v2070 = vunpack.c.h.b16 %v1393
        %v2071 = vunpack.c.l.b16 %v1394
        %v2072 = vunpack.c.h.b16 %v1394
        %v2073 = vunpack.c.l.b16 %v1395
        %v2074 = vunpack.c.h.b16 %v1395
        %v2075 = vunpack.c.l.b16 %v1396
        %v2076 = vunpack.c.h.b16 %v1396
        %v2077 = vunpack.c.l.b16 %v1397
        %v2078 = vunpack.c.h.b16 %v1397
        %v2079 = vunpack.c.l.b16 %v1398
        %v2080 = vunpack.c.h.b16 %v1398
        %v2081 = vunpack.c.l.b16 %v1399
        %v2082 = vunpack.c.h.b16 %v1399
        %v2083 = vunpack.c.l.b16 %v1400
        %v2084 = vunpack.c.h.b16 %v1400
        %v2085 = vunpack.c.l.b16 %v1401
        %v2086 = vunpack.c.h.b16 %v1401
        %v2087 = vunpack.c.l.b16 %v1402
        %v2088 = vunpack.c.h.b16 %v1402
        %v2089 = vunpack.c.l.b16 %v1403
        %v2090 = vunpack.c.h.b16 %v1403
        %v2091 = vunpack.c.l.b16 %v1404
        %v2092 = vunpack.c.h.b16 %v1404
        %v2093 = vunpack.c.l.b16 %v1405
        %v2094 = vunpack.c.h.b16 %v1405
        %v2095 = vunpack.c.l.b16 %v1406
        %v2096 = vunpack.c.h.b16 %v1406
        %v2097 = vunpack.c.l.b16 %v1407
        %v2098 = vunpack.c.h.b16 %v1407
        %v2099 = vunpack.c.l.b16 %v1408
        %v2100 = vunpack.c.h.b16 %v1408
        %v2101 = vunpack.c.l.b16 %v1409
        %v2102 = vunpack.c.h.b16 %v1409
        %v2103 = vunpack.c.l.b16 %v1410
        %v2104 = vunpack.c.h.b16 %v1410
        %v2105 = vunpack.c.l.b16 %v1411
        %v2106 = vunpack.c.h.b16 %v1411
        %v2107 = vunpack.c.l.b16 %v1412
        %v2108 = vunpack.c.h.b16 %v1412
        %v2109 = vunpack.c.l.b16 %v1413
        %v2110 = vunpack.c.h.b16 %v1413
        %v2111 = vunpack.c.l.b16 %v1414
        %v2112 = vunpack.c.h.b16 %v1414
        %v2113 = vunpack.c.l.b16 %v1415
        %v2114 = vunpack.c.h.b16 %v1415
        %v2115 = vunpack.c.l.b16 %v1416
        %v2116 = vunpack.c.h.b16 %v1416
        %v2117 = vunpack.c.l.b16 %v1417
        %v2118 = vunpack.c.h.b16 %v1417
        %v2119 = vunpack.c.l.b16 %v1418
        %v2120 = vunpack.c.h.b16 %v1418
        %v2121 = vunpack.c.l.b16 %v1419
        %v2122 = vunpack.c.h.b16 %v1419
        %v2123 = vunpack.c.l.b16 %v1420
        %v2124 = vunpack.c.h.b16 %v1420
        %v2125 = vunpack.c.l.b16 %v1421
        %v2126 = vunpack.c.h.b16 %v1421
        %v2127 = vunpack.c.l.b16 %v1422
        %v2128 = vunpack.c.h.b16 %v1422
        %v2129 = vunpack.c.l.b16 %v1423
        %v2130 = vunpack.c.h.b16 %v1423
        %v2131 = vunpack.c.l.b16 %v1424
        %v2132 = vunpack.c.h.b16 %v1424
        %v2133 = vunpack.c.l.b16 %v1425
        %v2134 = vunpack.c.h.b16 %v1425
        %v2135 = vunpack.c.l.b16 %v1426
        %v2136 = vunpack.c.h.b16 %v1426
        %v2137 = vunpack.c.l.b16 %v1427
        %v2138 = vunpack.c.h.b16 %v1427
        %v2139 = vunpack.c.l.b16 %v1428
        %v2140 = vunpack.c.h.b16 %v1428
        %v2141 = vunpack.c.l.b16 %v1429
        %v2142 = vunpack.c.h.b16 %v1429
        %v2143 = vunpack.c.l.b16 %v1430
        %v2144 = vunpack.c.h.b16 %v1430
        %v2145 = vunpack.c.l.b16 %v1431
        %v2146 = vunpack.c.h.b16 %v1431
        %v2147 = vunpack.c.l.b16 %v1432
        %v2148 = vunpack.c.h.b16 %v1432
        %v2149 = vunpack.c.l.b16 %v1433
        %v2150 = vunpack.c.h.b16 %v1433
        %v2151 = vunpack.c.l.b16 %v1434
        %v2152 = vunpack.c.h.b16 %v1434
        %v2153 = vunpack.c.l.b16 %v1435
        %v2154 = vunpack.c.h.b16 %v1435
        %v2155 = vunpack.c.l.b16 %v1436
        %v2156 = vunpack.c.h.b16 %v1436
        %v2157 = vunpack.c.l.b16 %v1437
        %v2158 = vunpack.c.h.b16 %v1437
        %v2159 = vunpack.c.l.b16 %v1438
        %v2160 = vunpack.c.h.b16 %v1438
        %v2161 = vunpack.c.l.b16 %v1439
        %v2162 = vunpack.c.h.b16 %v1439
        %v2163 = vunpack.c.l.b16 %v1440
        %v2164 = vunpack.c.h.b16 %v1440
        %v2165 = vunpack.c.l.b16 %v1441
        %v2166 = vunpack.c.h.b16 %v1441
        %v2167 = vunpack.c.l.b16 %v1442
        %v2168 = vunpack.c.h.b16 %v1442
        %v2169 = vunpack.c.l.b16 %v1443
        %v2170 = vunpack.c.h.b16 %v1443
        %v2171 = vunpack.c.l.b16 %v1444
        %v2172 = vunpack.c.h.b16 %v1444
        %v2173 = vunpack.c.l.b16 %v1445
        %v2174 = vunpack.c.h.b16 %v1445
        %v2175 = vunpack.c.l.b16 %v1446
        %v2176 = vunpack.c.h.b16 %v1446
        %v2177 = vunpack.c.l.b16 %v1447
        %v2178 = vunpack.c.h.b16 %v1447
        %v2179 = vunpack.c.l.b16 %v1448
        %v2180 = vunpack.c.h.b16 %v1448
        %v2181 = vunpack.c.l.b16 %v1449
        %v2182 = vunpack.c.h.b16 %v1449
        %v2183 = vunpack.c.l.b16 %v1450
        %v2184 = vunpack.c.h.b16 %v1450
        %v2185 = vunpack.c.l.b16 %v1451
        %v2186 = vunpack.c.h.b16 %v1451
        %v2187 = vunpack.c.l.b16 %v1452
        %v2188 = vunpack.c.h.b16 %v1452
        %v2189 = vunpack.c.l.b16 %v1453
        %v2190 = vunpack.c.h.b16 %v1453
        %v2191 = vunpack.c.l.b16 %v1454
        %v2192 = vunpack.c.h.b16 %v1454
        %v2193 = vunpack.c.l.b16 %v1455
        %v2194 = vunpack.c.h.b16 %v1455
        %v2195 = vunpack.c.l.b16 %v1456
        %v2196 = vunpack.c.h.b16 %v1456
        %v2197 = vunpack.c.l.b16 %v1457
        %v2198 = vunpack.c.h.b16 %v1457
        %v2199 = vunpack.c.l.b16 %v1458
        %v2200 = vunpack.c.h.b16 %v1458
        %v2201 = vunpack.c.l.b16 %v1459
        %v2202 = vunpack.c.h.b16 %v1459
        %v2203 = vunpack.c.l.b16 %v1460
        %v2204 = vunpack.c.h.b16 %v1460
        %v2205 = vunpack.c.l.b16 %v1461
        %v2206 = vunpack.c.h.b16 %v1461
        %v2207 = vunpack.c.l.b16 %v1462
        %v2208 = vunpack.c.h.b16 %v1462
        %v2209 = vunpack.c.l.b16 %v1463
        %v2210 = vunpack.c.h.b16 %v1463
        %v2211 = vunpack.c.l.b16 %v1464
        %v2212 = vunpack.c.h.b16 %v1464
        %v2213 = vunpack.c.l.b16 %v1465
        %v2214 = vunpack.c.h.b16 %v1465
        %v2215 = vunpack.c.l.b16 %v1466
        %v2216 = vunpack.c.h.b16 %v1466
        %v2217 = vunpack.c.l.b16 %v1467
        %v2218 = vunpack.c.h.b16 %v1467
        %v2219 = vunpack.c.l.b16 %v1468
        %v2220 = vunpack.c.h.b16 %v1468
        %v2221 = vunpack.c.l.b16 %v1469
        %v2222 = vunpack.c.h.b16 %v1469
        %v2223 = vunpack.c.l.b16 %v1470
        %v2224 = vunpack.c.h.b16 %v1470
        %v2225 = vunpack.c.l.b16 %v1471
        %v2226 = vunpack.c.h.b16 %v1471
        %v2227 = vunpack.c.l.b16 %v1472
        %v2228 = vunpack.c.h.b16 %v1472
        %v2229 = vunpack.c.l.b16 %v1473
        %v2230 = vunpack.c.h.b16 %v1473
        %v2231 = vunpack.c.l.b16 %v1474
        %v2232 = vunpack.c.h.b16 %v1474
        %v2233 = vunpack.c.l.b16 %v1475
        %v2234 = vunpack.c.h.b16 %v1475
        %v2235 = vunpack.c.l.b16 %v1476
        %v2236 = vunpack.c.h.b16 %v1476
        %v2237 = vunpack.c.l.b16 %v1477
        %v2238 = vunpack.c.h.b16 %v1477
        %v2239 = vunpack.c.l.b16 %v1478
        %v2240 = vunpack.c.h.b16 %v1478
        %v2241 = vunpack.c.l.b16 %v1479
        %v2242 = vunpack.c.h.b16 %v1479
        %v2243 = vunpack.c.l.b16 %v1480
        %v2244 = vunpack.c.h.b16 %v1480
        %v2245 = vunpack.c.l.b16 %v1481
        %v2246 = vunpack.c.h.b16 %v1481
        %v2247 = vunpack.c.l.b16 %v1482
        %v2248 = vunpack.c.h.b16 %v1482
        %v2249 = vunpack.c.l.b16 %v1483
        %v2250 = vunpack.c.h.b16 %v1483
        %v2251 = vunpack.c.l.b16 %v1484
        %v2252 = vunpack.c.h.b16 %v1484
        %v2253 = vunpack.c.l.b16 %v1485
        %v2254 = vunpack.c.h.b16 %v1485
        %v2255 = vunpack.c.l.b16 %v1486
        %v2256 = vunpack.c.h.b16 %v1486
        %v2257 = vunpack.c.l.b16 %v1487
        %v2258 = vunpack.c.h.b16 %v1487
        %v2259 = vunpack.c.l.b16 %v1488
        %v2260 = vunpack.c.h.b16 %v1488
        %v2261 = vunpack.c.l.b16 %v1489
        %v2262 = vunpack.c.h.b16 %v1489
        %v2263 = vunpack.c.l.b16 %v1490
        %v2264 = vunpack.c.h.b16 %v1490
        %v2265 = vunpack.c.l.b16 %v1491
        %v2266 = vunpack.c.h.b16 %v1491
        %v2267 = vunpack.c.l.b16 %v1492
        %v2268 = vunpack.c.h.b16 %v1492
        %v2269 = vunpack.c.l.b16 %v1493
        %v2270 = vunpack.c.h.b16 %v1493
        %v2271 = vunpack.c.l.b16 %v1494
        %v2272 = vunpack.c.h.b16 %v1494
        %v2273 = vunpack.c.l.b16 %v1495
        %v2274 = vunpack.c.h.b16 %v1495
        %v2275 = vunpack.c.l.b16 %v1496
        %v2276 = vunpack.c.h.b16 %v1496
        %v2277 = vunpack.c.l.b16 %v1497
        %v2278 = vunpack.c.h.b16 %v1497
        %v2279 = vunpack.c.l.b16 %v1498
        %v2280 = vunpack.c.h.b16 %v1498
        %v2281 = vunpack.c.l.b16 %v1499
        %v2282 = vunpack.c.h.b16 %v1499
        %v2283 = vunpack.c.l.b16 %v1500
        %v2284 = vunpack.c.h.b16 %v1500
        %v2285 = vunpack.c.l.b16 %v1501
        %v2286 = vunpack.c.h.b16 %v1501
        %v2287 = vunpack.c.l.b16 %v1502
        %v2288 = vunpack.c.h.b16 %v1502
        %v2289 = vunpack.c.l.b16 %v1503
        %v2290 = vunpack.c.h.b16 %v1503
        %v2291 = vunpack.c.l.b16 %v1504
        %v2292 = vunpack.c.h.b16 %v1504
        %v2293 = vunpack.c.l.b16 %v1505
        %v2294 = vunpack.c.h.b16 %v1505
        %v2295 = vunpack.c.l.b16 %v1506
        %v2296 = vunpack.c.h.b16 %v1506
        %v2297 = vunpack.c.l.b16 %v1507
        %v2298 = vunpack.c.h.b16 %v1507
        %v2299 = vunpack.c.l.b16 %v1508
        %v2300 = vunpack.c.h.b16 %v1508
        %v2301 = vunpack.c.l.b16 %v1509
        %v2302 = vunpack.c.h.b16 %v1509
        %v2303 = vunpack.c.l.b16 %v1510
        %v2304 = vunpack.c.h.b16 %v1510
        %v2305 = vunpack.c.l.b16 %v1511
        %v2306 = vunpack.c.h.b16 %v1511
        %v2307 = vunpack.c.l.b16 %v1512
        %v2308 = vunpack.c.h.b16 %v1512
        %v2309 = vunpack.c.l.b16 %v1513
        %v2310 = vunpack.c.h.b16 %v1513
        %v2311 = vunpack.c.l.b16 %v1514
        %v2312 = vunpack.c.h.b16 %v1514
        %v2313 = vunpack.c.l.b16 %v1515
        %v2314 = vunpack.c.h.b16 %v1515
        %v2315 = vunpack.c.l.b16 %v1516
        %v2316 = vunpack.c.h.b16 %v1516
        %v2317 = vunpack.c.l.b16 %v1517
        %v2318 = vunpack.c.h.b16 %v1517
        %v2319 = vunpack.c.l.b16 %v1518
        %v2320 = vunpack.c.h.b16 %v1518
        %v2321 = vunpack.c.l.b16 %v1519
        %v2322 = vunpack.c.h.b16 %v1519
        %v2323 = vunpack.c.l.b16 %v1520
        %v2324 = vunpack.c.h.b16 %v1520
        %v2325 = vunpack.c.l.b16 %v1521
        %v2326 = vunpack.c.h.b16 %v1521
        %v2327 = vunpack.c.l.b16 %v1522
        %v2328 = vunpack.c.h.b16 %v1522
        %v2329 = vunpack.c.l.b16 %v1523
        %v2330 = vunpack.c.h.b16 %v1523
        %v2331 = vunpack.c.l.b16 %v1524
        %v2332 = vunpack.c.h.b16 %v1524
        %v2333 = vunpack.c.l.b16 %v1525
        %v2334 = vunpack.c.h.b16 %v1525
        %v2335 = vunpack.c.l.b16 %v1526
        %v2336 = vunpack.c.h.b16 %v1526
        %v2337 = vunpack.c.l.b16 %v1527
        %v2338 = vunpack.c.h.b16 %v1527
        %v2339 = vunpack.c.l.b16 %v1528
        %v2340 = vunpack.c.h.b16 %v1528
        %v2341 = vunpack.c.l.b16 %v1529
        %v2342 = vunpack.c.h.b16 %v1529
        %v2343 = vunpack.c.l.b16 %v1530
        %v2344 = vunpack.c.h.b16 %v1530
        %v2345 = vunpack.c.l.b16 %v1531
        %v2346 = vunpack.c.h.b16 %v1531
        %v2347 = vunpack.c.l.b16 %v1532
        %v2348 = vunpack.c.h.b16 %v1532
        %v2349 = vunpack.c.l.b16 %v1533
        %v2350 = vunpack.c.h.b16 %v1533
        %v2351 = vunpack.c.l.b16 %v1534
        %v2352 = vunpack.c.h.b16 %v1534
        %v2353 = vunpack.c.l.b16 %v1535
        %v2354 = vunpack.c.h.b16 %v1535
        %v2355 = vunpack.c.l.b16 %v1536
        %v2356 = vunpack.c.h.b16 %v1536
        %v2357 = vunpack.c.l.b16 %v1537
        %v2358 = vunpack.c.h.b16 %v1537
        %v2359 = vunpack.c.l.b16 %v1538
        %v2360 = vunpack.c.h.b16 %v1538
        %v2361 = vunpack.c.l.b16 %v1539
        %v2362 = vunpack.c.h.b16 %v1539
        %v2363 = vunpack.c.l.b16 %v1540
        %v2364 = vunpack.c.h.b16 %v1540
        %v2365 = vunpack.c.l.b16 %v1541
        %v2366 = vunpack.c.h.b16 %v1541
        %v2367 = vunpack.c.l.b16 %v1542
        %v2368 = vunpack.c.h.b16 %v1542
        %v2369 = vunpack.c.l.b16 %v1543
        %v2370 = vunpack.c.h.b16 %v1543
        %v2371 = vunpack.c.l.b16 %v1544
        %v2372 = vunpack.c.h.b16 %v1544
        %v2373 = vunpack.c.l.b16 %v1545
        %v2374 = vunpack.c.h.b16 %v1545
        %v2375 = vunpack.c.l.b16 %v1546
        %v2376 = vunpack.c.h.b16 %v1546
        %v2377 = vunpack.c.l.b16 %v1547
        %v2378 = vunpack.c.h.b16 %v1547
        %v2379 = vunpack.c.l.b16 %v1548
        %v2380 = vunpack.c.h.b16 %v1548
        %v2381 = vunpack.c.l.b16 %v1549
        %v2382 = vunpack.c.h.b16 %v1549
        %v2383 = vunpack.c.l.b16 %v1550
        %v2384 = vunpack.c.h.b16 %v1550
        %v2385 = vunpack.c.l.b16 %v1551
        %v2386 = vunpack.c.h.b16 %v1551
        %v2387 = vunpack.c.l.b16 %v1552
        %v2388 = vunpack.c.h.b16 %v1552
        %v2389 = vpack.c.b16 %v1879, %v1877
        %v2390 = vpack.c.b16 %v1880, %v1878
        %v2391 = vpack.c.b16 %v1883, %v1881
        %v2392 = vpack.c.b16 %v1884, %v1882
        %v2393 = vpack.c.b16 %v1887, %v1885
        %v2394 = vpack.c.b16 %v1888, %v1886
        %v2395 = vpack.c.b16 %v1891, %v1889
        %v2396 = vpack.c.b16 %v1892, %v1890
        %v2397 = vpack.c.b16 %v1895, %v1893
        %v2398 = vpack.c.b16 %v1896, %v1894
        %v2399 = vpack.c.b16 %v1899, %v1897
        %v2400 = vpack.c.b16 %v1900, %v1898
        %v2401 = vpack.c.b16 %v1903, %v1901
        %v2402 = vpack.c.b16 %v1904, %v1902
        %v2403 = vpack.c.b16 %v1907, %v1905
        %v2404 = vpack.c.b16 %v1908, %v1906
        %v2405 = vpack.c.b16 %v1911, %v1909
        %v2406 = vpack.c.b16 %v1912, %v1910
        %v2407 = vpack.c.b16 %v1915, %v1913
        %v2408 = vpack.c.b16 %v1916, %v1914
        %v2409 = vpack.c.b16 %v1919, %v1917
        %v2410 = vpack.c.b16 %v1920, %v1918
        %v2411 = vpack.c.b16 %v1923, %v1921
        %v2412 = vpack.c.b16 %v1924, %v1922
        %v2413 = vpack.c.b16 %v1927, %v1925
        %v2414 = vpack.c.b16 %v1928, %v1926
        %v2415 = vpack.c.b16 %v1931, %v1929
        %v2416 = vpack.c.b16 %v1932, %v1930
        %v2417 = vpack.c.b16 %v1935, %v1933
        %v2418 = vpack.c.b16 %v1936, %v1934
        %v2419 = vpack.c.b16 %v1939, %v1937
        %v2420 = vpack.c.b16 %v1940, %v1938
        %v2421 = vpack.c.b16 %v1943, %v1941
        %v2422 = vpack.c.b16 %v1944, %v1942
        %v2423 = vpack.c.b16 %v1947, %v1945
        %v2424 = vpack.c.b16 %v1948, %v1946
        %v2425 = vpack.c.b16 %v1951, %v1949
        %v2426 = vpack.c.b16 %v1952, %v1950
        %v2427 = vpack.c.b16 %v1955, %v1953
        %v2428 = vpack.c.b16 %v1956, %v1954
        %v2429 = vpack.c.b16 %v1959, %v1957
        %v2430 = vpack.c.b16 %v1960, %v1958
        %v2431 = vpack.c.b16 %v1963, %v1961
        %v2432 = vpack.c.b16 %v1964, %v1962
        %v2433 = vpack.c.b16 %v1967, %v1965
        %v2434 = vpack.c.b16 %v1968, %v1966
        %v2435 = vpack.c.b16 %v1971, %v1969
        %v2436 = vpack.c.b16 %v1972, %v1970
        %v2437 = vpack.c.b16 %v1975, %v1973
        %v2438 = vpack.c.b16 %v1976, %v1974
        %v2439 = vpack.c.b16 %v1979, %v1977
        %v2440 = vpack.c.b16 %v1980, %v1978
        %v2441 = vpack.c.b16 %v1983, %v1981
        %v2442 = vpack.c.b16 %v1984, %v1982
        %v2443 = vpack.c.b16 %v1987, %v1985
        %v2444 = vpack.c.b16 %v1988, %v1986
        %v2445 = vpack.c.b16 %v1991, %v1989
        %v2446 = vpack.c.b16 %v1992, %v1990
        %v2447 = vpack.c.b16 %v1995, %v1993
        %v2448 = vpack.c.b16 %v1996, %v1994
        %v2449 = vpack.c.b16 %v1999, %v1997
        %v2450 = vpack.c.b16 %v2000, %v1998
        %v2451 = vpack.c.b16 %v2003, %v2001
        %v2452 = vpack.c.b16 %v2004, %v2002
        %v2453 = vpack.c.b16 %v2007, %v2005
        %v2454 = vpack.c.b16 %v2008, %v2006
        %v2455 = vpack.c.b16 %v2011, %v2009
        %v2456 = vpack.c.b16 %v2012, %v2010
        %v2457 = vpack.c.b16 %v2015, %v2013
        %v2458 = vpack.c.b16 %v2016, %v2014
        %v2459 = vpack.c.b16 %v2019, %v2017
        %v2460 = vpack.c.b16 %v2020, %v2018
        %v2461 = vpack.c.b16 %v2023, %v2021
        %v2462 = vpack.c.b16 %v2024, %v2022
        %v2463 = vpack.c.b16 %v2027, %v2025
        %v2464 = vpack.c.b16 %v2028, %v2026
        %v2465 = vpack.c.b16 %v2031, %v2029
        %v2466 = vpack.c.b16 %v2032, %v2030
        %v2467 = vpack.c.b16 %v2035, %v2033
        %v2468 = vpack.c.b16 %v2036, %v2034
        %v2469 = vpack.c.b16 %v2039, %v2037
        %v2470 = vpack.c.b16 %v2040, %v2038
        %v2471 = vpack.c.b16 %v2043, %v2041
        %v2472 = vpack.c.b16 %v2044, %v2042
        %v2473 = vpack.c.b16 %v2047, %v2045
        %v2474 = vpack.c.b16 %v2048, %v2046
        %v2475 = vpack.c.b16 %v2051, %v2049
        %v2476 = vpack.c.b16 %v2052, %v2050
        %v2477 = vpack.c.b16 %v2055, %v2053
        %v2478 = vpack.c.b16 %v2056, %v2054
        %v2479 = vpack.c.b16 %v2059, %v2057
        %v2480 = vpack.c.b16 %v2060, %v2058
        %v2481 = vpack.c.b16 %v2063, %v2061
        %v2482 = vpack.c.b16 %v2064, %v2062
        %v2483 = vpack.c.b16 %v2067, %v2065
        %v2484 = vpack.c.b16 %v2068, %v2066
        %v2485 = vpack.c.b16 %v2071, %v2069
        %v2486 = vpack.c.b16 %v2072, %v2070
        %v2487 = vpack.c.b16 %v2075, %v2073
        %v2488 = vpack.c.b16 %v2076, %v2074
        %v2489 = vpack.c.b16 %v2079, %v2077
        %v2490 = vpack.c.b16 %v2080, %v2078
        %v2491 = vpack.c.b16 %v2083, %v2081
        %v2492 = vpack.c.b16 %v2084, %v2082
        %v2493 = vpack.c.b16 %v2087, %v2085
        %v2494 = vpack.c.b16 %v2088, %v2086
        %v2495 = vpack.c.b16 %v2091, %v2089
        %v2496 = vpack.c.b16 %v2092, %v2090
        %v2497 = vpack.c.b16 %v2095, %v2093
        %v2498 = vpack.c.b16 %v2096, %v2094
        %v2499 = vpack.c.b16 %v2099, %v2097
        %v2500 = vpack.c.b16 %v2100, %v2098
        %v2501 = vpack.c.b16 %v2103, %v2101
        %v2502 = vpack.c.b16 %v2104, %v2102
        %v2503 = vpack.c.b16 %v2107, %v2105
        %v2504 = vpack.c.b16 %v2108, %v2106
        %v2505 = vpack.c.b16 %v2111, %v2109
        %v2506 = vpack.c.b16 %v2112, %v2110
        %v2507 = vpack.c.b16 %v2115, %v2113
        %v2508 = vpack.c.b16 %v2116, %v2114
        %v2509 = vpack.c.b16 %v2119, %v2117
        %v2510 = vpack.c.b16 %v2120, %v2118
        %v2511 = vpack.c.b16 %v2123, %v2121
        %v2512 = vpack.c.b16 %v2124, %v2122
        %v2513 = vpack.c.b16 %v2127, %v2125
        %v2514 = vpack.c.b16 %v2128, %v2126
        %v2515 = vpack.c.b16 %v2131, %v2129
        %v2516 = vpack.c.b16 %v2132, %v2130
        %v2517 = vpack.c.b16 %v2135, %v2133
        %v2518 = vpack.c.b16 %v2136, %v2134
        %v2519 = vpack.c.b16 %v2139, %v2137
        %v2520 = vpack.c.b16 %v2140, %v2138
        %v2521 = vpack.c.b16 %v2143, %v2141
        %v2522 = vpack.c.b16 %v2144, %v2142
        %v2523 = vpack.c.b16 %v2147, %v2145
        %v2524 = vpack.c.b16 %v2148, %v2146
        %v2525 = vpack.c.b16 %v2151, %v2149
        %v2526 = vpack.c.b16 %v2152, %v2150
        %v2527 = vpack.c.b16 %v2155, %v2153
        %v2528 = vpack.c.b16 %v2156, %v2154
        %v2529 = vpack.c.b16 %v2159, %v2157
        %v2530 = vpack.c.b16 %v2160, %v2158
        %v2531 = vpack.c.b16 %v2163, %v2161
        %v2532 = vpack.c.b16 %v2164, %v2162
        %v2533 = vpack.c.b16 %v2167, %v2165
        %v2534 = vpack.c.b16 %v2168, %v2166
        %v2535 = vpack.c.b16 %v2171, %v2169
        %v2536 = vpack.c.b16 %v2172, %v2170
        %v2537 = vpack.c.b16 %v2175, %v2173
        %v2538 = vpack.c.b16 %v2176, %v2174
        %v2539 = vpack.c.b16 %v2179, %v2177
        %v2540 = vpack.c.b16 %v2180, %v2178
        %v2541 = vpack.c.b16 %v2183, %v2181
        %v2542 = vpack.c.b16 %v2184, %v2182
        %v2543 = vpack.c.b16 %v2187, %v2185
        %v2544 = vpack.c.b16 %v2188, %v2186
        %v2545 = vpack.c.b16 %v2191, %v2189
        %v2546 = vpack.c.b16 %v2192, %v2190
        %v2547 = vpack.c.b16 %v2195, %v2193
        %v2548 = vpack.c.b16 %v2196, %v2194
        %v2549 = vpack.c.b16 %v2199, %v2197
        %v2550 = vpack.c.b16 %v2200, %v2198
        %v2551 = vpack.c.b16 %v2203, %v2201
        %v2552 = vpack.c.b16 %v2204, %v2202
        %v2553 = vpack.c.b16 %v2207, %v2205
        %v2554 = vpack.c.b16 %v2208, %v2206
        %v2555 = vpack.c.b16 %v2211, %v2209
        %v2556 = vpack.c.b16 %v2212, %v2210
        %v2557 = vpack.c.b16 %v2215, %v2213
        %v2558 = vpack.c.b16 %v2216, %v2214
        %v2559 = vpack.c.b16 %v2219, %v2217
        %v2560 = vpack.c.b16 %v2220, %v2218
        %v2561 = vpack.c.b16 %v2223, %v2221
        %v2562 = vpack.c.b16 %v2224, %v2222
        %v2563 = vpack.c.b16 %v2227, %v2225
        %v2564 = vpack.c.b16 %v2228, %v2226
        %v2565 = vpack.c.b16 %v2231, %v2229
        %v2566 = vpack.c.b16 %v2232, %v2230
        %v2567 = vpack.c.b16 %v2235, %v2233
        %v2568 = vpack.c.b16 %v2236, %v2234
        %v2569 = vpack.c.b16 %v2239, %v2237
        %v2570 = vpack.c.b16 %v2240, %v2238
        %v2571 = vpack.c.b16 %v2243, %v2241
        %v2572 = vpack.c.b16 %v2244, %v2242
        %v2573 = vpack.c.b16 %v2247, %v2245
        %v2574 = vpack.c.b16 %v2248, %v2246
        %v2575 = vpack.c.b16 %v2251, %v2249
        %v2576 = vpack.c.b16 %v2252, %v2250
        %v2577 = vpack.c.b16 %v2255, %v2253
        %v2578 = vpack.c.b16 %v2256, %v2254
        %v2579 = vpack.c.b16 %v2259, %v2257
        %v2580 = vpack.c.b16 %v2260, %v2258
        %v2581 = vpack.c.b16 %v2263, %v2261
        %v2582 = vpack.c.b16 %v2264, %v2262
        %v2583 = vpack.c.b16 %v2267, %v2265
        %v2584 = vpack.c.b16 %v2268, %v2266
        %v2585 = vpack.c.b16 %v2271, %v2269
        %v2586 = vpack.c.b16 %v2272, %v2270
        %v2587 = vpack.c.b16 %v2275, %v2273
        %v2588 = vpack.c.b16 %v2276, %v2274
        %v2589 = vpack.c.b16 %v2279, %v2277
        %v2590 = vpack.c.b16 %v2280, %v2278
        %v2591 = vpack.c.b16 %v2283, %v2281
        %v2592 = vpack.c.b16 %v2284, %v2282
        %v2593 = vpack.c.b16 %v2287, %v2285
        %v2594 = vpack.c.b16 %v2288, %v2286
        %v2595 = vpack.c.b16 %v2291, %v2289
        %v2596 = vpack.c.b16 %v2292, %v2290
        %v2597 = vpack.c.b16 %v2295, %v2293
        %v2598 = vpack.c.b16 %v2296, %v2294
        %v2599 = vpack.c.b16 %v2299, %v2297
        %v2600 = vpack.c.b16 %v2300, %v2298
        %v2601 = vpack.c.b16 %v2303, %v2301
        %v2602 = vpack.c.b16 %v2304, %v2302
        %v2603 = vpack.c.b16 %v2307, %v2305
        %v2604 = vpack.c.b16 %v2308, %v2306
        %v2605 = vpack.c.b16 %v2311, %v2309
        %v2606 = vpack.c.b16 %v2312, %v2310
        %v2607 = vpack.c.b16 %v2315, %v2313
        %v2608 = vpack.c.b16 %v2316, %v2314
        %v2609 = vpack.c.b16 %v2319, %v2317
        %v2610 = vpack.c.b16 %v2320, %v2318
        %v2611 = vpack.c.b16 %v2323, %v2321
        %v2612 = vpack.c.b16 %v2324, %v2322
        %v2613 = vpack.c.b16 %v2327, %v2325
        %v2614 = vpack.c.b16 %v2328, %v2326
        %v2615 = vpack.c.b16 %v2331, %v2329
        %v2616 = vpack.c.b16 %v2332, %v2330
        %v2617 = vpack.c.b16 %v2335, %v2333
        %v2618 = vpack.c.b16 %v2336, %v2334
        %v2619 = vpack.c.b16 %v2339, %v2337
        %v2620 = vpack.c.b16 %v2340, %v2338
        %v2621 = vpack.c.b16 %v2343, %v2341
        %v2622 = vpack.c.b16 %v2344, %v2342
        %v2623 = vpack.c.b16 %v2347, %v2345
        %v2624 = vpack.c.b16 %v2348, %v2346
        %v2625 = vpack.c.b16 %v2351, %v2349
        %v2626 = vpack.c.b16 %v2352, %v2350
        %v2627 = vpack.c.b16 %v2355, %v2353
        %v2628 = vpack.c.b16 %v2356, %v2354
        %v2629 = vpack.c.b16 %v2359, %v2357
        %v2630 = vpack.c.b16 %v2360, %v2358
        %v2631 = vpack.c.b16 %v2363, %v2361
        %v2632 = vpack.c.b16 %v2364, %v2362
        %v2633 = vpack.c.b16 %v2367, %v2365
        %v2634 = vpack.c.b16 %v2368, %v2366
        %v2635 = vpack.c.b16 %v2371, %v2369
        %v2636 = vpack.c.b16 %v2372, %v2370
        %v2637 = vpack.c.b16 %v2375, %v2373
        %v2638 = vpack.c.b16 %v2376, %v2374
        %v2639 = vpack.c.b16 %v2379, %v2377
        %v2640 = vpack.c.b16 %v2380, %v2378
        %v2641 = vpack.c.b16 %v2383, %v2381
        %v2642 = vpack.c.b16 %v2384, %v2382
        %v2643 = vpack.c.b16 %v2387, %v2385
        %v2644 = vpack.c.b16 %v2388, %v2386
        %2901 = vmatprep.subr.bf16.mxu0 %v2390
        %2902 = vmatpush1.bf16.msra.mxu0 %v2389
        %2903 = vmatprep.subr.bf16.mxu0 %v2392
        %2904 = vmatpush1.bf16.msra.mxu0 %v2391
        %2905 = vmatprep.subr.bf16.mxu0 %v2394
        %2906 = vmatpush1.bf16.msra.mxu0 %v2393
        %2907 = vmatprep.subr.bf16.mxu0 %v2396
        %2908 = vmatpush1.bf16.msra.mxu0 %v2395
        %2909 = vmatprep.subr.bf16.mxu0 %v2398
        %2910 = vmatpush1.bf16.msra.mxu0 %v2397
        %2911 = vmatprep.subr.bf16.mxu0 %v2400
        %2912 = vmatpush1.bf16.msra.mxu0 %v2399
        %2913 = vmatprep.subr.bf16.mxu0 %v2402
        %2914 = vmatpush1.bf16.msra.mxu0 %v2401
        %2915 = vmatprep.subr.bf16.mxu0 %v2404
        %2916 = vmatpush1.bf16.msra.mxu0 %v2403
        %2917 = vmatprep.subr.bf16.mxu0 %v2406
        %2918 = vmatpush1.bf16.msra.mxu0 %v2405
        %2919 = vmatprep.subr.bf16.mxu0 %v2408
        %2920 = vmatpush1.bf16.msra.mxu0 %v2407
        %2921 = vmatprep.subr.bf16.mxu0 %v2410
        %2922 = vmatpush1.bf16.msra.mxu0 %v2409
        %2923 = vmatprep.subr.bf16.mxu0 %v2412
        %2924 = vmatpush1.bf16.msra.mxu0 %v2411
        %2925 = vmatprep.subr.bf16.mxu0 %v2414
        %2926 = vmatpush1.bf16.msra.mxu0 %v2413
        %2927 = vmatprep.subr.bf16.mxu0 %v2416
        %2928 = vmatpush1.bf16.msra.mxu0 %v2415
        %2929 = vmatprep.subr.bf16.mxu0 %v2418
        %2930 = vmatpush1.bf16.msra.mxu0 %v2417
        %2931 = vmatprep.subr.bf16.mxu0 %v2420
        %2932 = vmatpush1.bf16.msra.mxu0 %v2419
        %2933 = vmatprep.mubr.bf16.mxu0 %v1590
        %2934 = vmatmul.mubr.bf16.gmra.mrb[0].mxu0 %v1589
        %v2935 = vpop.f32.mrb[0].mxu0
        %v2936 = vadd.f32 %v1558, %v2935
        %v2937 = vpop.f32.mrb[0].mxu0
        %v2938 = vadd.f32 %v1562, %v2937
        %v2939 = vpop.f32.mrb[0].mxu0
        %v2940 = vpop.f32.mrb[0].mxu0
        %2941 = vdwg.mxu0
        %2942 = vmatprep.subr.bf16.mxu0 %v2422
        %2943 = vmatpush1.bf16.msra.mxu0 %v2421
        %2944 = vmatprep.subr.bf16.mxu0 %v2424
        %2945 = vmatpush1.bf16.msra.mxu0 %v2423
        %2946 = vmatprep.subr.bf16.mxu0 %v2426
        %2947 = vmatpush1.bf16.msra.mxu0 %v2425
        %2948 = vmatprep.subr.bf16.mxu0 %v2428
        %2949 = vmatpush1.bf16.msra.mxu0 %v2427
        %2950 = vmatprep.subr.bf16.mxu0 %v2430
        %2951 = vmatpush1.bf16.msra.mxu0 %v2429
        %2952 = vmatprep.subr.bf16.mxu0 %v2432
        %2953 = vmatpush1.bf16.msra.mxu0 %v2431
        %2954 = vmatprep.subr.bf16.mxu0 %v2434
        %2955 = vmatpush1.bf16.msra.mxu0 %v2433
        %2956 = vmatprep.subr.bf16.mxu0 %v2436
        %2957 = vmatpush1.bf16.msra.mxu0 %v2435
        %2958 = vmatprep.subr.bf16.mxu0 %v2438
        %2959 = vmatpush1.bf16.msra.mxu0 %v2437
        %2960 = vmatprep.subr.bf16.mxu0 %v2440
        %2961 = vmatpush1.bf16.msra.mxu0 %v2439
        %2962 = vmatprep.subr.bf16.mxu0 %v2442
        %2963 = vmatpush1.bf16.msra.mxu0 %v2441
        %2964 = vmatprep.subr.bf16.mxu0 %v2444
        %2965 = vmatpush1.bf16.msra.mxu0 %v2443
        %2966 = vmatprep.subr.bf16.mxu0 %v2446
        %2967 = vmatpush1.bf16.msra.mxu0 %v2445
        %2968 = vmatprep.subr.bf16.mxu0 %v2448
        %2969 = vmatpush1.bf16.msra.mxu0 %v2447
        %2970 = vmatprep.subr.bf16.mxu0 %v2450
        %2971 = vmatpush1.bf16.msra.mxu0 %v2449
        %2972 = vmatprep.subr.bf16.mxu0 %v2452
        %2973 = vmatpush1.bf16.msra.mxu0 %v2451
        %2974 = vmatprep.mubr.bf16.mxu0 %v1592
        %2975 = vmatmul.mubr.bf16.gmra.mrb[0].mxu0 %v1591
        %v2976 = vpop.f32.mrb[0].mxu0
        %v2977 = vadd.f32 %v2936, %v2976
        %v2978 = vpop.f32.mrb[0].mxu0
        %v2979 = vadd.f32 %v2938, %v2978
        %v2980 = vpop.f32.mrb[0].mxu0
        %v2981 = vpop.f32.mrb[0].mxu0
        %2982 = vdwg.mxu0
        %2983 = vmatprep.subr.bf16.mxu0 %v2454
        %2984 = vmatpush1.bf16.msra.mxu0 %v2453
        %2985 = vmatprep.subr.bf16.mxu0 %v2456
        %2986 = vmatpush1.bf16.msra.mxu0 %v2455
        %2987 = vmatprep.subr.bf16.mxu0 %v2458
        %2988 = vmatpush1.bf16.msra.mxu0 %v2457
        %2989 = vmatprep.subr.bf16.mxu0 %v2460
        %2990 = vmatpush1.bf16.msra.mxu0 %v2459
        %2991 = vmatprep.subr.bf16.mxu0 %v2462
        %2992 = vmatpush1.bf16.msra.mxu0 %v2461
        %2993 = vmatprep.subr.bf16.mxu0 %v2464
        %2994 = vmatpush1.bf16.msra.mxu0 %v2463
        %2995 = vmatprep.subr.bf16.mxu0 %v2466
        %2996 = vmatpush1.bf16.msra.mxu0 %v2465
        %2997 = vmatprep.subr.bf16.mxu0 %v2468
        %2998 = vmatpush1.bf16.msra.mxu0 %v2467
        %2999 = vmatprep.subr.bf16.mxu0 %v2470
        %3000 = vmatpush1.bf16.msra.mxu0 %v2469
        %3001 = vmatprep.subr.bf16.mxu0 %v2472
        %3002 = vmatpush1.bf16.msra.mxu0 %v2471
        %3003 = vmatprep.subr.bf16.mxu0 %v2474
        %3004 = vmatpush1.bf16.msra.mxu0 %v2473
        %3005 = vmatprep.subr.bf16.mxu0 %v2476
        %3006 = vmatpush1.bf16.msra.mxu0 %v2475
        %3007 = vmatprep.subr.bf16.mxu0 %v2478
        %3008 = vmatpush1.bf16.msra.mxu0 %v2477
        %3009 = vmatprep.subr.bf16.mxu0 %v2480
        %3010 = vmatpush1.bf16.msra.mxu0 %v2479
        %3011 = vmatprep.subr.bf16.mxu0 %v2482
        %3012 = vmatpush1.bf16.msra.mxu0 %v2481
        %3013 = vmatprep.subr.bf16.mxu0 %v2484
        %3014 = vmatpush1.bf16.msra.mxu0 %v2483
        %3015 = vmatprep.mubr.bf16.mxu0 %v1594
        %3016 = vmatmul.mubr.bf16.gmra.mrb[0].mxu0 %v1593
        %v3017 = vpop.f32.mrb[0].mxu0
        %v3018 = vadd.f32 %v2977, %v3017
        %v3019 = vpop.f32.mrb[0].mxu0
        %v3020 = vadd.f32 %v2979, %v3019
        %v3021 = vpop.f32.mrb[0].mxu0
        %v3022 = vpop.f32.mrb[0].mxu0
        %3023 = vdwg.mxu0
        %3024 = vmatprep.subr.bf16.mxu0 %v2486
        %3025 = vmatpush1.bf16.msra.mxu0 %v2485
        %3026 = vmatprep.subr.bf16.mxu0 %v2488
        %3027 = vmatpush1.bf16.msra.mxu0 %v2487
        %3028 = vmatprep.subr.bf16.mxu0 %v2490
        %3029 = vmatpush1.bf16.msra.mxu0 %v2489
        %3030 = vmatprep.subr.bf16.mxu0 %v2492
        %3031 = vmatpush1.bf16.msra.mxu0 %v2491
        %3032 = vmatprep.subr.bf16.mxu0 %v2494
        %3033 = vmatpush1.bf16.msra.mxu0 %v2493
        %3034 = vmatprep.subr.bf16.mxu0 %v2496
        %3035 = vmatpush1.bf16.msra.mxu0 %v2495
        %3036 = vmatprep.subr.bf16.mxu0 %v2498
        %3037 = vmatpush1.bf16.msra.mxu0 %v2497
        %3038 = vmatprep.subr.bf16.mxu0 %v2500
        %3039 = vmatpush1.bf16.msra.mxu0 %v2499
        %3040 = vmatprep.subr.bf16.mxu0 %v2502
        %3041 = vmatpush1.bf16.msra.mxu0 %v2501
        %3042 = vmatprep.subr.bf16.mxu0 %v2504
        %3043 = vmatpush1.bf16.msra.mxu0 %v2503
        %3044 = vmatprep.subr.bf16.mxu0 %v2506
        %3045 = vmatpush1.bf16.msra.mxu0 %v2505
        %3046 = vmatprep.subr.bf16.mxu0 %v2508
        %3047 = vmatpush1.bf16.msra.mxu0 %v2507
        %3048 = vmatprep.subr.bf16.mxu0 %v2510
        %3049 = vmatpush1.bf16.msra.mxu0 %v2509
        %3050 = vmatprep.subr.bf16.mxu0 %v2512
        %3051 = vmatpush1.bf16.msra.mxu0 %v2511
        %3052 = vmatprep.subr.bf16.mxu0 %v2514
        %3053 = vmatpush1.bf16.msra.mxu0 %v2513
        %3054 = vmatprep.subr.bf16.mxu0 %v2516
        %3055 = vmatpush1.bf16.msra.mxu0 %v2515
        %3056 = vmatprep.mubr.bf16.mxu0 %v1596
        %3057 = vmatmul.mubr.bf16.gmra.mrb[0].mxu0 %v1595
        %v3058 = vpop.f32.mrb[0].mxu0
        %v3059 = vadd.f32 %v3018, %v3058
        %v3060 = vpop.f32.mrb[0].mxu0
        %v3061 = vadd.f32 %v3020, %v3060
        %v3062 = vpop.f32.mrb[0].mxu0
        %v3063 = vpop.f32.mrb[0].mxu0
        %3064 = vdwg.mxu0
        %3065 = vmatprep.subr.bf16.mxu0 %v2518
        %3066 = vmatpush1.bf16.msra.mxu0 %v2517
        %3067 = vmatprep.subr.bf16.mxu0 %v2520
        %3068 = vmatpush1.bf16.msra.mxu0 %v2519
        %3069 = vmatprep.subr.bf16.mxu0 %v2522
        %3070 = vmatpush1.bf16.msra.mxu0 %v2521
        %3071 = vmatprep.subr.bf16.mxu0 %v2524
        %3072 = vmatpush1.bf16.msra.mxu0 %v2523
        %3073 = vmatprep.subr.bf16.mxu0 %v2526
        %3074 = vmatpush1.bf16.msra.mxu0 %v2525
        %3075 = vmatprep.subr.bf16.mxu0 %v2528
        %3076 = vmatpush1.bf16.msra.mxu0 %v2527
        %3077 = vmatprep.subr.bf16.mxu0 %v2530
        %3078 = vmatpush1.bf16.msra.mxu0 %v2529
        %3079 = vmatprep.subr.bf16.mxu0 %v2532
        %3080 = vmatpush1.bf16.msra.mxu0 %v2531
        %3081 = vmatprep.subr.bf16.mxu0 %v2534
        %3082 = vmatpush1.bf16.msra.mxu0 %v2533
        %3083 = vmatprep.subr.bf16.mxu0 %v2536
        %3084 = vmatpush1.bf16.msra.mxu0 %v2535
        %3085 = vmatprep.subr.bf16.mxu0 %v2538
        %3086 = vmatpush1.bf16.msra.mxu0 %v2537
        %3087 = vmatprep.subr.bf16.mxu0 %v2540
        %3088 = vmatpush1.bf16.msra.mxu0 %v2539
        %3089 = vmatprep.subr.bf16.mxu0 %v2542
        %3090 = vmatpush1.bf16.msra.mxu0 %v2541
        %3091 = vmatprep.subr.bf16.mxu0 %v2544
        %3092 = vmatpush1.bf16.msra.mxu0 %v2543
        %3093 = vmatprep.subr.bf16.mxu0 %v2546
        %3094 = vmatpush1.bf16.msra.mxu0 %v2545
        %3095 = vmatprep.subr.bf16.mxu0 %v2548
        %3096 = vmatpush1.bf16.msra.mxu0 %v2547
        %3097 = vmatprep.mubr.bf16.mxu0 %v1598
        %3098 = vmatmul.mubr.bf16.gmra.mrb[0].mxu0 %v1597
        %v3099 = vpop.f32.mrb[0].mxu0
        %v3100 = vadd.f32 %v3059, %v3099
        %v3101 = vpop.f32.mrb[0].mxu0
        %v3102 = vadd.f32 %v3061, %v3101
        %v3103 = vpop.f32.mrb[0].mxu0
        %v3104 = vpop.f32.mrb[0].mxu0
        %3105 = vdwg.mxu0
        %3106 = vmatprep.subr.bf16.mxu0 %v2550
        %3107 = vmatpush1.bf16.msra.mxu0 %v2549
        %3108 = vmatprep.subr.bf16.mxu0 %v2552
        %3109 = vmatpush1.bf16.msra.mxu0 %v2551
        %3110 = vmatprep.subr.bf16.mxu0 %v2554
        %3111 = vmatpush1.bf16.msra.mxu0 %v2553
        %3112 = vmatprep.subr.bf16.mxu0 %v2556
        %3113 = vmatpush1.bf16.msra.mxu0 %v2555
        %3114 = vmatprep.subr.bf16.mxu0 %v2558
        %3115 = vmatpush1.bf16.msra.mxu0 %v2557
        %3116 = vmatprep.subr.bf16.mxu0 %v2560
        %3117 = vmatpush1.bf16.msra.mxu0 %v2559
        %3118 = vmatprep.subr.bf16.mxu0 %v2562
        %3119 = vmatpush1.bf16.msra.mxu0 %v2561
        %3120 = vmatprep.subr.bf16.mxu0 %v2564
        %3121 = vmatpush1.bf16.msra.mxu0 %v2563
        %3122 = vmatprep.subr.bf16.mxu0 %v2566
        %3123 = vmatpush1.bf16.msra.mxu0 %v2565
        %3124 = vmatprep.subr.bf16.mxu0 %v2568
        %3125 = vmatpush1.bf16.msra.mxu0 %v2567
        %3126 = vmatprep.subr.bf16.mxu0 %v2570
        %3127 = vmatpush1.bf16.msra.mxu0 %v2569
        %3128 = vmatprep.subr.bf16.mxu0 %v2572
        %3129 = vmatpush1.bf16.msra.mxu0 %v2571
        %3130 = vmatprep.subr.bf16.mxu0 %v2574
        %3131 = vmatpush1.bf16.msra.mxu0 %v2573
        %3132 = vmatprep.subr.bf16.mxu0 %v2576
        %3133 = vmatpush1.bf16.msra.mxu0 %v2575
        %3134 = vmatprep.subr.bf16.mxu0 %v2578
        %3135 = vmatpush1.bf16.msra.mxu0 %v2577
        %3136 = vmatprep.subr.bf16.mxu0 %v2580
        %3137 = vmatpush1.bf16.msra.mxu0 %v2579
        %3138 = vmatprep.mubr.bf16.mxu0 %v1600
        %3139 = vmatmul.mubr.bf16.gmra.mrb[0].mxu0 %v1599
        %v3140 = vpop.f32.mrb[0].mxu0
        %v3141 = vadd.f32 %v3100, %v3140
        %v3142 = vpop.f32.mrb[0].mxu0
        %v3143 = vadd.f32 %v3102, %v3142
        %v3144 = vpop.f32.mrb[0].mxu0
        %v3145 = vpop.f32.mrb[0].mxu0
        %3146 = vdwg.mxu0
        %3147 = vmatprep.subr.bf16.mxu0 %v2582
        %3148 = vmatpush1.bf16.msra.mxu0 %v2581
        %3149 = vmatprep.subr.bf16.mxu0 %v2584
        %3150 = vmatpush1.bf16.msra.mxu0 %v2583
        %3151 = vmatprep.subr.bf16.mxu0 %v2586
        %3152 = vmatpush1.bf16.msra.mxu0 %v2585
        %3153 = vmatprep.subr.bf16.mxu0 %v2588
        %3154 = vmatpush1.bf16.msra.mxu0 %v2587
        %3155 = vmatprep.subr.bf16.mxu0 %v2590
        %3156 = vmatpush1.bf16.msra.mxu0 %v2589
        %3157 = vmatprep.subr.bf16.mxu0 %v2592
        %3158 = vmatpush1.bf16.msra.mxu0 %v2591
        %3159 = vmatprep.subr.bf16.mxu0 %v2594
        %3160 = vmatpush1.bf16.msra.mxu0 %v2593
        %3161 = vmatprep.subr.bf16.mxu0 %v2596
        %3162 = vmatpush1.bf16.msra.mxu0 %v2595
        %3163 = vmatprep.subr.bf16.mxu0 %v2598
        %3164 = vmatpush1.bf16.msra.mxu0 %v2597
        %3165 = vmatprep.subr.bf16.mxu0 %v2600
        %3166 = vmatpush1.bf16.msra.mxu0 %v2599
        %3167 = vmatprep.subr.bf16.mxu0 %v2602
        %3168 = vmatpush1.bf16.msra.mxu0 %v2601
        %3169 = vmatprep.subr.bf16.mxu0 %v2604
        %3170 = vmatpush1.bf16.msra.mxu0 %v2603
        %3171 = vmatprep.subr.bf16.mxu0 %v2606
        %3172 = vmatpush1.bf16.msra.mxu0 %v2605
        %3173 = vmatprep.subr.bf16.mxu0 %v2608
        %3174 = vmatpush1.bf16.msra.mxu0 %v2607
        %3175 = vmatprep.subr.bf16.mxu0 %v2610
        %3176 = vmatpush1.bf16.msra.mxu0 %v2609
        %3177 = vmatprep.subr.bf16.mxu0 %v2612
        %3178 = vmatpush1.bf16.msra.mxu0 %v2611
        %3179 = vmatprep.mubr.bf16.mxu0 %v1602
        %3180 = vmatmul.mubr.bf16.gmra.mrb[0].mxu0 %v1601
        %v3181 = vpop.f32.mrb[0].mxu0
        %v3182 = vadd.f32 %v3141, %v3181
        %v3183 = vpop.f32.mrb[0].mxu0
        %v3184 = vadd.f32 %v3143, %v3183
        %v3185 = vpop.f32.mrb[0].mxu0
        %v3186 = vpop.f32.mrb[0].mxu0
        %3187 = vdwg.mxu0
        %3188 = vmatprep.subr.bf16.mxu0 %v2614
        %3189 = vmatpush1.bf16.msra.mxu0 %v2613
        %3190 = vmatprep.subr.bf16.mxu0 %v2616
        %3191 = vmatpush1.bf16.msra.mxu0 %v2615
        %3192 = vmatprep.subr.bf16.mxu0 %v2618
        %3193 = vmatpush1.bf16.msra.mxu0 %v2617
        %3194 = vmatprep.subr.bf16.mxu0 %v2620
        %3195 = vmatpush1.bf16.msra.mxu0 %v2619
        %3196 = vmatprep.subr.bf16.mxu0 %v2622
        %3197 = vmatpush1.bf16.msra.mxu0 %v2621
        %3198 = vmatprep.subr.bf16.mxu0 %v2624
        %3199 = vmatpush1.bf16.msra.mxu0 %v2623
        %3200 = vmatprep.subr.bf16.mxu0 %v2626
        %3201 = vmatpush1.bf16.msra.mxu0 %v2625
        %3202 = vmatprep.subr.bf16.mxu0 %v2628
        %3203 = vmatpush1.bf16.msra.mxu0 %v2627
        %3204 = vmatprep.subr.bf16.mxu0 %v2630
        %3205 = vmatpush1.bf16.msra.mxu0 %v2629
        %3206 = vmatprep.subr.bf16.mxu0 %v2632
        %3207 = vmatpush1.bf16.msra.mxu0 %v2631
        %3208 = vmatprep.subr.bf16.mxu0 %v2634
        %3209 = vmatpush1.bf16.msra.mxu0 %v2633
        %3210 = vmatprep.subr.bf16.mxu0 %v2636
        %3211 = vmatpush1.bf16.msra.mxu0 %v2635
        %3212 = vmatprep.subr.bf16.mxu0 %v2638
        %3213 = vmatpush1.bf16.msra.mxu0 %v2637
        %3214 = vmatprep.subr.bf16.mxu0 %v2640
        %3215 = vmatpush1.bf16.msra.mxu0 %v2639
        %3216 = vmatprep.subr.bf16.mxu0 %v2642
        %3217 = vmatpush1.bf16.msra.mxu0 %v2641
        %3218 = vmatprep.subr.bf16.mxu0 %v2644
        %3219 = vmatpush1.bf16.msra.mxu0 %v2643
        %3220 = vmatprep.mubr.bf16.mxu0 %v1604
        %3221 = vmatmul.mubr.bf16.gmra.mrb[0].mxu0 %v1603
        %v3222 = vpop.f32.mrb[0].mxu0
        %v3223 = vadd.f32 %v3182, %v3222
        %v3224 = vpop.f32.mrb[0].mxu0
        %v3225 = vadd.f32 %v3184, %v3224
        %v3226 = vpop.f32.mrb[0].mxu0
        %v3227 = vpop.f32.mrb[0].mxu0
        %3228 = vdwg.mxu0
        %v3229 = vmax.f32 %v3223, 0.0
        %v3230 = vmax.f32 %v3225, 0.0
        %v3231 = vpack.c.bf16 %v3229, %v3229
        %v3232 = vpack.c.bf16 %v3230, %v3230
        %v3235 = vunpack.c.l.b16 %v3231
        %v3236 = vunpack.c.l.b16 %v3232
        %v3237 = vpack.c.b16 %v3236, %v3235
        %3239 = vst [vmem:[%s1287] sm:$0xff] %v3237
        %s3240 = smul.u32 2, %s19
        %p3241 = scmp.lt.s32.totalorder %s18, 0
        %s3242 = scalar_select %p3241, %s18, 0
        %p3243 = scmp.lt.s32.totalorder %s3240, 7
        %s3244 = scalar_select %p3243, %s3240, 7
        %s3245 = smul.addr %s3242, 8
        %s3246 = sadd.s32 %s3244, %s3245
        %s3247 = smul.addr %s3246, 4
        %s3248 = scalar_lea.vmem %s3, %s3247
        // Predicated region
        $region71: #{_init_step.7} parent=65 // pred_check
          %p3249 = pneg %p124
        $region72: #{_init_step.7} parent=65 // pred_check_branch
          %3251 = sbr.rel (%p3249) target = $region74
        $region73: #{_init_step.7} parent=65 // pred_region
          %s3252 = smul.u32 2, %s19
        $region74: #{_init_step.7} parent=65 // pred_fallthru
          _
      $region66: #{_init_step.7} parent=5 // pred_fallthru
        _
      %p3253 = scmp.le.s32.totalorder 2, %s9
      // Predicated region
      $region75: #{_init_step.7} parent=5 // pred_check
        %p3254 = pneg %p3253
      $region76: #{_init_step.7} parent=5 // pred_check_branch
        %3256 = sbr.rel (%p3254) target = $region78
      $region77: #{_init_step.7} parent=5 // pred_region
        %s3257 = ssub.s32 %s9, 2
        // Predicated region
        $region79: #{_init_step.7} parent=77 // pred_check
          %p3258 = pneg %p130
        $region80: #{_init_step.7} parent=77 // pred_check_branch
          %3260 = sbr.rel (%p3258) target = $region82
        $region81: #{_init_step.7} parent=77 // pred_region
          %s3261 = smul.u32 2, %s21
          %p3262 = scmp.lt.s32.totalorder %s20, 0
          %s3263 = scalar_select %p3262, %s20, 0
          %p3264 = scmp.lt.s32.totalorder %s3261, 7
          %s3265 = scalar_select %p3264, %s3261, 7
          %s3266 = smul.addr %s3263, 8
          %s3267 = sadd.s32 %s3265, %s3266
          %s3268 = smul.addr %s3267, 4
          %s3269 = scalar_lea.vmem %s3, %s3268
        $region82: #{_init_step.7} parent=77 // pred_fallthru
          _
      $region78: #{_init_step.7} parent=5 // pred_fallthru
        _
    $region6: #{_init_step.7} parent=1 // loop_footer
      %s13 = sadd.s32 1, %s9
    $region7: #{_init_step.7} parent=1 // loop_footer_branch
      %8 = sbr.rel target = $region3
    $region8: #{_init_step.7} parent=1 // loop_exit
      _

// kernel: _init_step.8
$region0: #{_init_step.8}
  #allocation0 [shape = 'u32[]', space=smem, size = 0x4, offset = 0x4, fixed_abs, tag = 'smem constant byte address 0x4 - core index']
  #allocation1 [shape = 'u32[144,128]{1,0:T(1,128)}', space=vmem, size = 0x12000, scoped, tag = 'internal scratch']
  %s0 = inlined_call_operand.vmem [shape: bf16[8,1024], index: 0, kind: input, shape index: {}]
  %s1 = inlined_call_operand.vmem [shape: bf16[1024,512], index: 1, kind: input, shape index: {}]
  %s2 = inlined_call_operand.vmem [shape: f32[1,512], index: 2, kind: input, shape index: {}]
  %s3 = inlined_call_operand.vmem [shape: f32[8,512], index: 3, kind: output, shape index: {}]
  %s4 = sld [smem:[#allocation0]]
  $region83: #{_init_step.8} parent=0
    _
  %s6 = ssub.s32 1, %s4
  %s7 = scalar_select 0, %s6, %s4
  $region1: #{_init_step.8} parent=0
    #allocation2 [shape = 'u8[1048576]{0}', space=vmem, size = 0x100000, scoped, tag = 'input window, operand 1']
    loop: start=0, step=1, limit=4
    $region2: #{_init_step.8} parent=1 // loop_pre_header
      _
    $region3: #{_init_step.8} parent=1 // loop_header
      %s9 = sphi 0, %s13
      %p10 = scmp.ge.s32.totalorder %s9, 4
      %s16 = sphi 0, %s28
      %s17 = sphi 0, %s24
      %s18 = sphi 0, %s16
      %s19 = sphi 0, %s17
      %s20 = sphi 0, %s18
      %s21 = sphi 0, %s19
      %s31 = sphi 0, %s33
      %s34 = sphi 0, %s31
      %s35 = sphi 0, %s34
      %s51 = sphi 0, %s35
      %s57 = sphi 0, %s59
      %s60 = sphi 0, %s57
      %s61 = sphi 0, %s60
      %s77 = sphi 0, %s61
      %s83 = sphi 0, %s85
      %s86 = sphi 0, %s83
      %s87 = sphi 0, %s86
      %s103 = sphi 0, %s87
      %s111 = sphi 0, %s113
      %s114 = sphi 0, %s111
      %s115 = sphi 0, %s114
      %s131 = sphi 0, %s115
    $region4: #{_init_step.8} parent=1 // loop_header_branch
      %12 = sbr.rel (%p10) target = $region8
    $region5: #{_init_step.8} parent=1 // loop_body
      %s14 = ssub.s32 %s9, 1
      %s15 = ssub.s32 %s9, 2
      %s22 = sadd.s32 1, %s17
      %p23 = scmp.ge.s32.totalorder %s22, 2
      %s24 = scalar_select %p23, 0, %s22
      %s25 = sadd.s32 1, %s16
      %s26 = scalar_select %p23, %s25, %s16
      %p27 = scmp.ge.s32.totalorder %s26, 1
      %s28 = scalar_select %p27, 0, %s26
      %s29 = ssub.s32 %s16, %s28
      %p30 = scmp.eq.s32.totalorder %s29, 0
      %s32 = sadd.s32 %s31, 1
      %s33 = scalar_select %p30, %s31, %s32
      %p36 = pneg %p30
      %p37 = scmp.eq.s32.totalorder %s9, 1
      %p38 = por %p36, %p37
      %p39 = scmp.ne.s32.totalorder %s31, %s34
      %p40 = scmp.eq.s32.totalorder %s9, 0
      %p41 = por %p39, %p40
      %p42 = scmp.ne.s32.totalorder %s31, %s34
      %p43 = scmp.eq.s32.totalorder %s14, 1
      %p44 = por %p42, %p43
      %p45 = scmp.ne.s32.totalorder %s34, %s35
      %p46 = scmp.eq.s32.totalorder %s14, 0
      %p47 = por %p45, %p46
      %p48 = scmp.ne.s32.totalorder %s34, %s35
      %p49 = scmp.eq.s32.totalorder %s15, 1
      %p50 = por %p48, %p49
      %p52 = scmp.ne.s32.totalorder %s35, %s51
      %p53 = scmp.eq.s32.totalorder %s15, 0
      %p54 = por %p52, %p53
      %s55 = ssub.s32 %s17, %s24
      %p56 = scmp.eq.s32.totalorder %s55, 0
      %s58 = sadd.s32 %s57, 1
      %s59 = scalar_select %p56, %s57, %s58
      %p62 = pneg %p56
      %p63 = scmp.eq.s32.totalorder %s9, 1
      %p64 = por %p62, %p63
      %p65 = scmp.ne.s32.totalorder %s57, %s60
      %p66 = scmp.eq.s32.totalorder %s9, 0
      %p67 = por %p65, %p66
      %p68 = scmp.ne.s32.totalorder %s57, %s60
      %p69 = scmp.eq.s32.totalorder %s14, 1
      %p70 = por %p68, %p69
      %p71 = scmp.ne.s32.totalorder %s60, %s61
      %p72 = scmp.eq.s32.totalorder %s14, 0
      %p73 = por %p71, %p72
      %p74 = scmp.ne.s32.totalorder %s60, %s61
      %p75 = scmp.eq.s32.totalorder %s15, 1
      %p76 = por %p74, %p75
      %p78 = scmp.ne.s32.totalorder %s61, %s77
      %p79 = scmp.eq.s32.totalorder %s15, 0
      %p80 = por %p78, %p79
      %s81 = ssub.s32 %s17, %s24
      %p82 = scmp.eq.s32.totalorder %s81, 0
      %s84 = sadd.s32 %s83, 1
      %s85 = scalar_select %p82, %s83, %s84
      %p88 = pneg %p82
      %p89 = scmp.eq.s32.totalorder %s9, 1
      %p90 = por %p88, %p89
      %p91 = scmp.ne.s32.totalorder %s83, %s86
      %p92 = scmp.eq.s32.totalorder %s9, 0
      %p93 = por %p91, %p92
      %p94 = scmp.ne.s32.totalorder %s83, %s86
      %p95 = scmp.eq.s32.totalorder %s14, 1
      %p96 = por %p94, %p95
      %p97 = scmp.ne.s32.totalorder %s86, %s87
      %p98 = scmp.eq.s32.totalorder %s14, 0
      %p99 = por %p97, %p98
      %p100 = scmp.ne.s32.totalorder %s86, %s87
      %p101 = scmp.eq.s32.totalorder %s15, 1
      %p102 = por %p100, %p101
      %p104 = scmp.ne.s32.totalorder %s87, %s103
      %p105 = scmp.eq.s32.totalorder %s15, 0
      %p106 = por %p104, %p105
      %s107 = ssub.s32 %s16, %s28
      %s108 = ssub.s32 %s17, %s24
      %s109 = sor.u32 %s107, %s108
      %p110 = scmp.eq.s32.totalorder %s109, 0
      %s112 = sadd.s32 %s111, 1
      %s113 = scalar_select %p110, %s111, %s112
      %p116 = pneg %p110
      %p117 = scmp.eq.s32.totalorder %s9, 1
      %p118 = por %p116, %p117
      %p119 = scmp.ne.s32.totalorder %s111, %s114
      %p120 = scmp.eq.s32.totalorder %s9, 0
      %p121 = por %p119, %p120
      %p122 = scmp.ne.s32.totalorder %s111, %s114
      %p123 = scmp.eq.s32.totalorder %s14, 1
      %p124 = por %p122, %p123
      %p125 = scmp.ne.s32.totalorder %s114, %s115
      %p126 = scmp.eq.s32.totalorder %s14, 0
      %p127 = por %p125, %p126
      %p128 = scmp.ne.s32.totalorder %s114, %s115
      %p129 = scmp.eq.s32.totalorder %s15, 1
      %p130 = por %p128, %p129
      %p132 = scmp.ne.s32.totalorder %s115, %s131
      %p133 = scmp.eq.s32.totalorder %s15, 0
      %p134 = por %p132, %p133
      %p135 = scmp.le.s32.totalorder 1, %s9
      %p136 = scmp.lt.s32.totalorder %s9, 3
      %p137 = pnand %p135, %p136
      %p138 = pneg %p137
      // Predicated region
      $region9: #{_init_step.8} parent=5 // pred_check
        _
      $region10: #{_init_step.8} parent=5 // pred_check_branch
        %140 = sbr.rel (%p137) target = $region12
      $region11: #{_init_step.8} parent=5 // pred_region
        %s141 = ssub.s32 %s9, 1
        // Predicated region
        $region13: #{_init_step.8} parent=11 // pred_check
          %p142 = pneg %p47
        $region14: #{_init_step.8} parent=11 // pred_check_branch
          %144 = sbr.rel (%p142) target = $region16
        $region15: #{_init_step.8} parent=11 // pred_region
          %p145 = scmp.lt.s32.totalorder %s18, 0
          %s146 = scalar_select %p145, %s18, 0
          %s147 = smul.addr %s146, 8
          %s148 = smul.addr %s147, 4
          %s149 = scalar_lea.vmem %s0, %s148
        $region16: #{_init_step.8} parent=11 // pred_fallthru
          _
      $region12: #{_init_step.8} parent=5 // pred_fallthru
        _
      %p150 = scmp.lt.s32.totalorder %s9, 2
      // Predicated region
      $region17: #{_init_step.8} parent=5 // pred_check
        %p151 = pneg %p150
      $region18: #{_init_step.8} parent=5 // pred_check_branch
        %153 = sbr.rel (%p151) target = $region20
      $region19: #{_init_step.8} parent=5 // pred_region
        // Predicated region
        $region21: #{_init_step.8} parent=19 // pred_check
          %p154 = pneg %p67
        $region22: #{_init_step.8} parent=19 // pred_check_branch
          %156 = sbr.rel (%p154) target = $region24
        $region23: #{_init_step.8} parent=19 // pred_region
          %s157 = sand.u32 %s57, 1
          %s158 = sand.u32 %s57, 1
          %s159 = smul.addr %s158, 1024
          %s160 = scalar_lea.vmem [#allocation2], %s159
          %s161 = smul.u32 2, %s17
          %s162 = smul.addr %s161, 4
          %s163 = scalar_lea.vmem %s1, %s162
          // Predicated region
          $region25: #{_init_step.8} parent=23 // pred_check
            _
          $region26: #{_init_step.8} parent=23 // pred_check_branch
            %165 = sbr.rel (0) target = $region28
          $region27: #{_init_step.8} parent=23 // pred_region
            // Predicated region
            $region29: #{_init_step.8} parent=27 // pred_check
              _
            $region30: #{_init_step.8} parent=27 // pred_check_branch
              %167 = sbr.rel (0) target = $region32
            $region31: #{_init_step.8} parent=27 // pred_region
              // Predicated region
              $region44: #{_init_step.8} parent=31 // pred_check
                _
              $region45: #{_init_step.8} parent=31 // pred_check_branch
                %436 = sbr.rel (0) target = $region47
              $region46: #{_init_step.8} parent=31 // pred_region
                loop: start=0, step=1, limit=1
                $region48: #{_init_step.8} parent=46 // loop_pre_header
                  _
                $region49: #{_init_step.8} parent=46 // loop_header
                  %s438 = sphi 0, %s442
                  %p439 = scmp.ge.s32.totalorder %s438, 1
                  %s443 = sphi %s163, %s163
                  %s444 = sphi %s160, %s160
                $region50: #{_init_step.8} parent=46 // loop_header_branch
                  %441 = sbr.rel (%p439) target = $region54
                $region51: #{_init_step.8} parent=46 // loop_body
                  %v445 = vld [vmem:[%s443] sm:$0xff]
                  %446 = vst [vmem:[%s444] sm:$0xff] %v445
                  %v447 = vld [vmem:[%s443 + $0x10] sm:$0xff]
                  %448 = vst [vmem:[%s444 + $0x8] sm:$0xff] %v447
                  %v449 = vld [vmem:[%s443 + $0x20] sm:$0xff]
                  %450 = vst [vmem:[%s444 + $0x10] sm:$0xff] %v449
                  %v451 = vld [vmem:[%s443 + $0x30] sm:$0xff]
                  %452 = vst [vmem:[%s444 + $0x18] sm:$0xff] %v451
                  %v453 = vld [vmem:[%s443 + $0x40] sm:$0xff]
                  %454 = vst [vmem:[%s444 + $0x20] sm:$0xff] %v453
                  %v455 = vld [vmem:[%s443 + $0x50] sm:$0xff]
                  %456 = vst [vmem:[%s444 + $0x28] sm:$0xff] %v455
                  %v457 = vld [vmem:[%s443 + $0x60] sm:$0xff]
                  %458 = vst [vmem:[%s444 + $0x30] sm:$0xff] %v457
                  %v459 = vld [vmem:[%s443 + $0x70] sm:$0xff]
                  %460 = vst [vmem:[%s444 + $0x38] sm:$0xff] %v459
                  %v461 = vld [vmem:[%s443 + $0x80] sm:$0xff]
                  %462 = vst [vmem:[%s444 + $0x40] sm:$0xff] %v461
                  %v463 = vld [vmem:[%s443 + $0x90] sm:$0xff]
                  %464 = vst [vmem:[%s444 + $0x48] sm:$0xff] %v463
                  %v465 = vld [vmem:[%s443 + $0xa0] sm:$0xff]
                  %466 = vst [vmem:[%s444 + $0x50] sm:$0xff] %v465
                  %v467 = vld [vmem:[%s443 + $0xb0] sm:$0xff]
                  %468 = vst [vmem:[%s444 + $0x58] sm:$0xff] %v467
                  %v469 = vld [vmem:[%s443 + $0xc0] sm:$0xff]
                  %470 = vst [vmem:[%s444 + $0x60] sm:$0xff] %v469
                  %v471 = vld [vmem:[%s443 + $0xd0] sm:$0xff]
                  %472 = vst [vmem:[%s444 + $0x68] sm:$0xff] %v471
                  %v473 = vld [vmem:[%s443 + $0xe0] sm:$0xff]
                  %474 = vst [vmem:[%s444 + $0x70] sm:$0xff] %v473
                  %v475 = vld [vmem:[%s443 + $0xf0] sm:$0xff]
                  %476 = vst [vmem:[%s444 + $0x78] sm:$0xff] %v475
                  %v477 = vld [vmem:[%s443 + $0x100] sm:$0xff]
                  %478 = vst [vmem:[%s444 + $0x80] sm:$0xff] %v477
                  %v479 = vld [vmem:[%s443 + $0x110] sm:$0xff]
                  %480 = vst [vmem:[%s444 + $0x88] sm:$0xff] %v479
                  %v481 = vld [vmem:[%s443 + $0x120] sm:$0xff]
                  %482 = vst [vmem:[%s444 + $0x90] sm:$0xff] %v481
                  %v483 = vld [vmem:[%s443 + $0x130] sm:$0xff]
                  %484 = vst [vmem:[%s444 + $0x98] sm:$0xff] %v483
                  %v485 = vld [vmem:[%s443 + $0x140] sm:$0xff]
                  %486 = vst [vmem:[%s444 + $0xa0] sm:$0xff] %v485
                  %v487 = vld [vmem:[%s443 + $0x150] sm:$0xff]
                  %488 = vst [vmem:[%s444 + $0xa8] sm:$0xff] %v487
                  %v489 = vld [vmem:[%s443 + $0x160] sm:$0xff]
                  %490 = vst [vmem:[%s444 + $0xb0] sm:$0xff] %v489
                  %v491 = vld [vmem:[%s443 + $0x170] sm:$0xff]
                  %492 = vst [vmem:[%s444 + $0xb8] sm:$0xff] %v491
                  %v493 = vld [vmem:[%s443 + $0x180] sm:$0xff]
                  %494 = vst [vmem:[%s444 + $0xc0] sm:$0xff] %v493
                  %v495 = vld [vmem:[%s443 + $0x190] sm:$0xff]
                  %496 = vst [vmem:[%s444 + $0xc8] sm:$0xff] %v495
                  %v497 = vld [vmem:[%s443 + $0x1a0] sm:$0xff]
                  %498 = vst [vmem:[%s444 + $0xd0] sm:$0xff] %v497
                  %v499 = vld [vmem:[%s443 + $0x1b0] sm:$0xff]
                  %500 = vst [vmem:[%s444 + $0xd8] sm:$0xff] %v499
                  %v501 = vld [vmem:[%s443 + $0x1c0] sm:$0xff]
                  %502 = vst [vmem:[%s444 + $0xe0] sm:$0xff] %v501
                  %v503 = vld [vmem:[%s443 + $0x1d0] sm:$0xff]
                  %504 = vst [vmem:[%s444 + $0xe8] sm:$0xff] %v503
                  %v505 = vld [vmem:[%s443 + $0x1e0] sm:$0xff]
                  %506 = vst [vmem:[%s444 + $0xf0] sm:$0xff] %v505
                  %v507 = vld [vmem:[%s443 + $0x1f0] sm:$0xff]
                  %508 = vst [vmem:[%s444 + $0xf8] sm:$0xff] %v507
                  %v509 = vld [vmem:[%s443 + $0x200] sm:$0xff]
                  %510 = vst [vmem:[%s444 + $0x100] sm:$0xff] %v509
                  %v511 = vld [vmem:[%s443 + $0x210] sm:$0xff]
                  %512 = vst [vmem:[%s444 + $0x108] sm:$0xff] %v511
                  %v513 = vld [vmem:[%s443 + $0x220] sm:$0xff]
                  %514 = vst [vmem:[%s444 + $0x110] sm:$0xff] %v513
                  %v515 = vld [vmem:[%s443 + $0x230] sm:$0xff]
                  %516 = vst [vmem:[%s444 + $0x118] sm:$0xff] %v515
                  %v517 = vld [vmem:[%s443 + $0x240] sm:$0xff]
                  %518 = vst [vmem:[%s444 + $0x120] sm:$0xff] %v517
                  %v519 = vld [vmem:[%s443 + $0x250] sm:$0xff]
                  %520 = vst [vmem:[%s444 + $0x128] sm:$0xff] %v519
                  %v521 = vld [vmem:[%s443 + $0x260] sm:$0xff]
                  %522 = vst [vmem:[%s444 + $0x130] sm:$0xff] %v521
                  %v523 = vld [vmem:[%s443 + $0x270] sm:$0xff]
                  %524 = vst [vmem:[%s444 + $0x138] sm:$0xff] %v523
                  %v525 = vld [vmem:[%s443 + $0x280] sm:$0xff]
                  %526 = vst [vmem:[%s444 + $0x140] sm:$0xff] %v525
                  %v527 = vld [vmem:[%s443 + $0x290] sm:$0xff]
                  %528 = vst [vmem:[%s444 + $0x148] sm:$0xff] %v527
                  %v529 = vld [vmem:[%s443 + $0x2a0] sm:$0xff]
                  %530 = vst [vmem:[%s444 + $0x150] sm:$0xff] %v529
                  %v531 = vld [vmem:[%s443 + $0x2b0] sm:$0xff]
                  %532 = vst [vmem:[%s444 + $0x158] sm:$0xff] %v531
                  %v533 = vld [vmem:[%s443 + $0x2c0] sm:$0xff]
                  %534 = vst [vmem:[%s444 + $0x160] sm:$0xff] %v533
                  %v535 = vld [vmem:[%s443 + $0x2d0] sm:$0xff]
                  %536 = vst [vmem:[%s444 + $0x168] sm:$0xff] %v535
                  %v537 = vld [vmem:[%s443 + $0x2e0] sm:$0xff]
                  %538 = vst [vmem:[%s444 + $0x170] sm:$0xff] %v537
                  %v539 = vld [vmem:[%s443 + $0x2f0] sm:$0xff]
                  %540 = vst [vmem:[%s444 + $0x178] sm:$0xff] %v539
                  %v541 = vld [vmem:[%s443 + $0x300] sm:$0xff]
                  %542 = vst [vmem:[%s444 + $0x180] sm:$0xff] %v541
                  %v543 = vld [vmem:[%s443 + $0x310] sm:$0xff]
                  %544 = vst [vmem:[%s444 + $0x188] sm:$0xff] %v543
                  %v545 = vld [vmem:[%s443 + $0x320] sm:$0xff]
                  %546 = vst [vmem:[%s444 + $0x190] sm:$0xff] %v545
                  %v547 = vld [vmem:[%s443 + $0x330] sm:$0xff]
                  %548 = vst [vmem:[%s444 + $0x198] sm:$0xff] %v547
                  %v549 = vld [vmem:[%s443 + $0x340] sm:$0xff]
                  %550 = vst [vmem:[%s444 + $0x1a0] sm:$0xff] %v549
                  %v551 = vld [vmem:[%s443 + $0x350] sm:$0xff]
                  %552 = vst [vmem:[%s444 + $0x1a8] sm:$0xff] %v551
                  %v553 = vld [vmem:[%s443 + $0x360] sm:$0xff]
                  %554 = vst [vmem:[%s444 + $0x1b0] sm:$0xff] %v553
                  %v555 = vld [vmem:[%s443 + $0x370] sm:$0xff]
                  %556 = vst [vmem:[%s444 + $0x1b8] sm:$0xff] %v555
                  %v557 = vld [vmem:[%s443 + $0x380] sm:$0xff]
                  %558 = vst [vmem:[%s444 + $0x1c0] sm:$0xff] %v557
                  %v559 = vld [vmem:[%s443 + $0x390] sm:$0xff]
                  %560 = vst [vmem:[%s444 + $0x1c8] sm:$0xff] %v559
                  %v561 = vld [vmem:[%s443 + $0x3a0] sm:$0xff]
                  %562 = vst [vmem:[%s444 + $0x1d0] sm:$0xff] %v561
                  %v563 = vld [vmem:[%s443 + $0x3b0] sm:$0xff]
                  %564 = vst [vmem:[%s444 + $0x1d8] sm:$0xff] %v563
                  %v565 = vld [vmem:[%s443 + $0x3c0] sm:$0xff]
                  %566 = vst [vmem:[%s444 + $0x1e0] sm:$0xff] %v565
                  %v567 = vld [vmem:[%s443 + $0x3d0] sm:$0xff]
                  %568 = vst [vmem:[%s444 + $0x1e8] sm:$0xff] %v567
                  %v569 = vld [vmem:[%s443 + $0x3e0] sm:$0xff]
                  %570 = vst [vmem:[%s444 + $0x1f0] sm:$0xff] %v569
                  %v571 = vld [vmem:[%s443 + $0x3f0] sm:$0xff]
                  %572 = vst [vmem:[%s444 + $0x1f8] sm:$0xff] %v571
                  %v573 = vld [vmem:[%s443 + $0x400] sm:$0xff]
                  %574 = vst [vmem:[%s444 + $0x200] sm:$0xff] %v573
                  %v575 = vld [vmem:[%s443 + $0x410] sm:$0xff]
                  %576 = vst [vmem:[%s444 + $0x208] sm:$0xff] %v575
                  %v577 = vld [vmem:[%s443 + $0x420] sm:$0xff]
                  %578 = vst [vmem:[%s444 + $0x210] sm:$0xff] %v577
                  %v579 = vld [vmem:[%s443 + $0x430] sm:$0xff]
                  %580 = vst [vmem:[%s444 + $0x218] sm:$0xff] %v579
                  %v581 = vld [vmem:[%s443 + $0x440] sm:$0xff]
                  %582 = vst [vmem:[%s444 + $0x220] sm:$0xff] %v581
                  %v583 = vld [vmem:[%s443 + $0x450] sm:$0xff]
                  %584 = vst [vmem:[%s444 + $0x228] sm:$0xff] %v583
                  %v585 = vld [vmem:[%s443 + $0x460] sm:$0xff]
                  %586 = vst [vmem:[%s444 + $0x230] sm:$0xff] %v585
                  %v587 = vld [vmem:[%s443 + $0x470] sm:$0xff]
                  %588 = vst [vmem:[%s444 + $0x238] sm:$0xff] %v587
                  %v589 = vld [vmem:[%s443 + $0x480] sm:$0xff]
                  %590 = vst [vmem:[%s444 + $0x240] sm:$0xff] %v589
                  %v591 = vld [vmem:[%s443 + $0x490] sm:$0xff]
                  %592 = vst [vmem:[%s444 + $0x248] sm:$0xff] %v591
                  %v593 = vld [vmem:[%s443 + $0x4a0] sm:$0xff]
                  %594 = vst [vmem:[%s444 + $0x250] sm:$0xff] %v593
                  %v595 = vld [vmem:[%s443 + $0x4b0] sm:$0xff]
                  %596 = vst [vmem:[%s444 + $0x258] sm:$0xff] %v595
                  %v597 = vld [vmem:[%s443 + $0x4c0] sm:$0xff]
                  %598 = vst [vmem:[%s444 + $0x260] sm:$0xff] %v597
                  %v599 = vld [vmem:[%s443 + $0x4d0] sm:$0xff]
                  %600 = vst [vmem:[%s444 + $0x268] sm:$0xff] %v599
                  %v601 = vld [vmem:[%s443 + $0x4e0] sm:$0xff]
                  %602 = vst [vmem:[%s444 + $0x270] sm:$0xff] %v601
                  %v603 = vld [vmem:[%s443 + $0x4f0] sm:$0xff]
                  %604 = vst [vmem:[%s444 + $0x278] sm:$0xff] %v603
                  %v605 = vld [vmem:[%s443 + $0x500] sm:$0xff]
                  %606 = vst [vmem:[%s444 + $0x280] sm:$0xff] %v605
                  %v607 = vld [vmem:[%s443 + $0x510] sm:$0xff]
                  %608 = vst [vmem:[%s444 + $0x288] sm:$0xff] %v607
                  %v609 = vld [vmem:[%s443 + $0x520] sm:$0xff]
                  %610 = vst [vmem:[%s444 + $0x290] sm:$0xff] %v609
                  %v611 = vld [vmem:[%s443 + $0x530] sm:$0xff]
                  %612 = vst [vmem:[%s444 + $0x298] sm:$0xff] %v611
                  %v613 = vld [vmem:[%s443 + $0x540] sm:$0xff]
                  %614 = vst [vmem:[%s444 + $0x2a0] sm:$0xff] %v613
                  %v615 = vld [vmem:[%s443 + $0x550] sm:$0xff]
                  %616 = vst [vmem:[%s444 + $0x2a8] sm:$0xff] %v615
                  %v617 = vld [vmem:[%s443 + $0x560] sm:$0xff]
                  %618 = vst [vmem:[%s444 + $0x2b0] sm:$0xff] %v617
                  %v619 = vld [vmem:[%s443 + $0x570] sm:$0xff]
                  %620 = vst [vmem:[%s444 + $0x2b8] sm:$0xff] %v619
                  %v621 = vld [vmem:[%s443 + $0x580] sm:$0xff]
                  %622 = vst [vmem:[%s444 + $0x2c0] sm:$0xff] %v621
                  %v623 = vld [vmem:[%s443 + $0x590] sm:$0xff]
                  %624 = vst [vmem:[%s444 + $0x2c8] sm:$0xff] %v623
                  %v625 = vld [vmem:[%s443 + $0x5a0] sm:$0xff]
                  %626 = vst [vmem:[%s444 + $0x2d0] sm:$0xff] %v625
                  %v627 = vld [vmem:[%s443 + $0x5b0] sm:$0xff]
                  %628 = vst [vmem:[%s444 + $0x2d8] sm:$0xff] %v627
                  %v629 = vld [vmem:[%s443 + $0x5c0] sm:$0xff]
                  %630 = vst [vmem:[%s444 + $0x2e0] sm:$0xff] %v629
                  %v631 = vld [vmem:[%s443 + $0x5d0] sm:$0xff]
                  %632 = vst [vmem:[%s444 + $0x2e8] sm:$0xff] %v631
                  %v633 = vld [vmem:[%s443 + $0x5e0] sm:$0xff]
                  %634 = vst [vmem:[%s444 + $0x2f0] sm:$0xff] %v633
                  %v635 = vld [vmem:[%s443 + $0x5f0] sm:$0xff]
                  %636 = vst [vmem:[%s444 + $0x2f8] sm:$0xff] %v635
                  %v637 = vld [vmem:[%s443 + $0x600] sm:$0xff]
                  %638 = vst [vmem:[%s444 + $0x300] sm:$0xff] %v637
                  %v639 = vld [vmem:[%s443 + $0x610] sm:$0xff]
                  %640 = vst [vmem:[%s444 + $0x308] sm:$0xff] %v639
                  %v641 = vld [vmem:[%s443 + $0x620] sm:$0xff]
                  %642 = vst [vmem:[%s444 + $0x310] sm:$0xff] %v641
                  %v643 = vld [vmem:[%s443 + $0x630] sm:$0xff]
                  %644 = vst [vmem:[%s444 + $0x318] sm:$0xff] %v643
                  %v645 = vld [vmem:[%s443 + $0x640] sm:$0xff]
                  %646 = vst [vmem:[%s444 + $0x320] sm:$0xff] %v645
                  %v647 = vld [vmem:[%s443 + $0x650] sm:$0xff]
                  %648 = vst [vmem:[%s444 + $0x328] sm:$0xff] %v647
                  %v649 = vld [vmem:[%s443 + $0x660] sm:$0xff]
                  %650 = vst [vmem:[%s444 + $0x330] sm:$0xff] %v649
                  %v651 = vld [vmem:[%s443 + $0x670] sm:$0xff]
                  %652 = vst [vmem:[%s444 + $0x338] sm:$0xff] %v651
                  %v653 = vld [vmem:[%s443 + $0x680] sm:$0xff]
                  %654 = vst [vmem:[%s444 + $0x340] sm:$0xff] %v653
                  %v655 = vld [vmem:[%s443 + $0x690] sm:$0xff]
                  %656 = vst [vmem:[%s444 + $0x348] sm:$0xff] %v655
                  %v657 = vld [vmem:[%s443 + $0x6a0] sm:$0xff]
                  %658 = vst [vmem:[%s444 + $0x350] sm:$0xff] %v657
                  %v659 = vld [vmem:[%s443 + $0x6b0] sm:$0xff]
                  %660 = vst [vmem:[%s444 + $0x358] sm:$0xff] %v659
                  %v661 = vld [vmem:[%s443 + $0x6c0] sm:$0xff]
                  %662 = vst [vmem:[%s444 + $0x360] sm:$0xff] %v661
                  %v663 = vld [vmem:[%s443 + $0x6d0] sm:$0xff]
                  %664 = vst [vmem:[%s444 + $0x368] sm:$0xff] %v663
                  %v665 = vld [vmem:[%s443 + $0x6e0] sm:$0xff]
                  %666 = vst [vmem:[%s444 + $0x370] sm:$0xff] %v665
                  %v667 = vld [vmem:[%s443 + $0x6f0] sm:$0xff]
                  %668 = vst [vmem:[%s444 + $0x378] sm:$0xff] %v667
                  %v669 = vld [vmem:[%s443 + $0x700] sm:$0xff]
                  %670 = vst [vmem:[%s444 + $0x380] sm:$0xff] %v669
                  %v671 = vld [vmem:[%s443 + $0x710] sm:$0xff]
                  %672 = vst [vmem:[%s444 + $0x388] sm:$0xff] %v671
                  %v673 = vld [vmem:[%s443 + $0x720] sm:$0xff]
                  %674 = vst [vmem:[%s444 + $0x390] sm:$0xff] %v673
                  %v675 = vld [vmem:[%s443 + $0x730] sm:$0xff]
                  %676 = vst [vmem:[%s444 + $0x398] sm:$0xff] %v675
                  %v677 = vld [vmem:[%s443 + $0x740] sm:$0xff]
                  %678 = vst [vmem:[%s444 + $0x3a0] sm:$0xff] %v677
                  %v679 = vld [vmem:[%s443 + $0x750] sm:$0xff]
                  %680 = vst [vmem:[%s444 + $0x3a8] sm:$0xff] %v679
                  %v681 = vld [vmem:[%s443 + $0x760] sm:$0xff]
                  %682 = vst [vmem:[%s444 + $0x3b0] sm:$0xff] %v681
                  %v683 = vld [vmem:[%s443 + $0x770] sm:$0xff]
                  %684 = vst [vmem:[%s444 + $0x3b8] sm:$0xff] %v683
                  %v685 = vld [vmem:[%s443 + $0x780] sm:$0xff]
                  %686 = vst [vmem:[%s444 + $0x3c0] sm:$0xff] %v685
                  %v687 = vld [vmem:[%s443 + $0x790] sm:$0xff]
                  %688 = vst [vmem:[%s444 + $0x3c8] sm:$0xff] %v687
                  %v689 = vld [vmem:[%s443 + $0x7a0] sm:$0xff]
                  %690 = vst [vmem:[%s444 + $0x3d0] sm:$0xff] %v689
                  %v691 = vld [vmem:[%s443 + $0x7b0] sm:$0xff]
                  %692 = vst [vmem:[%s444 + $0x3d8] sm:$0xff] %v691
                  %v693 = vld [vmem:[%s443 + $0x7c0] sm:$0xff]
                  %694 = vst [vmem:[%s444 + $0x3e0] sm:$0xff] %v693
                  %v695 = vld [vmem:[%s443 + $0x7d0] sm:$0xff]
                  %696 = vst [vmem:[%s444 + $0x3e8] sm:$0xff] %v695
                  %v697 = vld [vmem:[%s443 + $0x7e0] sm:$0xff]
                  %698 = vst [vmem:[%s444 + $0x3f0] sm:$0xff] %v697
                  %v699 = vld [vmem:[%s443 + $0x7f0] sm:$0xff]
                  %700 = vst [vmem:[%s444 + $0x3f8] sm:$0xff] %v699
                $region52: #{_init_step.8} parent=46 // loop_footer
                  %s442 = sadd.s32 1, %s438
                $region53: #{_init_step.8} parent=46 // loop_footer_branch
                  %437 = sbr.rel target = $region49
                $region54: #{_init_step.8} parent=46 // loop_exit
                  _
              $region47: #{_init_step.8} parent=31 // pred_fallthru
                _
              // Predicated region
              $region55: #{_init_step.8} parent=31 // pred_check
                _
              $region56: #{_init_step.8} parent=31 // pred_check_branch
                %702 = sbr.rel target = $region58
              $region57: #{_init_step.8} parent=31 // pred_region
                _
              $region58: #{_init_step.8} parent=31 // pred_fallthru
                _
            $region32: #{_init_step.8} parent=27 // pred_fallthru
              _
            // Predicated region
            $region33: #{_init_step.8} parent=27 // pred_check
              _
            $region34: #{_init_step.8} parent=27 // pred_check_branch
              %169 = sbr.rel target = $region36
            $region35: #{_init_step.8} parent=27 // pred_region
              loop: start=0, step=1, limit=1
              $region37: #{_init_step.8} parent=35 // loop_pre_header
                _
              $region38: #{_init_step.8} parent=35 // loop_header
                %s172 = sphi 0, %s176
                %p173 = scmp.ge.s32.totalorder %s172, 1
                %s177 = sphi %s163, %s163
                %s178 = sphi %s160, %s160
              $region39: #{_init_step.8} parent=35 // loop_header_branch
                %175 = sbr.rel (%p173) target = $region43
              $region40: #{_init_step.8} parent=35 // loop_body
                %v179 = vld [vmem:[%s177] sm:$0xff]
                %180 = vst [vmem:[%s178] sm:$0xff] %v179
                %v181 = vld [vmem:[%s177 + $0x10] sm:$0xff]
                %182 = vst [vmem:[%s178 + $0x8] sm:$0xff] %v181
                %v183 = vld [vmem:[%s177 + $0x20] sm:$0xff]
                %184 = vst [vmem:[%s178 + $0x10] sm:$0xff] %v183
                %v185 = vld [vmem:[%s177 + $0x30] sm:$0xff]
                %186 = vst [vmem:[%s178 + $0x18] sm:$0xff] %v185
                %v187 = vld [vmem:[%s177 + $0x40] sm:$0xff]
                %188 = vst [vmem:[%s178 + $0x20] sm:$0xff] %v187
                %v189 = vld [vmem:[%s177 + $0x50] sm:$0xff]
                %190 = vst [vmem:[%s178 + $0x28] sm:$0xff] %v189
                %v191 = vld [vmem:[%s177 + $0x60] sm:$0xff]
                %192 = vst [vmem:[%s178 + $0x30] sm:$0xff] %v191
                %v193 = vld [vmem:[%s177 + $0x70] sm:$0xff]
                %194 = vst [vmem:[%s178 + $0x38] sm:$0xff] %v193
                %v195 = vld [vmem:[%s177 + $0x80] sm:$0xff]
                %196 = vst [vmem:[%s178 + $0x40] sm:$0xff] %v195
                %v197 = vld [vmem:[%s177 + $0x90] sm:$0xff]
                %198 = vst [vmem:[%s178 + $0x48] sm:$0xff] %v197
                %v199 = vld [vmem:[%s177 + $0xa0] sm:$0xff]
                %200 = vst [vmem:[%s178 + $0x50] sm:$0xff] %v199
                %v201 = vld [vmem:[%s177 + $0xb0] sm:$0xff]
                %202 = vst [vmem:[%s178 + $0x58] sm:$0xff] %v201
                %v203 = vld [vmem:[%s177 + $0xc0] sm:$0xff]
                %204 = vst [vmem:[%s178 + $0x60] sm:$0xff] %v203
                %v205 = vld [vmem:[%s177 + $0xd0] sm:$0xff]
                %206 = vst [vmem:[%s178 + $0x68] sm:$0xff] %v205
                %v207 = vld [vmem:[%s177 + $0xe0] sm:$0xff]
                %208 = vst [vmem:[%s178 + $0x70] sm:$0xff] %v207
                %v209 = vld [vmem:[%s177 + $0xf0] sm:$0xff]
                %210 = vst [vmem:[%s178 + $0x78] sm:$0xff] %v209
                %v211 = vld [vmem:[%s177 + $0x100] sm:$0xff]
                %212 = vst [vmem:[%s178 + $0x80] sm:$0xff] %v211
                %v213 = vld [vmem:[%s177 + $0x110] sm:$0xff]
                %214 = vst [vmem:[%s178 + $0x88] sm:$0xff] %v213
                %v215 = vld [vmem:[%s177 + $0x120] sm:$0xff]
                %216 = vst [vmem:[%s178 + $0x90] sm:$0xff] %v215
                %v217 = vld [vmem:[%s177 + $0x130] sm:$0xff]
                %218 = vst [vmem:[%s178 + $0x98] sm:$0xff] %v217
                %v219 = vld [vmem:[%s177 + $0x140] sm:$0xff]
                %220 = vst [vmem:[%s178 + $0xa0] sm:$0xff] %v219
                %v221 = vld [vmem:[%s177 + $0x150] sm:$0xff]
                %222 = vst [vmem:[%s178 + $0xa8] sm:$0xff] %v221
                %v223 = vld [vmem:[%s177 + $0x160] sm:$0xff]
                %224 = vst [vmem:[%s178 + $0xb0] sm:$0xff] %v223
                %v225 = vld [vmem:[%s177 + $0x170] sm:$0xff]
                %226 = vst [vmem:[%s178 + $0xb8] sm:$0xff] %v225
                %v227 = vld [vmem:[%s177 + $0x180] sm:$0xff]
                %228 = vst [vmem:[%s178 + $0xc0] sm:$0xff] %v227
                %v229 = vld [vmem:[%s177 + $0x190] sm:$0xff]
                %230 = vst [vmem:[%s178 + $0xc8] sm:$0xff] %v229
                %v231 = vld [vmem:[%s177 + $0x1a0] sm:$0xff]
                %232 = vst [vmem:[%s178 + $0xd0] sm:$0xff] %v231
                %v233 = vld [vmem:[%s177 + $0x1b0] sm:$0xff]
                %234 = vst [vmem:[%s178 + $0xd8] sm:$0xff] %v233
                %v235 = vld [vmem:[%s177 + $0x1c0] sm:$0xff]
                %236 = vst [vmem:[%s178 + $0xe0] sm:$0xff] %v235
                %v237 = vld [vmem:[%s177 + $0x1d0] sm:$0xff]
                %238 = vst [vmem:[%s178 + $0xe8] sm:$0xff] %v237
                %v239 = vld [vmem:[%s177 + $0x1e0] sm:$0xff]
                %240 = vst [vmem:[%s178 + $0xf0] sm:$0xff] %v239
                %v241 = vld [vmem:[%s177 + $0x1f0] sm:$0xff]
                %242 = vst [vmem:[%s178 + $0xf8] sm:$0xff] %v241
                %v243 = vld [vmem:[%s177 + $0x200] sm:$0xff]
                %244 = vst [vmem:[%s178 + $0x100] sm:$0xff] %v243
                %v245 = vld [vmem:[%s177 + $0x210] sm:$0xff]
                %246 = vst [vmem:[%s178 + $0x108] sm:$0xff] %v245
                %v247 = vld [vmem:[%s177 + $0x220] sm:$0xff]
                %248 = vst [vmem:[%s178 + $0x110] sm:$0xff] %v247
                %v249 = vld [vmem:[%s177 + $0x230] sm:$0xff]
                %250 = vst [vmem:[%s178 + $0x118] sm:$0xff] %v249
                %v251 = vld [vmem:[%s177 + $0x240] sm:$0xff]
                %252 = vst [vmem:[%s178 + $0x120] sm:$0xff] %v251
                %v253 = vld [vmem:[%s177 + $0x250] sm:$0xff]
                %254 = vst [vmem:[%s178 + $0x128] sm:$0xff] %v253
                %v255 = vld [vmem:[%s177 + $0x260] sm:$0xff]
                %256 = vst [vmem:[%s178 + $0x130] sm:$0xff] %v255
                %v257 = vld [vmem:[%s177 + $0x270] sm:$0xff]
                %258 = vst [vmem:[%s178 + $0x138] sm:$0xff] %v257
                %v259 = vld [vmem:[%s177 + $0x280] sm:$0xff]
                %260 = vst [vmem:[%s178 + $0x140] sm:$0xff] %v259
                %v261 = vld [vmem:[%s177 + $0x290] sm:$0xff]
                %262 = vst [vmem:[%s178 + $0x148] sm:$0xff] %v261
                %v263 = vld [vmem:[%s177 + $0x2a0] sm:$0xff]
                %264 = vst [vmem:[%s178 + $0x150] sm:$0xff] %v263
                %v265 = vld [vmem:[%s177 + $0x2b0] sm:$0xff]
                %266 = vst [vmem:[%s178 + $0x158] sm:$0xff] %v265
                %v267 = vld [vmem:[%s177 + $0x2c0] sm:$0xff]
                %268 = vst [vmem:[%s178 + $0x160] sm:$0xff] %v267
                %v269 = vld [vmem:[%s177 + $0x2d0] sm:$0xff]
                %270 = vst [vmem:[%s178 + $0x168] sm:$0xff] %v269
                %v271 = vld [vmem:[%s177 + $0x2e0] sm:$0xff]
                %272 = vst [vmem:[%s178 + $0x170] sm:$0xff] %v271
                %v273 = vld [vmem:[%s177 + $0x2f0] sm:$0xff]
                %274 = vst [vmem:[%s178 + $0x178] sm:$0xff] %v273
                %v275 = vld [vmem:[%s177 + $0x300] sm:$0xff]
                %276 = vst [vmem:[%s178 + $0x180] sm:$0xff] %v275
                %v277 = vld [vmem:[%s177 + $0x310] sm:$0xff]
                %278 = vst [vmem:[%s178 + $0x188] sm:$0xff] %v277
                %v279 = vld [vmem:[%s177 + $0x320] sm:$0xff]
                %280 = vst [vmem:[%s178 + $0x190] sm:$0xff] %v279
                %v281 = vld [vmem:[%s177 + $0x330] sm:$0xff]
                %282 = vst [vmem:[%s178 + $0x198] sm:$0xff] %v281
                %v283 = vld [vmem:[%s177 + $0x340] sm:$0xff]
                %284 = vst [vmem:[%s178 + $0x1a0] sm:$0xff] %v283
                %v285 = vld [vmem:[%s177 + $0x350] sm:$0xff]
                %286 = vst [vmem:[%s178 + $0x1a8] sm:$0xff] %v285
                %v287 = vld [vmem:[%s177 + $0x360] sm:$0xff]
                %288 = vst [vmem:[%s178 + $0x1b0] sm:$0xff] %v287
                %v289 = vld [vmem:[%s177 + $0x370] sm:$0xff]
                %290 = vst [vmem:[%s178 + $0x1b8] sm:$0xff] %v289
                %v291 = vld [vmem:[%s177 + $0x380] sm:$0xff]
                %292 = vst [vmem:[%s178 + $0x1c0] sm:$0xff] %v291
                %v293 = vld [vmem:[%s177 + $0x390] sm:$0xff]
                %294 = vst [vmem:[%s178 + $0x1c8] sm:$0xff] %v293
                %v295 = vld [vmem:[%s177 + $0x3a0] sm:$0xff]
                %296 = vst [vmem:[%s178 + $0x1d0] sm:$0xff] %v295
                %v297 = vld [vmem:[%s177 + $0x3b0] sm:$0xff]
                %298 = vst [vmem:[%s178 + $0x1d8] sm:$0xff] %v297
                %v299 = vld [vmem:[%s177 + $0x3c0] sm:$0xff]
                %300 = vst [vmem:[%s178 + $0x1e0] sm:$0xff] %v299
                %v301 = vld [vmem:[%s177 + $0x3d0] sm:$0xff]
                %302 = vst [vmem:[%s178 + $0x1e8] sm:$0xff] %v301
                %v303 = vld [vmem:[%s177 + $0x3e0] sm:$0xff]
                %304 = vst [vmem:[%s178 + $0x1f0] sm:$0xff] %v303
                %v305 = vld [vmem:[%s177 + $0x3f0] sm:$0xff]
                %306 = vst [vmem:[%s178 + $0x1f8] sm:$0xff] %v305
                %v307 = vld [vmem:[%s177 + $0x400] sm:$0xff]
                %308 = vst [vmem:[%s178 + $0x200] sm:$0xff] %v307
                %v309 = vld [vmem:[%s177 + $0x410] sm:$0xff]
                %310 = vst [vmem:[%s178 + $0x208] sm:$0xff] %v309
                %v311 = vld [vmem:[%s177 + $0x420] sm:$0xff]
                %312 = vst [vmem:[%s178 + $0x210] sm:$0xff] %v311
                %v313 = vld [vmem:[%s177 + $0x430] sm:$0xff]
                %314 = vst [vmem:[%s178 + $0x218] sm:$0xff] %v313
                %v315 = vld [vmem:[%s177 + $0x440] sm:$0xff]
                %316 = vst [vmem:[%s178 + $0x220] sm:$0xff] %v315
                %v317 = vld [vmem:[%s177 + $0x450] sm:$0xff]
                %318 = vst [vmem:[%s178 + $0x228] sm:$0xff] %v317
                %v319 = vld [vmem:[%s177 + $0x460] sm:$0xff]
                %320 = vst [vmem:[%s178 + $0x230] sm:$0xff] %v319
                %v321 = vld [vmem:[%s177 + $0x470] sm:$0xff]
                %322 = vst [vmem:[%s178 + $0x238] sm:$0xff] %v321
                %v323 = vld [vmem:[%s177 + $0x480] sm:$0xff]
                %324 = vst [vmem:[%s178 + $0x240] sm:$0xff] %v323
                %v325 = vld [vmem:[%s177 + $0x490] sm:$0xff]
                %326 = vst [vmem:[%s178 + $0x248] sm:$0xff] %v325
                %v327 = vld [vmem:[%s177 + $0x4a0] sm:$0xff]
                %328 = vst [vmem:[%s178 + $0x250] sm:$0xff] %v327
                %v329 = vld [vmem:[%s177 + $0x4b0] sm:$0xff]
                %330 = vst [vmem:[%s178 + $0x258] sm:$0xff] %v329
                %v331 = vld [vmem:[%s177 + $0x4c0] sm:$0xff]
                %332 = vst [vmem:[%s178 + $0x260] sm:$0xff] %v331
                %v333 = vld [vmem:[%s177 + $0x4d0] sm:$0xff]
                %334 = vst [vmem:[%s178 + $0x268] sm:$0xff] %v333
                %v335 = vld [vmem:[%s177 + $0x4e0] sm:$0xff]
                %336 = vst [vmem:[%s178 + $0x270] sm:$0xff] %v335
                %v337 = vld [vmem:[%s177 + $0x4f0] sm:$0xff]
                %338 = vst [vmem:[%s178 + $0x278] sm:$0xff] %v337
                %v339 = vld [vmem:[%s177 + $0x500] sm:$0xff]
                %340 = vst [vmem:[%s178 + $0x280] sm:$0xff] %v339
                %v341 = vld [vmem:[%s177 + $0x510] sm:$0xff]
                %342 = vst [vmem:[%s178 + $0x288] sm:$0xff] %v341
                %v343 = vld [vmem:[%s177 + $0x520] sm:$0xff]
                %344 = vst [vmem:[%s178 + $0x290] sm:$0xff] %v343
                %v345 = vld [vmem:[%s177 + $0x530] sm:$0xff]
                %346 = vst [vmem:[%s178 + $0x298] sm:$0xff] %v345
                %v347 = vld [vmem:[%s177 + $0x540] sm:$0xff]
                %348 = vst [vmem:[%s178 + $0x2a0] sm:$0xff] %v347
                %v349 = vld [vmem:[%s177 + $0x550] sm:$0xff]
                %350 = vst [vmem:[%s178 + $0x2a8] sm:$0xff] %v349
                %v351 = vld [vmem:[%s177 + $0x560] sm:$0xff]
                %352 = vst [vmem:[%s178 + $0x2b0] sm:$0xff] %v351
                %v353 = vld [vmem:[%s177 + $0x570] sm:$0xff]
                %354 = vst [vmem:[%s178 + $0x2b8] sm:$0xff] %v353
                %v355 = vld [vmem:[%s177 + $0x580] sm:$0xff]
                %356 = vst [vmem:[%s178 + $0x2c0] sm:$0xff] %v355
                %v357 = vld [vmem:[%s177 + $0x590] sm:$0xff]
                %358 = vst [vmem:[%s178 + $0x2c8] sm:$0xff] %v357
                %v359 = vld [vmem:[%s177 + $0x5a0] sm:$0xff]
                %360 = vst [vmem:[%s178 + $0x2d0] sm:$0xff] %v359
                %v361 = vld [vmem:[%s177 + $0x5b0] sm:$0xff]
                %362 = vst [vmem:[%s178 + $0x2d8] sm:$0xff] %v361
                %v363 = vld [vmem:[%s177 + $0x5c0] sm:$0xff]
                %364 = vst [vmem:[%s178 + $0x2e0] sm:$0xff] %v363
                %v365 = vld [vmem:[%s177 + $0x5d0] sm:$0xff]
                %366 = vst [vmem:[%s178 + $0x2e8] sm:$0xff] %v365
                %v367 = vld [vmem:[%s177 + $0x5e0] sm:$0xff]
                %368 = vst [vmem:[%s178 + $0x2f0] sm:$0xff] %v367
                %v369 = vld [vmem:[%s177 + $0x5f0] sm:$0xff]
                %370 = vst [vmem:[%s178 + $0x2f8] sm:$0xff] %v369
                %v371 = vld [vmem:[%s177 + $0x600] sm:$0xff]
                %372 = vst [vmem:[%s178 + $0x300] sm:$0xff] %v371
                %v373 = vld [vmem:[%s177 + $0x610] sm:$0xff]
                %374 = vst [vmem:[%s178 + $0x308] sm:$0xff] %v373
                %v375 = vld [vmem:[%s177 + $0x620] sm:$0xff]
                %376 = vst [vmem:[%s178 + $0x310] sm:$0xff] %v375
                %v377 = vld [vmem:[%s177 + $0x630] sm:$0xff]
                %378 = vst [vmem:[%s178 + $0x318] sm:$0xff] %v377
                %v379 = vld [vmem:[%s177 + $0x640] sm:$0xff]
                %380 = vst [vmem:[%s178 + $0x320] sm:$0xff] %v379
                %v381 = vld [vmem:[%s177 + $0x650] sm:$0xff]
                %382 = vst [vmem:[%s178 + $0x328] sm:$0xff] %v381
                %v383 = vld [vmem:[%s177 + $0x660] sm:$0xff]
                %384 = vst [vmem:[%s178 + $0x330] sm:$0xff] %v383
                %v385 = vld [vmem:[%s177 + $0x670] sm:$0xff]
                %386 = vst [vmem:[%s178 + $0x338] sm:$0xff] %v385
                %v387 = vld [vmem:[%s177 + $0x680] sm:$0xff]
                %388 = vst [vmem:[%s178 + $0x340] sm:$0xff] %v387
                %v389 = vld [vmem:[%s177 + $0x690] sm:$0xff]
                %390 = vst [vmem:[%s178 + $0x348] sm:$0xff] %v389
                %v391 = vld [vmem:[%s177 + $0x6a0] sm:$0xff]
                %392 = vst [vmem:[%s178 + $0x350] sm:$0xff] %v391
                %v393 = vld [vmem:[%s177 + $0x6b0] sm:$0xff]
                %394 = vst [vmem:[%s178 + $0x358] sm:$0xff] %v393
                %v395 = vld [vmem:[%s177 + $0x6c0] sm:$0xff]
                %396 = vst [vmem:[%s178 + $0x360] sm:$0xff] %v395
                %v397 = vld [vmem:[%s177 + $0x6d0] sm:$0xff]
                %398 = vst [vmem:[%s178 + $0x368] sm:$0xff] %v397
                %v399 = vld [vmem:[%s177 + $0x6e0] sm:$0xff]
                %400 = vst [vmem:[%s178 + $0x370] sm:$0xff] %v399
                %v401 = vld [vmem:[%s177 + $0x6f0] sm:$0xff]
                %402 = vst [vmem:[%s178 + $0x378] sm:$0xff] %v401
                %v403 = vld [vmem:[%s177 + $0x700] sm:$0xff]
                %404 = vst [vmem:[%s178 + $0x380] sm:$0xff] %v403
                %v405 = vld [vmem:[%s177 + $0x710] sm:$0xff]
                %406 = vst [vmem:[%s178 + $0x388] sm:$0xff] %v405
                %v407 = vld [vmem:[%s177 + $0x720] sm:$0xff]
                %408 = vst [vmem:[%s178 + $0x390] sm:$0xff] %v407
                %v409 = vld [vmem:[%s177 + $0x730] sm:$0xff]
                %410 = vst [vmem:[%s178 + $0x398] sm:$0xff] %v409
                %v411 = vld [vmem:[%s177 + $0x740] sm:$0xff]
                %412 = vst [vmem:[%s178 + $0x3a0] sm:$0xff] %v411
                %v413 = vld [vmem:[%s177 + $0x750] sm:$0xff]
                %414 = vst [vmem:[%s178 + $0x3a8] sm:$0xff] %v413
                %v415 = vld [vmem:[%s177 + $0x760] sm:$0xff]
                %416 = vst [vmem:[%s178 + $0x3b0] sm:$0xff] %v415
                %v417 = vld [vmem:[%s177 + $0x770] sm:$0xff]
                %418 = vst [vmem:[%s178 + $0x3b8] sm:$0xff] %v417
                %v419 = vld [vmem:[%s177 + $0x780] sm:$0xff]
                %420 = vst [vmem:[%s178 + $0x3c0] sm:$0xff] %v419
                %v421 = vld [vmem:[%s177 + $0x790] sm:$0xff]
                %422 = vst [vmem:[%s178 + $0x3c8] sm:$0xff] %v421
                %v423 = vld [vmem:[%s177 + $0x7a0] sm:$0xff]
                %424 = vst [vmem:[%s178 + $0x3d0] sm:$0xff] %v423
                %v425 = vld [vmem:[%s177 + $0x7b0] sm:$0xff]
                %426 = vst [vmem:[%s178 + $0x3d8] sm:$0xff] %v425
                %v427 = vld [vmem:[%s177 + $0x7c0] sm:$0xff]
                %428 = vst [vmem:[%s178 + $0x3e0] sm:$0xff] %v427
                %v429 = vld [vmem:[%s177 + $0x7d0] sm:$0xff]
                %430 = vst [vmem:[%s178 + $0x3e8] sm:$0xff] %v429
                %v431 = vld [vmem:[%s177 + $0x7e0] sm:$0xff]
                %432 = vst [vmem:[%s178 + $0x3f0] sm:$0xff] %v431
                %v433 = vld [vmem:[%s177 + $0x7f0] sm:$0xff]
                %434 = vst [vmem:[%s178 + $0x3f8] sm:$0xff] %v433
              $region41: #{_init_step.8} parent=35 // loop_footer
                %s176 = sadd.s32 1, %s172
              $region42: #{_init_step.8} parent=35 // loop_footer_branch
                %171 = sbr.rel target = $region38
              $region43: #{_init_step.8} parent=35 // loop_exit
                _
            $region36: #{_init_step.8} parent=27 // pred_fallthru
              _
          $region28: #{_init_step.8} parent=23 // pred_fallthru
            _
          %703 = vnop
        $region24: #{_init_step.8} parent=19 // pred_fallthru
          _
        // Predicated region
        $region59: #{_init_step.8} parent=19 // pred_check
          %p704 = pneg %p93
        $region60: #{_init_step.8} parent=19 // pred_check_branch
          %706 = sbr.rel (%p704) target = $region62
        $region61: #{_init_step.8} parent=19 // pred_region
          %s707 = smul.u32 2, %s17
          %p708 = scmp.lt.s32.totalorder %s707, 3
          %s709 = scalar_select %p708, %s707, 3
          %s710 = scalar_lea.vmem %s2, %s709
          %s711 = smul.u32 2, %s17
        $region62: #{_init_step.8} parent=19 // pred_fallthru
          _
      $region20: #{_init_step.8} parent=5 // pred_fallthru
        _
      %p712 = scmp.le.s32.totalorder 1, %s9
      %p713 = scmp.lt.s32.totalorder %s9, 3
      %p714 = pnand %p712, %p713
      %p715 = pneg %p714
      // Predicated region
      $region63: #{_init_step.8} parent=5 // pred_check
        _
      $region64: #{_init_step.8} parent=5 // pred_check_branch
        %717 = sbr.rel (%p714) target = $region66
      $region65: #{_init_step.8} parent=5 // pred_region
        %s718 = ssub.s32 %s9, 1
        %s719 = sand.u32 %s60, 1
        %s720 = sand.u32 %s60, 1
        %s721 = smul.addr %s720, 1024
        %s722 = scalar_lea.vmem [#allocation2], %s721
        // Predicated region
        $region67: #{_init_step.8} parent=65 // pred_check
          %p723 = pneg %p73
        $region68: #{_init_step.8} parent=65 // pred_check_branch
          %725 = sbr.rel (%p723) target = $region70
        $region69: #{_init_step.8} parent=65 // pred_region
          _
        $region70: #{_init_step.8} parent=65 // pred_fallthru
          _
        %p726 = scmp.lt.s32.totalorder %s18, 0
        %s727 = scalar_select %p726, %s18, 0
        %s728 = smul.addr %s727, 8
        %s729 = smul.addr %s728, 4
        %s730 = scalar_lea.vmem %s0, %s729
        %p731 = pneg %p47
        %p732 = pneg %p44
        %s733 = sand.u32 %s60, 1
        %s734 = sand.u32 %s60, 1
        %s735 = smul.addr %s734, 1024
        %s736 = scalar_lea.vmem [#allocation2], %s735
        %p737 = pneg %p73
        %p738 = pneg %p70
        %s739 = smul.u32 2, %s19
        %p740 = scmp.lt.s32.totalorder %s739, 3
        %s741 = scalar_select %p740, %s739, 3
        %s742 = scalar_lea.vmem %s2, %s741
        %p743 = pneg %p99
        %p744 = pneg %p96
        %p745 = pneg %p127
        %p746 = pneg %p124
        %s747 = smul.u32 2, %s19
        %p748 = scmp.lt.s32.totalorder %s18, 0
        %s749 = scalar_select %p748, %s18, 0
        %p750 = scmp.lt.s32.totalorder %s747, 3
        %s751 = scalar_select %p750, %s747, 3
        %s752 = smul.addr %s749, 4
        %s753 = sadd.s32 %s751, %s752
        %s754 = smul.addr %s753, 8
        %s755 = scalar_lea.vmem %s3, %s754
        %p756 = scmp.lt.s32.totalorder %s18, 0
        %s757 = scalar_select %p756, %s18, 0
        %s758 = smul.addr %s757, 8
        %s759 = smul.addr %s758, 4
        %s760 = scalar_lea.vmem %s0, %s759
        %s761 = smul.u32 2, %s19
        %s762 = smul.u32 2, %s19
        %p763 = scmp.lt.s32.totalorder %s762, 3
        %s764 = scalar_select %p763, %s762, 3
        %s765 = scalar_lea.vmem %s2, %s764
        %s766 = smul.u32 2, %s19
        %s767 = smul.u32 2, %s19
        %p768 = scmp.lt.s32.totalorder %s18, 0
        %s769 = scalar_select %p768, %s18, 0
        %p770 = scmp.lt.s32.totalorder %s767, 3
        %s771 = scalar_select %p770, %s767, 3
        %s772 = smul.addr %s769, 4
        %s773 = sadd.s32 %s771, %s772
        %s774 = smul.addr %s773, 8
        %s775 = scalar_lea.vmem %s3, %s774
        %s776 = smul.u32 2, %s19
        %v777 = vld [vmem:[%s760] sm:$0xff]
        %v778 = vld [vmem:[%s760 + $0x8] sm:$0xff]
        %v779 = vld [vmem:[%s760 + $0x10] sm:$0xff]
        %v780 = vld [vmem:[%s760 + $0x18] sm:$0xff]
        %v781 = vld [vmem:[%s722] sm:$0xff]
        %v782 = vld [vmem:[%s722 + $0x8] sm:$0xff]
        %v783 = vld [vmem:[%s722 + $0x10] sm:$0xff]
        %v784 = vld [vmem:[%s722 + $0x18] sm:$0xff]
        %v785 = vld [vmem:[%s722 + $0x20] sm:$0xff]
        %v786 = vld [vmem:[%s722 + $0x28] sm:$0xff]
        %v787 = vld [vmem:[%s722 + $0x30] sm:$0xff]
        %v788 = vld [vmem:[%s722 + $0x38] sm:$0xff]
        %v789 = vld [vmem:[%s722 + $0x40] sm:$0xff]
        %v790 = vld [vmem:[%s722 + $0x48] sm:$0xff]
        %v791 = vld [vmem:[%s722 + $0x50] sm:$0xff]
        %v792 = vld [vmem:[%s722 + $0x58] sm:$0xff]
        %v793 = vld [vmem:[%s722 + $0x60] sm:$0xff]
        %v794 = vld [vmem:[%s722 + $0x68] sm:$0xff]
        %v795 = vld [vmem:[%s722 + $0x70] sm:$0xff]
        %v796 = vld [vmem:[%s722 + $0x78] sm:$0xff]
        %v797 = vld [vmem:[%s722 + $0x80] sm:$0xff]
        %v798 = vld [vmem:[%s722 + $0x88] sm:$0xff]
        %v799 = vld [vmem:[%s722 + $0x90] sm:$0xff]
        %v800 = vld [vmem:[%s722 + $0x98] sm:$0xff]
        %v801 = vld [vmem:[%s722 + $0xa0] sm:$0xff]
        %v802 = vld [vmem:[%s722 + $0xa8] sm:$0xff]
        %v803 = vld [vmem:[%s722 + $0xb0] sm:$0xff]
        %v804 = vld [vmem:[%s722 + $0xb8] sm:$0xff]
        %v805 = vld [vmem:[%s722 + $0xc0] sm:$0xff]
        %v806 = vld [vmem:[%s722 + $0xc8] sm:$0xff]
        %v807 = vld [vmem:[%s722 + $0xd0] sm:$0xff]
        %v808 = vld [vmem:[%s722 + $0xd8] sm:$0xff]
        %v809 = vld [vmem:[%s722 + $0xe0] sm:$0xff]
        %v810 = vld [vmem:[%s722 + $0xe8] sm:$0xff]
        %v811 = vld [vmem:[%s722 + $0xf0] sm:$0xff]
        %v812 = vld [vmem:[%s722 + $0xf8] sm:$0xff]
        %v813 = vld [vmem:[%s722 + $0x100] sm:$0xff]
        %v814 = vld [vmem:[%s722 + $0x108] sm:$0xff]
        %v815 = vld [vmem:[%s722 + $0x110] sm:$0xff]
        %v816 = vld [vmem:[%s722 + $0x118] sm:$0xff]
        %v817 = vld [vmem:[%s722 + $0x120] sm:$0xff]
        %v818 = vld [vmem:[%s722 + $0x128] sm:$0xff]
        %v819 = vld [vmem:[%s722 + $0x130] sm:$0xff]
        %v820 = vld [vmem:[%s722 + $0x138] sm:$0xff]
        %v821 = vld [vmem:[%s722 + $0x140] sm:$0xff]
        %v822 = vld [vmem:[%s722 + $0x148] sm:$0xff]
        %v823 = vld [vmem:[%s722 + $0x150] sm:$0xff]
        %v824 = vld [vmem:[%s722 + $0x158] sm:$0xff]
        %v825 = vld [vmem:[%s722 + $0x160] sm:$0xff]
        %v826 = vld [vmem:[%s722 + $0x168] sm:$0xff]
        %v827 = vld [vmem:[%s722 + $0x170] sm:$0xff]
        %v828 = vld [vmem:[%s722 + $0x178] sm:$0xff]
        %v829 = vld [vmem:[%s722 + $0x180] sm:$0xff]
        %v830 = vld [vmem:[%s722 + $0x188] sm:$0xff]
        %v831 = vld [vmem:[%s722 + $0x190] sm:$0xff]
        %v832 = vld [vmem:[%s722 + $0x198] sm:$0xff]
        %v833 = vld [vmem:[%s722 + $0x1a0] sm:$0xff]
        %v834 = vld [vmem:[%s722 + $0x1a8] sm:$0xff]
        %v835 = vld [vmem:[%s722 + $0x1b0] sm:$0xff]
        %v836 = vld [vmem:[%s722 + $0x1b8] sm:$0xff]
        %v837 = vld [vmem:[%s722 + $0x1c0] sm:$0xff]
        %v838 = vld [vmem:[%s722 + $0x1c8] sm:$0xff]
        %v839 = vld [vmem:[%s722 + $0x1d0] sm:$0xff]
        %v840 = vld [vmem:[%s722 + $0x1d8] sm:$0xff]
        %v841 = vld [vmem:[%s722 + $0x1e0] sm:$0xff]
        %v842 = vld [vmem:[%s722 + $0x1e8] sm:$0xff]
        %v843 = vld [vmem:[%s722 + $0x1f0] sm:$0xff]
        %v844 = vld [vmem:[%s722 + $0x1f8] sm:$0xff]
        %v845 = vld [vmem:[%s722 + $0x200] sm:$0xff]
        %v846 = vld [vmem:[%s722 + $0x208] sm:$0xff]
        %v847 = vld [vmem:[%s722 + $0x210] sm:$0xff]
        %v848 = vld [vmem:[%s722 + $0x218] sm:$0xff]
        %v849 = vld [vmem:[%s722 + $0x220] sm:$0xff]
        %v850 = vld [vmem:[%s722 + $0x228] sm:$0xff]
        %v851 = vld [vmem:[%s722 + $0x230] sm:$0xff]
        %v852 = vld [vmem:[%s722 + $0x238] sm:$0xff]
        %v853 = vld [vmem:[%s722 + $0x240] sm:$0xff]
        %v854 = vld [vmem:[%s722 + $0x248] sm:$0xff]
        %v855 = vld [vmem:[%s722 + $0x250] sm:$0xff]
        %v856 = vld [vmem:[%s722 + $0x258] sm:$0xff]
        %v857 = vld [vmem:[%s722 + $0x260] sm:$0xff]
        %v858 = vld [vmem:[%s722 + $0x268] sm:$0xff]
        %v859 = vld [vmem:[%s722 + $0x270] sm:$0xff]
        %v860 = vld [vmem:[%s722 + $0x278] sm:$0xff]
        %v861 = vld [vmem:[%s722 + $0x280] sm:$0xff]
        %v862 = vld [vmem:[%s722 + $0x288] sm:$0xff]
        %v863 = vld [vmem:[%s722 + $0x290] sm:$0xff]
        %v864 = vld [vmem:[%s722 + $0x298] sm:$0xff]
        %v865 = vld [vmem:[%s722 + $0x2a0] sm:$0xff]
        %v866 = vld [vmem:[%s722 + $0x2a8] sm:$0xff]
        %v867 = vld [vmem:[%s722 + $0x2b0] sm:$0xff]
        %v868 = vld [vmem:[%s722 + $0x2b8] sm:$0xff]
        %v869 = vld [vmem:[%s722 + $0x2c0] sm:$0xff]
        %v870 = vld [vmem:[%s722 + $0x2c8] sm:$0xff]
        %v871 = vld [vmem:[%s722 + $0x2d0] sm:$0xff]
        %v872 = vld [vmem:[%s722 + $0x2d8] sm:$0xff]
        %v873 = vld [vmem:[%s722 + $0x2e0] sm:$0xff]
        %v874 = vld [vmem:[%s722 + $0x2e8] sm:$0xff]
        %v875 = vld [vmem:[%s722 + $0x2f0] sm:$0xff]
        %v876 = vld [vmem:[%s722 + $0x2f8] sm:$0xff]
        %v877 = vld [vmem:[%s722 + $0x300] sm:$0xff]
        %v878 = vld [vmem:[%s722 + $0x308] sm:$0xff]
        %v879 = vld [vmem:[%s722 + $0x310] sm:$0xff]
        %v880 = vld [vmem:[%s722 + $0x318] sm:$0xff]
        %v881 = vld [vmem:[%s722 + $0x320] sm:$0xff]
        %v882 = vld [vmem:[%s722 + $0x328] sm:$0xff]
        %v883 = vld [vmem:[%s722 + $0x330] sm:$0xff]
        %v884 = vld [vmem:[%s722 + $0x338] sm:$0xff]
        %v885 = vld [vmem:[%s722 + $0x340] sm:$0xff]
        %v886 = vld [vmem:[%s722 + $0x348] sm:$0xff]
        %v887 = vld [vmem:[%s722 + $0x350] sm:$0xff]
        %v888 = vld [vmem:[%s722 + $0x358] sm:$0xff]
        %v889 = vld [vmem:[%s722 + $0x360] sm:$0xff]
        %v890 = vld [vmem:[%s722 + $0x368] sm:$0xff]
        %v891 = vld [vmem:[%s722 + $0x370] sm:$0xff]
        %v892 = vld [vmem:[%s722 + $0x378] sm:$0xff]
        %v893 = vld [vmem:[%s722 + $0x380] sm:$0xff]
        %v894 = vld [vmem:[%s722 + $0x388] sm:$0xff]
        %v895 = vld [vmem:[%s722 + $0x390] sm:$0xff]
        %v896 = vld [vmem:[%s722 + $0x398] sm:$0xff]
        %v897 = vld [vmem:[%s722 + $0x3a0] sm:$0xff]
        %v898 = vld [vmem:[%s722 + $0x3a8] sm:$0xff]
        %v899 = vld [vmem:[%s722 + $0x3b0] sm:$0xff]
        %v900 = vld [vmem:[%s722 + $0x3b8] sm:$0xff]
        %v901 = vld [vmem:[%s722 + $0x3c0] sm:$0xff]
        %v902 = vld [vmem:[%s722 + $0x3c8] sm:$0xff]
        %v903 = vld [vmem:[%s722 + $0x3d0] sm:$0xff]
        %v904 = vld [vmem:[%s722 + $0x3d8] sm:$0xff]
        %v905 = vld [vmem:[%s722 + $0x3e0] sm:$0xff]
        %v906 = vld [vmem:[%s722 + $0x3e8] sm:$0xff]
        %v907 = vld [vmem:[%s722 + $0x3f0] sm:$0xff]
        %v908 = vld [vmem:[%s722 + $0x3f8] sm:$0xff]
        %v909 = vld [vmem:[%s765] sm:$0x3]
        %v911 = vlaneseq
        %v912 = vshrl.u32 %v911, 7
        %v913 = vsub.s32 0, %v912
        %v914 = vrot.slane %v909, %v913
        %v915 = vlaneseq
        %v916 = vshrl.u32 %v915, 7
        %v917 = vsub.s32 1, %v916
        %v918 = vrot.slane %v909, %v917
        %v925 = vunpack.c.l.b16 %v777
        %v926 = vunpack.c.h.b16 %v777
        %v927 = vunpack.c.l.b16 %v778
        %v928 = vunpack.c.h.b16 %v778
        %v929 = vunpack.c.l.b16 %v779
        %v930 = vunpack.c.h.b16 %v779
        %v931 = vunpack.c.l.b16 %v780
        %v932 = vunpack.c.h.b16 %v780
        %v933 = vpack.c.b16 %v925, %v925
        %v934 = vpack.c.b16 %v926, %v926
        %v935 = vpack.c.b16 %v927, %v927
        %v936 = vpack.c.b16 %v928, %v928
        %v937 = vpack.c.b16 %v929, %v929
        %v938 = vpack.c.b16 %v930, %v930
        %v939 = vpack.c.b16 %v931, %v931
        %v940 = vpack.c.b16 %v932, %v932
        %v1077 = vunpack.c.l.b16 %v781
        %v1078 = vunpack.c.h.b16 %v781
        %v1079 = vunpack.c.l.b16 %v782
        %v1080 = vunpack.c.h.b16 %v782
        %v1081 = vunpack.c.l.b16 %v783
        %v1082 = vunpack.c.h.b16 %v783
        %v1083 = vunpack.c.l.b16 %v784
        %v1084 = vunpack.c.h.b16 %v784
        %v1085 = vunpack.c.l.b16 %v785
        %v1086 = vunpack.c.h.b16 %v785
        %v1087 = vunpack.c.l.b16 %v786
        %v1088 = vunpack.c.h.b16 %v786
        %v1089 = vunpack.c.l.b16 %v787
        %v1090 = vunpack.c.h.b16 %v787
        %v1091 = vunpack.c.l.b16 %v788
        %v1092 = vunpack.c.h.b16 %v788
        %v1093 = vunpack.c.l.b16 %v789
        %v1094 = vunpack.c.h.b16 %v789
        %v1095 = vunpack.c.l.b16 %v790
        %v1096 = vunpack.c.h.b16 %v790
        %v1097 = vunpack.c.l.b16 %v791
        %v1098 = vunpack.c.h.b16 %v791
        %v1099 = vunpack.c.l.b16 %v792
        %v1100 = vunpack.c.h.b16 %v792
        %v1101 = vunpack.c.l.b16 %v793
        %v1102 = vunpack.c.h.b16 %v793
        %v1103 = vunpack.c.l.b16 %v794
        %v1104 = vunpack.c.h.b16 %v794
        %v1105 = vunpack.c.l.b16 %v795
        %v1106 = vunpack.c.h.b16 %v795
        %v1107 = vunpack.c.l.b16 %v796
        %v1108 = vunpack.c.h.b16 %v796
        %v1109 = vunpack.c.l.b16 %v797
        %v1110 = vunpack.c.h.b16 %v797
        %v1111 = vunpack.c.l.b16 %v798
        %v1112 = vunpack.c.h.b16 %v798
        %v1113 = vunpack.c.l.b16 %v799
        %v1114 = vunpack.c.h.b16 %v799
        %v1115 = vunpack.c.l.b16 %v800
        %v1116 = vunpack.c.h.b16 %v800
        %v1117 = vunpack.c.l.b16 %v801
        %v1118 = vunpack.c.h.b16 %v801
        %v1119 = vunpack.c.l.b16 %v802
        %v1120 = vunpack.c.h.b16 %v802
        %v1121 = vunpack.c.l.b16 %v803
        %v1122 = vunpack.c.h.b16 %v803
        %v1123 = vunpack.c.l.b16 %v804
        %v1124 = vunpack.c.h.b16 %v804
        %v1125 = vunpack.c.l.b16 %v805
        %v1126 = vunpack.c.h.b16 %v805
        %v1127 = vunpack.c.l.b16 %v806
        %v1128 = vunpack.c.h.b16 %v806
        %v1129 = vunpack.c.l.b16 %v807
        %v1130 = vunpack.c.h.b16 %v807
        %v1131 = vunpack.c.l.b16 %v808
        %v1132 = vunpack.c.h.b16 %v808
        %v1133 = vunpack.c.l.b16 %v809
        %v1134 = vunpack.c.h.b16 %v809
        %v1135 = vunpack.c.l.b16 %v810
        %v1136 = vunpack.c.h.b16 %v810
        %v1137 = vunpack.c.l.b16 %v811
        %v1138 = vunpack.c.h.b16 %v811
        %v1139 = vunpack.c.l.b16 %v812
        %v1140 = vunpack.c.h.b16 %v812
        %v1141 = vunpack.c.l.b16 %v813
        %v1142 = vunpack.c.h.b16 %v813
        %v1143 = vunpack.c.l.b16 %v814
        %v1144 = vunpack.c.h.b16 %v814
        %v1145 = vunpack.c.l.b16 %v815
        %v1146 = vunpack.c.h.b16 %v815
        %v1147 = vunpack.c.l.b16 %v816
        %v1148 = vunpack.c.h.b16 %v816
        %v1149 = vunpack.c.l.b16 %v817
        %v1150 = vunpack.c.h.b16 %v817
        %v1151 = vunpack.c.l.b16 %v818
        %v1152 = vunpack.c.h.b16 %v818
        %v1153 = vunpack.c.l.b16 %v819
        %v1154 = vunpack.c.h.b16 %v819
        %v1155 = vunpack.c.l.b16 %v820
        %v1156 = vunpack.c.h.b16 %v820
        %v1157 = vunpack.c.l.b16 %v821
        %v1158 = vunpack.c.h.b16 %v821
        %v1159 = vunpack.c.l.b16 %v822
        %v1160 = vunpack.c.h.b16 %v822
        %v1161 = vunpack.c.l.b16 %v823
        %v1162 = vunpack.c.h.b16 %v823
        %v1163 = vunpack.c.l.b16 %v824
        %v1164 = vunpack.c.h.b16 %v824
        %v1165 = vunpack.c.l.b16 %v825
        %v1166 = vunpack.c.h.b16 %v825
        %v1167 = vunpack.c.l.b16 %v826
        %v1168 = vunpack.c.h.b16 %v826
        %v1169 = vunpack.c.l.b16 %v827
        %v1170 = vunpack.c.h.b16 %v827
        %v1171 = vunpack.c.l.b16 %v828
        %v1172 = vunpack.c.h.b16 %v828
        %v1173 = vunpack.c.l.b16 %v829
        %v1174 = vunpack.c.h.b16 %v829
        %v1175 = vunpack.c.l.b16 %v830
        %v1176 = vunpack.c.h.b16 %v830
        %v1177 = vunpack.c.l.b16 %v831
        %v1178 = vunpack.c.h.b16 %v831
        %v1179 = vunpack.c.l.b16 %v832
        %v1180 = vunpack.c.h.b16 %v832
        %v1181 = vunpack.c.l.b16 %v833
        %v1182 = vunpack.c.h.b16 %v833
        %v1183 = vunpack.c.l.b16 %v834
        %v1184 = vunpack.c.h.b16 %v834
        %v1185 = vunpack.c.l.b16 %v835
        %v1186 = vunpack.c.h.b16 %v835
        %v1187 = vunpack.c.l.b16 %v836
        %v1188 = vunpack.c.h.b16 %v836
        %v1189 = vunpack.c.l.b16 %v837
        %v1190 = vunpack.c.h.b16 %v837
        %v1191 = vunpack.c.l.b16 %v838
        %v1192 = vunpack.c.h.b16 %v838
        %v1193 = vunpack.c.l.b16 %v839
        %v1194 = vunpack.c.h.b16 %v839
        %v1195 = vunpack.c.l.b16 %v840
        %v1196 = vunpack.c.h.b16 %v840
        %v1197 = vunpack.c.l.b16 %v841
        %v1198 = vunpack.c.h.b16 %v841
        %v1199 = vunpack.c.l.b16 %v842
        %v1200 = vunpack.c.h.b16 %v842
        %v1201 = vunpack.c.l.b16 %v843
        %v1202 = vunpack.c.h.b16 %v843
        %v1203 = vunpack.c.l.b16 %v844
        %v1204 = vunpack.c.h.b16 %v844
        %v1205 = vunpack.c.l.b16 %v845
        %v1206 = vunpack.c.h.b16 %v845
        %v1207 = vunpack.c.l.b16 %v846
        %v1208 = vunpack.c.h.b16 %v846
        %v1209 = vunpack.c.l.b16 %v847
        %v1210 = vunpack.c.h.b16 %v847
        %v1211 = vunpack.c.l.b16 %v848
        %v1212 = vunpack.c.h.b16 %v848
        %v1213 = vunpack.c.l.b16 %v849
        %v1214 = vunpack.c.h.b16 %v849
        %v1215 = vunpack.c.l.b16 %v850
        %v1216 = vunpack.c.h.b16 %v850
        %v1217 = vunpack.c.l.b16 %v851
        %v1218 = vunpack.c.h.b16 %v851
        %v1219 = vunpack.c.l.b16 %v852
        %v1220 = vunpack.c.h.b16 %v852
        %v1221 = vunpack.c.l.b16 %v853
        %v1222 = vunpack.c.h.b16 %v853
        %v1223 = vunpack.c.l.b16 %v854
        %v1224 = vunpack.c.h.b16 %v854
        %v1225 = vunpack.c.l.b16 %v855
        %v1226 = vunpack.c.h.b16 %v855
        %v1227 = vunpack.c.l.b16 %v856
        %v1228 = vunpack.c.h.b16 %v856
        %v1229 = vunpack.c.l.b16 %v857
        %v1230 = vunpack.c.h.b16 %v857
        %v1231 = vunpack.c.l.b16 %v858
        %v1232 = vunpack.c.h.b16 %v858
        %v1233 = vunpack.c.l.b16 %v859
        %v1234 = vunpack.c.h.b16 %v859
        %v1235 = vunpack.c.l.b16 %v860
        %v1236 = vunpack.c.h.b16 %v860
        %v1237 = vunpack.c.l.b16 %v861
        %v1238 = vunpack.c.h.b16 %v861
        %v1239 = vunpack.c.l.b16 %v862
        %v1240 = vunpack.c.h.b16 %v862
        %v1241 = vunpack.c.l.b16 %v863
        %v1242 = vunpack.c.h.b16 %v863
        %v1243 = vunpack.c.l.b16 %v864
        %v1244 = vunpack.c.h.b16 %v864
        %v1245 = vunpack.c.l.b16 %v865
        %v1246 = vunpack.c.h.b16 %v865
        %v1247 = vunpack.c.l.b16 %v866
        %v1248 = vunpack.c.h.b16 %v866
        %v1249 = vunpack.c.l.b16 %v867
        %v1250 = vunpack.c.h.b16 %v867
        %v1251 = vunpack.c.l.b16 %v868
        %v1252 = vunpack.c.h.b16 %v868
        %v1253 = vunpack.c.l.b16 %v869
        %v1254 = vunpack.c.h.b16 %v869
        %v1255 = vunpack.c.l.b16 %v870
        %v1256 = vunpack.c.h.b16 %v870
        %v1257 = vunpack.c.l.b16 %v871
        %v1258 = vunpack.c.h.b16 %v871
        %v1259 = vunpack.c.l.b16 %v872
        %v1260 = vunpack.c.h.b16 %v872
        %v1261 = vunpack.c.l.b16 %v873
        %v1262 = vunpack.c.h.b16 %v873
        %v1263 = vunpack.c.l.b16 %v874
        %v1264 = vunpack.c.h.b16 %v874
        %v1265 = vunpack.c.l.b16 %v875
        %v1266 = vunpack.c.h.b16 %v875
        %v1267 = vunpack.c.l.b16 %v876
        %v1268 = vunpack.c.h.b16 %v876
        %v1269 = vunpack.c.l.b16 %v877
        %v1270 = vunpack.c.h.b16 %v877
        %v1271 = vunpack.c.l.b16 %v878
        %v1272 = vunpack.c.h.b16 %v878
        %v1273 = vunpack.c.l.b16 %v879
        %v1274 = vunpack.c.h.b16 %v879
        %v1275 = vunpack.c.l.b16 %v880
        %v1276 = vunpack.c.h.b16 %v880
        %v1277 = vunpack.c.l.b16 %v881
        %v1278 = vunpack.c.h.b16 %v881
        %v1279 = vunpack.c.l.b16 %v882
        %v1280 = vunpack.c.h.b16 %v882
        %v1281 = vunpack.c.l.b16 %v883
        %v1282 = vunpack.c.h.b16 %v883
        %v1283 = vunpack.c.l.b16 %v884
        %v1284 = vunpack.c.h.b16 %v884
        %v1285 = vunpack.c.l.b16 %v885
        %v1286 = vunpack.c.h.b16 %v885
        %v1287 = vunpack.c.l.b16 %v886
        %v1288 = vunpack.c.h.b16 %v886
        %v1289 = vunpack.c.l.b16 %v887
        %v1290 = vunpack.c.h.b16 %v887
        %v1291 = vunpack.c.l.b16 %v888
        %v1292 = vunpack.c.h.b16 %v888
        %v1293 = vunpack.c.l.b16 %v889
        %v1294 = vunpack.c.h.b16 %v889
        %v1295 = vunpack.c.l.b16 %v890
        %v1296 = vunpack.c.h.b16 %v890
        %v1297 = vunpack.c.l.b16 %v891
        %v1298 = vunpack.c.h.b16 %v891
        %v1299 = vunpack.c.l.b16 %v892
        %v1300 = vunpack.c.h.b16 %v892
        %v1301 = vunpack.c.l.b16 %v893
        %v1302 = vunpack.c.h.b16 %v893
        %v1303 = vunpack.c.l.b16 %v894
        %v1304 = vunpack.c.h.b16 %v894
        %v1305 = vunpack.c.l.b16 %v895
        %v1306 = vunpack.c.h.b16 %v895
        %v1307 = vunpack.c.l.b16 %v896
        %v1308 = vunpack.c.h.b16 %v896
        %v1309 = vunpack.c.l.b16 %v897
        %v1310 = vunpack.c.h.b16 %v897
        %v1311 = vunpack.c.l.b16 %v898
        %v1312 = vunpack.c.h.b16 %v898
        %v1313 = vunpack.c.l.b16 %v899
        %v1314 = vunpack.c.h.b16 %v899
        %v1315 = vunpack.c.l.b16 %v900
        %v1316 = vunpack.c.h.b16 %v900
        %v1317 = vunpack.c.l.b16 %v901
        %v1318 = vunpack.c.h.b16 %v901
        %v1319 = vunpack.c.l.b16 %v902
        %v1320 = vunpack.c.h.b16 %v902
        %v1321 = vunpack.c.l.b16 %v903
        %v1322 = vunpack.c.h.b16 %v903
        %v1323 = vunpack.c.l.b16 %v904
        %v1324 = vunpack.c.h.b16 %v904
        %v1325 = vunpack.c.l.b16 %v905
        %v1326 = vunpack.c.h.b16 %v905
        %v1327 = vunpack.c.l.b16 %v906
        %v1328 = vunpack.c.h.b16 %v906
        %v1329 = vunpack.c.l.b16 %v907
        %v1330 = vunpack.c.h.b16 %v907
        %v1331 = vunpack.c.l.b16 %v908
        %v1332 = vunpack.c.h.b16 %v908
        %v1333 = vpack.c.b16 %v1079, %v1077
        %v1334 = vpack.c.b16 %v1080, %v1078
        %v1335 = vpack.c.b16 %v1083, %v1081
        %v1336 = vpack.c.b16 %v1084, %v1082
        %v1337 = vpack.c.b16 %v1087, %v1085
        %v1338 = vpack.c.b16 %v1088, %v1086
        %v1339 = vpack.c.b16 %v1091, %v1089
        %v1340 = vpack.c.b16 %v1092, %v1090
        %v1341 = vpack.c.b16 %v1095, %v1093
        %v1342 = vpack.c.b16 %v1096, %v1094
        %v1343 = vpack.c.b16 %v1099, %v1097
        %v1344 = vpack.c.b16 %v1100, %v1098
        %v1345 = vpack.c.b16 %v1103, %v1101
        %v1346 = vpack.c.b16 %v1104, %v1102
        %v1347 = vpack.c.b16 %v1107, %v1105
        %v1348 = vpack.c.b16 %v1108, %v1106
        %v1349 = vpack.c.b16 %v1111, %v1109
        %v1350 = vpack.c.b16 %v1112, %v1110
        %v1351 = vpack.c.b16 %v1115, %v1113
        %v1352 = vpack.c.b16 %v1116, %v1114
        %v1353 = vpack.c.b16 %v1119, %v1117
        %v1354 = vpack.c.b16 %v1120, %v1118
        %v1355 = vpack.c.b16 %v1123, %v1121
        %v1356 = vpack.c.b16 %v1124, %v1122
        %v1357 = vpack.c.b16 %v1127, %v1125
        %v1358 = vpack.c.b16 %v1128, %v1126
        %v1359 = vpack.c.b16 %v1131, %v1129
        %v1360 = vpack.c.b16 %v1132, %v1130
        %v1361 = vpack.c.b16 %v1135, %v1133
        %v1362 = vpack.c.b16 %v1136, %v1134
        %v1363 = vpack.c.b16 %v1139, %v1137
        %v1364 = vpack.c.b16 %v1140, %v1138
        %v1365 = vpack.c.b16 %v1143, %v1141
        %v1366 = vpack.c.b16 %v1144, %v1142
        %v1367 = vpack.c.b16 %v1147, %v1145
        %v1368 = vpack.c.b16 %v1148, %v1146
        %v1369 = vpack.c.b16 %v1151, %v1149
        %v1370 = vpack.c.b16 %v1152, %v1150
        %v1371 = vpack.c.b16 %v1155, %v1153
        %v1372 = vpack.c.b16 %v1156, %v1154
        %v1373 = vpack.c.b16 %v1159, %v1157
        %v1374 = vpack.c.b16 %v1160, %v1158
        %v1375 = vpack.c.b16 %v1163, %v1161
        %v1376 = vpack.c.b16 %v1164, %v1162
        %v1377 = vpack.c.b16 %v1167, %v1165
        %v1378 = vpack.c.b16 %v1168, %v1166
        %v1379 = vpack.c.b16 %v1171, %v1169
        %v1380 = vpack.c.b16 %v1172, %v1170
        %v1381 = vpack.c.b16 %v1175, %v1173
        %v1382 = vpack.c.b16 %v1176, %v1174
        %v1383 = vpack.c.b16 %v1179, %v1177
        %v1384 = vpack.c.b16 %v1180, %v1178
        %v1385 = vpack.c.b16 %v1183, %v1181
        %v1386 = vpack.c.b16 %v1184, %v1182
        %v1387 = vpack.c.b16 %v1187, %v1185
        %v1388 = vpack.c.b16 %v1188, %v1186
        %v1389 = vpack.c.b16 %v1191, %v1189
        %v1390 = vpack.c.b16 %v1192, %v1190
        %v1391 = vpack.c.b16 %v1195, %v1193
        %v1392 = vpack.c.b16 %v1196, %v1194
        %v1393 = vpack.c.b16 %v1199, %v1197
        %v1394 = vpack.c.b16 %v1200, %v1198
        %v1395 = vpack.c.b16 %v1203, %v1201
        %v1396 = vpack.c.b16 %v1204, %v1202
        %v1397 = vpack.c.b16 %v1207, %v1205
        %v1398 = vpack.c.b16 %v1208, %v1206
        %v1399 = vpack.c.b16 %v1211, %v1209
        %v1400 = vpack.c.b16 %v1212, %v1210
        %v1401 = vpack.c.b16 %v1215, %v1213
        %v1402 = vpack.c.b16 %v1216, %v1214
        %v1403 = vpack.c.b16 %v1219, %v1217
        %v1404 = vpack.c.b16 %v1220, %v1218
        %v1405 = vpack.c.b16 %v1223, %v1221
        %v1406 = vpack.c.b16 %v1224, %v1222
        %v1407 = vpack.c.b16 %v1227, %v1225
        %v1408 = vpack.c.b16 %v1228, %v1226
        %v1409 = vpack.c.b16 %v1231, %v1229
        %v1410 = vpack.c.b16 %v1232, %v1230
        %v1411 = vpack.c.b16 %v1235, %v1233
        %v1412 = vpack.c.b16 %v1236, %v1234
        %v1413 = vpack.c.b16 %v1239, %v1237
        %v1414 = vpack.c.b16 %v1240, %v1238
        %v1415 = vpack.c.b16 %v1243, %v1241
        %v1416 = vpack.c.b16 %v1244, %v1242
        %v1417 = vpack.c.b16 %v1247, %v1245
        %v1418 = vpack.c.b16 %v1248, %v1246
        %v1419 = vpack.c.b16 %v1251, %v1249
        %v1420 = vpack.c.b16 %v1252, %v1250
        %v1421 = vpack.c.b16 %v1255, %v1253
        %v1422 = vpack.c.b16 %v1256, %v1254
        %v1423 = vpack.c.b16 %v1259, %v1257
        %v1424 = vpack.c.b16 %v1260, %v1258
        %v1425 = vpack.c.b16 %v1263, %v1261
        %v1426 = vpack.c.b16 %v1264, %v1262
        %v1427 = vpack.c.b16 %v1267, %v1265
        %v1428 = vpack.c.b16 %v1268, %v1266
        %v1429 = vpack.c.b16 %v1271, %v1269
        %v1430 = vpack.c.b16 %v1272, %v1270
        %v1431 = vpack.c.b16 %v1275, %v1273
        %v1432 = vpack.c.b16 %v1276, %v1274
        %v1433 = vpack.c.b16 %v1279, %v1277
        %v1434 = vpack.c.b16 %v1280, %v1278
        %v1435 = vpack.c.b16 %v1283, %v1281
        %v1436 = vpack.c.b16 %v1284, %v1282
        %v1437 = vpack.c.b16 %v1287, %v1285
        %v1438 = vpack.c.b16 %v1288, %v1286
        %v1439 = vpack.c.b16 %v1291, %v1289
        %v1440 = vpack.c.b16 %v1292, %v1290
        %v1441 = vpack.c.b16 %v1295, %v1293
        %v1442 = vpack.c.b16 %v1296, %v1294
        %v1443 = vpack.c.b16 %v1299, %v1297
        %v1444 = vpack.c.b16 %v1300, %v1298
        %v1445 = vpack.c.b16 %v1303, %v1301
        %v1446 = vpack.c.b16 %v1304, %v1302
        %v1447 = vpack.c.b16 %v1307, %v1305
        %v1448 = vpack.c.b16 %v1308, %v1306
        %v1449 = vpack.c.b16 %v1311, %v1309
        %v1450 = vpack.c.b16 %v1312, %v1310
        %v1451 = vpack.c.b16 %v1315, %v1313
        %v1452 = vpack.c.b16 %v1316, %v1314
        %v1453 = vpack.c.b16 %v1319, %v1317
        %v1454 = vpack.c.b16 %v1320, %v1318
        %v1455 = vpack.c.b16 %v1323, %v1321
        %v1456 = vpack.c.b16 %v1324, %v1322
        %v1457 = vpack.c.b16 %v1327, %v1325
        %v1458 = vpack.c.b16 %v1328, %v1326
        %v1459 = vpack.c.b16 %v1331, %v1329
        %v1460 = vpack.c.b16 %v1332, %v1330
        %1589 = vmatprep.subr.bf16.mxu0 %v1334
        %1590 = vmatpush1.bf16.msra.mxu0 %v1333
        %1591 = vmatprep.subr.bf16.mxu0 %v1336
        %1592 = vmatpush1.bf16.msra.mxu0 %v1335
        %1593 = vmatprep.subr.bf16.mxu0 %v1338
        %1594 = vmatpush1.bf16.msra.mxu0 %v1337
        %1595 = vmatprep.subr.bf16.mxu0 %v1340
        %1596 = vmatpush1.bf16.msra.mxu0 %v1339
        %1597 = vmatprep.subr.bf16.mxu0 %v1342
        %1598 = vmatpush1.bf16.msra.mxu0 %v1341
        %1599 = vmatprep.subr.bf16.mxu0 %v1344
        %1600 = vmatpush1.bf16.msra.mxu0 %v1343
        %1601 = vmatprep.subr.bf16.mxu0 %v1346
        %1602 = vmatpush1.bf16.msra.mxu0 %v1345
        %1603 = vmatprep.subr.bf16.mxu0 %v1348
        %1604 = vmatpush1.bf16.msra.mxu0 %v1347
        %1605 = vmatprep.subr.bf16.mxu0 %v1350
        %1606 = vmatpush1.bf16.msra.mxu0 %v1349
        %1607 = vmatprep.subr.bf16.mxu0 %v1352
        %1608 = vmatpush1.bf16.msra.mxu0 %v1351
        %1609 = vmatprep.subr.bf16.mxu0 %v1354
        %1610 = vmatpush1.bf16.msra.mxu0 %v1353
        %1611 = vmatprep.subr.bf16.mxu0 %v1356
        %1612 = vmatpush1.bf16.msra.mxu0 %v1355
        %1613 = vmatprep.subr.bf16.mxu0 %v1358
        %1614 = vmatpush1.bf16.msra.mxu0 %v1357
        %1615 = vmatprep.subr.bf16.mxu0 %v1360
        %1616 = vmatpush1.bf16.msra.mxu0 %v1359
        %1617 = vmatprep.subr.bf16.mxu0 %v1362
        %1618 = vmatpush1.bf16.msra.mxu0 %v1361
        %1619 = vmatprep.subr.bf16.mxu0 %v1364
        %1620 = vmatpush1.bf16.msra.mxu0 %v1363
        %1621 = vmatprep.mubr.bf16.mxu0 %v934
        %1622 = vmatmul.mubr.bf16.gmra.mrb[0].mxu0 %v933
        %v1623 = vpop.f32.mrb[0].mxu0
        %v1624 = vadd.f32 %v914, %v1623
        %v1625 = vpop.f32.mrb[0].mxu0
        %v1626 = vadd.f32 %v918, %v1625
        %v1627 = vpop.f32.mrb[0].mxu0
        %v1628 = vpop.f32.mrb[0].mxu0
        %1629 = vdwg.mxu0
        %1630 = vmatprep.subr.bf16.mxu0 %v1366
        %1631 = vmatpush1.bf16.msra.mxu0 %v1365
        %1632 = vmatprep.subr.bf16.mxu0 %v1368
        %1633 = vmatpush1.bf16.msra.mxu0 %v1367
        %1634 = vmatprep.subr.bf16.mxu0 %v1370
        %1635 = vmatpush1.bf16.msra.mxu0 %v1369
        %1636 = vmatprep.subr.bf16.mxu0 %v1372
        %1637 = vmatpush1.bf16.msra.mxu0 %v1371
        %1638 = vmatprep.subr.bf16.mxu0 %v1374
        %1639 = vmatpush1.bf16.msra.mxu0 %v1373
        %1640 = vmatprep.subr.bf16.mxu0 %v1376
        %1641 = vmatpush1.bf16.msra.mxu0 %v1375
        %1642 = vmatprep.subr.bf16.mxu0 %v1378
        %1643 = vmatpush1.bf16.msra.mxu0 %v1377
        %1644 = vmatprep.subr.bf16.mxu0 %v1380
        %1645 = vmatpush1.bf16.msra.mxu0 %v1379
        %1646 = vmatprep.subr.bf16.mxu0 %v1382
        %1647 = vmatpush1.bf16.msra.mxu0 %v1381
        %1648 = vmatprep.subr.bf16.mxu0 %v1384
        %1649 = vmatpush1.bf16.msra.mxu0 %v1383
        %1650 = vmatprep.subr.bf16.mxu0 %v1386
        %1651 = vmatpush1.bf16.msra.mxu0 %v1385
        %1652 = vmatprep.subr.bf16.mxu0 %v1388
        %1653 = vmatpush1.bf16.msra.mxu0 %v1387
        %1654 = vmatprep.subr.bf16.mxu0 %v1390
        %1655 = vmatpush1.bf16.msra.mxu0 %v1389
        %1656 = vmatprep.subr.bf16.mxu0 %v1392
        %1657 = vmatpush1.bf16.msra.mxu0 %v1391
        %1658 = vmatprep.subr.bf16.mxu0 %v1394
        %1659 = vmatpush1.bf16.msra.mxu0 %v1393
        %1660 = vmatprep.subr.bf16.mxu0 %v1396
        %1661 = vmatpush1.bf16.msra.mxu0 %v1395
        %1662 = vmatprep.mubr.bf16.mxu0 %v936
        %1663 = vmatmul.mubr.bf16.gmra.mrb[0].mxu0 %v935
        %v1664 = vpop.f32.mrb[0].mxu0
        %v1665 = vadd.f32 %v1624, %v1664
        %v1666 = vpop.f32.mrb[0].mxu0
        %v1667 = vadd.f32 %v1626, %v1666
        %v1668 = vpop.f32.mrb[0].mxu0
        %v1669 = vpop.f32.mrb[0].mxu0
        %1670 = vdwg.mxu0
        %1671 = vmatprep.subr.bf16.mxu0 %v1398
        %1672 = vmatpush1.bf16.msra.mxu0 %v1397
        %1673 = vmatprep.subr.bf16.mxu0 %v1400
        %1674 = vmatpush1.bf16.msra.mxu0 %v1399
        %1675 = vmatprep.subr.bf16.mxu0 %v1402
        %1676 = vmatpush1.bf16.msra.mxu0 %v1401
        %1677 = vmatprep.subr.bf16.mxu0 %v1404
        %1678 = vmatpush1.bf16.msra.mxu0 %v1403
        %1679 = vmatprep.subr.bf16.mxu0 %v1406
        %1680 = vmatpush1.bf16.msra.mxu0 %v1405
        %1681 = vmatprep.subr.bf16.mxu0 %v1408
        %1682 = vmatpush1.bf16.msra.mxu0 %v1407
        %1683 = vmatprep.subr.bf16.mxu0 %v1410
        %1684 = vmatpush1.bf16.msra.mxu0 %v1409
        %1685 = vmatprep.subr.bf16.mxu0 %v1412
        %1686 = vmatpush1.bf16.msra.mxu0 %v1411
        %1687 = vmatprep.subr.bf16.mxu0 %v1414
        %1688 = vmatpush1.bf16.msra.mxu0 %v1413
        %1689 = vmatprep.subr.bf16.mxu0 %v1416
        %1690 = vmatpush1.bf16.msra.mxu0 %v1415
        %1691 = vmatprep.subr.bf16.mxu0 %v1418
        %1692 = vmatpush1.bf16.msra.mxu0 %v1417
        %1693 = vmatprep.subr.bf16.mxu0 %v1420
        %1694 = vmatpush1.bf16.msra.mxu0 %v1419
        %1695 = vmatprep.subr.bf16.mxu0 %v1422
        %1696 = vmatpush1.bf16.msra.mxu0 %v1421
        %1697 = vmatprep.subr.bf16.mxu0 %v1424
        %1698 = vmatpush1.bf16.msra.mxu0 %v1423
        %1699 = vmatprep.subr.bf16.mxu0 %v1426
        %1700 = vmatpush1.bf16.msra.mxu0 %v1425
        %1701 = vmatprep.subr.bf16.mxu0 %v1428
        %1702 = vmatpush1.bf16.msra.mxu0 %v1427
        %1703 = vmatprep.mubr.bf16.mxu0 %v938
        %1704 = vmatmul.mubr.bf16.gmra.mrb[0].mxu0 %v937
        %v1705 = vpop.f32.mrb[0].mxu0
        %v1706 = vadd.f32 %v1665, %v1705
        %v1707 = vpop.f32.mrb[0].mxu0
        %v1708 = vadd.f32 %v1667, %v1707
        %v1709 = vpop.f32.mrb[0].mxu0
        %v1710 = vpop.f32.mrb[0].mxu0
        %1711 = vdwg.mxu0
        %1712 = vmatprep.subr.bf16.mxu0 %v1430
        %1713 = vmatpush1.bf16.msra.mxu0 %v1429
        %1714 = vmatprep.subr.bf16.mxu0 %v1432
        %1715 = vmatpush1.bf16.msra.mxu0 %v1431
        %1716 = vmatprep.subr.bf16.mxu0 %v1434
        %1717 = vmatpush1.bf16.msra.mxu0 %v1433
        %1718 = vmatprep.subr.bf16.mxu0 %v1436
        %1719 = vmatpush1.bf16.msra.mxu0 %v1435
        %1720 = vmatprep.subr.bf16.mxu0 %v1438
        %1721 = vmatpush1.bf16.msra.mxu0 %v1437
        %1722 = vmatprep.subr.bf16.mxu0 %v1440
        %1723 = vmatpush1.bf16.msra.mxu0 %v1439
        %1724 = vmatprep.subr.bf16.mxu0 %v1442
        %1725 = vmatpush1.bf16.msra.mxu0 %v1441
        %1726 = vmatprep.subr.bf16.mxu0 %v1444
        %1727 = vmatpush1.bf16.msra.mxu0 %v1443
        %1728 = vmatprep.subr.bf16.mxu0 %v1446
        %1729 = vmatpush1.bf16.msra.mxu0 %v1445
        %1730 = vmatprep.subr.bf16.mxu0 %v1448
        %1731 = vmatpush1.bf16.msra.mxu0 %v1447
        %1732 = vmatprep.subr.bf16.mxu0 %v1450
        %1733 = vmatpush1.bf16.msra.mxu0 %v1449
        %1734 = vmatprep.subr.bf16.mxu0 %v1452
        %1735 = vmatpush1.bf16.msra.mxu0 %v1451
        %1736 = vmatprep.subr.bf16.mxu0 %v1454
        %1737 = vmatpush1.bf16.msra.mxu0 %v1453
        %1738 = vmatprep.subr.bf16.mxu0 %v1456
        %1739 = vmatpush1.bf16.msra.mxu0 %v1455
        %1740 = vmatprep.subr.bf16.mxu0 %v1458
        %1741 = vmatpush1.bf16.msra.mxu0 %v1457
        %1742 = vmatprep.subr.bf16.mxu0 %v1460
        %1743 = vmatpush1.bf16.msra.mxu0 %v1459
        %1744 = vmatprep.mubr.bf16.mxu0 %v940
        %1745 = vmatmul.mubr.bf16.gmra.mrb[0].mxu0 %v939
        %v1746 = vpop.f32.mrb[0].mxu0
        %v1747 = vadd.f32 %v1706, %v1746
        %v1748 = vpop.f32.mrb[0].mxu0
        %v1749 = vadd.f32 %v1708, %v1748
        %v1750 = vpop.f32.mrb[0].mxu0
        %v1751 = vpop.f32.mrb[0].mxu0
        %1752 = vdwg.mxu0
        %1753 = vst [vmem:[%s775] sm:$0xff] %v1747
        %1754 = vst [vmem:[%s775 + $0x8] sm:$0xff] %v1749
        %s1755 = smul.u32 2, %s19
        %p1756 = scmp.lt.s32.totalorder %s18, 0
        %s1757 = scalar_select %p1756, %s18, 0
        %p1758 = scmp.lt.s32.totalorder %s1755, 3
        %s1759 = scalar_select %p1758, %s1755, 3
        %s1760 = smul.addr %s1757, 4
        %s1761 = sadd.s32 %s1759, %s1760
        %s1762 = smul.addr %s1761, 8
        %s1763 = scalar_lea.vmem %s3, %s1762
        // Predicated region
        $region71: #{_init_step.8} parent=65 // pred_check
          %p1764 = pneg %p124
        $region72: #{_init_step.8} parent=65 // pred_check_branch
          %1766 = sbr.rel (%p1764) target = $region74
        $region73: #{_init_step.8} parent=65 // pred_region
          %s1767 = smul.u32 2, %s19
        $region74: #{_init_step.8} parent=65 // pred_fallthru
          _
      $region66: #{_init_step.8} parent=5 // pred_fallthru
        _
      %p1768 = scmp.le.s32.totalorder 2, %s9
      // Predicated region
      $region75: #{_init_step.8} parent=5 // pred_check
        %p1769 = pneg %p1768
      $region76: #{_init_step.8} parent=5 // pred_check_branch
        %1771 = sbr.rel (%p1769) target = $region78
      $region77: #{_init_step.8} parent=5 // pred_region
        %s1772 = ssub.s32 %s9, 2
        // Predicated region
        $region79: #{_init_step.8} parent=77 // pred_check
          %p1773 = pneg %p130
        $region80: #{_init_step.8} parent=77 // pred_check_branch
          %1775 = sbr.rel (%p1773) target = $region82
        $region81: #{_init_step.8} parent=77 // pred_region
          %s1776 = smul.u32 2, %s21
          %p1777 = scmp.lt.s32.totalorder %s20, 0
          %s1778 = scalar_select %p1777, %s20, 0
          %p1779 = scmp.lt.s32.totalorder %s1776, 3
          %s1780 = scalar_select %p1779, %s1776, 3
          %s1781 = smul.addr %s1778, 4
          %s1782 = sadd.s32 %s1780, %s1781
          %s1783 = smul.addr %s1782, 8
          %s1784 = scalar_lea.vmem %s3, %s1783
        $region82: #{_init_step.8} parent=77 // pred_fallthru
          _
      $region78: #{_init_step.8} parent=5 // pred_fallthru
        _
    $region6: #{_init_step.8} parent=1 // loop_footer
      %s13 = sadd.s32 1, %s9
    $region7: #{_init_step.8} parent=1 // loop_footer_branch
      %8 = sbr.rel target = $region3
    $region8: #{_init_step.8} parent=1 // loop_exit
      _

</llo_original>
